<compile_context>
chip_gen: v6e
topology: v6e:2x2x1
jax: 0.10.0
libtpu: 0.0.40
codegen_flags: <defaults>
</compile_context>

<pallas_src>
import functools

import jax
import jax.numpy as jnp
from jax.experimental import pallas as pl
from jax.experimental.pallas import tpu as pltpu


# ---------------------------------------------------------------------------
# Kernel
# ---------------------------------------------------------------------------
def _resgroup_kernel(x_ref, m_ref,
                     w1o_ref, w1c_ref, b1_ref,
                     w2o_ref, w2c_ref, b2_ref,
                     wd_ref, bd_ref, wu_ref, bu_ref,
                     wto_ref, wtc_ref, bt_ref,
                     o_ref, *, shifts, n_blocks):
    """One image per grid step: x_ref block is (1, C, P)."""
    x0 = x_ref[0]                     # (C, P) f32 — group-residual input
    masks = m_ref[...]                # (8, P) f32 — precomputed boundary masks

    def conv3x3(a, w_off, w_c, b):
        # a: (C, P); w_off: (C, 8*C) packed off-center taps; w_c: (C, C); b: (C, 1)
        # Stack the 8 off-center taps along the contraction dim -> K = 8*C = 256
        # (XLU rolls + VPU mask-mults overlap the MXU work), one accumulated dot.
        taps = [pltpu.roll(a, shift=shifts[k], axis=1) * masks[k:k + 1, :]
                for k in range(8)]
        a_stack = jnp.concatenate(taps, axis=0)          # (8*C, P)
        out = jnp.dot(w_off, a_stack, preferred_element_type=jnp.float32)
        out = out + jnp.dot(w_c, a, preferred_element_type=jnp.float32)
        return out + b                                   # bias broadcast over lanes

    res = x0
    for blk in range(n_blocks):                          # RCAB blocks (static unroll)
        r = jnp.maximum(conv3x3(res, w1o_ref[blk], w1c_ref[blk], b1_ref[blk]), 0.0)
        r = conv3x3(r, w2o_ref[blk], w2c_ref[blk], b2_ref[blk])
        # CALayer: global avg pool -> 1x1 -> ReLU -> 1x1 -> sigmoid.
        # Kept on the VPU/XLU/EUP (tiny), does not stall the MXU.
        avg = jnp.mean(r, axis=1, keepdims=True)                           # (C, 1)
        z = jnp.maximum(jnp.sum(wd_ref[blk] * avg, axis=0, keepdims=True)
                        + bd_ref[blk], 0.0)                                # (1, Cr)
        y = jax.nn.sigmoid(jnp.sum(wu_ref[blk] * z, axis=1, keepdims=True)
                           + bu_ref[blk])                                  # (C, 1)
        res = r * y + res                                # RCAB residual
    # ResidualGroup tail conv + group residual; lane-dense store.
    res = conv3x3(res, wto_ref[...], wtc_ref[...], bt_ref[...]) + x0
    o_ref[0] = res.astype(o_ref.dtype)


# ---------------------------------------------------------------------------
# Host-side packing helpers
# ---------------------------------------------------------------------------
def _make_taps(H, W):
    """Static roll shifts + (8, H*W) zero-padding boundary masks (off-center taps)."""
    P = H * W
    p = jnp.arange(P)
    yy, xx = p // W, p % W
    shifts, masks = [], []
    for ky in range(3):
        for kx in range(3):
            dy, dx = ky - 1, kx - 1
            if dy == 0 and dx == 0:
                continue
            # After roll by this shift, lane p holds source pixel p + dy*W + dx.
            shifts.append(int((-(dy * W + dx)) % P))
            valid = ((yy + dy >= 0) & (yy + dy < H) &
                     (xx + dx >= 0) & (xx + dx < W))
            masks.append(valid.astype(jnp.float32))
    return tuple(shifts), jnp.stack(masks, axis=0)       # (8, P)


def _pack_conv_weight(w):
    """(3,3,C_out,C_in) HWOI -> lane-dense ((C_out, 8*C_in) off-center, (C_out, C_in) center)."""
    offs = []
    for ky in range(3):
        for kx in range(3):
            if ky == 1 and kx == 1:
                continue
            offs.append(w[ky, kx])
    return jnp.concatenate(offs, axis=1), w[1, 1]


# ---------------------------------------------------------------------------
# Wrapper
# ---------------------------------------------------------------------------
def residual_group_pallas(x, blocks, tail_w, tail_b):
    """RCAN ResidualGroup forward.

    x       : (N, C, H, W) float32 (NCHW, PyTorch-native)
    blocks  : list of per-RCAB dicts with
                w1, w2 : (3, 3, C, C)  conv weights (HWOI; = PyTorch OIHW permuted)
                b1, b2 : (C,)          conv biases
                wd     : (C, Cr)       CALayer squeeze weight  (= Wd^T)
                bd     : (Cr,)
                wu     : (C, Cr)       CALayer excite weight   (= Wu)
                bu     : (C,)
    tail_w  : (3, 3, C, C), tail_b : (C,)   group tail conv
    Returns (N, C, H, W).
    """
    N, C, H, W = x.shape
    P = H * W
    n_blocks = len(blocks)
    Cr = blocks[0]["wd"].shape[1]

    shifts, masks = _make_taps(H, W)

    w1o, w1c, b1 = [], [], []
    w2o, w2c, b2 = [], [], []
    wd, bd, wu, bu = [], [], [], []
    for p in blocks:
        o, c = _pack_conv_weight(p["w1"]); w1o.append(o); w1c.append(c)
        b1.append(p["b1"].reshape(C, 1))
        o, c = _pack_conv_weight(p["w2"]); w2o.append(o); w2c.append(c)
        b2.append(p["b2"].reshape(C, 1))
        wd.append(p["wd"]); bd.append(p["bd"].reshape(1, Cr))
        wu.append(p["wu"]); bu.append(p["bu"].reshape(C, 1))
    stack = lambda xs: jnp.stack(xs, axis=0)
    w1o, w1c, b1 = stack(w1o), stack(w1c), stack(b1)
    w2o, w2c, b2 = stack(w2o), stack(w2c), stack(b2)
    wd, bd, wu, bu = stack(wd), stack(bd), stack(wu), stack(bu)
    wto, wtc = _pack_conv_weight(tail_w)
    bt = tail_b.reshape(C, 1)

    x_flat = x.reshape(N, C, P)                          # lane-dense pixels (free reshape)

    kernel = functools.partial(_resgroup_kernel, shifts=shifts, n_blocks=n_blocks)

    def const_spec(a):
        shp = a.shape
        return pl.BlockSpec(shp, lambda n: (0,) * len(shp))

    consts = [masks, w1o, w1c, b1, w2o, w2c, b2, wd, bd, wu, bu, wto, wtc, bt]

    flops = int(N * (2 * n_blocks + 1) * 2 * C * (9 * C) * P)
    weight_bytes = sum(int(a.size) * 4 for a in consts)
    cost = pl.CostEstimate(flops=flops,
                           transcendentals=int(N * n_blocks * C),
                           bytes_accessed=int(2 * N * C * P * 4 + weight_bytes))

    out = pl.pallas_call(
        kernel,
        out_shape=jax.ShapeDtypeStruct((N, C, P), x.dtype),
        grid_spec=pltpu.PrefetchScalarGridSpec(
            num_scalar_prefetch=0,
            grid=(N,),                                   # batch shards across v7x's 2 TCs
            in_specs=[pl.BlockSpec((1, C, P), lambda n: (n, 0, 0))]
                     + [const_spec(a) for a in consts],  # constant index_map -> no re-DMA
            out_specs=pl.BlockSpec((1, C, P), lambda n: (n, 0, 0)),
        ),
        compiler_params=pltpu.CompilerParams(
            dimension_semantics=("parallel",)),
        cost_estimate=cost,
    )(x_flat, *consts)
    return out.reshape(N, C, H, W)


# ---------------------------------------------------------------------------
# Pure-JAX reference (matches PyTorch ResidualGroup with bn=False, res_scale=1)
# ---------------------------------------------------------------------------
def residual_group_reference(x, blocks, tail_w, tail_b):
    def conv(inp, w, b):
        out = jax.lax.conv_general_dilated(
            inp, w, (1, 1), "SAME",
            dimension_numbers=("NCHW", "HWOI", "NCHW"))
        return out + b.reshape(1, -1, 1, 1)

    res = x
    for p in blocks:
        r = jax.nn.relu(conv(res, p["w1"], p["b1"]))
        r = conv(r, p["w2"], p["b2"])
        avg = jnp.mean(r, axis=(2, 3))                        # (N, C)
        z = jax.nn.relu(avg @ p["wd"] + p["bd"])              # (N, Cr)
        y = jax.nn.sigmoid(z @ p["wu"].T + p["bu"])           # (N, C)
        res = r * y[:, :, None, None] + res
    return conv(res, tail_w, tail_b) + x


# ---------------------------------------------------------------------------
if __name__ == "__main__":
    # ResidualGroup(n_feat=32, kernel_size=3, reduction=16, n_resblocks=4)
    N, C, H, W = 2, 32, 16, 16
    reduction = 16
    Cr = C // reduction
    n_blocks = 4

    keys = iter(jax.random.split(jax.random.PRNGKey(0), 64))
    x = jax.random.normal(next(keys), (N, C, H, W), jnp.float32)

    blocks = []
    for _ in range(n_blocks):
        blocks.append(dict(
            w1=jax.random.normal(next(keys), (3, 3, C, C), jnp.float32) * 0.05,
            b1=jax.random.normal(next(keys), (C,), jnp.float32) * 0.05,
            w2=jax.random.normal(next(keys), (3, 3, C, C), jnp.float32) * 0.05,
            b2=jax.random.normal(next(keys), (C,), jnp.float32) * 0.05,
            wd=jax.random.normal(next(keys), (C, Cr), jnp.float32) * 0.1,
            bd=jax.random.normal(next(keys), (Cr,), jnp.float32) * 0.1,
            wu=jax.random.normal(next(keys), (C, Cr), jnp.float32) * 0.1,
            bu=jax.random.normal(next(keys), (C,), jnp.float32) * 0.1,
        ))
    tail_w = jax.random.normal(next(keys), (3, 3, C, C), jnp.float32) * 0.05
    tail_b = jax.random.normal(next(keys), (C,), jnp.float32) * 0.05

    out = jax.block_until_ready(residual_group_pallas(x, blocks, tail_w, tail_b))
    ref = residual_group_reference(x, blocks, tail_w, tail_b)

    assert out.shape == (N, C, H, W)
    max_err = float(jnp.max(jnp.abs(out - ref)))
    assert jnp.allclose(out, ref, rtol=1e-3, atol=1e-3), f"max abs err {max_err}"
    print("KERNEL_OK")
</pallas_src>

<mosaic_0001>
module attributes {stable_mosaic.version = 11 : i64} {
  func.func @_resgroup_kernel(%arg0: i32, %arg1: memref<1x32x256xf32, #tpu.memory_space<vmem>>, %arg2: memref<8x256xf32, #tpu.memory_space<vmem>>, %arg3: memref<4x32x256xf32, #tpu.memory_space<vmem>>, %arg4: memref<4x32x32xf32, #tpu.memory_space<vmem>>, %arg5: memref<4x32x1xf32, #tpu.memory_space<vmem>>, %arg6: memref<4x32x256xf32, #tpu.memory_space<vmem>>, %arg7: memref<4x32x32xf32, #tpu.memory_space<vmem>>, %arg8: memref<4x32x1xf32, #tpu.memory_space<vmem>>, %arg9: memref<4x32x2xf32, #tpu.memory_space<vmem>>, %arg10: memref<4x1x2xf32, #tpu.memory_space<vmem>>, %arg11: memref<4x32x2xf32, #tpu.memory_space<vmem>>, %arg12: memref<4x32x1xf32, #tpu.memory_space<vmem>>, %arg13: memref<32x256xf32, #tpu.memory_space<vmem>>, %arg14: memref<32x32xf32, #tpu.memory_space<vmem>>, %arg15: memref<32x1xf32, #tpu.memory_space<vmem>>, %arg16: memref<1x32x256xf32, #tpu.memory_space<vmem>>) attributes {dimension_semantics = [#tpu.dimension_semantics<parallel>], iteration_bounds = array<i64: 2>, scalar_prefetch = 0 : i64, scratch_operands = 0 : i64, tpu.core_type = #tpu.core_type<tc>, window_params = [{transform_indices = @transform_0, window_bounds = array<i64: 1, 32, 256>}, {pipeline_mode = #tpu.pipeline_mode<synchronous>, transform_indices = @transform_1, window_bounds = array<i64: 8, 256>}, {pipeline_mode = #tpu.pipeline_mode<synchronous>, transform_indices = @transform_2, window_bounds = array<i64: 4, 32, 256>}, {pipeline_mode = #tpu.pipeline_mode<synchronous>, transform_indices = @transform_3, window_bounds = array<i64: 4, 32, 32>}, {pipeline_mode = #tpu.pipeline_mode<synchronous>, transform_indices = @transform_4, window_bounds = array<i64: 4, 32, 1>}, {pipeline_mode = #tpu.pipeline_mode<synchronous>, transform_indices = @transform_5, window_bounds = array<i64: 4, 32, 256>}, {pipeline_mode = #tpu.pipeline_mode<synchronous>, transform_indices = @transform_6, window_bounds = array<i64: 4, 32, 32>}, {pipeline_mode = #tpu.pipeline_mode<synchronous>, transform_indices = @transform_7, window_bounds = array<i64: 4, 32, 1>}, {pipeline_mode = #tpu.pipeline_mode<synchronous>, transform_indices = @transform_8, window_bounds = array<i64: 4, 32, 2>}, {pipeline_mode = #tpu.pipeline_mode<synchronous>, transform_indices = @transform_9, window_bounds = array<i64: 4, 1, 2>}, {pipeline_mode = #tpu.pipeline_mode<synchronous>, transform_indices = @transform_10, window_bounds = array<i64: 4, 32, 2>}, {pipeline_mode = #tpu.pipeline_mode<synchronous>, transform_indices = @transform_11, window_bounds = array<i64: 4, 32, 1>}, {pipeline_mode = #tpu.pipeline_mode<synchronous>, transform_indices = @transform_12, window_bounds = array<i64: 32, 256>}, {pipeline_mode = #tpu.pipeline_mode<synchronous>, transform_indices = @transform_13, window_bounds = array<i64: 32, 32>}, {pipeline_mode = #tpu.pipeline_mode<synchronous>, transform_indices = @transform_14, window_bounds = array<i64: 32, 1>}, {transform_indices = @transform_15, window_bounds = array<i64: 1, 32, 256>}]} {
    %c0 = arith.constant 0 : index
    %c0_0 = arith.constant 0 : index
    %c0_1 = arith.constant 0 : index
    %0 = vector.load %arg1[%c0, %c0_0, %c0_1] : memref<1x32x256xf32, #tpu.memory_space<vmem>>, vector<1x32x256xf32>
    %1 = vector.shape_cast %0 : vector<1x32x256xf32> to vector<32x256xf32>
    %c0_2 = arith.constant 0 : index
    %c0_3 = arith.constant 0 : index
    %2 = vector.load %arg2[%c0_2, %c0_3] : memref<8x256xf32, #tpu.memory_space<vmem>>, vector<8x256xf32>
    %c0_4 = arith.constant 0 : index
    %c0_5 = arith.constant 0 : index
    %c0_6 = arith.constant 0 : index
    %3 = vector.load %arg3[%c0_4, %c0_5, %c0_6] : memref<4x32x256xf32, #tpu.memory_space<vmem>>, vector<1x32x256xf32>
    %4 = vector.shape_cast %3 : vector<1x32x256xf32> to vector<32x256xf32>
    %c0_7 = arith.constant 0 : index
    %c0_8 = arith.constant 0 : index
    %c0_9 = arith.constant 0 : index
    %5 = vector.load %arg4[%c0_7, %c0_8, %c0_9] : memref<4x32x32xf32, #tpu.memory_space<vmem>>, vector<1x32x32xf32>
    %6 = vector.shape_cast %5 : vector<1x32x32xf32> to vector<32x32xf32>
    %c0_10 = arith.constant 0 : index
    %c0_11 = arith.constant 0 : index
    %c0_12 = arith.constant 0 : index
    %7 = vector.load %arg5[%c0_10, %c0_11, %c0_12] : memref<4x32x1xf32, #tpu.memory_space<vmem>>, vector<1x32x1xf32>
    %8 = vector.shape_cast %7 : vector<1x32x1xf32> to vector<32x1xf32>
    %c17_i32 = arith.constant 17 : i32
    %9 = tpu.dynamic_rotate %1 by %c17_i32 dim 1 : vector<32x256xf32>, i32 -> vector<32x256xf32>
    %10 = vector.extract_strided_slice %2 {offsets = [0, 0], sizes = [1, 256], strides = [1, 1]} : vector<8x256xf32> to vector<1x256xf32>
    %11 = vector.broadcast %10 : vector<1x256xf32> to vector<32x256xf32>
    %12 = arith.mulf %9, %11 : vector<32x256xf32>
    %c16_i32 = arith.constant 16 : i32
    %13 = tpu.dynamic_rotate %1 by %c16_i32 dim 1 : vector<32x256xf32>, i32 -> vector<32x256xf32>
    %14 = vector.extract_strided_slice %2 {offsets = [1, 0], sizes = [1, 256], strides = [1, 1]} : vector<8x256xf32> to vector<1x256xf32>
    %15 = vector.broadcast %14 : vector<1x256xf32> to vector<32x256xf32>
    %16 = arith.mulf %13, %15 : vector<32x256xf32>
    %c15_i32 = arith.constant 15 : i32
    %17 = tpu.dynamic_rotate %1 by %c15_i32 dim 1 : vector<32x256xf32>, i32 -> vector<32x256xf32>
    %18 = vector.extract_strided_slice %2 {offsets = [2, 0], sizes = [1, 256], strides = [1, 1]} : vector<8x256xf32> to vector<1x256xf32>
    %19 = vector.broadcast %18 : vector<1x256xf32> to vector<32x256xf32>
    %20 = arith.mulf %17, %19 : vector<32x256xf32>
    %c1_i32 = arith.constant 1 : i32
    %21 = tpu.dynamic_rotate %1 by %c1_i32 dim 1 : vector<32x256xf32>, i32 -> vector<32x256xf32>
    %22 = vector.extract_strided_slice %2 {offsets = [3, 0], sizes = [1, 256], strides = [1, 1]} : vector<8x256xf32> to vector<1x256xf32>
    %23 = vector.broadcast %22 : vector<1x256xf32> to vector<32x256xf32>
    %24 = arith.mulf %21, %23 : vector<32x256xf32>
    %c255_i32 = arith.constant 255 : i32
    %25 = tpu.dynamic_rotate %1 by %c255_i32 dim 1 : vector<32x256xf32>, i32 -> vector<32x256xf32>
    %26 = vector.extract_strided_slice %2 {offsets = [4, 0], sizes = [1, 256], strides = [1, 1]} : vector<8x256xf32> to vector<1x256xf32>
    %27 = vector.broadcast %26 : vector<1x256xf32> to vector<32x256xf32>
    %28 = arith.mulf %25, %27 : vector<32x256xf32>
    %c241_i32 = arith.constant 241 : i32
    %29 = tpu.dynamic_rotate %1 by %c241_i32 dim 1 : vector<32x256xf32>, i32 -> vector<32x256xf32>
    %30 = vector.extract_strided_slice %2 {offsets = [5, 0], sizes = [1, 256], strides = [1, 1]} : vector<8x256xf32> to vector<1x256xf32>
    %31 = vector.broadcast %30 : vector<1x256xf32> to vector<32x256xf32>
    %32 = arith.mulf %29, %31 : vector<32x256xf32>
    %c240_i32 = arith.constant 240 : i32
    %33 = tpu.dynamic_rotate %1 by %c240_i32 dim 1 : vector<32x256xf32>, i32 -> vector<32x256xf32>
    %34 = vector.extract_strided_slice %2 {offsets = [6, 0], sizes = [1, 256], strides = [1, 1]} : vector<8x256xf32> to vector<1x256xf32>
    %35 = vector.broadcast %34 : vector<1x256xf32> to vector<32x256xf32>
    %36 = arith.mulf %33, %35 : vector<32x256xf32>
    %c239_i32 = arith.constant 239 : i32
    %37 = tpu.dynamic_rotate %1 by %c239_i32 dim 1 : vector<32x256xf32>, i32 -> vector<32x256xf32>
    %38 = vector.extract_strided_slice %2 {offsets = [7, 0], sizes = [1, 256], strides = [1, 1]} : vector<8x256xf32> to vector<1x256xf32>
    %39 = vector.broadcast %38 : vector<1x256xf32> to vector<32x256xf32>
    %40 = arith.mulf %37, %39 : vector<32x256xf32>
    %41 = tpu.concatenate %12, %16, %20, %24, %28, %32, %36, %40 in 0 : vector<32x256xf32>, vector<32x256xf32>, vector<32x256xf32>, vector<32x256xf32>, vector<32x256xf32>, vector<32x256xf32>, vector<32x256xf32>, vector<32x256xf32> -> vector<256x256xf32>
    %cst = arith.constant dense<0.000000e+00> : vector<32x256xf32>
    %42 = tpu.matmul %4, %41, %cst {dimension_numbers = #tpu.dot_dimension_numbers<[1], [0], [0], [1], [0, 0, 1, 1], [], []>} : vector<32x256xf32>, vector<256x256xf32>, vector<32x256xf32> -> vector<32x256xf32>
    %cst_13 = arith.constant dense<0.000000e+00> : vector<32x256xf32>
    %43 = tpu.matmul %6, %1, %cst_13 {dimension_numbers = #tpu.dot_dimension_numbers<[1], [0], [0], [1], [0, 0, 1, 1], [], []>} : vector<32x32xf32>, vector<32x256xf32>, vector<32x256xf32> -> vector<32x256xf32>
    %44 = arith.addf %42, %43 : vector<32x256xf32>
    %45 = vector.broadcast %8 : vector<32x1xf32> to vector<32x256xf32>
    %46 = arith.addf %44, %45 : vector<32x256xf32>
    %cst_14 = arith.constant 0.000000e+00 : f32
    %47 = vector.broadcast %cst_14 : f32 to vector<32x256xf32>
    %48 = arith.maximumf %46, %47 : vector<32x256xf32>
    %c0_15 = arith.constant 0 : index
    %c0_16 = arith.constant 0 : index
    %c0_17 = arith.constant 0 : index
    %49 = vector.load %arg6[%c0_15, %c0_16, %c0_17] : memref<4x32x256xf32, #tpu.memory_space<vmem>>, vector<1x32x256xf32>
    %50 = vector.shape_cast %49 : vector<1x32x256xf32> to vector<32x256xf32>
    %c0_18 = arith.constant 0 : index
    %c0_19 = arith.constant 0 : index
    %c0_20 = arith.constant 0 : index
    %51 = vector.load %arg7[%c0_18, %c0_19, %c0_20] : memref<4x32x32xf32, #tpu.memory_space<vmem>>, vector<1x32x32xf32>
    %52 = vector.shape_cast %51 : vector<1x32x32xf32> to vector<32x32xf32>
    %c0_21 = arith.constant 0 : index
    %c0_22 = arith.constant 0 : index
    %c0_23 = arith.constant 0 : index
    %53 = vector.load %arg8[%c0_21, %c0_22, %c0_23] : memref<4x32x1xf32, #tpu.memory_space<vmem>>, vector<1x32x1xf32>
    %54 = vector.shape_cast %53 : vector<1x32x1xf32> to vector<32x1xf32>
    %c17_i32_24 = arith.constant 17 : i32
    %55 = tpu.dynamic_rotate %48 by %c17_i32_24 dim 1 : vector<32x256xf32>, i32 -> vector<32x256xf32>
    %56 = vector.extract_strided_slice %2 {offsets = [0, 0], sizes = [1, 256], strides = [1, 1]} : vector<8x256xf32> to vector<1x256xf32>
    %57 = vector.broadcast %56 : vector<1x256xf32> to vector<32x256xf32>
    %58 = arith.mulf %55, %57 : vector<32x256xf32>
    %c16_i32_25 = arith.constant 16 : i32
    %59 = tpu.dynamic_rotate %48 by %c16_i32_25 dim 1 : vector<32x256xf32>, i32 -> vector<32x256xf32>
    %60 = vector.extract_strided_slice %2 {offsets = [1, 0], sizes = [1, 256], strides = [1, 1]} : vector<8x256xf32> to vector<1x256xf32>
    %61 = vector.broadcast %60 : vector<1x256xf32> to vector<32x256xf32>
    %62 = arith.mulf %59, %61 : vector<32x256xf32>
    %c15_i32_26 = arith.constant 15 : i32
    %63 = tpu.dynamic_rotate %48 by %c15_i32_26 dim 1 : vector<32x256xf32>, i32 -> vector<32x256xf32>
    %64 = vector.extract_strided_slice %2 {offsets = [2, 0], sizes = [1, 256], strides = [1, 1]} : vector<8x256xf32> to vector<1x256xf32>
    %65 = vector.broadcast %64 : vector<1x256xf32> to vector<32x256xf32>
    %66 = arith.mulf %63, %65 : vector<32x256xf32>
    %c1_i32_27 = arith.constant 1 : i32
    %67 = tpu.dynamic_rotate %48 by %c1_i32_27 dim 1 : vector<32x256xf32>, i32 -> vector<32x256xf32>
    %68 = vector.extract_strided_slice %2 {offsets = [3, 0], sizes = [1, 256], strides = [1, 1]} : vector<8x256xf32> to vector<1x256xf32>
    %69 = vector.broadcast %68 : vector<1x256xf32> to vector<32x256xf32>
    %70 = arith.mulf %67, %69 : vector<32x256xf32>
    %c255_i32_28 = arith.constant 255 : i32
    %71 = tpu.dynamic_rotate %48 by %c255_i32_28 dim 1 : vector<32x256xf32>, i32 -> vector<32x256xf32>
    %72 = vector.extract_strided_slice %2 {offsets = [4, 0], sizes = [1, 256], strides = [1, 1]} : vector<8x256xf32> to vector<1x256xf32>
    %73 = vector.broadcast %72 : vector<1x256xf32> to vector<32x256xf32>
    %74 = arith.mulf %71, %73 : vector<32x256xf32>
    %c241_i32_29 = arith.constant 241 : i32
    %75 = tpu.dynamic_rotate %48 by %c241_i32_29 dim 1 : vector<32x256xf32>, i32 -> vector<32x256xf32>
    %76 = vector.extract_strided_slice %2 {offsets = [5, 0], sizes = [1, 256], strides = [1, 1]} : vector<8x256xf32> to vector<1x256xf32>
    %77 = vector.broadcast %76 : vector<1x256xf32> to vector<32x256xf32>
    %78 = arith.mulf %75, %77 : vector<32x256xf32>
    %c240_i32_30 = arith.constant 240 : i32
    %79 = tpu.dynamic_rotate %48 by %c240_i32_30 dim 1 : vector<32x256xf32>, i32 -> vector<32x256xf32>
    %80 = vector.extract_strided_slice %2 {offsets = [6, 0], sizes = [1, 256], strides = [1, 1]} : vector<8x256xf32> to vector<1x256xf32>
    %81 = vector.broadcast %80 : vector<1x256xf32> to vector<32x256xf32>
    %82 = arith.mulf %79, %81 : vector<32x256xf32>
    %c239_i32_31 = arith.constant 239 : i32
    %83 = tpu.dynamic_rotate %48 by %c239_i32_31 dim 1 : vector<32x256xf32>, i32 -> vector<32x256xf32>
    %84 = vector.extract_strided_slice %2 {offsets = [7, 0], sizes = [1, 256], strides = [1, 1]} : vector<8x256xf32> to vector<1x256xf32>
    %85 = vector.broadcast %84 : vector<1x256xf32> to vector<32x256xf32>
    %86 = arith.mulf %83, %85 : vector<32x256xf32>
    %87 = tpu.concatenate %58, %62, %66, %70, %74, %78, %82, %86 in 0 : vector<32x256xf32>, vector<32x256xf32>, vector<32x256xf32>, vector<32x256xf32>, vector<32x256xf32>, vector<32x256xf32>, vector<32x256xf32>, vector<32x256xf32> -> vector<256x256xf32>
    %cst_32 = arith.constant dense<0.000000e+00> : vector<32x256xf32>
    %88 = tpu.matmul %50, %87, %cst_32 {dimension_numbers = #tpu.dot_dimension_numbers<[1], [0], [0], [1], [0, 0, 1, 1], [], []>} : vector<32x256xf32>, vector<256x256xf32>, vector<32x256xf32> -> vector<32x256xf32>
    %cst_33 = arith.constant dense<0.000000e+00> : vector<32x256xf32>
    %89 = tpu.matmul %52, %48, %cst_33 {dimension_numbers = #tpu.dot_dimension_numbers<[1], [0], [0], [1], [0, 0, 1, 1], [], []>} : vector<32x32xf32>, vector<32x256xf32>, vector<32x256xf32> -> vector<32x256xf32>
    %90 = arith.addf %88, %89 : vector<32x256xf32>
    %91 = vector.broadcast %54 : vector<32x1xf32> to vector<32x256xf32>
    %92 = arith.addf %90, %91 : vector<32x256xf32>
    %cst_34 = arith.constant dense<0.000000e+00> : vector<32xf32>
    %93 = vector.multi_reduction <add>, %92, %cst_34 [1] : vector<32x256xf32> to vector<32xf32>
    %94 = vector.shape_cast %93 : vector<32xf32> to vector<32x1xf32>
    %cst_35 = arith.constant 2.560000e+02 : f32
    %95 = vector.broadcast %cst_35 : f32 to vector<32x1xf32>
    %96 = arith.divf %94, %95 : vector<32x1xf32>
    %c0_36 = arith.constant 0 : index
    %c0_37 = arith.constant 0 : index
    %c0_38 = arith.constant 0 : index
    %97 = vector.load %arg9[%c0_36, %c0_37, %c0_38] : memref<4x32x2xf32, #tpu.memory_space<vmem>>, vector<1x32x2xf32>
    %98 = vector.shape_cast %97 : vector<1x32x2xf32> to vector<32x2xf32>
    %99 = vector.broadcast %96 : vector<32x1xf32> to vector<32x2xf32>
    %100 = arith.mulf %98, %99 : vector<32x2xf32>
    %cst_39 = arith.constant dense<0.000000e+00> : vector<2xf32>
    %101 = vector.multi_reduction <add>, %100, %cst_39 [0] : vector<32x2xf32> to vector<2xf32>
    %102 = vector.shape_cast %101 : vector<2xf32> to vector<1x2xf32>
    %c0_40 = arith.constant 0 : index
    %c0_41 = arith.constant 0 : index
    %c0_42 = arith.constant 0 : index
    %103 = vector.load %arg10[%c0_40, %c0_41, %c0_42] : memref<4x1x2xf32, #tpu.memory_space<vmem>>, vector<1x1x2xf32>
    %104 = vector.shape_cast %103 : vector<1x1x2xf32> to vector<1x2xf32>
    %105 = arith.addf %102, %104 : vector<1x2xf32>
    %cst_43 = arith.constant 0.000000e+00 : f32
    %106 = vector.broadcast %cst_43 : f32 to vector<1x2xf32>
    %107 = arith.maximumf %105, %106 : vector<1x2xf32>
    %c0_44 = arith.constant 0 : index
    %c0_45 = arith.constant 0 : index
    %c0_46 = arith.constant 0 : index
    %108 = vector.load %arg11[%c0_44, %c0_45, %c0_46] : memref<4x32x2xf32, #tpu.memory_space<vmem>>, vector<1x32x2xf32>
    %109 = vector.shape_cast %108 : vector<1x32x2xf32> to vector<32x2xf32>
    %110 = vector.broadcast %107 : vector<1x2xf32> to vector<32x2xf32>
    %111 = arith.mulf %109, %110 : vector<32x2xf32>
    %cst_47 = arith.constant dense<0.000000e+00> : vector<32xf32>
    %112 = vector.multi_reduction <add>, %111, %cst_47 [1] : vector<32x2xf32> to vector<32xf32>
    %113 = vector.shape_cast %112 : vector<32xf32> to vector<32x1xf32>
    %c0_48 = arith.constant 0 : index
    %c0_49 = arith.constant 0 : index
    %c0_50 = arith.constant 0 : index
    %114 = vector.load %arg12[%c0_48, %c0_49, %c0_50] : memref<4x32x1xf32, #tpu.memory_space<vmem>>, vector<1x32x1xf32>
    %115 = vector.shape_cast %114 : vector<1x32x1xf32> to vector<32x1xf32>
    %116 = arith.addf %113, %115 : vector<32x1xf32>
    %117 = arith.negf %116 : vector<32x1xf32>
    %118 = math.exp %117 : vector<32x1xf32>
    %cst_51 = arith.constant 1.000000e+00 : f32
    %119 = vector.broadcast %cst_51 : f32 to vector<32x1xf32>
    %120 = arith.addf %119, %118 : vector<32x1xf32>
    %121 = arith.divf %119, %120 : vector<32x1xf32>
    %122 = vector.broadcast %121 : vector<32x1xf32> to vector<32x256xf32>
    %123 = arith.mulf %92, %122 : vector<32x256xf32>
    %124 = arith.addf %123, %1 : vector<32x256xf32>
    %c1 = arith.constant 1 : index
    %c0_52 = arith.constant 0 : index
    %c0_53 = arith.constant 0 : index
    %125 = vector.load %arg3[%c1, %c0_52, %c0_53] : memref<4x32x256xf32, #tpu.memory_space<vmem>>, vector<1x32x256xf32>
    %126 = vector.shape_cast %125 : vector<1x32x256xf32> to vector<32x256xf32>
    %c1_54 = arith.constant 1 : index
    %c0_55 = arith.constant 0 : index
    %c0_56 = arith.constant 0 : index
    %127 = vector.load %arg4[%c1_54, %c0_55, %c0_56] : memref<4x32x32xf32, #tpu.memory_space<vmem>>, vector<1x32x32xf32>
    %128 = vector.shape_cast %127 : vector<1x32x32xf32> to vector<32x32xf32>
    %c1_57 = arith.constant 1 : index
    %c0_58 = arith.constant 0 : index
    %c0_59 = arith.constant 0 : index
    %129 = vector.load %arg5[%c1_57, %c0_58, %c0_59] : memref<4x32x1xf32, #tpu.memory_space<vmem>>, vector<1x32x1xf32>
    %130 = vector.shape_cast %129 : vector<1x32x1xf32> to vector<32x1xf32>
    %c17_i32_60 = arith.constant 17 : i32
    %131 = tpu.dynamic_rotate %124 by %c17_i32_60 dim 1 : vector<32x256xf32>, i32 -> vector<32x256xf32>
    %132 = vector.extract_strided_slice %2 {offsets = [0, 0], sizes = [1, 256], strides = [1, 1]} : vector<8x256xf32> to vector<1x256xf32>
    %133 = vector.broadcast %132 : vector<1x256xf32> to vector<32x256xf32>
    %134 = arith.mulf %131, %133 : vector<32x256xf32>
    %c16_i32_61 = arith.constant 16 : i32
    %135 = tpu.dynamic_rotate %124 by %c16_i32_61 dim 1 : vector<32x256xf32>, i32 -> vector<32x256xf32>
    %136 = vector.extract_strided_slice %2 {offsets = [1, 0], sizes = [1, 256], strides = [1, 1]} : vector<8x256xf32> to vector<1x256xf32>
    %137 = vector.broadcast %136 : vector<1x256xf32> to vector<32x256xf32>
    %138 = arith.mulf %135, %137 : vector<32x256xf32>
    %c15_i32_62 = arith.constant 15 : i32
    %139 = tpu.dynamic_rotate %124 by %c15_i32_62 dim 1 : vector<32x256xf32>, i32 -> vector<32x256xf32>
    %140 = vector.extract_strided_slice %2 {offsets = [2, 0], sizes = [1, 256], strides = [1, 1]} : vector<8x256xf32> to vector<1x256xf32>
    %141 = vector.broadcast %140 : vector<1x256xf32> to vector<32x256xf32>
    %142 = arith.mulf %139, %141 : vector<32x256xf32>
    %c1_i32_63 = arith.constant 1 : i32
    %143 = tpu.dynamic_rotate %124 by %c1_i32_63 dim 1 : vector<32x256xf32>, i32 -> vector<32x256xf32>
    %144 = vector.extract_strided_slice %2 {offsets = [3, 0], sizes = [1, 256], strides = [1, 1]} : vector<8x256xf32> to vector<1x256xf32>
    %145 = vector.broadcast %144 : vector<1x256xf32> to vector<32x256xf32>
    %146 = arith.mulf %143, %145 : vector<32x256xf32>
    %c255_i32_64 = arith.constant 255 : i32
    %147 = tpu.dynamic_rotate %124 by %c255_i32_64 dim 1 : vector<32x256xf32>, i32 -> vector<32x256xf32>
    %148 = vector.extract_strided_slice %2 {offsets = [4, 0], sizes = [1, 256], strides = [1, 1]} : vector<8x256xf32> to vector<1x256xf32>
    %149 = vector.broadcast %148 : vector<1x256xf32> to vector<32x256xf32>
    %150 = arith.mulf %147, %149 : vector<32x256xf32>
    %c241_i32_65 = arith.constant 241 : i32
    %151 = tpu.dynamic_rotate %124 by %c241_i32_65 dim 1 : vector<32x256xf32>, i32 -> vector<32x256xf32>
    %152 = vector.extract_strided_slice %2 {offsets = [5, 0], sizes = [1, 256], strides = [1, 1]} : vector<8x256xf32> to vector<1x256xf32>
    %153 = vector.broadcast %152 : vector<1x256xf32> to vector<32x256xf32>
    %154 = arith.mulf %151, %153 : vector<32x256xf32>
    %c240_i32_66 = arith.constant 240 : i32
    %155 = tpu.dynamic_rotate %124 by %c240_i32_66 dim 1 : vector<32x256xf32>, i32 -> vector<32x256xf32>
    %156 = vector.extract_strided_slice %2 {offsets = [6, 0], sizes = [1, 256], strides = [1, 1]} : vector<8x256xf32> to vector<1x256xf32>
    %157 = vector.broadcast %156 : vector<1x256xf32> to vector<32x256xf32>
    %158 = arith.mulf %155, %157 : vector<32x256xf32>
    %c239_i32_67 = arith.constant 239 : i32
    %159 = tpu.dynamic_rotate %124 by %c239_i32_67 dim 1 : vector<32x256xf32>, i32 -> vector<32x256xf32>
    %160 = vector.extract_strided_slice %2 {offsets = [7, 0], sizes = [1, 256], strides = [1, 1]} : vector<8x256xf32> to vector<1x256xf32>
    %161 = vector.broadcast %160 : vector<1x256xf32> to vector<32x256xf32>
    %162 = arith.mulf %159, %161 : vector<32x256xf32>
    %163 = tpu.concatenate %134, %138, %142, %146, %150, %154, %158, %162 in 0 : vector<32x256xf32>, vector<32x256xf32>, vector<32x256xf32>, vector<32x256xf32>, vector<32x256xf32>, vector<32x256xf32>, vector<32x256xf32>, vector<32x256xf32> -> vector<256x256xf32>
    %cst_68 = arith.constant dense<0.000000e+00> : vector<32x256xf32>
    %164 = tpu.matmul %126, %163, %cst_68 {dimension_numbers = #tpu.dot_dimension_numbers<[1], [0], [0], [1], [0, 0, 1, 1], [], []>} : vector<32x256xf32>, vector<256x256xf32>, vector<32x256xf32> -> vector<32x256xf32>
    %cst_69 = arith.constant dense<0.000000e+00> : vector<32x256xf32>
    %165 = tpu.matmul %128, %124, %cst_69 {dimension_numbers = #tpu.dot_dimension_numbers<[1], [0], [0], [1], [0, 0, 1, 1], [], []>} : vector<32x32xf32>, vector<32x256xf32>, vector<32x256xf32> -> vector<32x256xf32>
    %166 = arith.addf %164, %165 : vector<32x256xf32>
    %167 = vector.broadcast %130 : vector<32x1xf32> to vector<32x256xf32>
    %168 = arith.addf %166, %167 : vector<32x256xf32>
    %cst_70 = arith.constant 0.000000e+00 : f32
    %169 = vector.broadcast %cst_70 : f32 to vector<32x256xf32>
    %170 = arith.maximumf %168, %169 : vector<32x256xf32>
    %c1_71 = arith.constant 1 : index
    %c0_72 = arith.constant 0 : index
    %c0_73 = arith.constant 0 : index
    %171 = vector.load %arg6[%c1_71, %c0_72, %c0_73] : memref<4x32x256xf32, #tpu.memory_space<vmem>>, vector<1x32x256xf32>
    %172 = vector.shape_cast %171 : vector<1x32x256xf32> to vector<32x256xf32>
    %c1_74 = arith.constant 1 : index
    %c0_75 = arith.constant 0 : index
    %c0_76 = arith.constant 0 : index
    %173 = vector.load %arg7[%c1_74, %c0_75, %c0_76] : memref<4x32x32xf32, #tpu.memory_space<vmem>>, vector<1x32x32xf32>
    %174 = vector.shape_cast %173 : vector<1x32x32xf32> to vector<32x32xf32>
    %c1_77 = arith.constant 1 : index
    %c0_78 = arith.constant 0 : index
    %c0_79 = arith.constant 0 : index
    %175 = vector.load %arg8[%c1_77, %c0_78, %c0_79] : memref<4x32x1xf32, #tpu.memory_space<vmem>>, vector<1x32x1xf32>
    %176 = vector.shape_cast %175 : vector<1x32x1xf32> to vector<32x1xf32>
    %c17_i32_80 = arith.constant 17 : i32
    %177 = tpu.dynamic_rotate %170 by %c17_i32_80 dim 1 : vector<32x256xf32>, i32 -> vector<32x256xf32>
    %178 = vector.extract_strided_slice %2 {offsets = [0, 0], sizes = [1, 256], strides = [1, 1]} : vector<8x256xf32> to vector<1x256xf32>
    %179 = vector.broadcast %178 : vector<1x256xf32> to vector<32x256xf32>
    %180 = arith.mulf %177, %179 : vector<32x256xf32>
    %c16_i32_81 = arith.constant 16 : i32
    %181 = tpu.dynamic_rotate %170 by %c16_i32_81 dim 1 : vector<32x256xf32>, i32 -> vector<32x256xf32>
    %182 = vector.extract_strided_slice %2 {offsets = [1, 0], sizes = [1, 256], strides = [1, 1]} : vector<8x256xf32> to vector<1x256xf32>
    %183 = vector.broadcast %182 : vector<1x256xf32> to vector<32x256xf32>
    %184 = arith.mulf %181, %183 : vector<32x256xf32>
    %c15_i32_82 = arith.constant 15 : i32
    %185 = tpu.dynamic_rotate %170 by %c15_i32_82 dim 1 : vector<32x256xf32>, i32 -> vector<32x256xf32>
    %186 = vector.extract_strided_slice %2 {offsets = [2, 0], sizes = [1, 256], strides = [1, 1]} : vector<8x256xf32> to vector<1x256xf32>
    %187 = vector.broadcast %186 : vector<1x256xf32> to vector<32x256xf32>
    %188 = arith.mulf %185, %187 : vector<32x256xf32>
    %c1_i32_83 = arith.constant 1 : i32
    %189 = tpu.dynamic_rotate %170 by %c1_i32_83 dim 1 : vector<32x256xf32>, i32 -> vector<32x256xf32>
    %190 = vector.extract_strided_slice %2 {offsets = [3, 0], sizes = [1, 256], strides = [1, 1]} : vector<8x256xf32> to vector<1x256xf32>
    %191 = vector.broadcast %190 : vector<1x256xf32> to vector<32x256xf32>
    %192 = arith.mulf %189, %191 : vector<32x256xf32>
    %c255_i32_84 = arith.constant 255 : i32
    %193 = tpu.dynamic_rotate %170 by %c255_i32_84 dim 1 : vector<32x256xf32>, i32 -> vector<32x256xf32>
    %194 = vector.extract_strided_slice %2 {offsets = [4, 0], sizes = [1, 256], strides = [1, 1]} : vector<8x256xf32> to vector<1x256xf32>
    %195 = vector.broadcast %194 : vector<1x256xf32> to vector<32x256xf32>
    %196 = arith.mulf %193, %195 : vector<32x256xf32>
    %c241_i32_85 = arith.constant 241 : i32
    %197 = tpu.dynamic_rotate %170 by %c241_i32_85 dim 1 : vector<32x256xf32>, i32 -> vector<32x256xf32>
    %198 = vector.extract_strided_slice %2 {offsets = [5, 0], sizes = [1, 256], strides = [1, 1]} : vector<8x256xf32> to vector<1x256xf32>
    %199 = vector.broadcast %198 : vector<1x256xf32> to vector<32x256xf32>
    %200 = arith.mulf %197, %199 : vector<32x256xf32>
    %c240_i32_86 = arith.constant 240 : i32
    %201 = tpu.dynamic_rotate %170 by %c240_i32_86 dim 1 : vector<32x256xf32>, i32 -> vector<32x256xf32>
    %202 = vector.extract_strided_slice %2 {offsets = [6, 0], sizes = [1, 256], strides = [1, 1]} : vector<8x256xf32> to vector<1x256xf32>
    %203 = vector.broadcast %202 : vector<1x256xf32> to vector<32x256xf32>
    %204 = arith.mulf %201, %203 : vector<32x256xf32>
    %c239_i32_87 = arith.constant 239 : i32
    %205 = tpu.dynamic_rotate %170 by %c239_i32_87 dim 1 : vector<32x256xf32>, i32 -> vector<32x256xf32>
    %206 = vector.extract_strided_slice %2 {offsets = [7, 0], sizes = [1, 256], strides = [1, 1]} : vector<8x256xf32> to vector<1x256xf32>
    %207 = vector.broadcast %206 : vector<1x256xf32> to vector<32x256xf32>
    %208 = arith.mulf %205, %207 : vector<32x256xf32>
    %209 = tpu.concatenate %180, %184, %188, %192, %196, %200, %204, %208 in 0 : vector<32x256xf32>, vector<32x256xf32>, vector<32x256xf32>, vector<32x256xf32>, vector<32x256xf32>, vector<32x256xf32>, vector<32x256xf32>, vector<32x256xf32> -> vector<256x256xf32>
    %cst_88 = arith.constant dense<0.000000e+00> : vector<32x256xf32>
    %210 = tpu.matmul %172, %209, %cst_88 {dimension_numbers = #tpu.dot_dimension_numbers<[1], [0], [0], [1], [0, 0, 1, 1], [], []>} : vector<32x256xf32>, vector<256x256xf32>, vector<32x256xf32> -> vector<32x256xf32>
    %cst_89 = arith.constant dense<0.000000e+00> : vector<32x256xf32>
    %211 = tpu.matmul %174, %170, %cst_89 {dimension_numbers = #tpu.dot_dimension_numbers<[1], [0], [0], [1], [0, 0, 1, 1], [], []>} : vector<32x32xf32>, vector<32x256xf32>, vector<32x256xf32> -> vector<32x256xf32>
    %212 = arith.addf %210, %211 : vector<32x256xf32>
    %213 = vector.broadcast %176 : vector<32x1xf32> to vector<32x256xf32>
    %214 = arith.addf %212, %213 : vector<32x256xf32>
    %cst_90 = arith.constant dense<0.000000e+00> : vector<32xf32>
    %215 = vector.multi_reduction <add>, %214, %cst_90 [1] : vector<32x256xf32> to vector<32xf32>
    %216 = vector.shape_cast %215 : vector<32xf32> to vector<32x1xf32>
    %cst_91 = arith.constant 2.560000e+02 : f32
    %217 = vector.broadcast %cst_91 : f32 to vector<32x1xf32>
    %218 = arith.divf %216, %217 : vector<32x1xf32>
    %c1_92 = arith.constant 1 : index
    %c0_93 = arith.constant 0 : index
    %c0_94 = arith.constant 0 : index
    %219 = vector.load %arg9[%c1_92, %c0_93, %c0_94] : memref<4x32x2xf32, #tpu.memory_space<vmem>>, vector<1x32x2xf32>
    %220 = vector.shape_cast %219 : vector<1x32x2xf32> to vector<32x2xf32>
    %221 = vector.broadcast %218 : vector<32x1xf32> to vector<32x2xf32>
    %222 = arith.mulf %220, %221 : vector<32x2xf32>
    %cst_95 = arith.constant dense<0.000000e+00> : vector<2xf32>
    %223 = vector.multi_reduction <add>, %222, %cst_95 [0] : vector<32x2xf32> to vector<2xf32>
    %224 = vector.shape_cast %223 : vector<2xf32> to vector<1x2xf32>
    %c1_96 = arith.constant 1 : index
    %c0_97 = arith.constant 0 : index
    %c0_98 = arith.constant 0 : index
    %225 = vector.load %arg10[%c1_96, %c0_97, %c0_98] : memref<4x1x2xf32, #tpu.memory_space<vmem>>, vector<1x1x2xf32>
    %226 = vector.shape_cast %225 : vector<1x1x2xf32> to vector<1x2xf32>
    %227 = arith.addf %224, %226 : vector<1x2xf32>
    %cst_99 = arith.constant 0.000000e+00 : f32
    %228 = vector.broadcast %cst_99 : f32 to vector<1x2xf32>
    %229 = arith.maximumf %227, %228 : vector<1x2xf32>
    %c1_100 = arith.constant 1 : index
    %c0_101 = arith.constant 0 : index
    %c0_102 = arith.constant 0 : index
    %230 = vector.load %arg11[%c1_100, %c0_101, %c0_102] : memref<4x32x2xf32, #tpu.memory_space<vmem>>, vector<1x32x2xf32>
    %231 = vector.shape_cast %230 : vector<1x32x2xf32> to vector<32x2xf32>
    %232 = vector.broadcast %229 : vector<1x2xf32> to vector<32x2xf32>
    %233 = arith.mulf %231, %232 : vector<32x2xf32>
    %cst_103 = arith.constant dense<0.000000e+00> : vector<32xf32>
    %234 = vector.multi_reduction <add>, %233, %cst_103 [1] : vector<32x2xf32> to vector<32xf32>
    %235 = vector.shape_cast %234 : vector<32xf32> to vector<32x1xf32>
    %c1_104 = arith.constant 1 : index
    %c0_105 = arith.constant 0 : index
    %c0_106 = arith.constant 0 : index
    %236 = vector.load %arg12[%c1_104, %c0_105, %c0_106] : memref<4x32x1xf32, #tpu.memory_space<vmem>>, vector<1x32x1xf32>
    %237 = vector.shape_cast %236 : vector<1x32x1xf32> to vector<32x1xf32>
    %238 = arith.addf %235, %237 : vector<32x1xf32>
    %239 = arith.negf %238 : vector<32x1xf32>
    %240 = math.exp %239 : vector<32x1xf32>
    %cst_107 = arith.constant 1.000000e+00 : f32
    %241 = vector.broadcast %cst_107 : f32 to vector<32x1xf32>
    %242 = arith.addf %241, %240 : vector<32x1xf32>
    %243 = arith.divf %241, %242 : vector<32x1xf32>
    %244 = vector.broadcast %243 : vector<32x1xf32> to vector<32x256xf32>
    %245 = arith.mulf %214, %244 : vector<32x256xf32>
    %246 = arith.addf %245, %124 : vector<32x256xf32>
    %c2 = arith.constant 2 : index
    %c0_108 = arith.constant 0 : index
    %c0_109 = arith.constant 0 : index
    %247 = vector.load %arg3[%c2, %c0_108, %c0_109] : memref<4x32x256xf32, #tpu.memory_space<vmem>>, vector<1x32x256xf32>
    %248 = vector.shape_cast %247 : vector<1x32x256xf32> to vector<32x256xf32>
    %c2_110 = arith.constant 2 : index
    %c0_111 = arith.constant 0 : index
    %c0_112 = arith.constant 0 : index
    %249 = vector.load %arg4[%c2_110, %c0_111, %c0_112] : memref<4x32x32xf32, #tpu.memory_space<vmem>>, vector<1x32x32xf32>
    %250 = vector.shape_cast %249 : vector<1x32x32xf32> to vector<32x32xf32>
    %c2_113 = arith.constant 2 : index
    %c0_114 = arith.constant 0 : index
    %c0_115 = arith.constant 0 : index
    %251 = vector.load %arg5[%c2_113, %c0_114, %c0_115] : memref<4x32x1xf32, #tpu.memory_space<vmem>>, vector<1x32x1xf32>
    %252 = vector.shape_cast %251 : vector<1x32x1xf32> to vector<32x1xf32>
    %c17_i32_116 = arith.constant 17 : i32
    %253 = tpu.dynamic_rotate %246 by %c17_i32_116 dim 1 : vector<32x256xf32>, i32 -> vector<32x256xf32>
    %254 = vector.extract_strided_slice %2 {offsets = [0, 0], sizes = [1, 256], strides = [1, 1]} : vector<8x256xf32> to vector<1x256xf32>
    %255 = vector.broadcast %254 : vector<1x256xf32> to vector<32x256xf32>
    %256 = arith.mulf %253, %255 : vector<32x256xf32>
    %c16_i32_117 = arith.constant 16 : i32
    %257 = tpu.dynamic_rotate %246 by %c16_i32_117 dim 1 : vector<32x256xf32>, i32 -> vector<32x256xf32>
    %258 = vector.extract_strided_slice %2 {offsets = [1, 0], sizes = [1, 256], strides = [1, 1]} : vector<8x256xf32> to vector<1x256xf32>
    %259 = vector.broadcast %258 : vector<1x256xf32> to vector<32x256xf32>
    %260 = arith.mulf %257, %259 : vector<32x256xf32>
    %c15_i32_118 = arith.constant 15 : i32
    %261 = tpu.dynamic_rotate %246 by %c15_i32_118 dim 1 : vector<32x256xf32>, i32 -> vector<32x256xf32>
    %262 = vector.extract_strided_slice %2 {offsets = [2, 0], sizes = [1, 256], strides = [1, 1]} : vector<8x256xf32> to vector<1x256xf32>
    %263 = vector.broadcast %262 : vector<1x256xf32> to vector<32x256xf32>
    %264 = arith.mulf %261, %263 : vector<32x256xf32>
    %c1_i32_119 = arith.constant 1 : i32
    %265 = tpu.dynamic_rotate %246 by %c1_i32_119 dim 1 : vector<32x256xf32>, i32 -> vector<32x256xf32>
    %266 = vector.extract_strided_slice %2 {offsets = [3, 0], sizes = [1, 256], strides = [1, 1]} : vector<8x256xf32> to vector<1x256xf32>
    %267 = vector.broadcast %266 : vector<1x256xf32> to vector<32x256xf32>
    %268 = arith.mulf %265, %267 : vector<32x256xf32>
    %c255_i32_120 = arith.constant 255 : i32
    %269 = tpu.dynamic_rotate %246 by %c255_i32_120 dim 1 : vector<32x256xf32>, i32 -> vector<32x256xf32>
    %270 = vector.extract_strided_slice %2 {offsets = [4, 0], sizes = [1, 256], strides = [1, 1]} : vector<8x256xf32> to vector<1x256xf32>
    %271 = vector.broadcast %270 : vector<1x256xf32> to vector<32x256xf32>
    %272 = arith.mulf %269, %271 : vector<32x256xf32>
    %c241_i32_121 = arith.constant 241 : i32
    %273 = tpu.dynamic_rotate %246 by %c241_i32_121 dim 1 : vector<32x256xf32>, i32 -> vector<32x256xf32>
    %274 = vector.extract_strided_slice %2 {offsets = [5, 0], sizes = [1, 256], strides = [1, 1]} : vector<8x256xf32> to vector<1x256xf32>
    %275 = vector.broadcast %274 : vector<1x256xf32> to vector<32x256xf32>
    %276 = arith.mulf %273, %275 : vector<32x256xf32>
    %c240_i32_122 = arith.constant 240 : i32
    %277 = tpu.dynamic_rotate %246 by %c240_i32_122 dim 1 : vector<32x256xf32>, i32 -> vector<32x256xf32>
    %278 = vector.extract_strided_slice %2 {offsets = [6, 0], sizes = [1, 256], strides = [1, 1]} : vector<8x256xf32> to vector<1x256xf32>
    %279 = vector.broadcast %278 : vector<1x256xf32> to vector<32x256xf32>
    %280 = arith.mulf %277, %279 : vector<32x256xf32>
    %c239_i32_123 = arith.constant 239 : i32
    %281 = tpu.dynamic_rotate %246 by %c239_i32_123 dim 1 : vector<32x256xf32>, i32 -> vector<32x256xf32>
    %282 = vector.extract_strided_slice %2 {offsets = [7, 0], sizes = [1, 256], strides = [1, 1]} : vector<8x256xf32> to vector<1x256xf32>
    %283 = vector.broadcast %282 : vector<1x256xf32> to vector<32x256xf32>
    %284 = arith.mulf %281, %283 : vector<32x256xf32>
    %285 = tpu.concatenate %256, %260, %264, %268, %272, %276, %280, %284 in 0 : vector<32x256xf32>, vector<32x256xf32>, vector<32x256xf32>, vector<32x256xf32>, vector<32x256xf32>, vector<32x256xf32>, vector<32x256xf32>, vector<32x256xf32> -> vector<256x256xf32>
    %cst_124 = arith.constant dense<0.000000e+00> : vector<32x256xf32>
    %286 = tpu.matmul %248, %285, %cst_124 {dimension_numbers = #tpu.dot_dimension_numbers<[1], [0], [0], [1], [0, 0, 1, 1], [], []>} : vector<32x256xf32>, vector<256x256xf32>, vector<32x256xf32> -> vector<32x256xf32>
    %cst_125 = arith.constant dense<0.000000e+00> : vector<32x256xf32>
    %287 = tpu.matmul %250, %246, %cst_125 {dimension_numbers = #tpu.dot_dimension_numbers<[1], [0], [0], [1], [0, 0, 1, 1], [], []>} : vector<32x32xf32>, vector<32x256xf32>, vector<32x256xf32> -> vector<32x256xf32>
    %288 = arith.addf %286, %287 : vector<32x256xf32>
    %289 = vector.broadcast %252 : vector<32x1xf32> to vector<32x256xf32>
    %290 = arith.addf %288, %289 : vector<32x256xf32>
    %cst_126 = arith.constant 0.000000e+00 : f32
    %291 = vector.broadcast %cst_126 : f32 to vector<32x256xf32>
    %292 = arith.maximumf %290, %291 : vector<32x256xf32>
    %c2_127 = arith.constant 2 : index
    %c0_128 = arith.constant 0 : index
    %c0_129 = arith.constant 0 : index
    %293 = vector.load %arg6[%c2_127, %c0_128, %c0_129] : memref<4x32x256xf32, #tpu.memory_space<vmem>>, vector<1x32x256xf32>
    %294 = vector.shape_cast %293 : vector<1x32x256xf32> to vector<32x256xf32>
    %c2_130 = arith.constant 2 : index
    %c0_131 = arith.constant 0 : index
    %c0_132 = arith.constant 0 : index
    %295 = vector.load %arg7[%c2_130, %c0_131, %c0_132] : memref<4x32x32xf32, #tpu.memory_space<vmem>>, vector<1x32x32xf32>
    %296 = vector.shape_cast %295 : vector<1x32x32xf32> to vector<32x32xf32>
    %c2_133 = arith.constant 2 : index
    %c0_134 = arith.constant 0 : index
    %c0_135 = arith.constant 0 : index
    %297 = vector.load %arg8[%c2_133, %c0_134, %c0_135] : memref<4x32x1xf32, #tpu.memory_space<vmem>>, vector<1x32x1xf32>
    %298 = vector.shape_cast %297 : vector<1x32x1xf32> to vector<32x1xf32>
    %c17_i32_136 = arith.constant 17 : i32
    %299 = tpu.dynamic_rotate %292 by %c17_i32_136 dim 1 : vector<32x256xf32>, i32 -> vector<32x256xf32>
    %300 = vector.extract_strided_slice %2 {offsets = [0, 0], sizes = [1, 256], strides = [1, 1]} : vector<8x256xf32> to vector<1x256xf32>
    %301 = vector.broadcast %300 : vector<1x256xf32> to vector<32x256xf32>
    %302 = arith.mulf %299, %301 : vector<32x256xf32>
    %c16_i32_137 = arith.constant 16 : i32
    %303 = tpu.dynamic_rotate %292 by %c16_i32_137 dim 1 : vector<32x256xf32>, i32 -> vector<32x256xf32>
    %304 = vector.extract_strided_slice %2 {offsets = [1, 0], sizes = [1, 256], strides = [1, 1]} : vector<8x256xf32> to vector<1x256xf32>
    %305 = vector.broadcast %304 : vector<1x256xf32> to vector<32x256xf32>
    %306 = arith.mulf %303, %305 : vector<32x256xf32>
    %c15_i32_138 = arith.constant 15 : i32
    %307 = tpu.dynamic_rotate %292 by %c15_i32_138 dim 1 : vector<32x256xf32>, i32 -> vector<32x256xf32>
    %308 = vector.extract_strided_slice %2 {offsets = [2, 0], sizes = [1, 256], strides = [1, 1]} : vector<8x256xf32> to vector<1x256xf32>
    %309 = vector.broadcast %308 : vector<1x256xf32> to vector<32x256xf32>
    %310 = arith.mulf %307, %309 : vector<32x256xf32>
    %c1_i32_139 = arith.constant 1 : i32
    %311 = tpu.dynamic_rotate %292 by %c1_i32_139 dim 1 : vector<32x256xf32>, i32 -> vector<32x256xf32>
    %312 = vector.extract_strided_slice %2 {offsets = [3, 0], sizes = [1, 256], strides = [1, 1]} : vector<8x256xf32> to vector<1x256xf32>
    %313 = vector.broadcast %312 : vector<1x256xf32> to vector<32x256xf32>
    %314 = arith.mulf %311, %313 : vector<32x256xf32>
    %c255_i32_140 = arith.constant 255 : i32
    %315 = tpu.dynamic_rotate %292 by %c255_i32_140 dim 1 : vector<32x256xf32>, i32 -> vector<32x256xf32>
    %316 = vector.extract_strided_slice %2 {offsets = [4, 0], sizes = [1, 256], strides = [1, 1]} : vector<8x256xf32> to vector<1x256xf32>
    %317 = vector.broadcast %316 : vector<1x256xf32> to vector<32x256xf32>
    %318 = arith.mulf %315, %317 : vector<32x256xf32>
    %c241_i32_141 = arith.constant 241 : i32
    %319 = tpu.dynamic_rotate %292 by %c241_i32_141 dim 1 : vector<32x256xf32>, i32 -> vector<32x256xf32>
    %320 = vector.extract_strided_slice %2 {offsets = [5, 0], sizes = [1, 256], strides = [1, 1]} : vector<8x256xf32> to vector<1x256xf32>
    %321 = vector.broadcast %320 : vector<1x256xf32> to vector<32x256xf32>
    %322 = arith.mulf %319, %321 : vector<32x256xf32>
    %c240_i32_142 = arith.constant 240 : i32
    %323 = tpu.dynamic_rotate %292 by %c240_i32_142 dim 1 : vector<32x256xf32>, i32 -> vector<32x256xf32>
    %324 = vector.extract_strided_slice %2 {offsets = [6, 0], sizes = [1, 256], strides = [1, 1]} : vector<8x256xf32> to vector<1x256xf32>
    %325 = vector.broadcast %324 : vector<1x256xf32> to vector<32x256xf32>
    %326 = arith.mulf %323, %325 : vector<32x256xf32>
    %c239_i32_143 = arith.constant 239 : i32
    %327 = tpu.dynamic_rotate %292 by %c239_i32_143 dim 1 : vector<32x256xf32>, i32 -> vector<32x256xf32>
    %328 = vector.extract_strided_slice %2 {offsets = [7, 0], sizes = [1, 256], strides = [1, 1]} : vector<8x256xf32> to vector<1x256xf32>
    %329 = vector.broadcast %328 : vector<1x256xf32> to vector<32x256xf32>
    %330 = arith.mulf %327, %329 : vector<32x256xf32>
    %331 = tpu.concatenate %302, %306, %310, %314, %318, %322, %326, %330 in 0 : vector<32x256xf32>, vector<32x256xf32>, vector<32x256xf32>, vector<32x256xf32>, vector<32x256xf32>, vector<32x256xf32>, vector<32x256xf32>, vector<32x256xf32> -> vector<256x256xf32>
    %cst_144 = arith.constant dense<0.000000e+00> : vector<32x256xf32>
    %332 = tpu.matmul %294, %331, %cst_144 {dimension_numbers = #tpu.dot_dimension_numbers<[1], [0], [0], [1], [0, 0, 1, 1], [], []>} : vector<32x256xf32>, vector<256x256xf32>, vector<32x256xf32> -> vector<32x256xf32>
    %cst_145 = arith.constant dense<0.000000e+00> : vector<32x256xf32>
    %333 = tpu.matmul %296, %292, %cst_145 {dimension_numbers = #tpu.dot_dimension_numbers<[1], [0], [0], [1], [0, 0, 1, 1], [], []>} : vector<32x32xf32>, vector<32x256xf32>, vector<32x256xf32> -> vector<32x256xf32>
    %334 = arith.addf %332, %333 : vector<32x256xf32>
    %335 = vector.broadcast %298 : vector<32x1xf32> to vector<32x256xf32>
    %336 = arith.addf %334, %335 : vector<32x256xf32>
    %cst_146 = arith.constant dense<0.000000e+00> : vector<32xf32>
    %337 = vector.multi_reduction <add>, %336, %cst_146 [1] : vector<32x256xf32> to vector<32xf32>
    %338 = vector.shape_cast %337 : vector<32xf32> to vector<32x1xf32>
    %cst_147 = arith.constant 2.560000e+02 : f32
    %339 = vector.broadcast %cst_147 : f32 to vector<32x1xf32>
    %340 = arith.divf %338, %339 : vector<32x1xf32>
    %c2_148 = arith.constant 2 : index
    %c0_149 = arith.constant 0 : index
    %c0_150 = arith.constant 0 : index
    %341 = vector.load %arg9[%c2_148, %c0_149, %c0_150] : memref<4x32x2xf32, #tpu.memory_space<vmem>>, vector<1x32x2xf32>
    %342 = vector.shape_cast %341 : vector<1x32x2xf32> to vector<32x2xf32>
    %343 = vector.broadcast %340 : vector<32x1xf32> to vector<32x2xf32>
    %344 = arith.mulf %342, %343 : vector<32x2xf32>
    %cst_151 = arith.constant dense<0.000000e+00> : vector<2xf32>
    %345 = vector.multi_reduction <add>, %344, %cst_151 [0] : vector<32x2xf32> to vector<2xf32>
    %346 = vector.shape_cast %345 : vector<2xf32> to vector<1x2xf32>
    %c2_152 = arith.constant 2 : index
    %c0_153 = arith.constant 0 : index
    %c0_154 = arith.constant 0 : index
    %347 = vector.load %arg10[%c2_152, %c0_153, %c0_154] : memref<4x1x2xf32, #tpu.memory_space<vmem>>, vector<1x1x2xf32>
    %348 = vector.shape_cast %347 : vector<1x1x2xf32> to vector<1x2xf32>
    %349 = arith.addf %346, %348 : vector<1x2xf32>
    %cst_155 = arith.constant 0.000000e+00 : f32
    %350 = vector.broadcast %cst_155 : f32 to vector<1x2xf32>
    %351 = arith.maximumf %349, %350 : vector<1x2xf32>
    %c2_156 = arith.constant 2 : index
    %c0_157 = arith.constant 0 : index
    %c0_158 = arith.constant 0 : index
    %352 = vector.load %arg11[%c2_156, %c0_157, %c0_158] : memref<4x32x2xf32, #tpu.memory_space<vmem>>, vector<1x32x2xf32>
    %353 = vector.shape_cast %352 : vector<1x32x2xf32> to vector<32x2xf32>
    %354 = vector.broadcast %351 : vector<1x2xf32> to vector<32x2xf32>
    %355 = arith.mulf %353, %354 : vector<32x2xf32>
    %cst_159 = arith.constant dense<0.000000e+00> : vector<32xf32>
    %356 = vector.multi_reduction <add>, %355, %cst_159 [1] : vector<32x2xf32> to vector<32xf32>
    %357 = vector.shape_cast %356 : vector<32xf32> to vector<32x1xf32>
    %c2_160 = arith.constant 2 : index
    %c0_161 = arith.constant 0 : index
    %c0_162 = arith.constant 0 : index
    %358 = vector.load %arg12[%c2_160, %c0_161, %c0_162] : memref<4x32x1xf32, #tpu.memory_space<vmem>>, vector<1x32x1xf32>
    %359 = vector.shape_cast %358 : vector<1x32x1xf32> to vector<32x1xf32>
    %360 = arith.addf %357, %359 : vector<32x1xf32>
    %361 = arith.negf %360 : vector<32x1xf32>
    %362 = math.exp %361 : vector<32x1xf32>
    %cst_163 = arith.constant 1.000000e+00 : f32
    %363 = vector.broadcast %cst_163 : f32 to vector<32x1xf32>
    %364 = arith.addf %363, %362 : vector<32x1xf32>
    %365 = arith.divf %363, %364 : vector<32x1xf32>
    %366 = vector.broadcast %365 : vector<32x1xf32> to vector<32x256xf32>
    %367 = arith.mulf %336, %366 : vector<32x256xf32>
    %368 = arith.addf %367, %246 : vector<32x256xf32>
    %c3 = arith.constant 3 : index
    %c0_164 = arith.constant 0 : index
    %c0_165 = arith.constant 0 : index
    %369 = vector.load %arg3[%c3, %c0_164, %c0_165] : memref<4x32x256xf32, #tpu.memory_space<vmem>>, vector<1x32x256xf32>
    %370 = vector.shape_cast %369 : vector<1x32x256xf32> to vector<32x256xf32>
    %c3_166 = arith.constant 3 : index
    %c0_167 = arith.constant 0 : index
    %c0_168 = arith.constant 0 : index
    %371 = vector.load %arg4[%c3_166, %c0_167, %c0_168] : memref<4x32x32xf32, #tpu.memory_space<vmem>>, vector<1x32x32xf32>
    %372 = vector.shape_cast %371 : vector<1x32x32xf32> to vector<32x32xf32>
    %c3_169 = arith.constant 3 : index
    %c0_170 = arith.constant 0 : index
    %c0_171 = arith.constant 0 : index
    %373 = vector.load %arg5[%c3_169, %c0_170, %c0_171] : memref<4x32x1xf32, #tpu.memory_space<vmem>>, vector<1x32x1xf32>
    %374 = vector.shape_cast %373 : vector<1x32x1xf32> to vector<32x1xf32>
    %c17_i32_172 = arith.constant 17 : i32
    %375 = tpu.dynamic_rotate %368 by %c17_i32_172 dim 1 : vector<32x256xf32>, i32 -> vector<32x256xf32>
    %376 = vector.extract_strided_slice %2 {offsets = [0, 0], sizes = [1, 256], strides = [1, 1]} : vector<8x256xf32> to vector<1x256xf32>
    %377 = vector.broadcast %376 : vector<1x256xf32> to vector<32x256xf32>
    %378 = arith.mulf %375, %377 : vector<32x256xf32>
    %c16_i32_173 = arith.constant 16 : i32
    %379 = tpu.dynamic_rotate %368 by %c16_i32_173 dim 1 : vector<32x256xf32>, i32 -> vector<32x256xf32>
    %380 = vector.extract_strided_slice %2 {offsets = [1, 0], sizes = [1, 256], strides = [1, 1]} : vector<8x256xf32> to vector<1x256xf32>
    %381 = vector.broadcast %380 : vector<1x256xf32> to vector<32x256xf32>
    %382 = arith.mulf %379, %381 : vector<32x256xf32>
    %c15_i32_174 = arith.constant 15 : i32
    %383 = tpu.dynamic_rotate %368 by %c15_i32_174 dim 1 : vector<32x256xf32>, i32 -> vector<32x256xf32>
    %384 = vector.extract_strided_slice %2 {offsets = [2, 0], sizes = [1, 256], strides = [1, 1]} : vector<8x256xf32> to vector<1x256xf32>
    %385 = vector.broadcast %384 : vector<1x256xf32> to vector<32x256xf32>
    %386 = arith.mulf %383, %385 : vector<32x256xf32>
    %c1_i32_175 = arith.constant 1 : i32
    %387 = tpu.dynamic_rotate %368 by %c1_i32_175 dim 1 : vector<32x256xf32>, i32 -> vector<32x256xf32>
    %388 = vector.extract_strided_slice %2 {offsets = [3, 0], sizes = [1, 256], strides = [1, 1]} : vector<8x256xf32> to vector<1x256xf32>
    %389 = vector.broadcast %388 : vector<1x256xf32> to vector<32x256xf32>
    %390 = arith.mulf %387, %389 : vector<32x256xf32>
    %c255_i32_176 = arith.constant 255 : i32
    %391 = tpu.dynamic_rotate %368 by %c255_i32_176 dim 1 : vector<32x256xf32>, i32 -> vector<32x256xf32>
    %392 = vector.extract_strided_slice %2 {offsets = [4, 0], sizes = [1, 256], strides = [1, 1]} : vector<8x256xf32> to vector<1x256xf32>
    %393 = vector.broadcast %392 : vector<1x256xf32> to vector<32x256xf32>
    %394 = arith.mulf %391, %393 : vector<32x256xf32>
    %c241_i32_177 = arith.constant 241 : i32
    %395 = tpu.dynamic_rotate %368 by %c241_i32_177 dim 1 : vector<32x256xf32>, i32 -> vector<32x256xf32>
    %396 = vector.extract_strided_slice %2 {offsets = [5, 0], sizes = [1, 256], strides = [1, 1]} : vector<8x256xf32> to vector<1x256xf32>
    %397 = vector.broadcast %396 : vector<1x256xf32> to vector<32x256xf32>
    %398 = arith.mulf %395, %397 : vector<32x256xf32>
    %c240_i32_178 = arith.constant 240 : i32
    %399 = tpu.dynamic_rotate %368 by %c240_i32_178 dim 1 : vector<32x256xf32>, i32 -> vector<32x256xf32>
    %400 = vector.extract_strided_slice %2 {offsets = [6, 0], sizes = [1, 256], strides = [1, 1]} : vector<8x256xf32> to vector<1x256xf32>
    %401 = vector.broadcast %400 : vector<1x256xf32> to vector<32x256xf32>
    %402 = arith.mulf %399, %401 : vector<32x256xf32>
    %c239_i32_179 = arith.constant 239 : i32
    %403 = tpu.dynamic_rotate %368 by %c239_i32_179 dim 1 : vector<32x256xf32>, i32 -> vector<32x256xf32>
    %404 = vector.extract_strided_slice %2 {offsets = [7, 0], sizes = [1, 256], strides = [1, 1]} : vector<8x256xf32> to vector<1x256xf32>
    %405 = vector.broadcast %404 : vector<1x256xf32> to vector<32x256xf32>
    %406 = arith.mulf %403, %405 : vector<32x256xf32>
    %407 = tpu.concatenate %378, %382, %386, %390, %394, %398, %402, %406 in 0 : vector<32x256xf32>, vector<32x256xf32>, vector<32x256xf32>, vector<32x256xf32>, vector<32x256xf32>, vector<32x256xf32>, vector<32x256xf32>, vector<32x256xf32> -> vector<256x256xf32>
    %cst_180 = arith.constant dense<0.000000e+00> : vector<32x256xf32>
    %408 = tpu.matmul %370, %407, %cst_180 {dimension_numbers = #tpu.dot_dimension_numbers<[1], [0], [0], [1], [0, 0, 1, 1], [], []>} : vector<32x256xf32>, vector<256x256xf32>, vector<32x256xf32> -> vector<32x256xf32>
    %cst_181 = arith.constant dense<0.000000e+00> : vector<32x256xf32>
    %409 = tpu.matmul %372, %368, %cst_181 {dimension_numbers = #tpu.dot_dimension_numbers<[1], [0], [0], [1], [0, 0, 1, 1], [], []>} : vector<32x32xf32>, vector<32x256xf32>, vector<32x256xf32> -> vector<32x256xf32>
    %410 = arith.addf %408, %409 : vector<32x256xf32>
    %411 = vector.broadcast %374 : vector<32x1xf32> to vector<32x256xf32>
    %412 = arith.addf %410, %411 : vector<32x256xf32>
    %cst_182 = arith.constant 0.000000e+00 : f32
    %413 = vector.broadcast %cst_182 : f32 to vector<32x256xf32>
    %414 = arith.maximumf %412, %413 : vector<32x256xf32>
    %c3_183 = arith.constant 3 : index
    %c0_184 = arith.constant 0 : index
    %c0_185 = arith.constant 0 : index
    %415 = vector.load %arg6[%c3_183, %c0_184, %c0_185] : memref<4x32x256xf32, #tpu.memory_space<vmem>>, vector<1x32x256xf32>
    %416 = vector.shape_cast %415 : vector<1x32x256xf32> to vector<32x256xf32>
    %c3_186 = arith.constant 3 : index
    %c0_187 = arith.constant 0 : index
    %c0_188 = arith.constant 0 : index
    %417 = vector.load %arg7[%c3_186, %c0_187, %c0_188] : memref<4x32x32xf32, #tpu.memory_space<vmem>>, vector<1x32x32xf32>
    %418 = vector.shape_cast %417 : vector<1x32x32xf32> to vector<32x32xf32>
    %c3_189 = arith.constant 3 : index
    %c0_190 = arith.constant 0 : index
    %c0_191 = arith.constant 0 : index
    %419 = vector.load %arg8[%c3_189, %c0_190, %c0_191] : memref<4x32x1xf32, #tpu.memory_space<vmem>>, vector<1x32x1xf32>
    %420 = vector.shape_cast %419 : vector<1x32x1xf32> to vector<32x1xf32>
    %c17_i32_192 = arith.constant 17 : i32
    %421 = tpu.dynamic_rotate %414 by %c17_i32_192 dim 1 : vector<32x256xf32>, i32 -> vector<32x256xf32>
    %422 = vector.extract_strided_slice %2 {offsets = [0, 0], sizes = [1, 256], strides = [1, 1]} : vector<8x256xf32> to vector<1x256xf32>
    %423 = vector.broadcast %422 : vector<1x256xf32> to vector<32x256xf32>
    %424 = arith.mulf %421, %423 : vector<32x256xf32>
    %c16_i32_193 = arith.constant 16 : i32
    %425 = tpu.dynamic_rotate %414 by %c16_i32_193 dim 1 : vector<32x256xf32>, i32 -> vector<32x256xf32>
    %426 = vector.extract_strided_slice %2 {offsets = [1, 0], sizes = [1, 256], strides = [1, 1]} : vector<8x256xf32> to vector<1x256xf32>
    %427 = vector.broadcast %426 : vector<1x256xf32> to vector<32x256xf32>
    %428 = arith.mulf %425, %427 : vector<32x256xf32>
    %c15_i32_194 = arith.constant 15 : i32
    %429 = tpu.dynamic_rotate %414 by %c15_i32_194 dim 1 : vector<32x256xf32>, i32 -> vector<32x256xf32>
    %430 = vector.extract_strided_slice %2 {offsets = [2, 0], sizes = [1, 256], strides = [1, 1]} : vector<8x256xf32> to vector<1x256xf32>
    %431 = vector.broadcast %430 : vector<1x256xf32> to vector<32x256xf32>
    %432 = arith.mulf %429, %431 : vector<32x256xf32>
    %c1_i32_195 = arith.constant 1 : i32
    %433 = tpu.dynamic_rotate %414 by %c1_i32_195 dim 1 : vector<32x256xf32>, i32 -> vector<32x256xf32>
    %434 = vector.extract_strided_slice %2 {offsets = [3, 0], sizes = [1, 256], strides = [1, 1]} : vector<8x256xf32> to vector<1x256xf32>
    %435 = vector.broadcast %434 : vector<1x256xf32> to vector<32x256xf32>
    %436 = arith.mulf %433, %435 : vector<32x256xf32>
    %c255_i32_196 = arith.constant 255 : i32
    %437 = tpu.dynamic_rotate %414 by %c255_i32_196 dim 1 : vector<32x256xf32>, i32 -> vector<32x256xf32>
    %438 = vector.extract_strided_slice %2 {offsets = [4, 0], sizes = [1, 256], strides = [1, 1]} : vector<8x256xf32> to vector<1x256xf32>
    %439 = vector.broadcast %438 : vector<1x256xf32> to vector<32x256xf32>
    %440 = arith.mulf %437, %439 : vector<32x256xf32>
    %c241_i32_197 = arith.constant 241 : i32
    %441 = tpu.dynamic_rotate %414 by %c241_i32_197 dim 1 : vector<32x256xf32>, i32 -> vector<32x256xf32>
    %442 = vector.extract_strided_slice %2 {offsets = [5, 0], sizes = [1, 256], strides = [1, 1]} : vector<8x256xf32> to vector<1x256xf32>
    %443 = vector.broadcast %442 : vector<1x256xf32> to vector<32x256xf32>
    %444 = arith.mulf %441, %443 : vector<32x256xf32>
    %c240_i32_198 = arith.constant 240 : i32
    %445 = tpu.dynamic_rotate %414 by %c240_i32_198 dim 1 : vector<32x256xf32>, i32 -> vector<32x256xf32>
    %446 = vector.extract_strided_slice %2 {offsets = [6, 0], sizes = [1, 256], strides = [1, 1]} : vector<8x256xf32> to vector<1x256xf32>
    %447 = vector.broadcast %446 : vector<1x256xf32> to vector<32x256xf32>
    %448 = arith.mulf %445, %447 : vector<32x256xf32>
    %c239_i32_199 = arith.constant 239 : i32
    %449 = tpu.dynamic_rotate %414 by %c239_i32_199 dim 1 : vector<32x256xf32>, i32 -> vector<32x256xf32>
    %450 = vector.extract_strided_slice %2 {offsets = [7, 0], sizes = [1, 256], strides = [1, 1]} : vector<8x256xf32> to vector<1x256xf32>
    %451 = vector.broadcast %450 : vector<1x256xf32> to vector<32x256xf32>
    %452 = arith.mulf %449, %451 : vector<32x256xf32>
    %453 = tpu.concatenate %424, %428, %432, %436, %440, %444, %448, %452 in 0 : vector<32x256xf32>, vector<32x256xf32>, vector<32x256xf32>, vector<32x256xf32>, vector<32x256xf32>, vector<32x256xf32>, vector<32x256xf32>, vector<32x256xf32> -> vector<256x256xf32>
    %cst_200 = arith.constant dense<0.000000e+00> : vector<32x256xf32>
    %454 = tpu.matmul %416, %453, %cst_200 {dimension_numbers = #tpu.dot_dimension_numbers<[1], [0], [0], [1], [0, 0, 1, 1], [], []>} : vector<32x256xf32>, vector<256x256xf32>, vector<32x256xf32> -> vector<32x256xf32>
    %cst_201 = arith.constant dense<0.000000e+00> : vector<32x256xf32>
    %455 = tpu.matmul %418, %414, %cst_201 {dimension_numbers = #tpu.dot_dimension_numbers<[1], [0], [0], [1], [0, 0, 1, 1], [], []>} : vector<32x32xf32>, vector<32x256xf32>, vector<32x256xf32> -> vector<32x256xf32>
    %456 = arith.addf %454, %455 : vector<32x256xf32>
    %457 = vector.broadcast %420 : vector<32x1xf32> to vector<32x256xf32>
    %458 = arith.addf %456, %457 : vector<32x256xf32>
    %cst_202 = arith.constant dense<0.000000e+00> : vector<32xf32>
    %459 = vector.multi_reduction <add>, %458, %cst_202 [1] : vector<32x256xf32> to vector<32xf32>
    %460 = vector.shape_cast %459 : vector<32xf32> to vector<32x1xf32>
    %cst_203 = arith.constant 2.560000e+02 : f32
    %461 = vector.broadcast %cst_203 : f32 to vector<32x1xf32>
    %462 = arith.divf %460, %461 : vector<32x1xf32>
    %c3_204 = arith.constant 3 : index
    %c0_205 = arith.constant 0 : index
    %c0_206 = arith.constant 0 : index
    %463 = vector.load %arg9[%c3_204, %c0_205, %c0_206] : memref<4x32x2xf32, #tpu.memory_space<vmem>>, vector<1x32x2xf32>
    %464 = vector.shape_cast %463 : vector<1x32x2xf32> to vector<32x2xf32>
    %465 = vector.broadcast %462 : vector<32x1xf32> to vector<32x2xf32>
    %466 = arith.mulf %464, %465 : vector<32x2xf32>
    %cst_207 = arith.constant dense<0.000000e+00> : vector<2xf32>
    %467 = vector.multi_reduction <add>, %466, %cst_207 [0] : vector<32x2xf32> to vector<2xf32>
    %468 = vector.shape_cast %467 : vector<2xf32> to vector<1x2xf32>
    %c3_208 = arith.constant 3 : index
    %c0_209 = arith.constant 0 : index
    %c0_210 = arith.constant 0 : index
    %469 = vector.load %arg10[%c3_208, %c0_209, %c0_210] : memref<4x1x2xf32, #tpu.memory_space<vmem>>, vector<1x1x2xf32>
    %470 = vector.shape_cast %469 : vector<1x1x2xf32> to vector<1x2xf32>
    %471 = arith.addf %468, %470 : vector<1x2xf32>
    %cst_211 = arith.constant 0.000000e+00 : f32
    %472 = vector.broadcast %cst_211 : f32 to vector<1x2xf32>
    %473 = arith.maximumf %471, %472 : vector<1x2xf32>
    %c3_212 = arith.constant 3 : index
    %c0_213 = arith.constant 0 : index
    %c0_214 = arith.constant 0 : index
    %474 = vector.load %arg11[%c3_212, %c0_213, %c0_214] : memref<4x32x2xf32, #tpu.memory_space<vmem>>, vector<1x32x2xf32>
    %475 = vector.shape_cast %474 : vector<1x32x2xf32> to vector<32x2xf32>
    %476 = vector.broadcast %473 : vector<1x2xf32> to vector<32x2xf32>
    %477 = arith.mulf %475, %476 : vector<32x2xf32>
    %cst_215 = arith.constant dense<0.000000e+00> : vector<32xf32>
    %478 = vector.multi_reduction <add>, %477, %cst_215 [1] : vector<32x2xf32> to vector<32xf32>
    %479 = vector.shape_cast %478 : vector<32xf32> to vector<32x1xf32>
    %c3_216 = arith.constant 3 : index
    %c0_217 = arith.constant 0 : index
    %c0_218 = arith.constant 0 : index
    %480 = vector.load %arg12[%c3_216, %c0_217, %c0_218] : memref<4x32x1xf32, #tpu.memory_space<vmem>>, vector<1x32x1xf32>
    %481 = vector.shape_cast %480 : vector<1x32x1xf32> to vector<32x1xf32>
    %482 = arith.addf %479, %481 : vector<32x1xf32>
    %483 = arith.negf %482 : vector<32x1xf32>
    %484 = math.exp %483 : vector<32x1xf32>
    %cst_219 = arith.constant 1.000000e+00 : f32
    %485 = vector.broadcast %cst_219 : f32 to vector<32x1xf32>
    %486 = arith.addf %485, %484 : vector<32x1xf32>
    %487 = arith.divf %485, %486 : vector<32x1xf32>
    %488 = vector.broadcast %487 : vector<32x1xf32> to vector<32x256xf32>
    %489 = arith.mulf %458, %488 : vector<32x256xf32>
    %490 = arith.addf %489, %368 : vector<32x256xf32>
    %c0_220 = arith.constant 0 : index
    %c0_221 = arith.constant 0 : index
    %491 = vector.load %arg13[%c0_220, %c0_221] : memref<32x256xf32, #tpu.memory_space<vmem>>, vector<32x256xf32>
    %c0_222 = arith.constant 0 : index
    %c0_223 = arith.constant 0 : index
    %492 = vector.load %arg14[%c0_222, %c0_223] : memref<32x32xf32, #tpu.memory_space<vmem>>, vector<32x32xf32>
    %c0_224 = arith.constant 0 : index
    %c0_225 = arith.constant 0 : index
    %493 = vector.load %arg15[%c0_224, %c0_225] : memref<32x1xf32, #tpu.memory_space<vmem>>, vector<32x1xf32>
    %c17_i32_226 = arith.constant 17 : i32
    %494 = tpu.dynamic_rotate %490 by %c17_i32_226 dim 1 : vector<32x256xf32>, i32 -> vector<32x256xf32>
    %495 = vector.extract_strided_slice %2 {offsets = [0, 0], sizes = [1, 256], strides = [1, 1]} : vector<8x256xf32> to vector<1x256xf32>
    %496 = vector.broadcast %495 : vector<1x256xf32> to vector<32x256xf32>
    %497 = arith.mulf %494, %496 : vector<32x256xf32>
    %c16_i32_227 = arith.constant 16 : i32
    %498 = tpu.dynamic_rotate %490 by %c16_i32_227 dim 1 : vector<32x256xf32>, i32 -> vector<32x256xf32>
    %499 = vector.extract_strided_slice %2 {offsets = [1, 0], sizes = [1, 256], strides = [1, 1]} : vector<8x256xf32> to vector<1x256xf32>
    %500 = vector.broadcast %499 : vector<1x256xf32> to vector<32x256xf32>
    %501 = arith.mulf %498, %500 : vector<32x256xf32>
    %c15_i32_228 = arith.constant 15 : i32
    %502 = tpu.dynamic_rotate %490 by %c15_i32_228 dim 1 : vector<32x256xf32>, i32 -> vector<32x256xf32>
    %503 = vector.extract_strided_slice %2 {offsets = [2, 0], sizes = [1, 256], strides = [1, 1]} : vector<8x256xf32> to vector<1x256xf32>
    %504 = vector.broadcast %503 : vector<1x256xf32> to vector<32x256xf32>
    %505 = arith.mulf %502, %504 : vector<32x256xf32>
    %c1_i32_229 = arith.constant 1 : i32
    %506 = tpu.dynamic_rotate %490 by %c1_i32_229 dim 1 : vector<32x256xf32>, i32 -> vector<32x256xf32>
    %507 = vector.extract_strided_slice %2 {offsets = [3, 0], sizes = [1, 256], strides = [1, 1]} : vector<8x256xf32> to vector<1x256xf32>
    %508 = vector.broadcast %507 : vector<1x256xf32> to vector<32x256xf32>
    %509 = arith.mulf %506, %508 : vector<32x256xf32>
    %c255_i32_230 = arith.constant 255 : i32
    %510 = tpu.dynamic_rotate %490 by %c255_i32_230 dim 1 : vector<32x256xf32>, i32 -> vector<32x256xf32>
    %511 = vector.extract_strided_slice %2 {offsets = [4, 0], sizes = [1, 256], strides = [1, 1]} : vector<8x256xf32> to vector<1x256xf32>
    %512 = vector.broadcast %511 : vector<1x256xf32> to vector<32x256xf32>
    %513 = arith.mulf %510, %512 : vector<32x256xf32>
    %c241_i32_231 = arith.constant 241 : i32
    %514 = tpu.dynamic_rotate %490 by %c241_i32_231 dim 1 : vector<32x256xf32>, i32 -> vector<32x256xf32>
    %515 = vector.extract_strided_slice %2 {offsets = [5, 0], sizes = [1, 256], strides = [1, 1]} : vector<8x256xf32> to vector<1x256xf32>
    %516 = vector.broadcast %515 : vector<1x256xf32> to vector<32x256xf32>
    %517 = arith.mulf %514, %516 : vector<32x256xf32>
    %c240_i32_232 = arith.constant 240 : i32
    %518 = tpu.dynamic_rotate %490 by %c240_i32_232 dim 1 : vector<32x256xf32>, i32 -> vector<32x256xf32>
    %519 = vector.extract_strided_slice %2 {offsets = [6, 0], sizes = [1, 256], strides = [1, 1]} : vector<8x256xf32> to vector<1x256xf32>
    %520 = vector.broadcast %519 : vector<1x256xf32> to vector<32x256xf32>
    %521 = arith.mulf %518, %520 : vector<32x256xf32>
    %c239_i32_233 = arith.constant 239 : i32
    %522 = tpu.dynamic_rotate %490 by %c239_i32_233 dim 1 : vector<32x256xf32>, i32 -> vector<32x256xf32>
    %523 = vector.extract_strided_slice %2 {offsets = [7, 0], sizes = [1, 256], strides = [1, 1]} : vector<8x256xf32> to vector<1x256xf32>
    %524 = vector.broadcast %523 : vector<1x256xf32> to vector<32x256xf32>
    %525 = arith.mulf %522, %524 : vector<32x256xf32>
    %526 = tpu.concatenate %497, %501, %505, %509, %513, %517, %521, %525 in 0 : vector<32x256xf32>, vector<32x256xf32>, vector<32x256xf32>, vector<32x256xf32>, vector<32x256xf32>, vector<32x256xf32>, vector<32x256xf32>, vector<32x256xf32> -> vector<256x256xf32>
    %cst_234 = arith.constant dense<0.000000e+00> : vector<32x256xf32>
    %527 = tpu.matmul %491, %526, %cst_234 {dimension_numbers = #tpu.dot_dimension_numbers<[1], [0], [0], [1], [0, 0, 1, 1], [], []>} : vector<32x256xf32>, vector<256x256xf32>, vector<32x256xf32> -> vector<32x256xf32>
    %cst_235 = arith.constant dense<0.000000e+00> : vector<32x256xf32>
    %528 = tpu.matmul %492, %490, %cst_235 {dimension_numbers = #tpu.dot_dimension_numbers<[1], [0], [0], [1], [0, 0, 1, 1], [], []>} : vector<32x32xf32>, vector<32x256xf32>, vector<32x256xf32> -> vector<32x256xf32>
    %529 = arith.addf %527, %528 : vector<32x256xf32>
    %530 = vector.broadcast %493 : vector<32x1xf32> to vector<32x256xf32>
    %531 = arith.addf %529, %530 : vector<32x256xf32>
    %532 = arith.addf %531, %1 : vector<32x256xf32>
    %c0_236 = arith.constant 0 : index
    %c0_237 = arith.constant 0 : index
    %c0_238 = arith.constant 0 : index
    %533 = vector.load %arg16[%c0_236, %c0_237, %c0_238] : memref<1x32x256xf32, #tpu.memory_space<vmem>>, vector<1x32x256xf32>
    %534 = vector.shape_cast %533 : vector<1x32x256xf32> to vector<32x256xf32>
    %535 = vector.shape_cast %532 : vector<32x256xf32> to vector<1x32x256xf32>
    tpu.vector_store %arg16[%c0_236, %c0_237, %c0_238], %535 {strides = array<i32>} : memref<1x32x256xf32, #tpu.memory_space<vmem>>, vector<1x32x256xf32>,
    return
  }
  func.func @transform_0(%arg0: i32) -> (i32, i32, i32) {
    %c0_i32 = arith.constant 0 : i32
    %c0_i32_0 = arith.constant 0 : i32
    %c0_i32_1 = arith.constant 0 : i32
    return %arg0, %c0_i32, %c0_i32_0 : i32, i32, i32
  }
  func.func @transform_1(%arg0: i32) -> (i32, i32) {
    %c0_i32 = arith.constant 0 : i32
    %c0_i32_0 = arith.constant 0 : i32
    %c0_i32_1 = arith.constant 0 : i32
    return %c0_i32, %c0_i32_0 : i32, i32
  }
  func.func @transform_2(%arg0: i32) -> (i32, i32, i32) {
    %c0_i32 = arith.constant 0 : i32
    %c0_i32_0 = arith.constant 0 : i32
    %c0_i32_1 = arith.constant 0 : i32
    %c0_i32_2 = arith.constant 0 : i32
    return %c0_i32, %c0_i32_0, %c0_i32_1 : i32, i32, i32
  }
  func.func @transform_3(%arg0: i32) -> (i32, i32, i32) {
    %c0_i32 = arith.constant 0 : i32
    %c0_i32_0 = arith.constant 0 : i32
    %c0_i32_1 = arith.constant 0 : i32
    %c0_i32_2 = arith.constant 0 : i32
    return %c0_i32, %c0_i32_0, %c0_i32_1 : i32, i32, i32
  }
  func.func @transform_4(%arg0: i32) -> (i32, i32, i32) {
    %c0_i32 = arith.constant 0 : i32
    %c0_i32_0 = arith.constant 0 : i32
    %c0_i32_1 = arith.constant 0 : i32
    %c0_i32_2 = arith.constant 0 : i32
    return %c0_i32, %c0_i32_0, %c0_i32_1 : i32, i32, i32
  }
  func.func @transform_5(%arg0: i32) -> (i32, i32, i32) {
    %c0_i32 = arith.constant 0 : i32
    %c0_i32_0 = arith.constant 0 : i32
    %c0_i32_1 = arith.constant 0 : i32
    %c0_i32_2 = arith.constant 0 : i32
    return %c0_i32, %c0_i32_0, %c0_i32_1 : i32, i32, i32
  }
  func.func @transform_6(%arg0: i32) -> (i32, i32, i32) {
    %c0_i32 = arith.constant 0 : i32
    %c0_i32_0 = arith.constant 0 : i32
    %c0_i32_1 = arith.constant 0 : i32
    %c0_i32_2 = arith.constant 0 : i32
    return %c0_i32, %c0_i32_0, %c0_i32_1 : i32, i32, i32
  }
  func.func @transform_7(%arg0: i32) -> (i32, i32, i32) {
    %c0_i32 = arith.constant 0 : i32
    %c0_i32_0 = arith.constant 0 : i32
    %c0_i32_1 = arith.constant 0 : i32
    %c0_i32_2 = arith.constant 0 : i32
    return %c0_i32, %c0_i32_0, %c0_i32_1 : i32, i32, i32
  }
  func.func @transform_8(%arg0: i32) -> (i32, i32, i32) {
    %c0_i32 = arith.constant 0 : i32
    %c0_i32_0 = arith.constant 0 : i32
    %c0_i32_1 = arith.constant 0 : i32
    %c0_i32_2 = arith.constant 0 : i32
    return %c0_i32, %c0_i32_0, %c0_i32_1 : i32, i32, i32
  }
  func.func @transform_9(%arg0: i32) -> (i32, i32, i32) {
    %c0_i32 = arith.constant 0 : i32
    %c0_i32_0 = arith.constant 0 : i32
    %c0_i32_1 = arith.constant 0 : i32
    %c0_i32_2 = arith.constant 0 : i32
    return %c0_i32, %c0_i32_0, %c0_i32_1 : i32, i32, i32
  }
  func.func @transform_10(%arg0: i32) -> (i32, i32, i32) {
    %c0_i32 = arith.constant 0 : i32
    %c0_i32_0 = arith.constant 0 : i32
    %c0_i32_1 = arith.constant 0 : i32
    %c0_i32_2 = arith.constant 0 : i32
    return %c0_i32, %c0_i32_0, %c0_i32_1 : i32, i32, i32
  }
  func.func @transform_11(%arg0: i32) -> (i32, i32, i32) {
    %c0_i32 = arith.constant 0 : i32
    %c0_i32_0 = arith.constant 0 : i32
    %c0_i32_1 = arith.constant 0 : i32
    %c0_i32_2 = arith.constant 0 : i32
    return %c0_i32, %c0_i32_0, %c0_i32_1 : i32, i32, i32
  }
  func.func @transform_12(%arg0: i32) -> (i32, i32) {
    %c0_i32 = arith.constant 0 : i32
    %c0_i32_0 = arith.constant 0 : i32
    %c0_i32_1 = arith.constant 0 : i32
    return %c0_i32, %c0_i32_0 : i32, i32
  }
  func.func @transform_13(%arg0: i32) -> (i32, i32) {
    %c0_i32 = arith.constant 0 : i32
    %c0_i32_0 = arith.constant 0 : i32
    %c0_i32_1 = arith.constant 0 : i32
    return %c0_i32, %c0_i32_0 : i32, i32
  }
  func.func @transform_14(%arg0: i32) -> (i32, i32) {
    %c0_i32 = arith.constant 0 : i32
    %c0_i32_0 = arith.constant 0 : i32
    %c0_i32_1 = arith.constant 0 : i32
    return %c0_i32, %c0_i32_0 : i32, i32
  }
  func.func @transform_15(%arg0: i32) -> (i32, i32, i32) {
    %c0_i32 = arith.constant 0 : i32
    %c0_i32_0 = arith.constant 0 : i32
    %c0_i32_1 = arith.constant 0 : i32
    return %arg0, %c0_i32, %c0_i32_0 : i32, i32, i32
  }
}

</mosaic_0001>

<llo_original>
// kernel: tpu_custom_call.1
$region0: #{tpu_custom_call.1}
  #allocation0 [shape = 'u32[]', space=smem, size = 0x4, offset = 0x4, fixed_abs, tag = 'smem constant byte address 0x4 - core index']
  #allocation1 [shape = 'u32[144,128]{1,0:T(1,128)}', space=vmem, size = 0x12000, scoped, tag = 'internal scratch']
  %s0 = inlined_call_operand.vmem [shape: f32[2,32,256], index: 0, kind: input, shape index: {}]
  %s1 = inlined_call_operand.hbm [shape: f32[8,256], index: 1, kind: input, shape index: {}]
  %s2 = inlined_call_operand.vmem [shape: f32[4,32,256], index: 2, kind: input, shape index: {}]
  %s3 = inlined_call_operand.hbm [shape: f32[4,32,32], index: 3, kind: input, shape index: {}]
  %s4 = inlined_call_operand.vmem [shape: f32[4,32,1], index: 4, kind: input, shape index: {}]
  %s5 = inlined_call_operand.vmem [shape: f32[4,32,256], index: 5, kind: input, shape index: {}]
  %s6 = inlined_call_operand.hbm [shape: f32[4,32,32], index: 6, kind: input, shape index: {}]
  %s7 = inlined_call_operand.vmem [shape: f32[4,32,1], index: 7, kind: input, shape index: {}]
  %s8 = inlined_call_operand.vmem [shape: f32[4,32,2], index: 8, kind: input, shape index: {}]
  %s9 = inlined_call_operand.vmem [shape: f32[4,1,2], index: 9, kind: input, shape index: {}]
  %s10 = inlined_call_operand.vmem [shape: f32[4,32,2], index: 10, kind: input, shape index: {}]
  %s11 = inlined_call_operand.vmem [shape: f32[4,32,1], index: 11, kind: input, shape index: {}]
  %s12 = inlined_call_operand.vmem [shape: f32[32,256], index: 12, kind: input, shape index: {}]
  %s13 = inlined_call_operand.hbm [shape: f32[32,32], index: 13, kind: input, shape index: {}]
  %s14 = inlined_call_operand.vmem [shape: f32[32,1], index: 14, kind: input, shape index: {}]
  %s15 = inlined_call_operand.hbm [shape: f32[2,32,256], index: 15, kind: output, shape index: {}]
  %s16 = sld [smem:[#allocation0]]
  $region109: #{tpu_custom_call.1} parent=0
    _
  %s18 = ssub.s32 1, %s16
  %s19 = scalar_select 0, %s18, %s16
  $region1: #{tpu_custom_call.1} parent=0
    #allocation2 [shape = 'u8[8192]{0}', space=vmem, size = 0x2000, scoped, tag = 'input window, operand 1, single buffered']
    #allocation3 [shape = 's32[2]{0}', space=sflag, size = 0x8, scoped, tag = 'scoped memory for tpu_custom_call.1']
    #allocation4 [shape = 's32[2]{0}', space=sflag, size = 0x8, scoped, tag = 'scoped memory for tpu_custom_call.1']
    #allocation5 [shape = 'u8[65536]{0}', space=vmem, size = 0x10000, scoped, tag = 'input window, operand 3, single buffered']
    #allocation6 [shape = 's32[1]{0}', space=sflag, size = 0x4, scoped, tag = 'scoped memory for tpu_custom_call.1']
    #allocation7 [shape = 'u8[65536]{0}', space=vmem, size = 0x10000, scoped, tag = 'input window, operand 6, single buffered']
    #allocation8 [shape = 'u8[16384]{0}', space=vmem, size = 0x4000, scoped, tag = 'input window, operand 13, single buffered']
    #allocation9 [shape = 's32[1]{0}', space=sflag, size = 0x4, scoped, tag = 'scoped memory for tpu_custom_call.1']
    #allocation10 [shape = 'u8[65536]{0}', space=vmem, size = 0x10000, scoped, tag = 'output window, operand 0']
    %20 = vsyncpa [#allocation3], 0
    %21 = vsyncpa [#allocation6], 0
    %22 = vsyncpa [#allocation9], 0
    %23 = vsyncpa [#allocation4], 0
    %s24 = scalar_lea.sflag [#allocation4], 1
    %25 = vsyncpa %s24, 0
    loop: start=0, step=1, limit=4
    $region2: #{tpu_custom_call.1} parent=1 // loop_pre_header
      _
    $region3: #{tpu_custom_call.1} parent=1 // loop_header
      %s27 = sphi 0, %s31
      %p28 = scmp.ge.s32.totalorder %s27, 4
      %s37 = sphi 0, %s39
      %s40 = sphi 0, %s37
      %s41 = sphi 0, %s40
      %s57 = sphi 0, %s41
      %s61 = sphi 0, %s61
      %s63 = sphi 0, %s61
      %s64 = sphi 0, %s63
      %s78 = sphi 0, %s64
      %s82 = sphi 0, %s82
      %s84 = sphi 0, %s82
      %s85 = sphi 0, %s84
      %s99 = sphi 0, %s85
      %s103 = sphi 0, %s103
      %s105 = sphi 0, %s103
      %s106 = sphi 0, %s105
      %s120 = sphi 0, %s106
      %s124 = sphi 0, %s124
      %s126 = sphi 0, %s124
      %s127 = sphi 0, %s126
      %s141 = sphi 0, %s127
      %s145 = sphi 0, %s145
      %s147 = sphi 0, %s145
      %s148 = sphi 0, %s147
      %s162 = sphi 0, %s148
      %s166 = sphi 0, %s166
      %s168 = sphi 0, %s166
      %s169 = sphi 0, %s168
      %s183 = sphi 0, %s169
      %s187 = sphi 0, %s187
      %s189 = sphi 0, %s187
      %s190 = sphi 0, %s189
      %s204 = sphi 0, %s190
      %s208 = sphi 0, %s208
      %s210 = sphi 0, %s208
      %s211 = sphi 0, %s210
      %s225 = sphi 0, %s211
      %s229 = sphi 0, %s229
      %s231 = sphi 0, %s229
      %s232 = sphi 0, %s231
      %s246 = sphi 0, %s232
      %s250 = sphi 0, %s250
      %s252 = sphi 0, %s250
      %s253 = sphi 0, %s252
      %s267 = sphi 0, %s253
      %s271 = sphi 0, %s271
      %s273 = sphi 0, %s271
      %s274 = sphi 0, %s273
      %s288 = sphi 0, %s274
      %s292 = sphi 0, %s292
      %s294 = sphi 0, %s292
      %s295 = sphi 0, %s294
      %s309 = sphi 0, %s295
      %s313 = sphi 0, %s313
      %s315 = sphi 0, %s313
      %s316 = sphi 0, %s315
      %s330 = sphi 0, %s316
      %s334 = sphi 0, %s334
      %s336 = sphi 0, %s334
      %s337 = sphi 0, %s336
      %s351 = sphi 0, %s337
      %s357 = sphi 0, %s359
      %s360 = sphi 0, %s357
      %s361 = sphi 0, %s360
      %s377 = sphi 0, %s361
    $region4: #{tpu_custom_call.1} parent=1 // loop_header_branch
      %30 = sbr.rel (%p28) target = $region8
    $region5: #{tpu_custom_call.1} parent=1 // loop_body
      %s32 = ssub.s32 %s27, 1
      %s33 = ssub.s32 %s27, 2
      %s34 = sadd.s32 %s27, 1
      %s35 = ssub.s32 %s27, %s34
      %p36 = scmp.eq.s32.totalorder %s35, 0
      %s38 = sadd.s32 %s37, 1
      %s39 = scalar_select %p36, %s37, %s38
      %p42 = pneg %p36
      %p43 = scmp.eq.s32.totalorder %s27, 1
      %p44 = por %p42, %p43
      %p45 = scmp.ne.s32.totalorder %s37, %s40
      %p46 = scmp.eq.s32.totalorder %s27, 0
      %p47 = por %p45, %p46
      %p48 = scmp.ne.s32.totalorder %s37, %s40
      %p49 = scmp.eq.s32.totalorder %s32, 1
      %p50 = por %p48, %p49
      %p51 = scmp.ne.s32.totalorder %s40, %s41
      %p52 = scmp.eq.s32.totalorder %s32, 0
      %p53 = por %p51, %p52
      %p54 = scmp.ne.s32.totalorder %s40, %s41
      %p55 = scmp.eq.s32.totalorder %s33, 1
      %p56 = por %p54, %p55
      %p58 = scmp.ne.s32.totalorder %s41, %s57
      %p59 = scmp.eq.s32.totalorder %s33, 0
      %p60 = por %p58, %p59
      %s62 = sadd.s32 %s61, 1
      %p65 = scmp.eq.s32.totalorder %s27, 1
      %p66 = scmp.ne.s32.totalorder %s61, %s63
      %p67 = scmp.eq.s32.totalorder %s27, 0
      %p68 = por %p66, %p67
      %p69 = scmp.ne.s32.totalorder %s61, %s63
      %p70 = scmp.eq.s32.totalorder %s32, 1
      %p71 = por %p69, %p70
      %p72 = scmp.ne.s32.totalorder %s63, %s64
      %p73 = scmp.eq.s32.totalorder %s32, 0
      %p74 = por %p72, %p73
      %p75 = scmp.ne.s32.totalorder %s63, %s64
      %p76 = scmp.eq.s32.totalorder %s33, 1
      %p77 = por %p75, %p76
      %p79 = scmp.ne.s32.totalorder %s64, %s78
      %p80 = scmp.eq.s32.totalorder %s33, 0
      %p81 = por %p79, %p80
      %s83 = sadd.s32 %s82, 1
      %p86 = scmp.eq.s32.totalorder %s27, 1
      %p87 = scmp.ne.s32.totalorder %s82, %s84
      %p88 = scmp.eq.s32.totalorder %s27, 0
      %p89 = por %p87, %p88
      %p90 = scmp.ne.s32.totalorder %s82, %s84
      %p91 = scmp.eq.s32.totalorder %s32, 1
      %p92 = por %p90, %p91
      %p93 = scmp.ne.s32.totalorder %s84, %s85
      %p94 = scmp.eq.s32.totalorder %s32, 0
      %p95 = por %p93, %p94
      %p96 = scmp.ne.s32.totalorder %s84, %s85
      %p97 = scmp.eq.s32.totalorder %s33, 1
      %p98 = por %p96, %p97
      %p100 = scmp.ne.s32.totalorder %s85, %s99
      %p101 = scmp.eq.s32.totalorder %s33, 0
      %p102 = por %p100, %p101
      %s104 = sadd.s32 %s103, 1
      %p107 = scmp.eq.s32.totalorder %s27, 1
      %p108 = scmp.ne.s32.totalorder %s103, %s105
      %p109 = scmp.eq.s32.totalorder %s27, 0
      %p110 = por %p108, %p109
      %p111 = scmp.ne.s32.totalorder %s103, %s105
      %p112 = scmp.eq.s32.totalorder %s32, 1
      %p113 = por %p111, %p112
      %p114 = scmp.ne.s32.totalorder %s105, %s106
      %p115 = scmp.eq.s32.totalorder %s32, 0
      %p116 = por %p114, %p115
      %p117 = scmp.ne.s32.totalorder %s105, %s106
      %p118 = scmp.eq.s32.totalorder %s33, 1
      %p119 = por %p117, %p118
      %p121 = scmp.ne.s32.totalorder %s106, %s120
      %p122 = scmp.eq.s32.totalorder %s33, 0
      %p123 = por %p121, %p122
      %s125 = sadd.s32 %s124, 1
      %p128 = scmp.eq.s32.totalorder %s27, 1
      %p129 = scmp.ne.s32.totalorder %s124, %s126
      %p130 = scmp.eq.s32.totalorder %s27, 0
      %p131 = por %p129, %p130
      %p132 = scmp.ne.s32.totalorder %s124, %s126
      %p133 = scmp.eq.s32.totalorder %s32, 1
      %p134 = por %p132, %p133
      %p135 = scmp.ne.s32.totalorder %s126, %s127
      %p136 = scmp.eq.s32.totalorder %s32, 0
      %p137 = por %p135, %p136
      %p138 = scmp.ne.s32.totalorder %s126, %s127
      %p139 = scmp.eq.s32.totalorder %s33, 1
      %p140 = por %p138, %p139
      %p142 = scmp.ne.s32.totalorder %s127, %s141
      %p143 = scmp.eq.s32.totalorder %s33, 0
      %p144 = por %p142, %p143
      %s146 = sadd.s32 %s145, 1
      %p149 = scmp.eq.s32.totalorder %s27, 1
      %p150 = scmp.ne.s32.totalorder %s145, %s147
      %p151 = scmp.eq.s32.totalorder %s27, 0
      %p152 = por %p150, %p151
      %p153 = scmp.ne.s32.totalorder %s145, %s147
      %p154 = scmp.eq.s32.totalorder %s32, 1
      %p155 = por %p153, %p154
      %p156 = scmp.ne.s32.totalorder %s147, %s148
      %p157 = scmp.eq.s32.totalorder %s32, 0
      %p158 = por %p156, %p157
      %p159 = scmp.ne.s32.totalorder %s147, %s148
      %p160 = scmp.eq.s32.totalorder %s33, 1
      %p161 = por %p159, %p160
      %p163 = scmp.ne.s32.totalorder %s148, %s162
      %p164 = scmp.eq.s32.totalorder %s33, 0
      %p165 = por %p163, %p164
      %s167 = sadd.s32 %s166, 1
      %p170 = scmp.eq.s32.totalorder %s27, 1
      %p171 = scmp.ne.s32.totalorder %s166, %s168
      %p172 = scmp.eq.s32.totalorder %s27, 0
      %p173 = por %p171, %p172
      %p174 = scmp.ne.s32.totalorder %s166, %s168
      %p175 = scmp.eq.s32.totalorder %s32, 1
      %p176 = por %p174, %p175
      %p177 = scmp.ne.s32.totalorder %s168, %s169
      %p178 = scmp.eq.s32.totalorder %s32, 0
      %p179 = por %p177, %p178
      %p180 = scmp.ne.s32.totalorder %s168, %s169
      %p181 = scmp.eq.s32.totalorder %s33, 1
      %p182 = por %p180, %p181
      %p184 = scmp.ne.s32.totalorder %s169, %s183
      %p185 = scmp.eq.s32.totalorder %s33, 0
      %p186 = por %p184, %p185
      %s188 = sadd.s32 %s187, 1
      %p191 = scmp.eq.s32.totalorder %s27, 1
      %p192 = scmp.ne.s32.totalorder %s187, %s189
      %p193 = scmp.eq.s32.totalorder %s27, 0
      %p194 = por %p192, %p193
      %p195 = scmp.ne.s32.totalorder %s187, %s189
      %p196 = scmp.eq.s32.totalorder %s32, 1
      %p197 = por %p195, %p196
      %p198 = scmp.ne.s32.totalorder %s189, %s190
      %p199 = scmp.eq.s32.totalorder %s32, 0
      %p200 = por %p198, %p199
      %p201 = scmp.ne.s32.totalorder %s189, %s190
      %p202 = scmp.eq.s32.totalorder %s33, 1
      %p203 = por %p201, %p202
      %p205 = scmp.ne.s32.totalorder %s190, %s204
      %p206 = scmp.eq.s32.totalorder %s33, 0
      %p207 = por %p205, %p206
      %s209 = sadd.s32 %s208, 1
      %p212 = scmp.eq.s32.totalorder %s27, 1
      %p213 = scmp.ne.s32.totalorder %s208, %s210
      %p214 = scmp.eq.s32.totalorder %s27, 0
      %p215 = por %p213, %p214
      %p216 = scmp.ne.s32.totalorder %s208, %s210
      %p217 = scmp.eq.s32.totalorder %s32, 1
      %p218 = por %p216, %p217
      %p219 = scmp.ne.s32.totalorder %s210, %s211
      %p220 = scmp.eq.s32.totalorder %s32, 0
      %p221 = por %p219, %p220
      %p222 = scmp.ne.s32.totalorder %s210, %s211
      %p223 = scmp.eq.s32.totalorder %s33, 1
      %p224 = por %p222, %p223
      %p226 = scmp.ne.s32.totalorder %s211, %s225
      %p227 = scmp.eq.s32.totalorder %s33, 0
      %p228 = por %p226, %p227
      %s230 = sadd.s32 %s229, 1
      %p233 = scmp.eq.s32.totalorder %s27, 1
      %p234 = scmp.ne.s32.totalorder %s229, %s231
      %p235 = scmp.eq.s32.totalorder %s27, 0
      %p236 = por %p234, %p235
      %p237 = scmp.ne.s32.totalorder %s229, %s231
      %p238 = scmp.eq.s32.totalorder %s32, 1
      %p239 = por %p237, %p238
      %p240 = scmp.ne.s32.totalorder %s231, %s232
      %p241 = scmp.eq.s32.totalorder %s32, 0
      %p242 = por %p240, %p241
      %p243 = scmp.ne.s32.totalorder %s231, %s232
      %p244 = scmp.eq.s32.totalorder %s33, 1
      %p245 = por %p243, %p244
      %p247 = scmp.ne.s32.totalorder %s232, %s246
      %p248 = scmp.eq.s32.totalorder %s33, 0
      %p249 = por %p247, %p248
      %s251 = sadd.s32 %s250, 1
      %p254 = scmp.eq.s32.totalorder %s27, 1
      %p255 = scmp.ne.s32.totalorder %s250, %s252
      %p256 = scmp.eq.s32.totalorder %s27, 0
      %p257 = por %p255, %p256
      %p258 = scmp.ne.s32.totalorder %s250, %s252
      %p259 = scmp.eq.s32.totalorder %s32, 1
      %p260 = por %p258, %p259
      %p261 = scmp.ne.s32.totalorder %s252, %s253
      %p262 = scmp.eq.s32.totalorder %s32, 0
      %p263 = por %p261, %p262
      %p264 = scmp.ne.s32.totalorder %s252, %s253
      %p265 = scmp.eq.s32.totalorder %s33, 1
      %p266 = por %p264, %p265
      %p268 = scmp.ne.s32.totalorder %s253, %s267
      %p269 = scmp.eq.s32.totalorder %s33, 0
      %p270 = por %p268, %p269
      %s272 = sadd.s32 %s271, 1
      %p275 = scmp.eq.s32.totalorder %s27, 1
      %p276 = scmp.ne.s32.totalorder %s271, %s273
      %p277 = scmp.eq.s32.totalorder %s27, 0
      %p278 = por %p276, %p277
      %p279 = scmp.ne.s32.totalorder %s271, %s273
      %p280 = scmp.eq.s32.totalorder %s32, 1
      %p281 = por %p279, %p280
      %p282 = scmp.ne.s32.totalorder %s273, %s274
      %p283 = scmp.eq.s32.totalorder %s32, 0
      %p284 = por %p282, %p283
      %p285 = scmp.ne.s32.totalorder %s273, %s274
      %p286 = scmp.eq.s32.totalorder %s33, 1
      %p287 = por %p285, %p286
      %p289 = scmp.ne.s32.totalorder %s274, %s288
      %p290 = scmp.eq.s32.totalorder %s33, 0
      %p291 = por %p289, %p290
      %s293 = sadd.s32 %s292, 1
      %p296 = scmp.eq.s32.totalorder %s27, 1
      %p297 = scmp.ne.s32.totalorder %s292, %s294
      %p298 = scmp.eq.s32.totalorder %s27, 0
      %p299 = por %p297, %p298
      %p300 = scmp.ne.s32.totalorder %s292, %s294
      %p301 = scmp.eq.s32.totalorder %s32, 1
      %p302 = por %p300, %p301
      %p303 = scmp.ne.s32.totalorder %s294, %s295
      %p304 = scmp.eq.s32.totalorder %s32, 0
      %p305 = por %p303, %p304
      %p306 = scmp.ne.s32.totalorder %s294, %s295
      %p307 = scmp.eq.s32.totalorder %s33, 1
      %p308 = por %p306, %p307
      %p310 = scmp.ne.s32.totalorder %s295, %s309
      %p311 = scmp.eq.s32.totalorder %s33, 0
      %p312 = por %p310, %p311
      %s314 = sadd.s32 %s313, 1
      %p317 = scmp.eq.s32.totalorder %s27, 1
      %p318 = scmp.ne.s32.totalorder %s313, %s315
      %p319 = scmp.eq.s32.totalorder %s27, 0
      %p320 = por %p318, %p319
      %p321 = scmp.ne.s32.totalorder %s313, %s315
      %p322 = scmp.eq.s32.totalorder %s32, 1
      %p323 = por %p321, %p322
      %p324 = scmp.ne.s32.totalorder %s315, %s316
      %p325 = scmp.eq.s32.totalorder %s32, 0
      %p326 = por %p324, %p325
      %p327 = scmp.ne.s32.totalorder %s315, %s316
      %p328 = scmp.eq.s32.totalorder %s33, 1
      %p329 = por %p327, %p328
      %p331 = scmp.ne.s32.totalorder %s316, %s330
      %p332 = scmp.eq.s32.totalorder %s33, 0
      %p333 = por %p331, %p332
      %s335 = sadd.s32 %s334, 1
      %p338 = scmp.eq.s32.totalorder %s27, 1
      %p339 = scmp.ne.s32.totalorder %s334, %s336
      %p340 = scmp.eq.s32.totalorder %s27, 0
      %p341 = por %p339, %p340
      %p342 = scmp.ne.s32.totalorder %s334, %s336
      %p343 = scmp.eq.s32.totalorder %s32, 1
      %p344 = por %p342, %p343
      %p345 = scmp.ne.s32.totalorder %s336, %s337
      %p346 = scmp.eq.s32.totalorder %s32, 0
      %p347 = por %p345, %p346
      %p348 = scmp.ne.s32.totalorder %s336, %s337
      %p349 = scmp.eq.s32.totalorder %s33, 1
      %p350 = por %p348, %p349
      %p352 = scmp.ne.s32.totalorder %s337, %s351
      %p353 = scmp.eq.s32.totalorder %s33, 0
      %p354 = por %p352, %p353
      %s355 = ssub.s32 %s27, %s34
      %p356 = scmp.eq.s32.totalorder %s355, 0
      %s358 = sadd.s32 %s357, 1
      %s359 = scalar_select %p356, %s357, %s358
      %p362 = pneg %p356
      %p363 = scmp.eq.s32.totalorder %s27, 1
      %p364 = por %p362, %p363
      %p365 = scmp.ne.s32.totalorder %s357, %s360
      %p366 = scmp.eq.s32.totalorder %s27, 0
      %p367 = por %p365, %p366
      %p368 = scmp.ne.s32.totalorder %s357, %s360
      %p369 = scmp.eq.s32.totalorder %s32, 1
      %p370 = por %p368, %p369
      %p371 = scmp.ne.s32.totalorder %s360, %s361
      %p372 = scmp.eq.s32.totalorder %s32, 0
      %p373 = por %p371, %p372
      %p374 = scmp.ne.s32.totalorder %s360, %s361
      %p375 = scmp.eq.s32.totalorder %s33, 1
      %p376 = por %p374, %p375
      %p378 = scmp.ne.s32.totalorder %s361, %s377
      %p379 = scmp.eq.s32.totalorder %s33, 0
      %p380 = por %p378, %p379
      %p381 = scmp.le.s32.totalorder 1, %s27
      %p382 = scmp.lt.s32.totalorder %s27, 3
      %p383 = pnand %p381, %p382
      %p384 = pneg %p383
      // Predicated region
      $region9: #{tpu_custom_call.1} parent=5 // pred_check
        _
      $region10: #{tpu_custom_call.1} parent=5 // pred_check_branch
        %386 = sbr.rel (%p383) target = $region12
      $region11: #{tpu_custom_call.1} parent=5 // pred_region
        %s387 = ssub.s32 %s27, 1
        // Predicated region
        $region13: #{tpu_custom_call.1} parent=11 // pred_check
          %p388 = pneg %p74
        $region14: #{tpu_custom_call.1} parent=11 // pred_check_branch
          %390 = sbr.rel (%p388) target = $region16
        $region15: #{tpu_custom_call.1} parent=11 // pred_region
          %s392 = ssub.s32 256, 256
          %393 = vsyncadd [#allocation3], %s392
          %s395 = sshll.u32 [#allocation2], 4
          %s396 = int_to_ptr.vmem [resolvable:$true] %s395
          %398 = dma.hbm_to_vmem [thread:$0]  %s1, 256, %s396, [#allocation3]
        $region16: #{tpu_custom_call.1} parent=11 // pred_fallthru
          _
        // Predicated region
        $region17: #{tpu_custom_call.1} parent=11 // pred_check
          %p399 = pneg %p95
        $region18: #{tpu_custom_call.1} parent=11 // pred_check_branch
          %401 = sbr.rel (%p399) target = $region20
        $region19: #{tpu_custom_call.1} parent=11 // pred_region
          _
        $region20: #{tpu_custom_call.1} parent=11 // pred_fallthru
          _
        // Predicated region
        $region21: #{tpu_custom_call.1} parent=11 // pred_check
          %p402 = pneg %p116
        $region22: #{tpu_custom_call.1} parent=11 // pred_check_branch
          %404 = sbr.rel (%p402) target = $region24
        $region23: #{tpu_custom_call.1} parent=11 // pred_region
          %s406 = ssub.s32 2048, 2048
          %407 = vsyncadd [#allocation6], %s406
          %s408 = sshll.u32 [#allocation5], 4
          %s409 = int_to_ptr.vmem [resolvable:$true] %s408
          %414 = dma.hbm_to_vmem [thread:$0]  %s3, 2048, %s409, [#allocation6], 128, 128, 8
        $region24: #{tpu_custom_call.1} parent=11 // pred_fallthru
          _
        // Predicated region
        $region25: #{tpu_custom_call.1} parent=11 // pred_check
          %p415 = pneg %p137
        $region26: #{tpu_custom_call.1} parent=11 // pred_check_branch
          %417 = sbr.rel (%p415) target = $region28
        $region27: #{tpu_custom_call.1} parent=11 // pred_region
          _
        $region28: #{tpu_custom_call.1} parent=11 // pred_fallthru
          _
        // Predicated region
        $region29: #{tpu_custom_call.1} parent=11 // pred_check
          %p418 = pneg %p158
        $region30: #{tpu_custom_call.1} parent=11 // pred_check_branch
          %420 = sbr.rel (%p418) target = $region32
        $region31: #{tpu_custom_call.1} parent=11 // pred_region
          _
        $region32: #{tpu_custom_call.1} parent=11 // pred_fallthru
          _
        // Predicated region
        $region33: #{tpu_custom_call.1} parent=11 // pred_check
          %p421 = pneg %p179
        $region34: #{tpu_custom_call.1} parent=11 // pred_check_branch
          %423 = sbr.rel (%p421) target = $region36
        $region35: #{tpu_custom_call.1} parent=11 // pred_region
          %s425 = ssub.s32 2048, 2048
          %426 = vsyncadd [#allocation6], %s425
          %s427 = sshll.u32 [#allocation7], 4
          %s428 = int_to_ptr.vmem [resolvable:$true] %s427
          %433 = dma.hbm_to_vmem [thread:$0]  %s6, 2048, %s428, [#allocation6], 128, 128, 8
        $region36: #{tpu_custom_call.1} parent=11 // pred_fallthru
          _
        // Predicated region
        $region37: #{tpu_custom_call.1} parent=11 // pred_check
          %p434 = pneg %p200
        $region38: #{tpu_custom_call.1} parent=11 // pred_check_branch
          %436 = sbr.rel (%p434) target = $region40
        $region39: #{tpu_custom_call.1} parent=11 // pred_region
          _
        $region40: #{tpu_custom_call.1} parent=11 // pred_fallthru
          _
        // Predicated region
        $region41: #{tpu_custom_call.1} parent=11 // pred_check
          %p437 = pneg %p221
        $region42: #{tpu_custom_call.1} parent=11 // pred_check_branch
          %439 = sbr.rel (%p437) target = $region44
        $region43: #{tpu_custom_call.1} parent=11 // pred_region
          _
        $region44: #{tpu_custom_call.1} parent=11 // pred_fallthru
          _
        // Predicated region
        $region45: #{tpu_custom_call.1} parent=11 // pred_check
          %p440 = pneg %p242
        $region46: #{tpu_custom_call.1} parent=11 // pred_check_branch
          %442 = sbr.rel (%p440) target = $region48
        $region47: #{tpu_custom_call.1} parent=11 // pred_region
          _
        $region48: #{tpu_custom_call.1} parent=11 // pred_fallthru
          _
        // Predicated region
        $region49: #{tpu_custom_call.1} parent=11 // pred_check
          %p443 = pneg %p263
        $region50: #{tpu_custom_call.1} parent=11 // pred_check_branch
          %445 = sbr.rel (%p443) target = $region52
        $region51: #{tpu_custom_call.1} parent=11 // pred_region
          _
        $region52: #{tpu_custom_call.1} parent=11 // pred_fallthru
          _
        // Predicated region
        $region53: #{tpu_custom_call.1} parent=11 // pred_check
          %p446 = pneg %p284
        $region54: #{tpu_custom_call.1} parent=11 // pred_check_branch
          %448 = sbr.rel (%p446) target = $region56
        $region55: #{tpu_custom_call.1} parent=11 // pred_region
          _
        $region56: #{tpu_custom_call.1} parent=11 // pred_fallthru
          _
        // Predicated region
        $region57: #{tpu_custom_call.1} parent=11 // pred_check
          %p449 = pneg %p305
        $region58: #{tpu_custom_call.1} parent=11 // pred_check_branch
          %451 = sbr.rel (%p449) target = $region60
        $region59: #{tpu_custom_call.1} parent=11 // pred_region
          _
        $region60: #{tpu_custom_call.1} parent=11 // pred_fallthru
          _
        // Predicated region
        $region61: #{tpu_custom_call.1} parent=11 // pred_check
          %p452 = pneg %p326
        $region62: #{tpu_custom_call.1} parent=11 // pred_check_branch
          %454 = sbr.rel (%p452) target = $region64
        $region63: #{tpu_custom_call.1} parent=11 // pred_region
          %s456 = ssub.s32 512, 512
          %457 = vsyncadd [#allocation9], %s456
          %s458 = sshll.u32 [#allocation8], 4
          %s459 = int_to_ptr.vmem [resolvable:$true] %s458
          %464 = dma.hbm_to_vmem [thread:$0]  %s13, 512, %s459, [#allocation9], 128, 128, 8
        $region64: #{tpu_custom_call.1} parent=11 // pred_fallthru
          _
        // Predicated region
        $region65: #{tpu_custom_call.1} parent=11 // pred_check
          %p465 = pneg %p347
        $region66: #{tpu_custom_call.1} parent=11 // pred_check_branch
          %467 = sbr.rel (%p465) target = $region68
        $region67: #{tpu_custom_call.1} parent=11 // pred_region
          _
        $region68: #{tpu_custom_call.1} parent=11 // pred_fallthru
          _
      $region12: #{tpu_custom_call.1} parent=5 // pred_fallthru
        _
      %p468 = scmp.lt.s32.totalorder %s27, 2
      // Predicated region
      $region69: #{tpu_custom_call.1} parent=5 // pred_check
        %p469 = pneg %p468
      $region70: #{tpu_custom_call.1} parent=5 // pred_check_branch
        %471 = sbr.rel (%p469) target = $region72
      $region71: #{tpu_custom_call.1} parent=5 // pred_region
        // Predicated region
        $region73: #{tpu_custom_call.1} parent=71 // pred_check
          %p472 = pneg %p47
        $region74: #{tpu_custom_call.1} parent=71 // pred_check_branch
          %474 = sbr.rel (%p472) target = $region76
        $region75: #{tpu_custom_call.1} parent=71 // pred_region
          %p475 = scmp.lt.s32.totalorder %s27, 1
          %s476 = scalar_select %p475, %s27, 1
          %s477 = smul.addr %s476, 8
          %s478 = smul.addr %s477, 8
          %s479 = scalar_lea.vmem %s0, %s478
        $region76: #{tpu_custom_call.1} parent=71 // pred_fallthru
          _
      $region72: #{tpu_custom_call.1} parent=5 // pred_fallthru
        _
      %p480 = scmp.le.s32.totalorder 1, %s27
      %p481 = scmp.lt.s32.totalorder %s27, 3
      %p482 = pnand %p480, %p481
      %p483 = pneg %p482
      // Predicated region
      $region77: #{tpu_custom_call.1} parent=5 // pred_check
        _
      $region78: #{tpu_custom_call.1} parent=5 // pred_check_branch
        %485 = sbr.rel (%p482) target = $region80
      $region79: #{tpu_custom_call.1} parent=5 // pred_region
        %s486 = ssub.s32 %s27, 1
        // Predicated region
        $region81: #{tpu_custom_call.1} parent=79 // pred_check
          %p487 = pneg %p74
        $region82: #{tpu_custom_call.1} parent=79 // pred_check_branch
          %489 = sbr.rel (%p487) target = $region84
        $region83: #{tpu_custom_call.1} parent=79 // pred_region
          %490 = dma.done [#allocation3], 256
        $region84: #{tpu_custom_call.1} parent=79 // pred_fallthru
          _
        // Predicated region
        $region85: #{tpu_custom_call.1} parent=79 // pred_check
          %p491 = pneg %p116
        $region86: #{tpu_custom_call.1} parent=79 // pred_check_branch
          %493 = sbr.rel (%p491) target = $region88
        $region87: #{tpu_custom_call.1} parent=79 // pred_region
          %494 = dma.done [#allocation6], 2048
        $region88: #{tpu_custom_call.1} parent=79 // pred_fallthru
          _
        // Predicated region
        $region89: #{tpu_custom_call.1} parent=79 // pred_check
          %p495 = pneg %p179
        $region90: #{tpu_custom_call.1} parent=79 // pred_check_branch
          %497 = sbr.rel (%p495) target = $region92
        $region91: #{tpu_custom_call.1} parent=79 // pred_region
          %498 = dma.done [#allocation6], 2048
        $region92: #{tpu_custom_call.1} parent=79 // pred_fallthru
          _
        // Predicated region
        $region93: #{tpu_custom_call.1} parent=79 // pred_check
          %p499 = pneg %p326
        $region94: #{tpu_custom_call.1} parent=79 // pred_check_branch
          %501 = sbr.rel (%p499) target = $region96
        $region95: #{tpu_custom_call.1} parent=79 // pred_region
          %502 = dma.done [#allocation9], 512
        $region96: #{tpu_custom_call.1} parent=79 // pred_fallthru
          _
        %p503 = scmp.lt.s32.totalorder %s32, 1
        %s504 = scalar_select %p503, %s32, 1
        %s505 = smul.addr %s504, 8
        %s506 = smul.addr %s505, 8
        %s507 = scalar_lea.vmem %s0, %s506
        %p508 = pneg %p53
        %p509 = pneg %p50
        %p510 = pneg %p74
        %p511 = pneg %p71
        %p512 = pneg %p95
        %p513 = pneg %p92
        %p514 = pneg %p116
        %p515 = pneg %p113
        %p516 = pneg %p137
        %p517 = pneg %p134
        %p518 = pneg %p158
        %p519 = pneg %p155
        %p520 = pneg %p179
        %p521 = pneg %p176
        %p522 = pneg %p200
        %p523 = pneg %p197
        %p524 = pneg %p221
        %p525 = pneg %p218
        %p526 = pneg %p242
        %p527 = pneg %p239
        %p528 = pneg %p263
        %p529 = pneg %p260
        %p530 = pneg %p284
        %p531 = pneg %p281
        %p532 = pneg %p305
        %p533 = pneg %p302
        %p534 = pneg %p326
        %p535 = pneg %p323
        %p536 = pneg %p347
        %p537 = pneg %p344
        %p538 = pneg %p373
        %p539 = pneg %p370
        %s540 = sand.u32 %s360, 1
        %s541 = scalar_lea.sflag [#allocation4], %s540
        %s542 = sand.u32 %s360, 1
        %s543 = smul.addr %s542, 64
        %s544 = scalar_lea.vmem [#allocation10], %s543
        %p545 = scmp.lt.s32.totalorder %s32, 1
        %s546 = scalar_select %p545, %s32, 1
        %s547 = smul.addr %s546, 8
        %s548 = smul.addr %s547, 8
        %s549 = scalar_lea.vmem %s0, %s548
        %v550 = vld [vmem:[%s549] sm:$0xff]
        %v551 = vld [vmem:[%s549 + $0x8] sm:$0xff]
        %v552 = vld [vmem:[%s549 + $0x10] sm:$0xff]
        %v553 = vld [vmem:[%s549 + $0x18] sm:$0xff]
        %v554 = vld [vmem:[%s549 + $0x20] sm:$0xff]
        %v555 = vld [vmem:[%s549 + $0x28] sm:$0xff]
        %v556 = vld [vmem:[%s549 + $0x30] sm:$0xff]
        %v557 = vld [vmem:[%s549 + $0x38] sm:$0xff]
        %v558 = vld [vmem:[#allocation2] sm:$0xff]
        %v559 = vld [vmem:[#allocation2 + $0x8] sm:$0xff]
        %v560 = vld [vmem:[%s2] sm:$0xff]
        %v561 = vld [vmem:[%s2 + $0x8] sm:$0xff]
        %v562 = vld [vmem:[%s2 + $0x10] sm:$0xff]
        %v563 = vld [vmem:[%s2 + $0x18] sm:$0xff]
        %v564 = vld [vmem:[%s2 + $0x20] sm:$0xff]
        %v565 = vld [vmem:[%s2 + $0x28] sm:$0xff]
        %v566 = vld [vmem:[%s2 + $0x30] sm:$0xff]
        %v567 = vld [vmem:[%s2 + $0x38] sm:$0xff]
        %v568 = vld [vmem:[#allocation5] sm:$0xff]
        %v569 = vld [vmem:[#allocation5 + $0x8] sm:$0xff]
        %v570 = vld [vmem:[#allocation5 + $0x10] sm:$0xff]
        %v571 = vld [vmem:[#allocation5 + $0x18] sm:$0xff]
        %v572 = vld [vmem:[%s4] sm:$0xff]
        %v573 = vld [vmem:[%s4 + $0x8] sm:$0xff]
        %v574 = vld [vmem:[%s4 + $0x10] sm:$0xff]
        %v575 = vld [vmem:[%s4 + $0x18] sm:$0xff]
        %576 = vrot.lane.b32.xlu0 %v550, 17
        %v577 = vpop.permute.xlu0 %576
        %578 = vrot.lane.b32.xlu0 %v552, 17
        %v579 = vpop.permute.xlu0 %578
        %580 = vrot.lane.b32.xlu0 %v554, 17
        %v581 = vpop.permute.xlu0 %580
        %582 = vrot.lane.b32.xlu0 %v556, 17
        %v583 = vpop.permute.xlu0 %582
        %584 = vrot.lane.b32.xlu0 %v551, 17
        %v585 = vpop.permute.xlu0 %584
        %586 = vrot.lane.b32.xlu0 %v553, 17
        %v587 = vpop.permute.xlu0 %586
        %588 = vrot.lane.b32.xlu0 %v555, 17
        %v589 = vpop.permute.xlu0 %588
        %590 = vrot.lane.b32.xlu0 %v557, 17
        %v591 = vpop.permute.xlu0 %590
        %v592 = vlaneseq
        %v593 = vand.u32 %v592, 127
        %vm594 = vcmp.lt.s32.totalorder %v593, 17
        %v595 = vsel %vm594, %v577, %v585
        %v596 = vsel %vm594, %v579, %v587
        %v597 = vsel %vm594, %v581, %v589
        %v598 = vsel %vm594, %v583, %v591
        %v599 = vsel %vm594, %v585, %v577
        %v600 = vsel %vm594, %v587, %v579
        %v601 = vsel %vm594, %v589, %v581
        %v602 = vsel %vm594, %v591, %v583
        %v603 = vlaneseq
        %v604 = vshrl.u32 %v603, 7
        %v605 = vsub.s32 0, %v604
        %v606 = vrot.slane %v558, %v605
        %v607 = vlaneseq
        %v608 = vshrl.u32 %v607, 7
        %v609 = vsub.s32 0, %v608
        %v610 = vrot.slane %v559, %v609
        %v611 = vmul.f32 %v599, %v606
        %v612 = vmul.f32 %v595, %v610
        %v613 = vmul.f32 %v600, %v606
        %v614 = vmul.f32 %v596, %v610
        %v615 = vmul.f32 %v601, %v606
        %v616 = vmul.f32 %v597, %v610
        %v617 = vmul.f32 %v602, %v606
        %v618 = vmul.f32 %v598, %v610
        %619 = vrot.lane.b32.xlu0 %v550, 16
        %v620 = vpop.permute.xlu0 %619
        %621 = vrot.lane.b32.xlu0 %v552, 16
        %v622 = vpop.permute.xlu0 %621
        %623 = vrot.lane.b32.xlu0 %v554, 16
        %v624 = vpop.permute.xlu0 %623
        %625 = vrot.lane.b32.xlu0 %v556, 16
        %v626 = vpop.permute.xlu0 %625
        %627 = vrot.lane.b32.xlu0 %v551, 16
        %v628 = vpop.permute.xlu0 %627
        %629 = vrot.lane.b32.xlu0 %v553, 16
        %v630 = vpop.permute.xlu0 %629
        %631 = vrot.lane.b32.xlu0 %v555, 16
        %v632 = vpop.permute.xlu0 %631
        %633 = vrot.lane.b32.xlu0 %v557, 16
        %v634 = vpop.permute.xlu0 %633
        %vm635 = vcmp.lt.s32.totalorder %v593, 16
        %v636 = vsel %vm635, %v620, %v628
        %v637 = vsel %vm635, %v622, %v630
        %v638 = vsel %vm635, %v624, %v632
        %v639 = vsel %vm635, %v626, %v634
        %v640 = vsel %vm635, %v628, %v620
        %v641 = vsel %vm635, %v630, %v622
        %v642 = vsel %vm635, %v632, %v624
        %v643 = vsel %vm635, %v634, %v626
        %v644 = vlaneseq
        %v645 = vshrl.u32 %v644, 7
        %v646 = vsub.s32 1, %v645
        %v647 = vrot.slane %v558, %v646
        %v648 = vlaneseq
        %v649 = vshrl.u32 %v648, 7
        %v650 = vsub.s32 1, %v649
        %v651 = vrot.slane %v559, %v650
        %v652 = vmul.f32 %v640, %v647
        %v653 = vmul.f32 %v636, %v651
        %v654 = vmul.f32 %v641, %v647
        %v655 = vmul.f32 %v637, %v651
        %v656 = vmul.f32 %v642, %v647
        %v657 = vmul.f32 %v638, %v651
        %v658 = vmul.f32 %v643, %v647
        %v659 = vmul.f32 %v639, %v651
        %660 = vrot.lane.b32.xlu0 %v550, 15
        %v661 = vpop.permute.xlu0 %660
        %662 = vrot.lane.b32.xlu0 %v552, 15
        %v663 = vpop.permute.xlu0 %662
        %664 = vrot.lane.b32.xlu0 %v554, 15
        %v665 = vpop.permute.xlu0 %664
        %666 = vrot.lane.b32.xlu0 %v556, 15
        %v667 = vpop.permute.xlu0 %666
        %668 = vrot.lane.b32.xlu0 %v551, 15
        %v669 = vpop.permute.xlu0 %668
        %670 = vrot.lane.b32.xlu0 %v553, 15
        %v671 = vpop.permute.xlu0 %670
        %672 = vrot.lane.b32.xlu0 %v555, 15
        %v673 = vpop.permute.xlu0 %672
        %674 = vrot.lane.b32.xlu0 %v557, 15
        %v675 = vpop.permute.xlu0 %674
        %vm676 = vcmp.lt.s32.totalorder %v593, 15
        %v677 = vsel %vm676, %v661, %v669
        %v678 = vsel %vm676, %v663, %v671
        %v679 = vsel %vm676, %v665, %v673
        %v680 = vsel %vm676, %v667, %v675
        %v681 = vsel %vm676, %v669, %v661
        %v682 = vsel %vm676, %v671, %v663
        %v683 = vsel %vm676, %v673, %v665
        %v684 = vsel %vm676, %v675, %v667
        %v685 = vlaneseq
        %v686 = vshrl.u32 %v685, 7
        %v687 = vsub.s32 2, %v686
        %v688 = vrot.slane %v558, %v687
        %v689 = vlaneseq
        %v690 = vshrl.u32 %v689, 7
        %v691 = vsub.s32 2, %v690
        %v692 = vrot.slane %v559, %v691
        %v693 = vmul.f32 %v681, %v688
        %v694 = vmul.f32 %v677, %v692
        %v695 = vmul.f32 %v682, %v688
        %v696 = vmul.f32 %v678, %v692
        %v697 = vmul.f32 %v683, %v688
        %v698 = vmul.f32 %v679, %v692
        %v699 = vmul.f32 %v684, %v688
        %v700 = vmul.f32 %v680, %v692
        %701 = vrot.lane.b32.xlu0 %v550, 1
        %v702 = vpop.permute.xlu0 %701
        %703 = vrot.lane.b32.xlu0 %v552, 1
        %v704 = vpop.permute.xlu0 %703
        %705 = vrot.lane.b32.xlu0 %v554, 1
        %v706 = vpop.permute.xlu0 %705
        %707 = vrot.lane.b32.xlu0 %v556, 1
        %v708 = vpop.permute.xlu0 %707
        %709 = vrot.lane.b32.xlu0 %v551, 1
        %v710 = vpop.permute.xlu0 %709
        %711 = vrot.lane.b32.xlu0 %v553, 1
        %v712 = vpop.permute.xlu0 %711
        %713 = vrot.lane.b32.xlu0 %v555, 1
        %v714 = vpop.permute.xlu0 %713
        %715 = vrot.lane.b32.xlu0 %v557, 1
        %v716 = vpop.permute.xlu0 %715
        %vm717 = vcmp.lt.s32.totalorder %v593, 1
        %v718 = vsel %vm717, %v702, %v710
        %v719 = vsel %vm717, %v704, %v712
        %v720 = vsel %vm717, %v706, %v714
        %v721 = vsel %vm717, %v708, %v716
        %v722 = vsel %vm717, %v710, %v702
        %v723 = vsel %vm717, %v712, %v704
        %v724 = vsel %vm717, %v714, %v706
        %v725 = vsel %vm717, %v716, %v708
        %v726 = vlaneseq
        %v727 = vshrl.u32 %v726, 7
        %v728 = vsub.s32 3, %v727
        %v729 = vrot.slane %v558, %v728
        %v730 = vlaneseq
        %v731 = vshrl.u32 %v730, 7
        %v732 = vsub.s32 3, %v731
        %v733 = vrot.slane %v559, %v732
        %v734 = vmul.f32 %v722, %v729
        %v735 = vmul.f32 %v718, %v733
        %v736 = vmul.f32 %v723, %v729
        %v737 = vmul.f32 %v719, %v733
        %v738 = vmul.f32 %v724, %v729
        %v739 = vmul.f32 %v720, %v733
        %v740 = vmul.f32 %v725, %v729
        %v741 = vmul.f32 %v721, %v733
        %742 = vrot.lane.b32.xlu0 %v550, 127
        %v743 = vpop.permute.xlu0 %742
        %744 = vrot.lane.b32.xlu0 %v552, 127
        %v745 = vpop.permute.xlu0 %744
        %746 = vrot.lane.b32.xlu0 %v554, 127
        %v747 = vpop.permute.xlu0 %746
        %748 = vrot.lane.b32.xlu0 %v556, 127
        %v749 = vpop.permute.xlu0 %748
        %750 = vrot.lane.b32.xlu0 %v551, 127
        %v751 = vpop.permute.xlu0 %750
        %752 = vrot.lane.b32.xlu0 %v553, 127
        %v753 = vpop.permute.xlu0 %752
        %754 = vrot.lane.b32.xlu0 %v555, 127
        %v755 = vpop.permute.xlu0 %754
        %756 = vrot.lane.b32.xlu0 %v557, 127
        %v757 = vpop.permute.xlu0 %756
        %vm758 = vcmp.lt.s32.totalorder %v593, 127
        %v759 = vsel %vm758, %v743, %v751
        %v760 = vsel %vm758, %v745, %v753
        %v761 = vsel %vm758, %v747, %v755
        %v762 = vsel %vm758, %v749, %v757
        %v763 = vsel %vm758, %v751, %v743
        %v764 = vsel %vm758, %v753, %v745
        %v765 = vsel %vm758, %v755, %v747
        %v766 = vsel %vm758, %v757, %v749
        %v767 = vlaneseq
        %v768 = vshrl.u32 %v767, 7
        %v769 = vsub.s32 4, %v768
        %v770 = vrot.slane %v558, %v769
        %v771 = vlaneseq
        %v772 = vshrl.u32 %v771, 7
        %v773 = vsub.s32 4, %v772
        %v774 = vrot.slane %v559, %v773
        %v775 = vmul.f32 %v759, %v770
        %v776 = vmul.f32 %v763, %v774
        %v777 = vmul.f32 %v760, %v770
        %v778 = vmul.f32 %v764, %v774
        %v779 = vmul.f32 %v761, %v770
        %v780 = vmul.f32 %v765, %v774
        %v781 = vmul.f32 %v762, %v770
        %v782 = vmul.f32 %v766, %v774
        %783 = vrot.lane.b32.xlu0 %v550, 113
        %v784 = vpop.permute.xlu0 %783
        %785 = vrot.lane.b32.xlu0 %v552, 113
        %v786 = vpop.permute.xlu0 %785
        %787 = vrot.lane.b32.xlu0 %v554, 113
        %v788 = vpop.permute.xlu0 %787
        %789 = vrot.lane.b32.xlu0 %v556, 113
        %v790 = vpop.permute.xlu0 %789
        %791 = vrot.lane.b32.xlu0 %v551, 113
        %v792 = vpop.permute.xlu0 %791
        %793 = vrot.lane.b32.xlu0 %v553, 113
        %v794 = vpop.permute.xlu0 %793
        %795 = vrot.lane.b32.xlu0 %v555, 113
        %v796 = vpop.permute.xlu0 %795
        %797 = vrot.lane.b32.xlu0 %v557, 113
        %v798 = vpop.permute.xlu0 %797
        %vm799 = vcmp.lt.s32.totalorder %v593, 113
        %v800 = vsel %vm799, %v784, %v792
        %v801 = vsel %vm799, %v786, %v794
        %v802 = vsel %vm799, %v788, %v796
        %v803 = vsel %vm799, %v790, %v798
        %v804 = vsel %vm799, %v792, %v784
        %v805 = vsel %vm799, %v794, %v786
        %v806 = vsel %vm799, %v796, %v788
        %v807 = vsel %vm799, %v798, %v790
        %v808 = vlaneseq
        %v809 = vshrl.u32 %v808, 7
        %v810 = vsub.s32 5, %v809
        %v811 = vrot.slane %v558, %v810
        %v812 = vlaneseq
        %v813 = vshrl.u32 %v812, 7
        %v814 = vsub.s32 5, %v813
        %v815 = vrot.slane %v559, %v814
        %v816 = vmul.f32 %v800, %v811
        %v817 = vmul.f32 %v804, %v815
        %v818 = vmul.f32 %v801, %v811
        %v819 = vmul.f32 %v805, %v815
        %v820 = vmul.f32 %v802, %v811
        %v821 = vmul.f32 %v806, %v815
        %v822 = vmul.f32 %v803, %v811
        %v823 = vmul.f32 %v807, %v815
        %824 = vrot.lane.b32.xlu0 %v550, 112
        %v825 = vpop.permute.xlu0 %824
        %826 = vrot.lane.b32.xlu0 %v552, 112
        %v827 = vpop.permute.xlu0 %826
        %828 = vrot.lane.b32.xlu0 %v554, 112
        %v829 = vpop.permute.xlu0 %828
        %830 = vrot.lane.b32.xlu0 %v556, 112
        %v831 = vpop.permute.xlu0 %830
        %832 = vrot.lane.b32.xlu0 %v551, 112
        %v833 = vpop.permute.xlu0 %832
        %834 = vrot.lane.b32.xlu0 %v553, 112
        %v835 = vpop.permute.xlu0 %834
        %836 = vrot.lane.b32.xlu0 %v555, 112
        %v837 = vpop.permute.xlu0 %836
        %838 = vrot.lane.b32.xlu0 %v557, 112
        %v839 = vpop.permute.xlu0 %838
        %vm840 = vcmp.lt.s32.totalorder %v593, 112
        %v841 = vsel %vm840, %v825, %v833
        %v842 = vsel %vm840, %v827, %v835
        %v843 = vsel %vm840, %v829, %v837
        %v844 = vsel %vm840, %v831, %v839
        %v845 = vsel %vm840, %v833, %v825
        %v846 = vsel %vm840, %v835, %v827
        %v847 = vsel %vm840, %v837, %v829
        %v848 = vsel %vm840, %v839, %v831
        %v849 = vlaneseq
        %v850 = vshrl.u32 %v849, 7
        %v851 = vsub.s32 6, %v850
        %v852 = vrot.slane %v558, %v851
        %v853 = vlaneseq
        %v854 = vshrl.u32 %v853, 7
        %v855 = vsub.s32 6, %v854
        %v856 = vrot.slane %v559, %v855
        %v857 = vmul.f32 %v841, %v852
        %v858 = vmul.f32 %v845, %v856
        %v859 = vmul.f32 %v842, %v852
        %v860 = vmul.f32 %v846, %v856
        %v861 = vmul.f32 %v843, %v852
        %v862 = vmul.f32 %v847, %v856
        %v863 = vmul.f32 %v844, %v852
        %v864 = vmul.f32 %v848, %v856
        %865 = vrot.lane.b32.xlu0 %v550, 111
        %v866 = vpop.permute.xlu0 %865
        %867 = vrot.lane.b32.xlu0 %v552, 111
        %v868 = vpop.permute.xlu0 %867
        %869 = vrot.lane.b32.xlu0 %v554, 111
        %v870 = vpop.permute.xlu0 %869
        %871 = vrot.lane.b32.xlu0 %v556, 111
        %v872 = vpop.permute.xlu0 %871
        %873 = vrot.lane.b32.xlu0 %v551, 111
        %v874 = vpop.permute.xlu0 %873
        %875 = vrot.lane.b32.xlu0 %v553, 111
        %v876 = vpop.permute.xlu0 %875
        %877 = vrot.lane.b32.xlu0 %v555, 111
        %v878 = vpop.permute.xlu0 %877
        %879 = vrot.lane.b32.xlu0 %v557, 111
        %v880 = vpop.permute.xlu0 %879
        %vm881 = vcmp.lt.s32.totalorder %v593, 111
        %v882 = vsel %vm881, %v866, %v874
        %v883 = vsel %vm881, %v868, %v876
        %v884 = vsel %vm881, %v870, %v878
        %v885 = vsel %vm881, %v872, %v880
        %v886 = vsel %vm881, %v874, %v866
        %v887 = vsel %vm881, %v876, %v868
        %v888 = vsel %vm881, %v878, %v870
        %v889 = vsel %vm881, %v880, %v872
        %v890 = vlaneseq
        %v891 = vshrl.u32 %v890, 7
        %v892 = vsub.s32 7, %v891
        %v893 = vrot.slane %v558, %v892
        %v894 = vlaneseq
        %v895 = vshrl.u32 %v894, 7
        %v896 = vsub.s32 7, %v895
        %v897 = vrot.slane %v559, %v896
        %v898 = vmul.f32 %v882, %v893
        %v899 = vmul.f32 %v886, %v897
        %v900 = vmul.f32 %v883, %v893
        %v901 = vmul.f32 %v887, %v897
        %v902 = vmul.f32 %v884, %v893
        %v903 = vmul.f32 %v888, %v897
        %v904 = vmul.f32 %v885, %v893
        %v905 = vmul.f32 %v889, %v897
        %vm906 = vcmask 261120
        %v908 = vsel %vm906, %v568, 0
        %v911 = vsel %vm906, %v569, 0
        %v914 = vsel %vm906, %v570, 0
        %v917 = vsel %vm906, %v571, 0
        %919 = vmatprep.subr.mxu0 0.0
        %920 = vmatpush1.msra.mxu0 0.0
        %921 = vmatprep.subr.mxu0 0.0
        %922 = vmatpush1.msra.mxu0 0.0
        %923 = vmatprep.subr.mxu0 0.0
        %924 = vmatpush1.msra.mxu0 0.0
        %925 = vmatprep.subr.mxu0 0.0
        %926 = vmatpush1.msra.mxu0 0.0
        %927 = vmatprep.subr.mxu0 0.0
        %928 = vmatpush1.msra.mxu0 0.0
        %929 = vmatprep.subr.mxu0 0.0
        %930 = vmatpush1.msra.mxu0 0.0
        %931 = vmatprep.subr.mxu0 0.0
        %932 = vmatpush1.msra.mxu0 0.0
        %933 = vmatprep.subr.mxu0 0.0
        %934 = vmatpush1.msra.mxu0 0.0
        %935 = vmatprep.subr.mxu0 0.0
        %936 = vmatpush1.msra.mxu0 0.0
        %937 = vmatprep.subr.mxu0 0.0
        %938 = vmatpush1.msra.mxu0 0.0
        %939 = vmatprep.subr.mxu0 0.0
        %940 = vmatpush1.msra.mxu0 0.0
        %941 = vmatprep.subr.mxu0 0.0
        %942 = vmatpush1.msra.mxu0 0.0
        %943 = vmatprep.subr.mxu0 %v557
        %944 = vmatpush1.msra.mxu0 %v556
        %945 = vmatprep.subr.mxu0 %v555
        %946 = vmatpush1.msra.mxu0 %v554
        %947 = vmatprep.subr.mxu0 %v553
        %948 = vmatpush1.msra.mxu0 %v552
        %949 = vmatprep.subr.mxu0 %v551
        %950 = vmatpush1.msra.mxu0 %v550
        %951 = vmatprep.subr.mxu0 0.0
        %952 = vmatpush2.msra.mxu0 0.0
        %953 = vmatprep.subr.mxu0 0.0
        %954 = vmatpush2.msra.mxu0 0.0
        %955 = vmatprep.subr.mxu0 0.0
        %956 = vmatpush2.msra.mxu0 0.0
        %957 = vmatprep.subr.mxu0 0.0
        %958 = vmatpush2.msra.mxu0 0.0
        %959 = vmatprep.subr.mxu0 0.0
        %960 = vmatpush2.msra.mxu0 0.0
        %961 = vmatprep.subr.mxu0 0.0
        %962 = vmatpush2.msra.mxu0 0.0
        %963 = vmatprep.subr.mxu0 0.0
        %964 = vmatpush2.msra.mxu0 0.0
        %965 = vmatprep.subr.mxu0 0.0
        %966 = vmatpush2.msra.mxu0 0.0
        %967 = vmatprep.subr.mxu0 0.0
        %968 = vmatpush2.msra.mxu0 0.0
        %969 = vmatprep.subr.mxu0 0.0
        %970 = vmatpush2.msra.mxu0 0.0
        %971 = vmatprep.subr.mxu0 0.0
        %972 = vmatpush2.msra.mxu0 0.0
        %973 = vmatprep.subr.mxu0 0.0
        %974 = vmatpush2.msra.mxu0 0.0
        %975 = vmatprep.subr.mxu0 0.0
        %976 = vmatpush2.msra.mxu0 0.0
        %977 = vmatprep.subr.mxu0 0.0
        %978 = vmatpush2.msra.mxu0 0.0
        %979 = vmatprep.subr.mxu0 0.0
        %980 = vmatpush2.msra.mxu0 0.0
        %981 = vmatprep.subr.mxu0 0.0
        %982 = vmatpush2.msra.mxu0 0.0
        %983 = vmatprep.mubr.f32.mxu0 0.0
        %984 = vmatmul.mubr.f32.gmra.mxu0 %v908
        %v985 = vpop.f32.mrf.mxu0
        %v986 = vadd.f32 0.0, %v985
        %v987 = vpop.f32.mrf.mxu0
        %v988 = vadd.f32 0.0, %v987
        %989 = vmatprep.mubr.f32.mxu0 0.0
        %990 = vmatmul.mubr.f32.gmra.mxu0 %v911
        %v991 = vpop.f32.mrf.mxu0
        %v992 = vadd.f32 0.0, %v991
        %v993 = vpop.f32.mrf.mxu0
        %v994 = vadd.f32 0.0, %v993
        %995 = vmatprep.mubr.f32.mxu0 0.0
        %996 = vmatmul.mubr.f32.gmra.mxu0 %v914
        %v997 = vpop.f32.mrf.mxu0
        %v998 = vadd.f32 0.0, %v997
        %v999 = vpop.f32.mrf.mxu0
        %v1000 = vadd.f32 0.0, %v999
        %1001 = vmatprep.mubr.f32.mxu0 0.0
        %1002 = vmatmul.mubr.f32.gmra.mxu0 %v917
        %v1003 = vpop.f32.mrf.mxu0
        %v1004 = vadd.f32 0.0, %v1003
        %v1005 = vpop.f32.mrf.mxu0
        %v1006 = vadd.f32 0.0, %v1005
        %1007 = vdwg.mxu0
        %1008 = vmatprep.subr.mxu0 %v741
        %1009 = vmatpush1.msra.mxu0 %v740
        %1010 = vmatprep.subr.mxu0 %v739
        %1011 = vmatpush1.msra.mxu0 %v738
        %1012 = vmatprep.subr.mxu0 %v737
        %1013 = vmatpush1.msra.mxu0 %v736
        %1014 = vmatprep.subr.mxu0 %v735
        %1015 = vmatpush1.msra.mxu0 %v734
        %1016 = vmatprep.subr.mxu0 %v700
        %1017 = vmatpush1.msra.mxu0 %v699
        %1018 = vmatprep.subr.mxu0 %v698
        %1019 = vmatpush1.msra.mxu0 %v697
        %1020 = vmatprep.subr.mxu0 %v696
        %1021 = vmatpush1.msra.mxu0 %v695
        %1022 = vmatprep.subr.mxu0 %v694
        %1023 = vmatpush1.msra.mxu0 %v693
        %1024 = vmatprep.subr.mxu0 %v659
        %1025 = vmatpush1.msra.mxu0 %v658
        %1026 = vmatprep.subr.mxu0 %v657
        %1027 = vmatpush1.msra.mxu0 %v656
        %1028 = vmatprep.subr.mxu0 %v655
        %1029 = vmatpush1.msra.mxu0 %v654
        %1030 = vmatprep.subr.mxu0 %v653
        %1031 = vmatpush1.msra.mxu0 %v652
        %1032 = vmatprep.subr.mxu0 %v618
        %1033 = vmatpush1.msra.mxu0 %v617
        %1034 = vmatprep.subr.mxu0 %v616
        %1035 = vmatpush1.msra.mxu0 %v615
        %1036 = vmatprep.subr.mxu0 %v614
        %1037 = vmatpush1.msra.mxu0 %v613
        %1038 = vmatprep.subr.mxu0 %v612
        %1039 = vmatpush1.msra.mxu0 %v611
        %1040 = vmatprep.subr.mxu0 %v905
        %1041 = vmatpush2.msra.mxu0 %v904
        %1042 = vmatprep.subr.mxu0 %v903
        %1043 = vmatpush2.msra.mxu0 %v902
        %1044 = vmatprep.subr.mxu0 %v901
        %1045 = vmatpush2.msra.mxu0 %v900
        %1046 = vmatprep.subr.mxu0 %v899
        %1047 = vmatpush2.msra.mxu0 %v898
        %1048 = vmatprep.subr.mxu0 %v864
        %1049 = vmatpush2.msra.mxu0 %v863
        %1050 = vmatprep.subr.mxu0 %v862
        %1051 = vmatpush2.msra.mxu0 %v861
        %1052 = vmatprep.subr.mxu0 %v860
        %1053 = vmatpush2.msra.mxu0 %v859
        %1054 = vmatprep.subr.mxu0 %v858
        %1055 = vmatpush2.msra.mxu0 %v857
        %1056 = vmatprep.subr.mxu0 %v823
        %1057 = vmatpush2.msra.mxu0 %v822
        %1058 = vmatprep.subr.mxu0 %v821
        %1059 = vmatpush2.msra.mxu0 %v820
        %1060 = vmatprep.subr.mxu0 %v819
        %1061 = vmatpush2.msra.mxu0 %v818
        %1062 = vmatprep.subr.mxu0 %v817
        %1063 = vmatpush2.msra.mxu0 %v816
        %1064 = vmatprep.subr.mxu0 %v782
        %1065 = vmatpush2.msra.mxu0 %v781
        %1066 = vmatprep.subr.mxu0 %v780
        %1067 = vmatpush2.msra.mxu0 %v779
        %1068 = vmatprep.subr.mxu0 %v778
        %1069 = vmatpush2.msra.mxu0 %v777
        %1070 = vmatprep.subr.mxu0 %v776
        %1071 = vmatpush2.msra.mxu0 %v775
        %1072 = vmatprep.mubr.f32.mxu0 %v561
        %1073 = vmatmul.mubr.f32.gmra.mxu0 %v560
        %v1074 = vpop.f32.mrf.mxu0
        %v1075 = vadd.f32 %v986, %v1074
        %v1076 = vpop.f32.mrf.mxu0
        %v1077 = vadd.f32 %v988, %v1076
        %1078 = vmatprep.mubr.f32.mxu0 %v563
        %1079 = vmatmul.mubr.f32.gmra.mxu0 %v562
        %v1080 = vpop.f32.mrf.mxu0
        %v1081 = vadd.f32 %v992, %v1080
        %v1082 = vpop.f32.mrf.mxu0
        %v1083 = vadd.f32 %v994, %v1082
        %1084 = vmatprep.mubr.f32.mxu0 %v565
        %1085 = vmatmul.mubr.f32.gmra.mxu0 %v564
        %v1086 = vpop.f32.mrf.mxu0
        %v1087 = vadd.f32 %v998, %v1086
        %v1088 = vpop.f32.mrf.mxu0
        %v1089 = vadd.f32 %v1000, %v1088
        %1090 = vmatprep.mubr.f32.mxu0 %v567
        %1091 = vmatmul.mubr.f32.gmra.mxu0 %v566
        %v1092 = vpop.f32.mrf.mxu0
        %v1093 = vadd.f32 %v1004, %v1092
        %v1094 = vpop.f32.mrf.mxu0
        %v1095 = vadd.f32 %v1006, %v1094
        %1096 = vdwg.mxu0
        %1098 = vset.pattern.permute.xlu0 0
        %1099 = vperm.xlu0 %1098, %v572
        %v1100 = vpop.permute.xlu0 %1099
        %1103 = vset.pattern.permute.xlu0 0
        %1104 = vperm.xlu0 %1103, %v573
        %v1105 = vpop.permute.xlu0 %1104
        %1108 = vset.pattern.permute.xlu0 0
        %1109 = vperm.xlu0 %1108, %v574
        %v1110 = vpop.permute.xlu0 %1109
        %1113 = vset.pattern.permute.xlu0 0
        %1114 = vperm.xlu0 %1113, %v575
        %v1115 = vpop.permute.xlu0 %1114
        %v1117 = vadd.f32 %v1075, %v1100
        %v1118 = vadd.f32 %v1077, %v1100
        %v1119 = vadd.f32 %v1081, %v1105
        %v1120 = vadd.f32 %v1083, %v1105
        %v1121 = vadd.f32 %v1087, %v1110
        %v1122 = vadd.f32 %v1089, %v1110
        %v1123 = vadd.f32 %v1093, %v1115
        %v1124 = vadd.f32 %v1095, %v1115
        %v1125 = vmax.f32 %v1117, 0.0
        %v1126 = vmax.f32 %v1118, 0.0
        %v1127 = vmax.f32 %v1119, 0.0
        %v1128 = vmax.f32 %v1120, 0.0
        %v1129 = vmax.f32 %v1121, 0.0
        %v1130 = vmax.f32 %v1122, 0.0
        %v1131 = vmax.f32 %v1123, 0.0
        %v1132 = vmax.f32 %v1124, 0.0
        %v1133 = vld [vmem:[%s5] sm:$0xff]
        %v1134 = vld [vmem:[%s5 + $0x8] sm:$0xff]
        %v1135 = vld [vmem:[%s5 + $0x10] sm:$0xff]
        %v1136 = vld [vmem:[%s5 + $0x18] sm:$0xff]
        %v1137 = vld [vmem:[%s5 + $0x20] sm:$0xff]
        %v1138 = vld [vmem:[%s5 + $0x28] sm:$0xff]
        %v1139 = vld [vmem:[%s5 + $0x30] sm:$0xff]
        %v1140 = vld [vmem:[%s5 + $0x38] sm:$0xff]
        %v1141 = vld [vmem:[#allocation7] sm:$0xff]
        %v1142 = vld [vmem:[#allocation7 + $0x8] sm:$0xff]
        %v1143 = vld [vmem:[#allocation7 + $0x10] sm:$0xff]
        %v1144 = vld [vmem:[#allocation7 + $0x18] sm:$0xff]
        %v1145 = vld [vmem:[%s7] sm:$0xff]
        %v1146 = vld [vmem:[%s7 + $0x8] sm:$0xff]
        %v1147 = vld [vmem:[%s7 + $0x10] sm:$0xff]
        %v1148 = vld [vmem:[%s7 + $0x18] sm:$0xff]
        %1149 = vrot.lane.b32.xlu0 %v1125, 17
        %v1150 = vpop.permute.xlu0 %1149
        %1151 = vrot.lane.b32.xlu0 %v1127, 17
        %v1152 = vpop.permute.xlu0 %1151
        %1153 = vrot.lane.b32.xlu0 %v1129, 17
        %v1154 = vpop.permute.xlu0 %1153
        %1155 = vrot.lane.b32.xlu0 %v1131, 17
        %v1156 = vpop.permute.xlu0 %1155
        %1157 = vrot.lane.b32.xlu0 %v1126, 17
        %v1158 = vpop.permute.xlu0 %1157
        %1159 = vrot.lane.b32.xlu0 %v1128, 17
        %v1160 = vpop.permute.xlu0 %1159
        %1161 = vrot.lane.b32.xlu0 %v1130, 17
        %v1162 = vpop.permute.xlu0 %1161
        %1163 = vrot.lane.b32.xlu0 %v1132, 17
        %v1164 = vpop.permute.xlu0 %1163
        %v1165 = vsel %vm594, %v1150, %v1158
        %v1166 = vsel %vm594, %v1152, %v1160
        %v1167 = vsel %vm594, %v1154, %v1162
        %v1168 = vsel %vm594, %v1156, %v1164
        %v1169 = vsel %vm594, %v1158, %v1150
        %v1170 = vsel %vm594, %v1160, %v1152
        %v1171 = vsel %vm594, %v1162, %v1154
        %v1172 = vsel %vm594, %v1164, %v1156
        %v1173 = vmul.f32 %v1169, %v606
        %v1174 = vmul.f32 %v1165, %v610
        %v1175 = vmul.f32 %v1170, %v606
        %v1176 = vmul.f32 %v1166, %v610
        %v1177 = vmul.f32 %v1171, %v606
        %v1178 = vmul.f32 %v1167, %v610
        %v1179 = vmul.f32 %v1172, %v606
        %v1180 = vmul.f32 %v1168, %v610
        %1181 = vrot.lane.b32.xlu0 %v1125, 16
        %v1182 = vpop.permute.xlu0 %1181
        %1183 = vrot.lane.b32.xlu0 %v1127, 16
        %v1184 = vpop.permute.xlu0 %1183
        %1185 = vrot.lane.b32.xlu0 %v1129, 16
        %v1186 = vpop.permute.xlu0 %1185
        %1187 = vrot.lane.b32.xlu0 %v1131, 16
        %v1188 = vpop.permute.xlu0 %1187
        %1189 = vrot.lane.b32.xlu0 %v1126, 16
        %v1190 = vpop.permute.xlu0 %1189
        %1191 = vrot.lane.b32.xlu0 %v1128, 16
        %v1192 = vpop.permute.xlu0 %1191
        %1193 = vrot.lane.b32.xlu0 %v1130, 16
        %v1194 = vpop.permute.xlu0 %1193
        %1195 = vrot.lane.b32.xlu0 %v1132, 16
        %v1196 = vpop.permute.xlu0 %1195
        %v1197 = vsel %vm635, %v1182, %v1190
        %v1198 = vsel %vm635, %v1184, %v1192
        %v1199 = vsel %vm635, %v1186, %v1194
        %v1200 = vsel %vm635, %v1188, %v1196
        %v1201 = vsel %vm635, %v1190, %v1182
        %v1202 = vsel %vm635, %v1192, %v1184
        %v1203 = vsel %vm635, %v1194, %v1186
        %v1204 = vsel %vm635, %v1196, %v1188
        %v1205 = vmul.f32 %v1201, %v647
        %v1206 = vmul.f32 %v1197, %v651
        %v1207 = vmul.f32 %v1202, %v647
        %v1208 = vmul.f32 %v1198, %v651
        %v1209 = vmul.f32 %v1203, %v647
        %v1210 = vmul.f32 %v1199, %v651
        %v1211 = vmul.f32 %v1204, %v647
        %v1212 = vmul.f32 %v1200, %v651
        %1213 = vrot.lane.b32.xlu0 %v1125, 15
        %v1214 = vpop.permute.xlu0 %1213
        %1215 = vrot.lane.b32.xlu0 %v1127, 15
        %v1216 = vpop.permute.xlu0 %1215
        %1217 = vrot.lane.b32.xlu0 %v1129, 15
        %v1218 = vpop.permute.xlu0 %1217
        %1219 = vrot.lane.b32.xlu0 %v1131, 15
        %v1220 = vpop.permute.xlu0 %1219
        %1221 = vrot.lane.b32.xlu0 %v1126, 15
        %v1222 = vpop.permute.xlu0 %1221
        %1223 = vrot.lane.b32.xlu0 %v1128, 15
        %v1224 = vpop.permute.xlu0 %1223
        %1225 = vrot.lane.b32.xlu0 %v1130, 15
        %v1226 = vpop.permute.xlu0 %1225
        %1227 = vrot.lane.b32.xlu0 %v1132, 15
        %v1228 = vpop.permute.xlu0 %1227
        %v1229 = vsel %vm676, %v1214, %v1222
        %v1230 = vsel %vm676, %v1216, %v1224
        %v1231 = vsel %vm676, %v1218, %v1226
        %v1232 = vsel %vm676, %v1220, %v1228
        %v1233 = vsel %vm676, %v1222, %v1214
        %v1234 = vsel %vm676, %v1224, %v1216
        %v1235 = vsel %vm676, %v1226, %v1218
        %v1236 = vsel %vm676, %v1228, %v1220
        %v1237 = vmul.f32 %v1233, %v688
        %v1238 = vmul.f32 %v1229, %v692
        %v1239 = vmul.f32 %v1234, %v688
        %v1240 = vmul.f32 %v1230, %v692
        %v1241 = vmul.f32 %v1235, %v688
        %v1242 = vmul.f32 %v1231, %v692
        %v1243 = vmul.f32 %v1236, %v688
        %v1244 = vmul.f32 %v1232, %v692
        %1245 = vrot.lane.b32.xlu0 %v1125, 1
        %v1246 = vpop.permute.xlu0 %1245
        %1247 = vrot.lane.b32.xlu0 %v1127, 1
        %v1248 = vpop.permute.xlu0 %1247
        %1249 = vrot.lane.b32.xlu0 %v1129, 1
        %v1250 = vpop.permute.xlu0 %1249
        %1251 = vrot.lane.b32.xlu0 %v1131, 1
        %v1252 = vpop.permute.xlu0 %1251
        %1253 = vrot.lane.b32.xlu0 %v1126, 1
        %v1254 = vpop.permute.xlu0 %1253
        %1255 = vrot.lane.b32.xlu0 %v1128, 1
        %v1256 = vpop.permute.xlu0 %1255
        %1257 = vrot.lane.b32.xlu0 %v1130, 1
        %v1258 = vpop.permute.xlu0 %1257
        %1259 = vrot.lane.b32.xlu0 %v1132, 1
        %v1260 = vpop.permute.xlu0 %1259
        %v1261 = vsel %vm717, %v1246, %v1254
        %v1262 = vsel %vm717, %v1248, %v1256
        %v1263 = vsel %vm717, %v1250, %v1258
        %v1264 = vsel %vm717, %v1252, %v1260
        %v1265 = vsel %vm717, %v1254, %v1246
        %v1266 = vsel %vm717, %v1256, %v1248
        %v1267 = vsel %vm717, %v1258, %v1250
        %v1268 = vsel %vm717, %v1260, %v1252
        %v1269 = vmul.f32 %v1265, %v729
        %v1270 = vmul.f32 %v1261, %v733
        %v1271 = vmul.f32 %v1266, %v729
        %v1272 = vmul.f32 %v1262, %v733
        %v1273 = vmul.f32 %v1267, %v729
        %v1274 = vmul.f32 %v1263, %v733
        %v1275 = vmul.f32 %v1268, %v729
        %v1276 = vmul.f32 %v1264, %v733
        %1277 = vrot.lane.b32.xlu0 %v1125, 127
        %v1278 = vpop.permute.xlu0 %1277
        %1279 = vrot.lane.b32.xlu0 %v1127, 127
        %v1280 = vpop.permute.xlu0 %1279
        %1281 = vrot.lane.b32.xlu0 %v1129, 127
        %v1282 = vpop.permute.xlu0 %1281
        %1283 = vrot.lane.b32.xlu0 %v1131, 127
        %v1284 = vpop.permute.xlu0 %1283
        %1285 = vrot.lane.b32.xlu0 %v1126, 127
        %v1286 = vpop.permute.xlu0 %1285
        %1287 = vrot.lane.b32.xlu0 %v1128, 127
        %v1288 = vpop.permute.xlu0 %1287
        %1289 = vrot.lane.b32.xlu0 %v1130, 127
        %v1290 = vpop.permute.xlu0 %1289
        %1291 = vrot.lane.b32.xlu0 %v1132, 127
        %v1292 = vpop.permute.xlu0 %1291
        %v1293 = vsel %vm758, %v1278, %v1286
        %v1294 = vsel %vm758, %v1280, %v1288
        %v1295 = vsel %vm758, %v1282, %v1290
        %v1296 = vsel %vm758, %v1284, %v1292
        %v1297 = vsel %vm758, %v1286, %v1278
        %v1298 = vsel %vm758, %v1288, %v1280
        %v1299 = vsel %vm758, %v1290, %v1282
        %v1300 = vsel %vm758, %v1292, %v1284
        %v1301 = vmul.f32 %v1293, %v770
        %v1302 = vmul.f32 %v1297, %v774
        %v1303 = vmul.f32 %v1294, %v770
        %v1304 = vmul.f32 %v1298, %v774
        %v1305 = vmul.f32 %v1295, %v770
        %v1306 = vmul.f32 %v1299, %v774
        %v1307 = vmul.f32 %v1296, %v770
        %v1308 = vmul.f32 %v1300, %v774
        %1309 = vrot.lane.b32.xlu0 %v1125, 113
        %v1310 = vpop.permute.xlu0 %1309
        %1311 = vrot.lane.b32.xlu0 %v1127, 113
        %v1312 = vpop.permute.xlu0 %1311
        %1313 = vrot.lane.b32.xlu0 %v1129, 113
        %v1314 = vpop.permute.xlu0 %1313
        %1315 = vrot.lane.b32.xlu0 %v1131, 113
        %v1316 = vpop.permute.xlu0 %1315
        %1317 = vrot.lane.b32.xlu0 %v1126, 113
        %v1318 = vpop.permute.xlu0 %1317
        %1319 = vrot.lane.b32.xlu0 %v1128, 113
        %v1320 = vpop.permute.xlu0 %1319
        %1321 = vrot.lane.b32.xlu0 %v1130, 113
        %v1322 = vpop.permute.xlu0 %1321
        %1323 = vrot.lane.b32.xlu0 %v1132, 113
        %v1324 = vpop.permute.xlu0 %1323
        %v1325 = vsel %vm799, %v1310, %v1318
        %v1326 = vsel %vm799, %v1312, %v1320
        %v1327 = vsel %vm799, %v1314, %v1322
        %v1328 = vsel %vm799, %v1316, %v1324
        %v1329 = vsel %vm799, %v1318, %v1310
        %v1330 = vsel %vm799, %v1320, %v1312
        %v1331 = vsel %vm799, %v1322, %v1314
        %v1332 = vsel %vm799, %v1324, %v1316
        %v1333 = vmul.f32 %v1325, %v811
        %v1334 = vmul.f32 %v1329, %v815
        %v1335 = vmul.f32 %v1326, %v811
        %v1336 = vmul.f32 %v1330, %v815
        %v1337 = vmul.f32 %v1327, %v811
        %v1338 = vmul.f32 %v1331, %v815
        %v1339 = vmul.f32 %v1328, %v811
        %v1340 = vmul.f32 %v1332, %v815
        %1341 = vrot.lane.b32.xlu0 %v1125, 112
        %v1342 = vpop.permute.xlu0 %1341
        %1343 = vrot.lane.b32.xlu0 %v1127, 112
        %v1344 = vpop.permute.xlu0 %1343
        %1345 = vrot.lane.b32.xlu0 %v1129, 112
        %v1346 = vpop.permute.xlu0 %1345
        %1347 = vrot.lane.b32.xlu0 %v1131, 112
        %v1348 = vpop.permute.xlu0 %1347
        %1349 = vrot.lane.b32.xlu0 %v1126, 112
        %v1350 = vpop.permute.xlu0 %1349
        %1351 = vrot.lane.b32.xlu0 %v1128, 112
        %v1352 = vpop.permute.xlu0 %1351
        %1353 = vrot.lane.b32.xlu0 %v1130, 112
        %v1354 = vpop.permute.xlu0 %1353
        %1355 = vrot.lane.b32.xlu0 %v1132, 112
        %v1356 = vpop.permute.xlu0 %1355
        %v1357 = vsel %vm840, %v1342, %v1350
        %v1358 = vsel %vm840, %v1344, %v1352
        %v1359 = vsel %vm840, %v1346, %v1354
        %v1360 = vsel %vm840, %v1348, %v1356
        %v1361 = vsel %vm840, %v1350, %v1342
        %v1362 = vsel %vm840, %v1352, %v1344
        %v1363 = vsel %vm840, %v1354, %v1346
        %v1364 = vsel %vm840, %v1356, %v1348
        %v1365 = vmul.f32 %v1357, %v852
        %v1366 = vmul.f32 %v1361, %v856
        %v1367 = vmul.f32 %v1358, %v852
        %v1368 = vmul.f32 %v1362, %v856
        %v1369 = vmul.f32 %v1359, %v852
        %v1370 = vmul.f32 %v1363, %v856
        %v1371 = vmul.f32 %v1360, %v852
        %v1372 = vmul.f32 %v1364, %v856
        %1373 = vrot.lane.b32.xlu0 %v1125, 111
        %v1374 = vpop.permute.xlu0 %1373
        %1375 = vrot.lane.b32.xlu0 %v1127, 111
        %v1376 = vpop.permute.xlu0 %1375
        %1377 = vrot.lane.b32.xlu0 %v1129, 111
        %v1378 = vpop.permute.xlu0 %1377
        %1379 = vrot.lane.b32.xlu0 %v1131, 111
        %v1380 = vpop.permute.xlu0 %1379
        %1381 = vrot.lane.b32.xlu0 %v1126, 111
        %v1382 = vpop.permute.xlu0 %1381
        %1383 = vrot.lane.b32.xlu0 %v1128, 111
        %v1384 = vpop.permute.xlu0 %1383
        %1385 = vrot.lane.b32.xlu0 %v1130, 111
        %v1386 = vpop.permute.xlu0 %1385
        %1387 = vrot.lane.b32.xlu0 %v1132, 111
        %v1388 = vpop.permute.xlu0 %1387
        %v1389 = vsel %vm881, %v1374, %v1382
        %v1390 = vsel %vm881, %v1376, %v1384
        %v1391 = vsel %vm881, %v1378, %v1386
        %v1392 = vsel %vm881, %v1380, %v1388
        %v1393 = vsel %vm881, %v1382, %v1374
        %v1394 = vsel %vm881, %v1384, %v1376
        %v1395 = vsel %vm881, %v1386, %v1378
        %v1396 = vsel %vm881, %v1388, %v1380
        %v1397 = vmul.f32 %v1389, %v893
        %v1398 = vmul.f32 %v1393, %v897
        %v1399 = vmul.f32 %v1390, %v893
        %v1400 = vmul.f32 %v1394, %v897
        %v1401 = vmul.f32 %v1391, %v893
        %v1402 = vmul.f32 %v1395, %v897
        %v1403 = vmul.f32 %v1392, %v893
        %v1404 = vmul.f32 %v1396, %v897
        %v1406 = vsel %vm906, %v1141, 0
        %v1409 = vsel %vm906, %v1142, 0
        %v1412 = vsel %vm906, %v1143, 0
        %v1415 = vsel %vm906, %v1144, 0
        %1417 = vmatprep.subr.mxu0 0.0
        %1418 = vmatpush1.msra.mxu0 0.0
        %1419 = vmatprep.subr.mxu0 0.0
        %1420 = vmatpush1.msra.mxu0 0.0
        %1421 = vmatprep.subr.mxu0 0.0
        %1422 = vmatpush1.msra.mxu0 0.0
        %1423 = vmatprep.subr.mxu0 0.0
        %1424 = vmatpush1.msra.mxu0 0.0
        %1425 = vmatprep.subr.mxu0 0.0
        %1426 = vmatpush1.msra.mxu0 0.0
        %1427 = vmatprep.subr.mxu0 0.0
        %1428 = vmatpush1.msra.mxu0 0.0
        %1429 = vmatprep.subr.mxu0 0.0
        %1430 = vmatpush1.msra.mxu0 0.0
        %1431 = vmatprep.subr.mxu0 0.0
        %1432 = vmatpush1.msra.mxu0 0.0
        %1433 = vmatprep.subr.mxu0 0.0
        %1434 = vmatpush1.msra.mxu0 0.0
        %1435 = vmatprep.subr.mxu0 0.0
        %1436 = vmatpush1.msra.mxu0 0.0
        %1437 = vmatprep.subr.mxu0 0.0
        %1438 = vmatpush1.msra.mxu0 0.0
        %1439 = vmatprep.subr.mxu0 0.0
        %1440 = vmatpush1.msra.mxu0 0.0
        %1441 = vmatprep.subr.mxu0 %v1132
        %1442 = vmatpush1.msra.mxu0 %v1131
        %1443 = vmatprep.subr.mxu0 %v1130
        %1444 = vmatpush1.msra.mxu0 %v1129
        %1445 = vmatprep.subr.mxu0 %v1128
        %1446 = vmatpush1.msra.mxu0 %v1127
        %1447 = vmatprep.subr.mxu0 %v1126
        %1448 = vmatpush1.msra.mxu0 %v1125
        %1449 = vmatprep.subr.mxu0 0.0
        %1450 = vmatpush2.msra.mxu0 0.0
        %1451 = vmatprep.subr.mxu0 0.0
        %1452 = vmatpush2.msra.mxu0 0.0
        %1453 = vmatprep.subr.mxu0 0.0
        %1454 = vmatpush2.msra.mxu0 0.0
        %1455 = vmatprep.subr.mxu0 0.0
        %1456 = vmatpush2.msra.mxu0 0.0
        %1457 = vmatprep.subr.mxu0 0.0
        %1458 = vmatpush2.msra.mxu0 0.0
        %1459 = vmatprep.subr.mxu0 0.0
        %1460 = vmatpush2.msra.mxu0 0.0
        %1461 = vmatprep.subr.mxu0 0.0
        %1462 = vmatpush2.msra.mxu0 0.0
        %1463 = vmatprep.subr.mxu0 0.0
        %1464 = vmatpush2.msra.mxu0 0.0
        %1465 = vmatprep.subr.mxu0 0.0
        %1466 = vmatpush2.msra.mxu0 0.0
        %1467 = vmatprep.subr.mxu0 0.0
        %1468 = vmatpush2.msra.mxu0 0.0
        %1469 = vmatprep.subr.mxu0 0.0
        %1470 = vmatpush2.msra.mxu0 0.0
        %1471 = vmatprep.subr.mxu0 0.0
        %1472 = vmatpush2.msra.mxu0 0.0
        %1473 = vmatprep.subr.mxu0 0.0
        %1474 = vmatpush2.msra.mxu0 0.0
        %1475 = vmatprep.subr.mxu0 0.0
        %1476 = vmatpush2.msra.mxu0 0.0
        %1477 = vmatprep.subr.mxu0 0.0
        %1478 = vmatpush2.msra.mxu0 0.0
        %1479 = vmatprep.subr.mxu0 0.0
        %1480 = vmatpush2.msra.mxu0 0.0
        %1481 = vmatprep.mubr.f32.mxu0 0.0
        %1482 = vmatmul.mubr.f32.gmra.mxu0 %v1406
        %v1483 = vpop.f32.mrf.mxu0
        %v1484 = vadd.f32 0.0, %v1483
        %v1485 = vpop.f32.mrf.mxu0
        %v1486 = vadd.f32 0.0, %v1485
        %1487 = vmatprep.mubr.f32.mxu0 0.0
        %1488 = vmatmul.mubr.f32.gmra.mxu0 %v1409
        %v1489 = vpop.f32.mrf.mxu0
        %v1490 = vadd.f32 0.0, %v1489
        %v1491 = vpop.f32.mrf.mxu0
        %v1492 = vadd.f32 0.0, %v1491
        %1493 = vmatprep.mubr.f32.mxu0 0.0
        %1494 = vmatmul.mubr.f32.gmra.mxu0 %v1412
        %v1495 = vpop.f32.mrf.mxu0
        %v1496 = vadd.f32 0.0, %v1495
        %v1497 = vpop.f32.mrf.mxu0
        %v1498 = vadd.f32 0.0, %v1497
        %1499 = vmatprep.mubr.f32.mxu0 0.0
        %1500 = vmatmul.mubr.f32.gmra.mxu0 %v1415
        %v1501 = vpop.f32.mrf.mxu0
        %v1502 = vadd.f32 0.0, %v1501
        %v1503 = vpop.f32.mrf.mxu0
        %v1504 = vadd.f32 0.0, %v1503
        %1505 = vdwg.mxu0
        %1506 = vmatprep.subr.mxu0 %v1276
        %1507 = vmatpush1.msra.mxu0 %v1275
        %1508 = vmatprep.subr.mxu0 %v1274
        %1509 = vmatpush1.msra.mxu0 %v1273
        %1510 = vmatprep.subr.mxu0 %v1272
        %1511 = vmatpush1.msra.mxu0 %v1271
        %1512 = vmatprep.subr.mxu0 %v1270
        %1513 = vmatpush1.msra.mxu0 %v1269
        %1514 = vmatprep.subr.mxu0 %v1244
        %1515 = vmatpush1.msra.mxu0 %v1243
        %1516 = vmatprep.subr.mxu0 %v1242
        %1517 = vmatpush1.msra.mxu0 %v1241
        %1518 = vmatprep.subr.mxu0 %v1240
        %1519 = vmatpush1.msra.mxu0 %v1239
        %1520 = vmatprep.subr.mxu0 %v1238
        %1521 = vmatpush1.msra.mxu0 %v1237
        %1522 = vmatprep.subr.mxu0 %v1212
        %1523 = vmatpush1.msra.mxu0 %v1211
        %1524 = vmatprep.subr.mxu0 %v1210
        %1525 = vmatpush1.msra.mxu0 %v1209
        %1526 = vmatprep.subr.mxu0 %v1208
        %1527 = vmatpush1.msra.mxu0 %v1207
        %1528 = vmatprep.subr.mxu0 %v1206
        %1529 = vmatpush1.msra.mxu0 %v1205
        %1530 = vmatprep.subr.mxu0 %v1180
        %1531 = vmatpush1.msra.mxu0 %v1179
        %1532 = vmatprep.subr.mxu0 %v1178
        %1533 = vmatpush1.msra.mxu0 %v1177
        %1534 = vmatprep.subr.mxu0 %v1176
        %1535 = vmatpush1.msra.mxu0 %v1175
        %1536 = vmatprep.subr.mxu0 %v1174
        %1537 = vmatpush1.msra.mxu0 %v1173
        %1538 = vmatprep.subr.mxu0 %v1404
        %1539 = vmatpush2.msra.mxu0 %v1403
        %1540 = vmatprep.subr.mxu0 %v1402
        %1541 = vmatpush2.msra.mxu0 %v1401
        %1542 = vmatprep.subr.mxu0 %v1400
        %1543 = vmatpush2.msra.mxu0 %v1399
        %1544 = vmatprep.subr.mxu0 %v1398
        %1545 = vmatpush2.msra.mxu0 %v1397
        %1546 = vmatprep.subr.mxu0 %v1372
        %1547 = vmatpush2.msra.mxu0 %v1371
        %1548 = vmatprep.subr.mxu0 %v1370
        %1549 = vmatpush2.msra.mxu0 %v1369
        %1550 = vmatprep.subr.mxu0 %v1368
        %1551 = vmatpush2.msra.mxu0 %v1367
        %1552 = vmatprep.subr.mxu0 %v1366
        %1553 = vmatpush2.msra.mxu0 %v1365
        %1554 = vmatprep.subr.mxu0 %v1340
        %1555 = vmatpush2.msra.mxu0 %v1339
        %1556 = vmatprep.subr.mxu0 %v1338
        %1557 = vmatpush2.msra.mxu0 %v1337
        %1558 = vmatprep.subr.mxu0 %v1336
        %1559 = vmatpush2.msra.mxu0 %v1335
        %1560 = vmatprep.subr.mxu0 %v1334
        %1561 = vmatpush2.msra.mxu0 %v1333
        %1562 = vmatprep.subr.mxu0 %v1308
        %1563 = vmatpush2.msra.mxu0 %v1307
        %1564 = vmatprep.subr.mxu0 %v1306
        %1565 = vmatpush2.msra.mxu0 %v1305
        %1566 = vmatprep.subr.mxu0 %v1304
        %1567 = vmatpush2.msra.mxu0 %v1303
        %1568 = vmatprep.subr.mxu0 %v1302
        %1569 = vmatpush2.msra.mxu0 %v1301
        %1570 = vmatprep.mubr.f32.mxu0 %v1134
        %1571 = vmatmul.mubr.f32.gmra.mxu0 %v1133
        %v1572 = vpop.f32.mrf.mxu0
        %v1573 = vadd.f32 %v1484, %v1572
        %v1574 = vpop.f32.mrf.mxu0
        %v1575 = vadd.f32 %v1486, %v1574
        %1576 = vmatprep.mubr.f32.mxu0 %v1136
        %1577 = vmatmul.mubr.f32.gmra.mxu0 %v1135
        %v1578 = vpop.f32.mrf.mxu0
        %v1579 = vadd.f32 %v1490, %v1578
        %v1580 = vpop.f32.mrf.mxu0
        %v1581 = vadd.f32 %v1492, %v1580
        %1582 = vmatprep.mubr.f32.mxu0 %v1138
        %1583 = vmatmul.mubr.f32.gmra.mxu0 %v1137
        %v1584 = vpop.f32.mrf.mxu0
        %v1585 = vadd.f32 %v1496, %v1584
        %v1586 = vpop.f32.mrf.mxu0
        %v1587 = vadd.f32 %v1498, %v1586
        %1588 = vmatprep.mubr.f32.mxu0 %v1140
        %1589 = vmatmul.mubr.f32.gmra.mxu0 %v1139
        %v1590 = vpop.f32.mrf.mxu0
        %v1591 = vadd.f32 %v1502, %v1590
        %v1592 = vpop.f32.mrf.mxu0
        %v1593 = vadd.f32 %v1504, %v1592
        %1594 = vdwg.mxu0
        %1596 = vset.pattern.permute.xlu0 0
        %1597 = vperm.xlu0 %1596, %v1145
        %v1598 = vpop.permute.xlu0 %1597
        %1601 = vset.pattern.permute.xlu0 0
        %1602 = vperm.xlu0 %1601, %v1146
        %v1603 = vpop.permute.xlu0 %1602
        %1606 = vset.pattern.permute.xlu0 0
        %1607 = vperm.xlu0 %1606, %v1147
        %v1608 = vpop.permute.xlu0 %1607
        %1611 = vset.pattern.permute.xlu0 0
        %1612 = vperm.xlu0 %1611, %v1148
        %v1613 = vpop.permute.xlu0 %1612
        %v1615 = vadd.f32 %v1573, %v1598
        %v1616 = vadd.f32 %v1575, %v1598
        %v1617 = vadd.f32 %v1579, %v1603
        %v1618 = vadd.f32 %v1581, %v1603
        %v1619 = vadd.f32 %v1585, %v1608
        %v1620 = vadd.f32 %v1587, %v1608
        %v1621 = vadd.f32 %v1591, %v1613
        %v1622 = vadd.f32 %v1593, %v1613
        %v1623 = vadd.f32 %v1615, %v1616
        %1624 = vadd.xlane.f32.xlu0 %v1623
        %v1625 = vpop.xlane.xlu0 %1624
        %v1626 = vadd.f32 %v1617, %v1618
        %1627 = vadd.xlane.f32.xlu0 %v1626
        %v1628 = vpop.xlane.xlu0 %1627
        %v1629 = vadd.f32 %v1619, %v1620
        %1630 = vadd.xlane.f32.xlu0 %v1629
        %v1631 = vpop.xlane.xlu0 %1630
        %v1632 = vadd.f32 %v1621, %v1622
        %1633 = vadd.xlane.f32.xlu0 %v1632
        %v1634 = vpop.xlane.xlu0 %1633
        %v1635 = vrcp.pop 256.0
        %v1636 = vmul.f32 %v1625, %v1635
        %v1637 = vmul.f32 %v1628, %v1635
        %v1638 = vmul.f32 %v1631, %v1635
        %v1639 = vmul.f32 %v1634, %v1635
        %v1640 = vld [vmem:[%s8] sm:$0xff]
        %v1641 = vld [vmem:[%s8 + $0x8] sm:$0xff]
        %v1642 = vld [vmem:[%s8 + $0x10] sm:$0xff]
        %v1643 = vld [vmem:[%s8 + $0x18] sm:$0xff]
        %v1644 = vmul.f32 %v1640, %v1636
        %v1645 = vmul.f32 %v1641, %v1637
        %v1646 = vmul.f32 %v1642, %v1638
        %v1647 = vmul.f32 %v1643, %v1639
        %vm1648 = vcmask 15360
        %v1649 = vsel %vm1648, %v1644, 0.0
        %v1650 = vsel %vm1648, %v1645, 0.0
        %v1651 = vadd.f32 %v1649, %v1650
        %v1652 = vsel %vm1648, %v1646, 0.0
        %v1653 = vadd.f32 %v1651, %v1652
        %v1654 = vsel %vm1648, %v1647, 0.0
        %v1655 = vadd.f32 %v1653, %v1654
        %v1656 = vrot.slane %v1655, 4
        %v1657 = vadd.f32 %v1655, %v1656
        %v1658 = vrot.slane %v1657, 2
        %v1659 = vadd.f32 %v1657, %v1658
        %v1660 = vrot.slane %v1659, 1
        %v1661 = vadd.f32 %v1659, %v1660
        %v1662 = vld [vmem:[%s9] sm:$0x1]
        %v1663 = vadd.f32 %v1661, %v1662
        %v1664 = vmax.f32 %v1663, 0.0
        %v1665 = vld [vmem:[%s10] sm:$0xff]
        %v1666 = vld [vmem:[%s10 + $0x8] sm:$0xff]
        %v1667 = vld [vmem:[%s10 + $0x10] sm:$0xff]
        %v1668 = vld [vmem:[%s10 + $0x18] sm:$0xff]
        %v1669 = vlaneseq
        %v1670 = vshrl.u32 %v1669, 7
        %v1671 = vsub.s32 0, %v1670
        %v1672 = vrot.slane %v1664, %v1671
        %v1673 = vmul.f32 %v1665, %v1672
        %v1674 = vmul.f32 %v1666, %v1672
        %v1675 = vmul.f32 %v1667, %v1672
        %v1676 = vmul.f32 %v1668, %v1672
        %v1677 = vsel %vm1648, %v1673, 0.0
        %1678 = vadd.xlane.f32.xlu0 %v1677
        %v1679 = vpop.xlane.xlu0 %1678
        %v1680 = vsel %vm1648, %v1674, 0.0
        %1681 = vadd.xlane.f32.xlu0 %v1680
        %v1682 = vpop.xlane.xlu0 %1681
        %v1683 = vsel %vm1648, %v1675, 0.0
        %1684 = vadd.xlane.f32.xlu0 %v1683
        %v1685 = vpop.xlane.xlu0 %1684
        %v1686 = vsel %vm1648, %v1676, 0.0
        %1687 = vadd.xlane.f32.xlu0 %v1686
        %v1688 = vpop.xlane.xlu0 %1687
        %v1689 = vld [vmem:[%s11] sm:$0xff]
        %v1690 = vld [vmem:[%s11 + $0x8] sm:$0xff]
        %v1691 = vld [vmem:[%s11 + $0x10] sm:$0xff]
        %v1692 = vld [vmem:[%s11 + $0x18] sm:$0xff]
        %v1693 = vadd.f32 %v1679, %v1689
        %v1694 = vadd.f32 %v1682, %v1690
        %v1695 = vadd.f32 %v1685, %v1691
        %v1696 = vadd.f32 %v1688, %v1692
        %v1697 = vxor.u32 %v1693, 2147483648
        %v1698 = vxor.u32 %v1694, 2147483648
        %v1699 = vxor.u32 %v1695, 2147483648
        %v1700 = vxor.u32 %v1696, 2147483648
        %v1701 = vmul.f32 %v1697, 1.442695
        %v1702 = vpow.pop %v1701
        %v1703 = vmul.f32 %v1698, 1.442695
        %v1704 = vpow.pop %v1703
        %v1705 = vmul.f32 %v1699, 1.442695
        %v1706 = vpow.pop %v1705
        %v1707 = vmul.f32 %v1700, 1.442695
        %v1708 = vpow.pop %v1707
        %v1709 = vadd.f32 %v1702, 1.0
        %v1710 = vadd.f32 %v1704, 1.0
        %v1711 = vadd.f32 %v1706, 1.0
        %v1712 = vadd.f32 %v1708, 1.0
        %v1713 = vrcp.pop %v1709
        %v1714 = vmul.f32 1.0, %v1713
        %v1715 = vrcp.pop %v1710
        %v1716 = vmul.f32 1.0, %v1715
        %v1717 = vrcp.pop %v1711
        %v1718 = vmul.f32 1.0, %v1717
        %v1719 = vrcp.pop %v1712
        %v1720 = vmul.f32 1.0, %v1719
        %1722 = vset.pattern.permute.xlu0 0
        %1723 = vperm.xlu0 %1722, %v1714
        %v1724 = vpop.permute.xlu0 %1723
        %1727 = vset.pattern.permute.xlu0 0
        %1728 = vperm.xlu0 %1727, %v1716
        %v1729 = vpop.permute.xlu0 %1728
        %1732 = vset.pattern.permute.xlu0 0
        %1733 = vperm.xlu0 %1732, %v1718
        %v1734 = vpop.permute.xlu0 %1733
        %1737 = vset.pattern.permute.xlu0 0
        %1738 = vperm.xlu0 %1737, %v1720
        %v1739 = vpop.permute.xlu0 %1738
        %v1741 = vmul.f32 %v1615, %v1724
        %v1742 = vmul.f32 %v1616, %v1724
        %v1743 = vmul.f32 %v1617, %v1729
        %v1744 = vmul.f32 %v1618, %v1729
        %v1745 = vmul.f32 %v1619, %v1734
        %v1746 = vmul.f32 %v1620, %v1734
        %v1747 = vmul.f32 %v1621, %v1739
        %v1748 = vmul.f32 %v1622, %v1739
        %v1749 = vadd.f32 %v1741, %v550
        %v1750 = vadd.f32 %v1742, %v551
        %v1751 = vadd.f32 %v1743, %v552
        %v1752 = vadd.f32 %v1744, %v553
        %v1753 = vadd.f32 %v1745, %v554
        %v1754 = vadd.f32 %v1746, %v555
        %v1755 = vadd.f32 %v1747, %v556
        %v1756 = vadd.f32 %v1748, %v557
        %s1757 = scalar_lea.vmem %s2, 64
        %v1758 = vld [vmem:[%s1757] sm:$0xff]
        %v1759 = vld [vmem:[%s1757 + $0x8] sm:$0xff]
        %v1760 = vld [vmem:[%s1757 + $0x10] sm:$0xff]
        %v1761 = vld [vmem:[%s1757 + $0x18] sm:$0xff]
        %v1762 = vld [vmem:[%s1757 + $0x20] sm:$0xff]
        %v1763 = vld [vmem:[%s1757 + $0x28] sm:$0xff]
        %v1764 = vld [vmem:[%s1757 + $0x30] sm:$0xff]
        %v1765 = vld [vmem:[%s1757 + $0x38] sm:$0xff]
        %s1766 = scalar_lea.vmem [#allocation5], 32
        %v1767 = vld [vmem:[%s1766] sm:$0xff]
        %v1768 = vld [vmem:[%s1766 + $0x8] sm:$0xff]
        %v1769 = vld [vmem:[%s1766 + $0x10] sm:$0xff]
        %v1770 = vld [vmem:[%s1766 + $0x18] sm:$0xff]
        %s1771 = scalar_lea.vmem %s4, 32
        %v1772 = vld [vmem:[%s1771] sm:$0xff]
        %v1773 = vld [vmem:[%s1771 + $0x8] sm:$0xff]
        %v1774 = vld [vmem:[%s1771 + $0x10] sm:$0xff]
        %v1775 = vld [vmem:[%s1771 + $0x18] sm:$0xff]
        %1776 = vrot.lane.b32.xlu0 %v1749, 17
        %v1777 = vpop.permute.xlu0 %1776
        %1778 = vrot.lane.b32.xlu0 %v1751, 17
        %v1779 = vpop.permute.xlu0 %1778
        %1780 = vrot.lane.b32.xlu0 %v1753, 17
        %v1781 = vpop.permute.xlu0 %1780
        %1782 = vrot.lane.b32.xlu0 %v1755, 17
        %v1783 = vpop.permute.xlu0 %1782
        %1784 = vrot.lane.b32.xlu0 %v1750, 17
        %v1785 = vpop.permute.xlu0 %1784
        %1786 = vrot.lane.b32.xlu0 %v1752, 17
        %v1787 = vpop.permute.xlu0 %1786
        %1788 = vrot.lane.b32.xlu0 %v1754, 17
        %v1789 = vpop.permute.xlu0 %1788
        %1790 = vrot.lane.b32.xlu0 %v1756, 17
        %v1791 = vpop.permute.xlu0 %1790
        %v1792 = vsel %vm594, %v1777, %v1785
        %v1793 = vsel %vm594, %v1779, %v1787
        %v1794 = vsel %vm594, %v1781, %v1789
        %v1795 = vsel %vm594, %v1783, %v1791
        %v1796 = vsel %vm594, %v1785, %v1777
        %v1797 = vsel %vm594, %v1787, %v1779
        %v1798 = vsel %vm594, %v1789, %v1781
        %v1799 = vsel %vm594, %v1791, %v1783
        %v1800 = vmul.f32 %v1796, %v606
        %v1801 = vmul.f32 %v1792, %v610
        %v1802 = vmul.f32 %v1797, %v606
        %v1803 = vmul.f32 %v1793, %v610
        %v1804 = vmul.f32 %v1798, %v606
        %v1805 = vmul.f32 %v1794, %v610
        %v1806 = vmul.f32 %v1799, %v606
        %v1807 = vmul.f32 %v1795, %v610
        %1808 = vrot.lane.b32.xlu0 %v1749, 16
        %v1809 = vpop.permute.xlu0 %1808
        %1810 = vrot.lane.b32.xlu0 %v1751, 16
        %v1811 = vpop.permute.xlu0 %1810
        %1812 = vrot.lane.b32.xlu0 %v1753, 16
        %v1813 = vpop.permute.xlu0 %1812
        %1814 = vrot.lane.b32.xlu0 %v1755, 16
        %v1815 = vpop.permute.xlu0 %1814
        %1816 = vrot.lane.b32.xlu0 %v1750, 16
        %v1817 = vpop.permute.xlu0 %1816
        %1818 = vrot.lane.b32.xlu0 %v1752, 16
        %v1819 = vpop.permute.xlu0 %1818
        %1820 = vrot.lane.b32.xlu0 %v1754, 16
        %v1821 = vpop.permute.xlu0 %1820
        %1822 = vrot.lane.b32.xlu0 %v1756, 16
        %v1823 = vpop.permute.xlu0 %1822
        %v1824 = vsel %vm635, %v1809, %v1817
        %v1825 = vsel %vm635, %v1811, %v1819
        %v1826 = vsel %vm635, %v1813, %v1821
        %v1827 = vsel %vm635, %v1815, %v1823
        %v1828 = vsel %vm635, %v1817, %v1809
        %v1829 = vsel %vm635, %v1819, %v1811
        %v1830 = vsel %vm635, %v1821, %v1813
        %v1831 = vsel %vm635, %v1823, %v1815
        %v1832 = vmul.f32 %v1828, %v647
        %v1833 = vmul.f32 %v1824, %v651
        %v1834 = vmul.f32 %v1829, %v647
        %v1835 = vmul.f32 %v1825, %v651
        %v1836 = vmul.f32 %v1830, %v647
        %v1837 = vmul.f32 %v1826, %v651
        %v1838 = vmul.f32 %v1831, %v647
        %v1839 = vmul.f32 %v1827, %v651
        %1840 = vrot.lane.b32.xlu0 %v1749, 15
        %v1841 = vpop.permute.xlu0 %1840
        %1842 = vrot.lane.b32.xlu0 %v1751, 15
        %v1843 = vpop.permute.xlu0 %1842
        %1844 = vrot.lane.b32.xlu0 %v1753, 15
        %v1845 = vpop.permute.xlu0 %1844
        %1846 = vrot.lane.b32.xlu0 %v1755, 15
        %v1847 = vpop.permute.xlu0 %1846
        %1848 = vrot.lane.b32.xlu0 %v1750, 15
        %v1849 = vpop.permute.xlu0 %1848
        %1850 = vrot.lane.b32.xlu0 %v1752, 15
        %v1851 = vpop.permute.xlu0 %1850
        %1852 = vrot.lane.b32.xlu0 %v1754, 15
        %v1853 = vpop.permute.xlu0 %1852
        %1854 = vrot.lane.b32.xlu0 %v1756, 15
        %v1855 = vpop.permute.xlu0 %1854
        %v1856 = vsel %vm676, %v1841, %v1849
        %v1857 = vsel %vm676, %v1843, %v1851
        %v1858 = vsel %vm676, %v1845, %v1853
        %v1859 = vsel %vm676, %v1847, %v1855
        %v1860 = vsel %vm676, %v1849, %v1841
        %v1861 = vsel %vm676, %v1851, %v1843
        %v1862 = vsel %vm676, %v1853, %v1845
        %v1863 = vsel %vm676, %v1855, %v1847
        %v1864 = vmul.f32 %v1860, %v688
        %v1865 = vmul.f32 %v1856, %v692
        %v1866 = vmul.f32 %v1861, %v688
        %v1867 = vmul.f32 %v1857, %v692
        %v1868 = vmul.f32 %v1862, %v688
        %v1869 = vmul.f32 %v1858, %v692
        %v1870 = vmul.f32 %v1863, %v688
        %v1871 = vmul.f32 %v1859, %v692
        %1872 = vrot.lane.b32.xlu0 %v1749, 1
        %v1873 = vpop.permute.xlu0 %1872
        %1874 = vrot.lane.b32.xlu0 %v1751, 1
        %v1875 = vpop.permute.xlu0 %1874
        %1876 = vrot.lane.b32.xlu0 %v1753, 1
        %v1877 = vpop.permute.xlu0 %1876
        %1878 = vrot.lane.b32.xlu0 %v1755, 1
        %v1879 = vpop.permute.xlu0 %1878
        %1880 = vrot.lane.b32.xlu0 %v1750, 1
        %v1881 = vpop.permute.xlu0 %1880
        %1882 = vrot.lane.b32.xlu0 %v1752, 1
        %v1883 = vpop.permute.xlu0 %1882
        %1884 = vrot.lane.b32.xlu0 %v1754, 1
        %v1885 = vpop.permute.xlu0 %1884
        %1886 = vrot.lane.b32.xlu0 %v1756, 1
        %v1887 = vpop.permute.xlu0 %1886
        %v1888 = vsel %vm717, %v1873, %v1881
        %v1889 = vsel %vm717, %v1875, %v1883
        %v1890 = vsel %vm717, %v1877, %v1885
        %v1891 = vsel %vm717, %v1879, %v1887
        %v1892 = vsel %vm717, %v1881, %v1873
        %v1893 = vsel %vm717, %v1883, %v1875
        %v1894 = vsel %vm717, %v1885, %v1877
        %v1895 = vsel %vm717, %v1887, %v1879
        %v1896 = vmul.f32 %v1892, %v729
        %v1897 = vmul.f32 %v1888, %v733
        %v1898 = vmul.f32 %v1893, %v729
        %v1899 = vmul.f32 %v1889, %v733
        %v1900 = vmul.f32 %v1894, %v729
        %v1901 = vmul.f32 %v1890, %v733
        %v1902 = vmul.f32 %v1895, %v729
        %v1903 = vmul.f32 %v1891, %v733
        %1904 = vrot.lane.b32.xlu0 %v1749, 127
        %v1905 = vpop.permute.xlu0 %1904
        %1906 = vrot.lane.b32.xlu0 %v1751, 127
        %v1907 = vpop.permute.xlu0 %1906
        %1908 = vrot.lane.b32.xlu0 %v1753, 127
        %v1909 = vpop.permute.xlu0 %1908
        %1910 = vrot.lane.b32.xlu0 %v1755, 127
        %v1911 = vpop.permute.xlu0 %1910
        %1912 = vrot.lane.b32.xlu0 %v1750, 127
        %v1913 = vpop.permute.xlu0 %1912
        %1914 = vrot.lane.b32.xlu0 %v1752, 127
        %v1915 = vpop.permute.xlu0 %1914
        %1916 = vrot.lane.b32.xlu0 %v1754, 127
        %v1917 = vpop.permute.xlu0 %1916
        %1918 = vrot.lane.b32.xlu0 %v1756, 127
        %v1919 = vpop.permute.xlu0 %1918
        %v1920 = vsel %vm758, %v1905, %v1913
        %v1921 = vsel %vm758, %v1907, %v1915
        %v1922 = vsel %vm758, %v1909, %v1917
        %v1923 = vsel %vm758, %v1911, %v1919
        %v1924 = vsel %vm758, %v1913, %v1905
        %v1925 = vsel %vm758, %v1915, %v1907
        %v1926 = vsel %vm758, %v1917, %v1909
        %v1927 = vsel %vm758, %v1919, %v1911
        %v1928 = vmul.f32 %v1920, %v770
        %v1929 = vmul.f32 %v1924, %v774
        %v1930 = vmul.f32 %v1921, %v770
        %v1931 = vmul.f32 %v1925, %v774
        %v1932 = vmul.f32 %v1922, %v770
        %v1933 = vmul.f32 %v1926, %v774
        %v1934 = vmul.f32 %v1923, %v770
        %v1935 = vmul.f32 %v1927, %v774
        %1936 = vrot.lane.b32.xlu0 %v1749, 113
        %v1937 = vpop.permute.xlu0 %1936
        %1938 = vrot.lane.b32.xlu0 %v1751, 113
        %v1939 = vpop.permute.xlu0 %1938
        %1940 = vrot.lane.b32.xlu0 %v1753, 113
        %v1941 = vpop.permute.xlu0 %1940
        %1942 = vrot.lane.b32.xlu0 %v1755, 113
        %v1943 = vpop.permute.xlu0 %1942
        %1944 = vrot.lane.b32.xlu0 %v1750, 113
        %v1945 = vpop.permute.xlu0 %1944
        %1946 = vrot.lane.b32.xlu0 %v1752, 113
        %v1947 = vpop.permute.xlu0 %1946
        %1948 = vrot.lane.b32.xlu0 %v1754, 113
        %v1949 = vpop.permute.xlu0 %1948
        %1950 = vrot.lane.b32.xlu0 %v1756, 113
        %v1951 = vpop.permute.xlu0 %1950
        %v1952 = vsel %vm799, %v1937, %v1945
        %v1953 = vsel %vm799, %v1939, %v1947
        %v1954 = vsel %vm799, %v1941, %v1949
        %v1955 = vsel %vm799, %v1943, %v1951
        %v1956 = vsel %vm799, %v1945, %v1937
        %v1957 = vsel %vm799, %v1947, %v1939
        %v1958 = vsel %vm799, %v1949, %v1941
        %v1959 = vsel %vm799, %v1951, %v1943
        %v1960 = vmul.f32 %v1952, %v811
        %v1961 = vmul.f32 %v1956, %v815
        %v1962 = vmul.f32 %v1953, %v811
        %v1963 = vmul.f32 %v1957, %v815
        %v1964 = vmul.f32 %v1954, %v811
        %v1965 = vmul.f32 %v1958, %v815
        %v1966 = vmul.f32 %v1955, %v811
        %v1967 = vmul.f32 %v1959, %v815
        %1968 = vrot.lane.b32.xlu0 %v1749, 112
        %v1969 = vpop.permute.xlu0 %1968
        %1970 = vrot.lane.b32.xlu0 %v1751, 112
        %v1971 = vpop.permute.xlu0 %1970
        %1972 = vrot.lane.b32.xlu0 %v1753, 112
        %v1973 = vpop.permute.xlu0 %1972
        %1974 = vrot.lane.b32.xlu0 %v1755, 112
        %v1975 = vpop.permute.xlu0 %1974
        %1976 = vrot.lane.b32.xlu0 %v1750, 112
        %v1977 = vpop.permute.xlu0 %1976
        %1978 = vrot.lane.b32.xlu0 %v1752, 112
        %v1979 = vpop.permute.xlu0 %1978
        %1980 = vrot.lane.b32.xlu0 %v1754, 112
        %v1981 = vpop.permute.xlu0 %1980
        %1982 = vrot.lane.b32.xlu0 %v1756, 112
        %v1983 = vpop.permute.xlu0 %1982
        %v1984 = vsel %vm840, %v1969, %v1977
        %v1985 = vsel %vm840, %v1971, %v1979
        %v1986 = vsel %vm840, %v1973, %v1981
        %v1987 = vsel %vm840, %v1975, %v1983
        %v1988 = vsel %vm840, %v1977, %v1969
        %v1989 = vsel %vm840, %v1979, %v1971
        %v1990 = vsel %vm840, %v1981, %v1973
        %v1991 = vsel %vm840, %v1983, %v1975
        %v1992 = vmul.f32 %v1984, %v852
        %v1993 = vmul.f32 %v1988, %v856
        %v1994 = vmul.f32 %v1985, %v852
        %v1995 = vmul.f32 %v1989, %v856
        %v1996 = vmul.f32 %v1986, %v852
        %v1997 = vmul.f32 %v1990, %v856
        %v1998 = vmul.f32 %v1987, %v852
        %v1999 = vmul.f32 %v1991, %v856
        %2000 = vrot.lane.b32.xlu0 %v1749, 111
        %v2001 = vpop.permute.xlu0 %2000
        %2002 = vrot.lane.b32.xlu0 %v1751, 111
        %v2003 = vpop.permute.xlu0 %2002
        %2004 = vrot.lane.b32.xlu0 %v1753, 111
        %v2005 = vpop.permute.xlu0 %2004
        %2006 = vrot.lane.b32.xlu0 %v1755, 111
        %v2007 = vpop.permute.xlu0 %2006
        %2008 = vrot.lane.b32.xlu0 %v1750, 111
        %v2009 = vpop.permute.xlu0 %2008
        %2010 = vrot.lane.b32.xlu0 %v1752, 111
        %v2011 = vpop.permute.xlu0 %2010
        %2012 = vrot.lane.b32.xlu0 %v1754, 111
        %v2013 = vpop.permute.xlu0 %2012
        %2014 = vrot.lane.b32.xlu0 %v1756, 111
        %v2015 = vpop.permute.xlu0 %2014
        %v2016 = vsel %vm881, %v2001, %v2009
        %v2017 = vsel %vm881, %v2003, %v2011
        %v2018 = vsel %vm881, %v2005, %v2013
        %v2019 = vsel %vm881, %v2007, %v2015
        %v2020 = vsel %vm881, %v2009, %v2001
        %v2021 = vsel %vm881, %v2011, %v2003
        %v2022 = vsel %vm881, %v2013, %v2005
        %v2023 = vsel %vm881, %v2015, %v2007
        %v2024 = vmul.f32 %v2016, %v893
        %v2025 = vmul.f32 %v2020, %v897
        %v2026 = vmul.f32 %v2017, %v893
        %v2027 = vmul.f32 %v2021, %v897
        %v2028 = vmul.f32 %v2018, %v893
        %v2029 = vmul.f32 %v2022, %v897
        %v2030 = vmul.f32 %v2019, %v893
        %v2031 = vmul.f32 %v2023, %v897
        %v2033 = vsel %vm906, %v1767, 0
        %v2036 = vsel %vm906, %v1768, 0
        %v2039 = vsel %vm906, %v1769, 0
        %v2042 = vsel %vm906, %v1770, 0
        %2044 = vmatprep.subr.mxu0 0.0
        %2045 = vmatpush1.msra.mxu0 0.0
        %2046 = vmatprep.subr.mxu0 0.0
        %2047 = vmatpush1.msra.mxu0 0.0
        %2048 = vmatprep.subr.mxu0 0.0
        %2049 = vmatpush1.msra.mxu0 0.0
        %2050 = vmatprep.subr.mxu0 0.0
        %2051 = vmatpush1.msra.mxu0 0.0
        %2052 = vmatprep.subr.mxu0 0.0
        %2053 = vmatpush1.msra.mxu0 0.0
        %2054 = vmatprep.subr.mxu0 0.0
        %2055 = vmatpush1.msra.mxu0 0.0
        %2056 = vmatprep.subr.mxu0 0.0
        %2057 = vmatpush1.msra.mxu0 0.0
        %2058 = vmatprep.subr.mxu0 0.0
        %2059 = vmatpush1.msra.mxu0 0.0
        %2060 = vmatprep.subr.mxu0 0.0
        %2061 = vmatpush1.msra.mxu0 0.0
        %2062 = vmatprep.subr.mxu0 0.0
        %2063 = vmatpush1.msra.mxu0 0.0
        %2064 = vmatprep.subr.mxu0 0.0
        %2065 = vmatpush1.msra.mxu0 0.0
        %2066 = vmatprep.subr.mxu0 0.0
        %2067 = vmatpush1.msra.mxu0 0.0
        %2068 = vmatprep.subr.mxu0 %v1756
        %2069 = vmatpush1.msra.mxu0 %v1755
        %2070 = vmatprep.subr.mxu0 %v1754
        %2071 = vmatpush1.msra.mxu0 %v1753
        %2072 = vmatprep.subr.mxu0 %v1752
        %2073 = vmatpush1.msra.mxu0 %v1751
        %2074 = vmatprep.subr.mxu0 %v1750
        %2075 = vmatpush1.msra.mxu0 %v1749
        %2076 = vmatprep.subr.mxu0 0.0
        %2077 = vmatpush2.msra.mxu0 0.0
        %2078 = vmatprep.subr.mxu0 0.0
        %2079 = vmatpush2.msra.mxu0 0.0
        %2080 = vmatprep.subr.mxu0 0.0
        %2081 = vmatpush2.msra.mxu0 0.0
        %2082 = vmatprep.subr.mxu0 0.0
        %2083 = vmatpush2.msra.mxu0 0.0
        %2084 = vmatprep.subr.mxu0 0.0
        %2085 = vmatpush2.msra.mxu0 0.0
        %2086 = vmatprep.subr.mxu0 0.0
        %2087 = vmatpush2.msra.mxu0 0.0
        %2088 = vmatprep.subr.mxu0 0.0
        %2089 = vmatpush2.msra.mxu0 0.0
        %2090 = vmatprep.subr.mxu0 0.0
        %2091 = vmatpush2.msra.mxu0 0.0
        %2092 = vmatprep.subr.mxu0 0.0
        %2093 = vmatpush2.msra.mxu0 0.0
        %2094 = vmatprep.subr.mxu0 0.0
        %2095 = vmatpush2.msra.mxu0 0.0
        %2096 = vmatprep.subr.mxu0 0.0
        %2097 = vmatpush2.msra.mxu0 0.0
        %2098 = vmatprep.subr.mxu0 0.0
        %2099 = vmatpush2.msra.mxu0 0.0
        %2100 = vmatprep.subr.mxu0 0.0
        %2101 = vmatpush2.msra.mxu0 0.0
        %2102 = vmatprep.subr.mxu0 0.0
        %2103 = vmatpush2.msra.mxu0 0.0
        %2104 = vmatprep.subr.mxu0 0.0
        %2105 = vmatpush2.msra.mxu0 0.0
        %2106 = vmatprep.subr.mxu0 0.0
        %2107 = vmatpush2.msra.mxu0 0.0
        %2108 = vmatprep.mubr.f32.mxu0 0.0
        %2109 = vmatmul.mubr.f32.gmra.mxu0 %v2033
        %v2110 = vpop.f32.mrf.mxu0
        %v2111 = vadd.f32 0.0, %v2110
        %v2112 = vpop.f32.mrf.mxu0
        %v2113 = vadd.f32 0.0, %v2112
        %2114 = vmatprep.mubr.f32.mxu0 0.0
        %2115 = vmatmul.mubr.f32.gmra.mxu0 %v2036
        %v2116 = vpop.f32.mrf.mxu0
        %v2117 = vadd.f32 0.0, %v2116
        %v2118 = vpop.f32.mrf.mxu0
        %v2119 = vadd.f32 0.0, %v2118
        %2120 = vmatprep.mubr.f32.mxu0 0.0
        %2121 = vmatmul.mubr.f32.gmra.mxu0 %v2039
        %v2122 = vpop.f32.mrf.mxu0
        %v2123 = vadd.f32 0.0, %v2122
        %v2124 = vpop.f32.mrf.mxu0
        %v2125 = vadd.f32 0.0, %v2124
        %2126 = vmatprep.mubr.f32.mxu0 0.0
        %2127 = vmatmul.mubr.f32.gmra.mxu0 %v2042
        %v2128 = vpop.f32.mrf.mxu0
        %v2129 = vadd.f32 0.0, %v2128
        %v2130 = vpop.f32.mrf.mxu0
        %v2131 = vadd.f32 0.0, %v2130
        %2132 = vdwg.mxu0
        %2133 = vmatprep.subr.mxu0 %v1903
        %2134 = vmatpush1.msra.mxu0 %v1902
        %2135 = vmatprep.subr.mxu0 %v1901
        %2136 = vmatpush1.msra.mxu0 %v1900
        %2137 = vmatprep.subr.mxu0 %v1899
        %2138 = vmatpush1.msra.mxu0 %v1898
        %2139 = vmatprep.subr.mxu0 %v1897
        %2140 = vmatpush1.msra.mxu0 %v1896
        %2141 = vmatprep.subr.mxu0 %v1871
        %2142 = vmatpush1.msra.mxu0 %v1870
        %2143 = vmatprep.subr.mxu0 %v1869
        %2144 = vmatpush1.msra.mxu0 %v1868
        %2145 = vmatprep.subr.mxu0 %v1867
        %2146 = vmatpush1.msra.mxu0 %v1866
        %2147 = vmatprep.subr.mxu0 %v1865
        %2148 = vmatpush1.msra.mxu0 %v1864
        %2149 = vmatprep.subr.mxu0 %v1839
        %2150 = vmatpush1.msra.mxu0 %v1838
        %2151 = vmatprep.subr.mxu0 %v1837
        %2152 = vmatpush1.msra.mxu0 %v1836
        %2153 = vmatprep.subr.mxu0 %v1835
        %2154 = vmatpush1.msra.mxu0 %v1834
        %2155 = vmatprep.subr.mxu0 %v1833
        %2156 = vmatpush1.msra.mxu0 %v1832
        %2157 = vmatprep.subr.mxu0 %v1807
        %2158 = vmatpush1.msra.mxu0 %v1806
        %2159 = vmatprep.subr.mxu0 %v1805
        %2160 = vmatpush1.msra.mxu0 %v1804
        %2161 = vmatprep.subr.mxu0 %v1803
        %2162 = vmatpush1.msra.mxu0 %v1802
        %2163 = vmatprep.subr.mxu0 %v1801
        %2164 = vmatpush1.msra.mxu0 %v1800
        %2165 = vmatprep.subr.mxu0 %v2031
        %2166 = vmatpush2.msra.mxu0 %v2030
        %2167 = vmatprep.subr.mxu0 %v2029
        %2168 = vmatpush2.msra.mxu0 %v2028
        %2169 = vmatprep.subr.mxu0 %v2027
        %2170 = vmatpush2.msra.mxu0 %v2026
        %2171 = vmatprep.subr.mxu0 %v2025
        %2172 = vmatpush2.msra.mxu0 %v2024
        %2173 = vmatprep.subr.mxu0 %v1999
        %2174 = vmatpush2.msra.mxu0 %v1998
        %2175 = vmatprep.subr.mxu0 %v1997
        %2176 = vmatpush2.msra.mxu0 %v1996
        %2177 = vmatprep.subr.mxu0 %v1995
        %2178 = vmatpush2.msra.mxu0 %v1994
        %2179 = vmatprep.subr.mxu0 %v1993
        %2180 = vmatpush2.msra.mxu0 %v1992
        %2181 = vmatprep.subr.mxu0 %v1967
        %2182 = vmatpush2.msra.mxu0 %v1966
        %2183 = vmatprep.subr.mxu0 %v1965
        %2184 = vmatpush2.msra.mxu0 %v1964
        %2185 = vmatprep.subr.mxu0 %v1963
        %2186 = vmatpush2.msra.mxu0 %v1962
        %2187 = vmatprep.subr.mxu0 %v1961
        %2188 = vmatpush2.msra.mxu0 %v1960
        %2189 = vmatprep.subr.mxu0 %v1935
        %2190 = vmatpush2.msra.mxu0 %v1934
        %2191 = vmatprep.subr.mxu0 %v1933
        %2192 = vmatpush2.msra.mxu0 %v1932
        %2193 = vmatprep.subr.mxu0 %v1931
        %2194 = vmatpush2.msra.mxu0 %v1930
        %2195 = vmatprep.subr.mxu0 %v1929
        %2196 = vmatpush2.msra.mxu0 %v1928
        %2197 = vmatprep.mubr.f32.mxu0 %v1759
        %2198 = vmatmul.mubr.f32.gmra.mxu0 %v1758
        %v2199 = vpop.f32.mrf.mxu0
        %v2200 = vadd.f32 %v2111, %v2199
        %v2201 = vpop.f32.mrf.mxu0
        %v2202 = vadd.f32 %v2113, %v2201
        %2203 = vmatprep.mubr.f32.mxu0 %v1761
        %2204 = vmatmul.mubr.f32.gmra.mxu0 %v1760
        %v2205 = vpop.f32.mrf.mxu0
        %v2206 = vadd.f32 %v2117, %v2205
        %v2207 = vpop.f32.mrf.mxu0
        %v2208 = vadd.f32 %v2119, %v2207
        %2209 = vmatprep.mubr.f32.mxu0 %v1763
        %2210 = vmatmul.mubr.f32.gmra.mxu0 %v1762
        %v2211 = vpop.f32.mrf.mxu0
        %v2212 = vadd.f32 %v2123, %v2211
        %v2213 = vpop.f32.mrf.mxu0
        %v2214 = vadd.f32 %v2125, %v2213
        %2215 = vmatprep.mubr.f32.mxu0 %v1765
        %2216 = vmatmul.mubr.f32.gmra.mxu0 %v1764
        %v2217 = vpop.f32.mrf.mxu0
        %v2218 = vadd.f32 %v2129, %v2217
        %v2219 = vpop.f32.mrf.mxu0
        %v2220 = vadd.f32 %v2131, %v2219
        %2221 = vdwg.mxu0
        %2223 = vset.pattern.permute.xlu0 0
        %2224 = vperm.xlu0 %2223, %v1772
        %v2225 = vpop.permute.xlu0 %2224
        %2228 = vset.pattern.permute.xlu0 0
        %2229 = vperm.xlu0 %2228, %v1773
        %v2230 = vpop.permute.xlu0 %2229
        %2233 = vset.pattern.permute.xlu0 0
        %2234 = vperm.xlu0 %2233, %v1774
        %v2235 = vpop.permute.xlu0 %2234
        %2238 = vset.pattern.permute.xlu0 0
        %2239 = vperm.xlu0 %2238, %v1775
        %v2240 = vpop.permute.xlu0 %2239
        %v2242 = vadd.f32 %v2200, %v2225
        %v2243 = vadd.f32 %v2202, %v2225
        %v2244 = vadd.f32 %v2206, %v2230
        %v2245 = vadd.f32 %v2208, %v2230
        %v2246 = vadd.f32 %v2212, %v2235
        %v2247 = vadd.f32 %v2214, %v2235
        %v2248 = vadd.f32 %v2218, %v2240
        %v2249 = vadd.f32 %v2220, %v2240
        %v2250 = vmax.f32 %v2242, 0.0
        %v2251 = vmax.f32 %v2243, 0.0
        %v2252 = vmax.f32 %v2244, 0.0
        %v2253 = vmax.f32 %v2245, 0.0
        %v2254 = vmax.f32 %v2246, 0.0
        %v2255 = vmax.f32 %v2247, 0.0
        %v2256 = vmax.f32 %v2248, 0.0
        %v2257 = vmax.f32 %v2249, 0.0
        %s2258 = scalar_lea.vmem %s5, 64
        %v2259 = vld [vmem:[%s2258] sm:$0xff]
        %v2260 = vld [vmem:[%s2258 + $0x8] sm:$0xff]
        %v2261 = vld [vmem:[%s2258 + $0x10] sm:$0xff]
        %v2262 = vld [vmem:[%s2258 + $0x18] sm:$0xff]
        %v2263 = vld [vmem:[%s2258 + $0x20] sm:$0xff]
        %v2264 = vld [vmem:[%s2258 + $0x28] sm:$0xff]
        %v2265 = vld [vmem:[%s2258 + $0x30] sm:$0xff]
        %v2266 = vld [vmem:[%s2258 + $0x38] sm:$0xff]
        %s2267 = scalar_lea.vmem [#allocation7], 32
        %v2268 = vld [vmem:[%s2267] sm:$0xff]
        %v2269 = vld [vmem:[%s2267 + $0x8] sm:$0xff]
        %v2270 = vld [vmem:[%s2267 + $0x10] sm:$0xff]
        %v2271 = vld [vmem:[%s2267 + $0x18] sm:$0xff]
        %s2272 = scalar_lea.vmem %s7, 32
        %v2273 = vld [vmem:[%s2272] sm:$0xff]
        %v2274 = vld [vmem:[%s2272 + $0x8] sm:$0xff]
        %v2275 = vld [vmem:[%s2272 + $0x10] sm:$0xff]
        %v2276 = vld [vmem:[%s2272 + $0x18] sm:$0xff]
        %2277 = vrot.lane.b32.xlu0 %v2250, 17
        %v2278 = vpop.permute.xlu0 %2277
        %2279 = vrot.lane.b32.xlu0 %v2252, 17
        %v2280 = vpop.permute.xlu0 %2279
        %2281 = vrot.lane.b32.xlu0 %v2254, 17
        %v2282 = vpop.permute.xlu0 %2281
        %2283 = vrot.lane.b32.xlu0 %v2256, 17
        %v2284 = vpop.permute.xlu0 %2283
        %2285 = vrot.lane.b32.xlu0 %v2251, 17
        %v2286 = vpop.permute.xlu0 %2285
        %2287 = vrot.lane.b32.xlu0 %v2253, 17
        %v2288 = vpop.permute.xlu0 %2287
        %2289 = vrot.lane.b32.xlu0 %v2255, 17
        %v2290 = vpop.permute.xlu0 %2289
        %2291 = vrot.lane.b32.xlu0 %v2257, 17
        %v2292 = vpop.permute.xlu0 %2291
        %v2293 = vsel %vm594, %v2278, %v2286
        %v2294 = vsel %vm594, %v2280, %v2288
        %v2295 = vsel %vm594, %v2282, %v2290
        %v2296 = vsel %vm594, %v2284, %v2292
        %v2297 = vsel %vm594, %v2286, %v2278
        %v2298 = vsel %vm594, %v2288, %v2280
        %v2299 = vsel %vm594, %v2290, %v2282
        %v2300 = vsel %vm594, %v2292, %v2284
        %v2301 = vmul.f32 %v2297, %v606
        %v2302 = vmul.f32 %v2293, %v610
        %v2303 = vmul.f32 %v2298, %v606
        %v2304 = vmul.f32 %v2294, %v610
        %v2305 = vmul.f32 %v2299, %v606
        %v2306 = vmul.f32 %v2295, %v610
        %v2307 = vmul.f32 %v2300, %v606
        %v2308 = vmul.f32 %v2296, %v610
        %2309 = vrot.lane.b32.xlu0 %v2250, 16
        %v2310 = vpop.permute.xlu0 %2309
        %2311 = vrot.lane.b32.xlu0 %v2252, 16
        %v2312 = vpop.permute.xlu0 %2311
        %2313 = vrot.lane.b32.xlu0 %v2254, 16
        %v2314 = vpop.permute.xlu0 %2313
        %2315 = vrot.lane.b32.xlu0 %v2256, 16
        %v2316 = vpop.permute.xlu0 %2315
        %2317 = vrot.lane.b32.xlu0 %v2251, 16
        %v2318 = vpop.permute.xlu0 %2317
        %2319 = vrot.lane.b32.xlu0 %v2253, 16
        %v2320 = vpop.permute.xlu0 %2319
        %2321 = vrot.lane.b32.xlu0 %v2255, 16
        %v2322 = vpop.permute.xlu0 %2321
        %2323 = vrot.lane.b32.xlu0 %v2257, 16
        %v2324 = vpop.permute.xlu0 %2323
        %v2325 = vsel %vm635, %v2310, %v2318
        %v2326 = vsel %vm635, %v2312, %v2320
        %v2327 = vsel %vm635, %v2314, %v2322
        %v2328 = vsel %vm635, %v2316, %v2324
        %v2329 = vsel %vm635, %v2318, %v2310
        %v2330 = vsel %vm635, %v2320, %v2312
        %v2331 = vsel %vm635, %v2322, %v2314
        %v2332 = vsel %vm635, %v2324, %v2316
        %v2333 = vmul.f32 %v2329, %v647
        %v2334 = vmul.f32 %v2325, %v651
        %v2335 = vmul.f32 %v2330, %v647
        %v2336 = vmul.f32 %v2326, %v651
        %v2337 = vmul.f32 %v2331, %v647
        %v2338 = vmul.f32 %v2327, %v651
        %v2339 = vmul.f32 %v2332, %v647
        %v2340 = vmul.f32 %v2328, %v651
        %2341 = vrot.lane.b32.xlu0 %v2250, 15
        %v2342 = vpop.permute.xlu0 %2341
        %2343 = vrot.lane.b32.xlu0 %v2252, 15
        %v2344 = vpop.permute.xlu0 %2343
        %2345 = vrot.lane.b32.xlu0 %v2254, 15
        %v2346 = vpop.permute.xlu0 %2345
        %2347 = vrot.lane.b32.xlu0 %v2256, 15
        %v2348 = vpop.permute.xlu0 %2347
        %2349 = vrot.lane.b32.xlu0 %v2251, 15
        %v2350 = vpop.permute.xlu0 %2349
        %2351 = vrot.lane.b32.xlu0 %v2253, 15
        %v2352 = vpop.permute.xlu0 %2351
        %2353 = vrot.lane.b32.xlu0 %v2255, 15
        %v2354 = vpop.permute.xlu0 %2353
        %2355 = vrot.lane.b32.xlu0 %v2257, 15
        %v2356 = vpop.permute.xlu0 %2355
        %v2357 = vsel %vm676, %v2342, %v2350
        %v2358 = vsel %vm676, %v2344, %v2352
        %v2359 = vsel %vm676, %v2346, %v2354
        %v2360 = vsel %vm676, %v2348, %v2356
        %v2361 = vsel %vm676, %v2350, %v2342
        %v2362 = vsel %vm676, %v2352, %v2344
        %v2363 = vsel %vm676, %v2354, %v2346
        %v2364 = vsel %vm676, %v2356, %v2348
        %v2365 = vmul.f32 %v2361, %v688
        %v2366 = vmul.f32 %v2357, %v692
        %v2367 = vmul.f32 %v2362, %v688
        %v2368 = vmul.f32 %v2358, %v692
        %v2369 = vmul.f32 %v2363, %v688
        %v2370 = vmul.f32 %v2359, %v692
        %v2371 = vmul.f32 %v2364, %v688
        %v2372 = vmul.f32 %v2360, %v692
        %2373 = vrot.lane.b32.xlu0 %v2250, 1
        %v2374 = vpop.permute.xlu0 %2373
        %2375 = vrot.lane.b32.xlu0 %v2252, 1
        %v2376 = vpop.permute.xlu0 %2375
        %2377 = vrot.lane.b32.xlu0 %v2254, 1
        %v2378 = vpop.permute.xlu0 %2377
        %2379 = vrot.lane.b32.xlu0 %v2256, 1
        %v2380 = vpop.permute.xlu0 %2379
        %2381 = vrot.lane.b32.xlu0 %v2251, 1
        %v2382 = vpop.permute.xlu0 %2381
        %2383 = vrot.lane.b32.xlu0 %v2253, 1
        %v2384 = vpop.permute.xlu0 %2383
        %2385 = vrot.lane.b32.xlu0 %v2255, 1
        %v2386 = vpop.permute.xlu0 %2385
        %2387 = vrot.lane.b32.xlu0 %v2257, 1
        %v2388 = vpop.permute.xlu0 %2387
        %v2389 = vsel %vm717, %v2374, %v2382
        %v2390 = vsel %vm717, %v2376, %v2384
        %v2391 = vsel %vm717, %v2378, %v2386
        %v2392 = vsel %vm717, %v2380, %v2388
        %v2393 = vsel %vm717, %v2382, %v2374
        %v2394 = vsel %vm717, %v2384, %v2376
        %v2395 = vsel %vm717, %v2386, %v2378
        %v2396 = vsel %vm717, %v2388, %v2380
        %v2397 = vmul.f32 %v2393, %v729
        %v2398 = vmul.f32 %v2389, %v733
        %v2399 = vmul.f32 %v2394, %v729
        %v2400 = vmul.f32 %v2390, %v733
        %v2401 = vmul.f32 %v2395, %v729
        %v2402 = vmul.f32 %v2391, %v733
        %v2403 = vmul.f32 %v2396, %v729
        %v2404 = vmul.f32 %v2392, %v733
        %2405 = vrot.lane.b32.xlu0 %v2250, 127
        %v2406 = vpop.permute.xlu0 %2405
        %2407 = vrot.lane.b32.xlu0 %v2252, 127
        %v2408 = vpop.permute.xlu0 %2407
        %2409 = vrot.lane.b32.xlu0 %v2254, 127
        %v2410 = vpop.permute.xlu0 %2409
        %2411 = vrot.lane.b32.xlu0 %v2256, 127
        %v2412 = vpop.permute.xlu0 %2411
        %2413 = vrot.lane.b32.xlu0 %v2251, 127
        %v2414 = vpop.permute.xlu0 %2413
        %2415 = vrot.lane.b32.xlu0 %v2253, 127
        %v2416 = vpop.permute.xlu0 %2415
        %2417 = vrot.lane.b32.xlu0 %v2255, 127
        %v2418 = vpop.permute.xlu0 %2417
        %2419 = vrot.lane.b32.xlu0 %v2257, 127
        %v2420 = vpop.permute.xlu0 %2419
        %v2421 = vsel %vm758, %v2406, %v2414
        %v2422 = vsel %vm758, %v2408, %v2416
        %v2423 = vsel %vm758, %v2410, %v2418
        %v2424 = vsel %vm758, %v2412, %v2420
        %v2425 = vsel %vm758, %v2414, %v2406
        %v2426 = vsel %vm758, %v2416, %v2408
        %v2427 = vsel %vm758, %v2418, %v2410
        %v2428 = vsel %vm758, %v2420, %v2412
        %v2429 = vmul.f32 %v2421, %v770
        %v2430 = vmul.f32 %v2425, %v774
        %v2431 = vmul.f32 %v2422, %v770
        %v2432 = vmul.f32 %v2426, %v774
        %v2433 = vmul.f32 %v2423, %v770
        %v2434 = vmul.f32 %v2427, %v774
        %v2435 = vmul.f32 %v2424, %v770
        %v2436 = vmul.f32 %v2428, %v774
        %2437 = vrot.lane.b32.xlu0 %v2250, 113
        %v2438 = vpop.permute.xlu0 %2437
        %2439 = vrot.lane.b32.xlu0 %v2252, 113
        %v2440 = vpop.permute.xlu0 %2439
        %2441 = vrot.lane.b32.xlu0 %v2254, 113
        %v2442 = vpop.permute.xlu0 %2441
        %2443 = vrot.lane.b32.xlu0 %v2256, 113
        %v2444 = vpop.permute.xlu0 %2443
        %2445 = vrot.lane.b32.xlu0 %v2251, 113
        %v2446 = vpop.permute.xlu0 %2445
        %2447 = vrot.lane.b32.xlu0 %v2253, 113
        %v2448 = vpop.permute.xlu0 %2447
        %2449 = vrot.lane.b32.xlu0 %v2255, 113
        %v2450 = vpop.permute.xlu0 %2449
        %2451 = vrot.lane.b32.xlu0 %v2257, 113
        %v2452 = vpop.permute.xlu0 %2451
        %v2453 = vsel %vm799, %v2438, %v2446
        %v2454 = vsel %vm799, %v2440, %v2448
        %v2455 = vsel %vm799, %v2442, %v2450
        %v2456 = vsel %vm799, %v2444, %v2452
        %v2457 = vsel %vm799, %v2446, %v2438
        %v2458 = vsel %vm799, %v2448, %v2440
        %v2459 = vsel %vm799, %v2450, %v2442
        %v2460 = vsel %vm799, %v2452, %v2444
        %v2461 = vmul.f32 %v2453, %v811
        %v2462 = vmul.f32 %v2457, %v815
        %v2463 = vmul.f32 %v2454, %v811
        %v2464 = vmul.f32 %v2458, %v815
        %v2465 = vmul.f32 %v2455, %v811
        %v2466 = vmul.f32 %v2459, %v815
        %v2467 = vmul.f32 %v2456, %v811
        %v2468 = vmul.f32 %v2460, %v815
        %2469 = vrot.lane.b32.xlu0 %v2250, 112
        %v2470 = vpop.permute.xlu0 %2469
        %2471 = vrot.lane.b32.xlu0 %v2252, 112
        %v2472 = vpop.permute.xlu0 %2471
        %2473 = vrot.lane.b32.xlu0 %v2254, 112
        %v2474 = vpop.permute.xlu0 %2473
        %2475 = vrot.lane.b32.xlu0 %v2256, 112
        %v2476 = vpop.permute.xlu0 %2475
        %2477 = vrot.lane.b32.xlu0 %v2251, 112
        %v2478 = vpop.permute.xlu0 %2477
        %2479 = vrot.lane.b32.xlu0 %v2253, 112
        %v2480 = vpop.permute.xlu0 %2479
        %2481 = vrot.lane.b32.xlu0 %v2255, 112
        %v2482 = vpop.permute.xlu0 %2481
        %2483 = vrot.lane.b32.xlu0 %v2257, 112
        %v2484 = vpop.permute.xlu0 %2483
        %v2485 = vsel %vm840, %v2470, %v2478
        %v2486 = vsel %vm840, %v2472, %v2480
        %v2487 = vsel %vm840, %v2474, %v2482
        %v2488 = vsel %vm840, %v2476, %v2484
        %v2489 = vsel %vm840, %v2478, %v2470
        %v2490 = vsel %vm840, %v2480, %v2472
        %v2491 = vsel %vm840, %v2482, %v2474
        %v2492 = vsel %vm840, %v2484, %v2476
        %v2493 = vmul.f32 %v2485, %v852
        %v2494 = vmul.f32 %v2489, %v856
        %v2495 = vmul.f32 %v2486, %v852
        %v2496 = vmul.f32 %v2490, %v856
        %v2497 = vmul.f32 %v2487, %v852
        %v2498 = vmul.f32 %v2491, %v856
        %v2499 = vmul.f32 %v2488, %v852
        %v2500 = vmul.f32 %v2492, %v856
        %2501 = vrot.lane.b32.xlu0 %v2250, 111
        %v2502 = vpop.permute.xlu0 %2501
        %2503 = vrot.lane.b32.xlu0 %v2252, 111
        %v2504 = vpop.permute.xlu0 %2503
        %2505 = vrot.lane.b32.xlu0 %v2254, 111
        %v2506 = vpop.permute.xlu0 %2505
        %2507 = vrot.lane.b32.xlu0 %v2256, 111
        %v2508 = vpop.permute.xlu0 %2507
        %2509 = vrot.lane.b32.xlu0 %v2251, 111
        %v2510 = vpop.permute.xlu0 %2509
        %2511 = vrot.lane.b32.xlu0 %v2253, 111
        %v2512 = vpop.permute.xlu0 %2511
        %2513 = vrot.lane.b32.xlu0 %v2255, 111
        %v2514 = vpop.permute.xlu0 %2513
        %2515 = vrot.lane.b32.xlu0 %v2257, 111
        %v2516 = vpop.permute.xlu0 %2515
        %v2517 = vsel %vm881, %v2502, %v2510
        %v2518 = vsel %vm881, %v2504, %v2512
        %v2519 = vsel %vm881, %v2506, %v2514
        %v2520 = vsel %vm881, %v2508, %v2516
        %v2521 = vsel %vm881, %v2510, %v2502
        %v2522 = vsel %vm881, %v2512, %v2504
        %v2523 = vsel %vm881, %v2514, %v2506
        %v2524 = vsel %vm881, %v2516, %v2508
        %v2525 = vmul.f32 %v2517, %v893
        %v2526 = vmul.f32 %v2521, %v897
        %v2527 = vmul.f32 %v2518, %v893
        %v2528 = vmul.f32 %v2522, %v897
        %v2529 = vmul.f32 %v2519, %v893
        %v2530 = vmul.f32 %v2523, %v897
        %v2531 = vmul.f32 %v2520, %v893
        %v2532 = vmul.f32 %v2524, %v897
        %v2534 = vsel %vm906, %v2268, 0
        %v2537 = vsel %vm906, %v2269, 0
        %v2540 = vsel %vm906, %v2270, 0
        %v2543 = vsel %vm906, %v2271, 0
        %2545 = vmatprep.subr.mxu0 0.0
        %2546 = vmatpush1.msra.mxu0 0.0
        %2547 = vmatprep.subr.mxu0 0.0
        %2548 = vmatpush1.msra.mxu0 0.0
        %2549 = vmatprep.subr.mxu0 0.0
        %2550 = vmatpush1.msra.mxu0 0.0
        %2551 = vmatprep.subr.mxu0 0.0
        %2552 = vmatpush1.msra.mxu0 0.0
        %2553 = vmatprep.subr.mxu0 0.0
        %2554 = vmatpush1.msra.mxu0 0.0
        %2555 = vmatprep.subr.mxu0 0.0
        %2556 = vmatpush1.msra.mxu0 0.0
        %2557 = vmatprep.subr.mxu0 0.0
        %2558 = vmatpush1.msra.mxu0 0.0
        %2559 = vmatprep.subr.mxu0 0.0
        %2560 = vmatpush1.msra.mxu0 0.0
        %2561 = vmatprep.subr.mxu0 0.0
        %2562 = vmatpush1.msra.mxu0 0.0
        %2563 = vmatprep.subr.mxu0 0.0
        %2564 = vmatpush1.msra.mxu0 0.0
        %2565 = vmatprep.subr.mxu0 0.0
        %2566 = vmatpush1.msra.mxu0 0.0
        %2567 = vmatprep.subr.mxu0 0.0
        %2568 = vmatpush1.msra.mxu0 0.0
        %2569 = vmatprep.subr.mxu0 %v2257
        %2570 = vmatpush1.msra.mxu0 %v2256
        %2571 = vmatprep.subr.mxu0 %v2255
        %2572 = vmatpush1.msra.mxu0 %v2254
        %2573 = vmatprep.subr.mxu0 %v2253
        %2574 = vmatpush1.msra.mxu0 %v2252
        %2575 = vmatprep.subr.mxu0 %v2251
        %2576 = vmatpush1.msra.mxu0 %v2250
        %2577 = vmatprep.subr.mxu0 0.0
        %2578 = vmatpush2.msra.mxu0 0.0
        %2579 = vmatprep.subr.mxu0 0.0
        %2580 = vmatpush2.msra.mxu0 0.0
        %2581 = vmatprep.subr.mxu0 0.0
        %2582 = vmatpush2.msra.mxu0 0.0
        %2583 = vmatprep.subr.mxu0 0.0
        %2584 = vmatpush2.msra.mxu0 0.0
        %2585 = vmatprep.subr.mxu0 0.0
        %2586 = vmatpush2.msra.mxu0 0.0
        %2587 = vmatprep.subr.mxu0 0.0
        %2588 = vmatpush2.msra.mxu0 0.0
        %2589 = vmatprep.subr.mxu0 0.0
        %2590 = vmatpush2.msra.mxu0 0.0
        %2591 = vmatprep.subr.mxu0 0.0
        %2592 = vmatpush2.msra.mxu0 0.0
        %2593 = vmatprep.subr.mxu0 0.0
        %2594 = vmatpush2.msra.mxu0 0.0
        %2595 = vmatprep.subr.mxu0 0.0
        %2596 = vmatpush2.msra.mxu0 0.0
        %2597 = vmatprep.subr.mxu0 0.0
        %2598 = vmatpush2.msra.mxu0 0.0
        %2599 = vmatprep.subr.mxu0 0.0
        %2600 = vmatpush2.msra.mxu0 0.0
        %2601 = vmatprep.subr.mxu0 0.0
        %2602 = vmatpush2.msra.mxu0 0.0
        %2603 = vmatprep.subr.mxu0 0.0
        %2604 = vmatpush2.msra.mxu0 0.0
        %2605 = vmatprep.subr.mxu0 0.0
        %2606 = vmatpush2.msra.mxu0 0.0
        %2607 = vmatprep.subr.mxu0 0.0
        %2608 = vmatpush2.msra.mxu0 0.0
        %2609 = vmatprep.mubr.f32.mxu0 0.0
        %2610 = vmatmul.mubr.f32.gmra.mxu0 %v2534
        %v2611 = vpop.f32.mrf.mxu0
        %v2612 = vadd.f32 0.0, %v2611
        %v2613 = vpop.f32.mrf.mxu0
        %v2614 = vadd.f32 0.0, %v2613
        %2615 = vmatprep.mubr.f32.mxu0 0.0
        %2616 = vmatmul.mubr.f32.gmra.mxu0 %v2537
        %v2617 = vpop.f32.mrf.mxu0
        %v2618 = vadd.f32 0.0, %v2617
        %v2619 = vpop.f32.mrf.mxu0
        %v2620 = vadd.f32 0.0, %v2619
        %2621 = vmatprep.mubr.f32.mxu0 0.0
        %2622 = vmatmul.mubr.f32.gmra.mxu0 %v2540
        %v2623 = vpop.f32.mrf.mxu0
        %v2624 = vadd.f32 0.0, %v2623
        %v2625 = vpop.f32.mrf.mxu0
        %v2626 = vadd.f32 0.0, %v2625
        %2627 = vmatprep.mubr.f32.mxu0 0.0
        %2628 = vmatmul.mubr.f32.gmra.mxu0 %v2543
        %v2629 = vpop.f32.mrf.mxu0
        %v2630 = vadd.f32 0.0, %v2629
        %v2631 = vpop.f32.mrf.mxu0
        %v2632 = vadd.f32 0.0, %v2631
        %2633 = vdwg.mxu0
        %2634 = vmatprep.subr.mxu0 %v2404
        %2635 = vmatpush1.msra.mxu0 %v2403
        %2636 = vmatprep.subr.mxu0 %v2402
        %2637 = vmatpush1.msra.mxu0 %v2401
        %2638 = vmatprep.subr.mxu0 %v2400
        %2639 = vmatpush1.msra.mxu0 %v2399
        %2640 = vmatprep.subr.mxu0 %v2398
        %2641 = vmatpush1.msra.mxu0 %v2397
        %2642 = vmatprep.subr.mxu0 %v2372
        %2643 = vmatpush1.msra.mxu0 %v2371
        %2644 = vmatprep.subr.mxu0 %v2370
        %2645 = vmatpush1.msra.mxu0 %v2369
        %2646 = vmatprep.subr.mxu0 %v2368
        %2647 = vmatpush1.msra.mxu0 %v2367
        %2648 = vmatprep.subr.mxu0 %v2366
        %2649 = vmatpush1.msra.mxu0 %v2365
        %2650 = vmatprep.subr.mxu0 %v2340
        %2651 = vmatpush1.msra.mxu0 %v2339
        %2652 = vmatprep.subr.mxu0 %v2338
        %2653 = vmatpush1.msra.mxu0 %v2337
        %2654 = vmatprep.subr.mxu0 %v2336
        %2655 = vmatpush1.msra.mxu0 %v2335
        %2656 = vmatprep.subr.mxu0 %v2334
        %2657 = vmatpush1.msra.mxu0 %v2333
        %2658 = vmatprep.subr.mxu0 %v2308
        %2659 = vmatpush1.msra.mxu0 %v2307
        %2660 = vmatprep.subr.mxu0 %v2306
        %2661 = vmatpush1.msra.mxu0 %v2305
        %2662 = vmatprep.subr.mxu0 %v2304
        %2663 = vmatpush1.msra.mxu0 %v2303
        %2664 = vmatprep.subr.mxu0 %v2302
        %2665 = vmatpush1.msra.mxu0 %v2301
        %2666 = vmatprep.subr.mxu0 %v2532
        %2667 = vmatpush2.msra.mxu0 %v2531
        %2668 = vmatprep.subr.mxu0 %v2530
        %2669 = vmatpush2.msra.mxu0 %v2529
        %2670 = vmatprep.subr.mxu0 %v2528
        %2671 = vmatpush2.msra.mxu0 %v2527
        %2672 = vmatprep.subr.mxu0 %v2526
        %2673 = vmatpush2.msra.mxu0 %v2525
        %2674 = vmatprep.subr.mxu0 %v2500
        %2675 = vmatpush2.msra.mxu0 %v2499
        %2676 = vmatprep.subr.mxu0 %v2498
        %2677 = vmatpush2.msra.mxu0 %v2497
        %2678 = vmatprep.subr.mxu0 %v2496
        %2679 = vmatpush2.msra.mxu0 %v2495
        %2680 = vmatprep.subr.mxu0 %v2494
        %2681 = vmatpush2.msra.mxu0 %v2493
        %2682 = vmatprep.subr.mxu0 %v2468
        %2683 = vmatpush2.msra.mxu0 %v2467
        %2684 = vmatprep.subr.mxu0 %v2466
        %2685 = vmatpush2.msra.mxu0 %v2465
        %2686 = vmatprep.subr.mxu0 %v2464
        %2687 = vmatpush2.msra.mxu0 %v2463
        %2688 = vmatprep.subr.mxu0 %v2462
        %2689 = vmatpush2.msra.mxu0 %v2461
        %2690 = vmatprep.subr.mxu0 %v2436
        %2691 = vmatpush2.msra.mxu0 %v2435
        %2692 = vmatprep.subr.mxu0 %v2434
        %2693 = vmatpush2.msra.mxu0 %v2433
        %2694 = vmatprep.subr.mxu0 %v2432
        %2695 = vmatpush2.msra.mxu0 %v2431
        %2696 = vmatprep.subr.mxu0 %v2430
        %2697 = vmatpush2.msra.mxu0 %v2429
        %2698 = vmatprep.mubr.f32.mxu0 %v2260
        %2699 = vmatmul.mubr.f32.gmra.mxu0 %v2259
        %v2700 = vpop.f32.mrf.mxu0
        %v2701 = vadd.f32 %v2612, %v2700
        %v2702 = vpop.f32.mrf.mxu0
        %v2703 = vadd.f32 %v2614, %v2702
        %2704 = vmatprep.mubr.f32.mxu0 %v2262
        %2705 = vmatmul.mubr.f32.gmra.mxu0 %v2261
        %v2706 = vpop.f32.mrf.mxu0
        %v2707 = vadd.f32 %v2618, %v2706
        %v2708 = vpop.f32.mrf.mxu0
        %v2709 = vadd.f32 %v2620, %v2708
        %2710 = vmatprep.mubr.f32.mxu0 %v2264
        %2711 = vmatmul.mubr.f32.gmra.mxu0 %v2263
        %v2712 = vpop.f32.mrf.mxu0
        %v2713 = vadd.f32 %v2624, %v2712
        %v2714 = vpop.f32.mrf.mxu0
        %v2715 = vadd.f32 %v2626, %v2714
        %2716 = vmatprep.mubr.f32.mxu0 %v2266
        %2717 = vmatmul.mubr.f32.gmra.mxu0 %v2265
        %v2718 = vpop.f32.mrf.mxu0
        %v2719 = vadd.f32 %v2630, %v2718
        %v2720 = vpop.f32.mrf.mxu0
        %v2721 = vadd.f32 %v2632, %v2720
        %2722 = vdwg.mxu0
        %2724 = vset.pattern.permute.xlu0 0
        %2725 = vperm.xlu0 %2724, %v2273
        %v2726 = vpop.permute.xlu0 %2725
        %2729 = vset.pattern.permute.xlu0 0
        %2730 = vperm.xlu0 %2729, %v2274
        %v2731 = vpop.permute.xlu0 %2730
        %2734 = vset.pattern.permute.xlu0 0
        %2735 = vperm.xlu0 %2734, %v2275
        %v2736 = vpop.permute.xlu0 %2735
        %2739 = vset.pattern.permute.xlu0 0
        %2740 = vperm.xlu0 %2739, %v2276
        %v2741 = vpop.permute.xlu0 %2740
        %v2743 = vadd.f32 %v2701, %v2726
        %v2744 = vadd.f32 %v2703, %v2726
        %v2745 = vadd.f32 %v2707, %v2731
        %v2746 = vadd.f32 %v2709, %v2731
        %v2747 = vadd.f32 %v2713, %v2736
        %v2748 = vadd.f32 %v2715, %v2736
        %v2749 = vadd.f32 %v2719, %v2741
        %v2750 = vadd.f32 %v2721, %v2741
        %v2751 = vadd.f32 %v2743, %v2744
        %2752 = vadd.xlane.f32.xlu0 %v2751
        %v2753 = vpop.xlane.xlu0 %2752
        %v2754 = vadd.f32 %v2745, %v2746
        %2755 = vadd.xlane.f32.xlu0 %v2754
        %v2756 = vpop.xlane.xlu0 %2755
        %v2757 = vadd.f32 %v2747, %v2748
        %2758 = vadd.xlane.f32.xlu0 %v2757
        %v2759 = vpop.xlane.xlu0 %2758
        %v2760 = vadd.f32 %v2749, %v2750
        %2761 = vadd.xlane.f32.xlu0 %v2760
        %v2762 = vpop.xlane.xlu0 %2761
        %v2763 = vmul.f32 %v2753, %v1635
        %v2764 = vmul.f32 %v2756, %v1635
        %v2765 = vmul.f32 %v2759, %v1635
        %v2766 = vmul.f32 %v2762, %v1635
        %s2767 = scalar_lea.vmem %s8, 32
        %v2768 = vld [vmem:[%s2767] sm:$0xff]
        %v2769 = vld [vmem:[%s2767 + $0x8] sm:$0xff]
        %v2770 = vld [vmem:[%s2767 + $0x10] sm:$0xff]
        %v2771 = vld [vmem:[%s2767 + $0x18] sm:$0xff]
        %v2772 = vmul.f32 %v2768, %v2763
        %v2773 = vmul.f32 %v2769, %v2764
        %v2774 = vmul.f32 %v2770, %v2765
        %v2775 = vmul.f32 %v2771, %v2766
        %v2776 = vsel %vm1648, %v2772, 0.0
        %v2777 = vsel %vm1648, %v2773, 0.0
        %v2778 = vadd.f32 %v2776, %v2777
        %v2779 = vsel %vm1648, %v2774, 0.0
        %v2780 = vadd.f32 %v2778, %v2779
        %v2781 = vsel %vm1648, %v2775, 0.0
        %v2782 = vadd.f32 %v2780, %v2781
        %v2783 = vrot.slane %v2782, 4
        %v2784 = vadd.f32 %v2782, %v2783
        %v2785 = vrot.slane %v2784, 2
        %v2786 = vadd.f32 %v2784, %v2785
        %v2787 = vrot.slane %v2786, 1
        %v2788 = vadd.f32 %v2786, %v2787
        %s2789 = scalar_lea.vmem %s9, 1
        %v2790 = vld [vmem:[%s2789] sm:$0x1]
        %v2791 = vadd.f32 %v2788, %v2790
        %v2792 = vmax.f32 %v2791, 0.0
        %s2793 = scalar_lea.vmem %s10, 32
        %v2794 = vld [vmem:[%s2793] sm:$0xff]
        %v2795 = vld [vmem:[%s2793 + $0x8] sm:$0xff]
        %v2796 = vld [vmem:[%s2793 + $0x10] sm:$0xff]
        %v2797 = vld [vmem:[%s2793 + $0x18] sm:$0xff]
        %v2798 = vlaneseq
        %v2799 = vshrl.u32 %v2798, 7
        %v2800 = vsub.s32 0, %v2799
        %v2801 = vrot.slane %v2792, %v2800
        %v2802 = vmul.f32 %v2794, %v2801
        %v2803 = vmul.f32 %v2795, %v2801
        %v2804 = vmul.f32 %v2796, %v2801
        %v2805 = vmul.f32 %v2797, %v2801
        %v2806 = vsel %vm1648, %v2802, 0.0
        %2807 = vadd.xlane.f32.xlu0 %v2806
        %v2808 = vpop.xlane.xlu0 %2807
        %v2809 = vsel %vm1648, %v2803, 0.0
        %2810 = vadd.xlane.f32.xlu0 %v2809
        %v2811 = vpop.xlane.xlu0 %2810
        %v2812 = vsel %vm1648, %v2804, 0.0
        %2813 = vadd.xlane.f32.xlu0 %v2812
        %v2814 = vpop.xlane.xlu0 %2813
        %v2815 = vsel %vm1648, %v2805, 0.0
        %2816 = vadd.xlane.f32.xlu0 %v2815
        %v2817 = vpop.xlane.xlu0 %2816
        %s2818 = scalar_lea.vmem %s11, 32
        %v2819 = vld [vmem:[%s2818] sm:$0xff]
        %v2820 = vld [vmem:[%s2818 + $0x8] sm:$0xff]
        %v2821 = vld [vmem:[%s2818 + $0x10] sm:$0xff]
        %v2822 = vld [vmem:[%s2818 + $0x18] sm:$0xff]
        %v2823 = vadd.f32 %v2808, %v2819
        %v2824 = vadd.f32 %v2811, %v2820
        %v2825 = vadd.f32 %v2814, %v2821
        %v2826 = vadd.f32 %v2817, %v2822
        %v2827 = vxor.u32 %v2823, 2147483648
        %v2828 = vxor.u32 %v2824, 2147483648
        %v2829 = vxor.u32 %v2825, 2147483648
        %v2830 = vxor.u32 %v2826, 2147483648
        %v2831 = vmul.f32 %v2827, 1.442695
        %v2832 = vpow.pop %v2831
        %v2833 = vmul.f32 %v2828, 1.442695
        %v2834 = vpow.pop %v2833
        %v2835 = vmul.f32 %v2829, 1.442695
        %v2836 = vpow.pop %v2835
        %v2837 = vmul.f32 %v2830, 1.442695
        %v2838 = vpow.pop %v2837
        %v2839 = vadd.f32 %v2832, 1.0
        %v2840 = vadd.f32 %v2834, 1.0
        %v2841 = vadd.f32 %v2836, 1.0
        %v2842 = vadd.f32 %v2838, 1.0
        %v2843 = vrcp.pop %v2839
        %v2844 = vmul.f32 1.0, %v2843
        %v2845 = vrcp.pop %v2840
        %v2846 = vmul.f32 1.0, %v2845
        %v2847 = vrcp.pop %v2841
        %v2848 = vmul.f32 1.0, %v2847
        %v2849 = vrcp.pop %v2842
        %v2850 = vmul.f32 1.0, %v2849
        %2852 = vset.pattern.permute.xlu0 0
        %2853 = vperm.xlu0 %2852, %v2844
        %v2854 = vpop.permute.xlu0 %2853
        %2857 = vset.pattern.permute.xlu0 0
        %2858 = vperm.xlu0 %2857, %v2846
        %v2859 = vpop.permute.xlu0 %2858
        %2862 = vset.pattern.permute.xlu0 0
        %2863 = vperm.xlu0 %2862, %v2848
        %v2864 = vpop.permute.xlu0 %2863
        %2867 = vset.pattern.permute.xlu0 0
        %2868 = vperm.xlu0 %2867, %v2850
        %v2869 = vpop.permute.xlu0 %2868
        %v2871 = vmul.f32 %v2743, %v2854
        %v2872 = vmul.f32 %v2744, %v2854
        %v2873 = vmul.f32 %v2745, %v2859
        %v2874 = vmul.f32 %v2746, %v2859
        %v2875 = vmul.f32 %v2747, %v2864
        %v2876 = vmul.f32 %v2748, %v2864
        %v2877 = vmul.f32 %v2749, %v2869
        %v2878 = vmul.f32 %v2750, %v2869
        %v2879 = vadd.f32 %v2871, %v1749
        %v2880 = vadd.f32 %v2872, %v1750
        %v2881 = vadd.f32 %v2873, %v1751
        %v2882 = vadd.f32 %v2874, %v1752
        %v2883 = vadd.f32 %v2875, %v1753
        %v2884 = vadd.f32 %v2876, %v1754
        %v2885 = vadd.f32 %v2877, %v1755
        %v2886 = vadd.f32 %v2878, %v1756
        %s2887 = scalar_lea.vmem %s2, 128
        %v2888 = vld [vmem:[%s2887] sm:$0xff]
        %v2889 = vld [vmem:[%s2887 + $0x8] sm:$0xff]
        %v2890 = vld [vmem:[%s2887 + $0x10] sm:$0xff]
        %v2891 = vld [vmem:[%s2887 + $0x18] sm:$0xff]
        %v2892 = vld [vmem:[%s2887 + $0x20] sm:$0xff]
        %v2893 = vld [vmem:[%s2887 + $0x28] sm:$0xff]
        %v2894 = vld [vmem:[%s2887 + $0x30] sm:$0xff]
        %v2895 = vld [vmem:[%s2887 + $0x38] sm:$0xff]
        %s2896 = scalar_lea.vmem [#allocation5], 64
        %v2897 = vld [vmem:[%s2896] sm:$0xff]
        %v2898 = vld [vmem:[%s2896 + $0x8] sm:$0xff]
        %v2899 = vld [vmem:[%s2896 + $0x10] sm:$0xff]
        %v2900 = vld [vmem:[%s2896 + $0x18] sm:$0xff]
        %s2901 = scalar_lea.vmem %s4, 64
        %v2902 = vld [vmem:[%s2901] sm:$0xff]
        %v2903 = vld [vmem:[%s2901 + $0x8] sm:$0xff]
        %v2904 = vld [vmem:[%s2901 + $0x10] sm:$0xff]
        %v2905 = vld [vmem:[%s2901 + $0x18] sm:$0xff]
        %2906 = vrot.lane.b32.xlu0 %v2879, 17
        %v2907 = vpop.permute.xlu0 %2906
        %2908 = vrot.lane.b32.xlu0 %v2881, 17
        %v2909 = vpop.permute.xlu0 %2908
        %2910 = vrot.lane.b32.xlu0 %v2883, 17
        %v2911 = vpop.permute.xlu0 %2910
        %2912 = vrot.lane.b32.xlu0 %v2885, 17
        %v2913 = vpop.permute.xlu0 %2912
        %2914 = vrot.lane.b32.xlu0 %v2880, 17
        %v2915 = vpop.permute.xlu0 %2914
        %2916 = vrot.lane.b32.xlu0 %v2882, 17
        %v2917 = vpop.permute.xlu0 %2916
        %2918 = vrot.lane.b32.xlu0 %v2884, 17
        %v2919 = vpop.permute.xlu0 %2918
        %2920 = vrot.lane.b32.xlu0 %v2886, 17
        %v2921 = vpop.permute.xlu0 %2920
        %v2922 = vsel %vm594, %v2907, %v2915
        %v2923 = vsel %vm594, %v2909, %v2917
        %v2924 = vsel %vm594, %v2911, %v2919
        %v2925 = vsel %vm594, %v2913, %v2921
        %v2926 = vsel %vm594, %v2915, %v2907
        %v2927 = vsel %vm594, %v2917, %v2909
        %v2928 = vsel %vm594, %v2919, %v2911
        %v2929 = vsel %vm594, %v2921, %v2913
        %v2930 = vmul.f32 %v2926, %v606
        %v2931 = vmul.f32 %v2922, %v610
        %v2932 = vmul.f32 %v2927, %v606
        %v2933 = vmul.f32 %v2923, %v610
        %v2934 = vmul.f32 %v2928, %v606
        %v2935 = vmul.f32 %v2924, %v610
        %v2936 = vmul.f32 %v2929, %v606
        %v2937 = vmul.f32 %v2925, %v610
        %2938 = vrot.lane.b32.xlu0 %v2879, 16
        %v2939 = vpop.permute.xlu0 %2938
        %2940 = vrot.lane.b32.xlu0 %v2881, 16
        %v2941 = vpop.permute.xlu0 %2940
        %2942 = vrot.lane.b32.xlu0 %v2883, 16
        %v2943 = vpop.permute.xlu0 %2942
        %2944 = vrot.lane.b32.xlu0 %v2885, 16
        %v2945 = vpop.permute.xlu0 %2944
        %2946 = vrot.lane.b32.xlu0 %v2880, 16
        %v2947 = vpop.permute.xlu0 %2946
        %2948 = vrot.lane.b32.xlu0 %v2882, 16
        %v2949 = vpop.permute.xlu0 %2948
        %2950 = vrot.lane.b32.xlu0 %v2884, 16
        %v2951 = vpop.permute.xlu0 %2950
        %2952 = vrot.lane.b32.xlu0 %v2886, 16
        %v2953 = vpop.permute.xlu0 %2952
        %v2954 = vsel %vm635, %v2939, %v2947
        %v2955 = vsel %vm635, %v2941, %v2949
        %v2956 = vsel %vm635, %v2943, %v2951
        %v2957 = vsel %vm635, %v2945, %v2953
        %v2958 = vsel %vm635, %v2947, %v2939
        %v2959 = vsel %vm635, %v2949, %v2941
        %v2960 = vsel %vm635, %v2951, %v2943
        %v2961 = vsel %vm635, %v2953, %v2945
        %v2962 = vmul.f32 %v2958, %v647
        %v2963 = vmul.f32 %v2954, %v651
        %v2964 = vmul.f32 %v2959, %v647
        %v2965 = vmul.f32 %v2955, %v651
        %v2966 = vmul.f32 %v2960, %v647
        %v2967 = vmul.f32 %v2956, %v651
        %v2968 = vmul.f32 %v2961, %v647
        %v2969 = vmul.f32 %v2957, %v651
        %2970 = vrot.lane.b32.xlu0 %v2879, 15
        %v2971 = vpop.permute.xlu0 %2970
        %2972 = vrot.lane.b32.xlu0 %v2881, 15
        %v2973 = vpop.permute.xlu0 %2972
        %2974 = vrot.lane.b32.xlu0 %v2883, 15
        %v2975 = vpop.permute.xlu0 %2974
        %2976 = vrot.lane.b32.xlu0 %v2885, 15
        %v2977 = vpop.permute.xlu0 %2976
        %2978 = vrot.lane.b32.xlu0 %v2880, 15
        %v2979 = vpop.permute.xlu0 %2978
        %2980 = vrot.lane.b32.xlu0 %v2882, 15
        %v2981 = vpop.permute.xlu0 %2980
        %2982 = vrot.lane.b32.xlu0 %v2884, 15
        %v2983 = vpop.permute.xlu0 %2982
        %2984 = vrot.lane.b32.xlu0 %v2886, 15
        %v2985 = vpop.permute.xlu0 %2984
        %v2986 = vsel %vm676, %v2971, %v2979
        %v2987 = vsel %vm676, %v2973, %v2981
        %v2988 = vsel %vm676, %v2975, %v2983
        %v2989 = vsel %vm676, %v2977, %v2985
        %v2990 = vsel %vm676, %v2979, %v2971
        %v2991 = vsel %vm676, %v2981, %v2973
        %v2992 = vsel %vm676, %v2983, %v2975
        %v2993 = vsel %vm676, %v2985, %v2977
        %v2994 = vmul.f32 %v2990, %v688
        %v2995 = vmul.f32 %v2986, %v692
        %v2996 = vmul.f32 %v2991, %v688
        %v2997 = vmul.f32 %v2987, %v692
        %v2998 = vmul.f32 %v2992, %v688
        %v2999 = vmul.f32 %v2988, %v692
        %v3000 = vmul.f32 %v2993, %v688
        %v3001 = vmul.f32 %v2989, %v692
        %3002 = vrot.lane.b32.xlu0 %v2879, 1
        %v3003 = vpop.permute.xlu0 %3002
        %3004 = vrot.lane.b32.xlu0 %v2881, 1
        %v3005 = vpop.permute.xlu0 %3004
        %3006 = vrot.lane.b32.xlu0 %v2883, 1
        %v3007 = vpop.permute.xlu0 %3006
        %3008 = vrot.lane.b32.xlu0 %v2885, 1
        %v3009 = vpop.permute.xlu0 %3008
        %3010 = vrot.lane.b32.xlu0 %v2880, 1
        %v3011 = vpop.permute.xlu0 %3010
        %3012 = vrot.lane.b32.xlu0 %v2882, 1
        %v3013 = vpop.permute.xlu0 %3012
        %3014 = vrot.lane.b32.xlu0 %v2884, 1
        %v3015 = vpop.permute.xlu0 %3014
        %3016 = vrot.lane.b32.xlu0 %v2886, 1
        %v3017 = vpop.permute.xlu0 %3016
        %v3018 = vsel %vm717, %v3003, %v3011
        %v3019 = vsel %vm717, %v3005, %v3013
        %v3020 = vsel %vm717, %v3007, %v3015
        %v3021 = vsel %vm717, %v3009, %v3017
        %v3022 = vsel %vm717, %v3011, %v3003
        %v3023 = vsel %vm717, %v3013, %v3005
        %v3024 = vsel %vm717, %v3015, %v3007
        %v3025 = vsel %vm717, %v3017, %v3009
        %v3026 = vmul.f32 %v3022, %v729
        %v3027 = vmul.f32 %v3018, %v733
        %v3028 = vmul.f32 %v3023, %v729
        %v3029 = vmul.f32 %v3019, %v733
        %v3030 = vmul.f32 %v3024, %v729
        %v3031 = vmul.f32 %v3020, %v733
        %v3032 = vmul.f32 %v3025, %v729
        %v3033 = vmul.f32 %v3021, %v733
        %3034 = vrot.lane.b32.xlu0 %v2879, 127
        %v3035 = vpop.permute.xlu0 %3034
        %3036 = vrot.lane.b32.xlu0 %v2881, 127
        %v3037 = vpop.permute.xlu0 %3036
        %3038 = vrot.lane.b32.xlu0 %v2883, 127
        %v3039 = vpop.permute.xlu0 %3038
        %3040 = vrot.lane.b32.xlu0 %v2885, 127
        %v3041 = vpop.permute.xlu0 %3040
        %3042 = vrot.lane.b32.xlu0 %v2880, 127
        %v3043 = vpop.permute.xlu0 %3042
        %3044 = vrot.lane.b32.xlu0 %v2882, 127
        %v3045 = vpop.permute.xlu0 %3044
        %3046 = vrot.lane.b32.xlu0 %v2884, 127
        %v3047 = vpop.permute.xlu0 %3046
        %3048 = vrot.lane.b32.xlu0 %v2886, 127
        %v3049 = vpop.permute.xlu0 %3048
        %v3050 = vsel %vm758, %v3035, %v3043
        %v3051 = vsel %vm758, %v3037, %v3045
        %v3052 = vsel %vm758, %v3039, %v3047
        %v3053 = vsel %vm758, %v3041, %v3049
        %v3054 = vsel %vm758, %v3043, %v3035
        %v3055 = vsel %vm758, %v3045, %v3037
        %v3056 = vsel %vm758, %v3047, %v3039
        %v3057 = vsel %vm758, %v3049, %v3041
        %v3058 = vmul.f32 %v3050, %v770
        %v3059 = vmul.f32 %v3054, %v774
        %v3060 = vmul.f32 %v3051, %v770
        %v3061 = vmul.f32 %v3055, %v774
        %v3062 = vmul.f32 %v3052, %v770
        %v3063 = vmul.f32 %v3056, %v774
        %v3064 = vmul.f32 %v3053, %v770
        %v3065 = vmul.f32 %v3057, %v774
        %3066 = vrot.lane.b32.xlu0 %v2879, 113
        %v3067 = vpop.permute.xlu0 %3066
        %3068 = vrot.lane.b32.xlu0 %v2881, 113
        %v3069 = vpop.permute.xlu0 %3068
        %3070 = vrot.lane.b32.xlu0 %v2883, 113
        %v3071 = vpop.permute.xlu0 %3070
        %3072 = vrot.lane.b32.xlu0 %v2885, 113
        %v3073 = vpop.permute.xlu0 %3072
        %3074 = vrot.lane.b32.xlu0 %v2880, 113
        %v3075 = vpop.permute.xlu0 %3074
        %3076 = vrot.lane.b32.xlu0 %v2882, 113
        %v3077 = vpop.permute.xlu0 %3076
        %3078 = vrot.lane.b32.xlu0 %v2884, 113
        %v3079 = vpop.permute.xlu0 %3078
        %3080 = vrot.lane.b32.xlu0 %v2886, 113
        %v3081 = vpop.permute.xlu0 %3080
        %v3082 = vsel %vm799, %v3067, %v3075
        %v3083 = vsel %vm799, %v3069, %v3077
        %v3084 = vsel %vm799, %v3071, %v3079
        %v3085 = vsel %vm799, %v3073, %v3081
        %v3086 = vsel %vm799, %v3075, %v3067
        %v3087 = vsel %vm799, %v3077, %v3069
        %v3088 = vsel %vm799, %v3079, %v3071
        %v3089 = vsel %vm799, %v3081, %v3073
        %v3090 = vmul.f32 %v3082, %v811
        %v3091 = vmul.f32 %v3086, %v815
        %v3092 = vmul.f32 %v3083, %v811
        %v3093 = vmul.f32 %v3087, %v815
        %v3094 = vmul.f32 %v3084, %v811
        %v3095 = vmul.f32 %v3088, %v815
        %v3096 = vmul.f32 %v3085, %v811
        %v3097 = vmul.f32 %v3089, %v815
        %3098 = vrot.lane.b32.xlu0 %v2879, 112
        %v3099 = vpop.permute.xlu0 %3098
        %3100 = vrot.lane.b32.xlu0 %v2881, 112
        %v3101 = vpop.permute.xlu0 %3100
        %3102 = vrot.lane.b32.xlu0 %v2883, 112
        %v3103 = vpop.permute.xlu0 %3102
        %3104 = vrot.lane.b32.xlu0 %v2885, 112
        %v3105 = vpop.permute.xlu0 %3104
        %3106 = vrot.lane.b32.xlu0 %v2880, 112
        %v3107 = vpop.permute.xlu0 %3106
        %3108 = vrot.lane.b32.xlu0 %v2882, 112
        %v3109 = vpop.permute.xlu0 %3108
        %3110 = vrot.lane.b32.xlu0 %v2884, 112
        %v3111 = vpop.permute.xlu0 %3110
        %3112 = vrot.lane.b32.xlu0 %v2886, 112
        %v3113 = vpop.permute.xlu0 %3112
        %v3114 = vsel %vm840, %v3099, %v3107
        %v3115 = vsel %vm840, %v3101, %v3109
        %v3116 = vsel %vm840, %v3103, %v3111
        %v3117 = vsel %vm840, %v3105, %v3113
        %v3118 = vsel %vm840, %v3107, %v3099
        %v3119 = vsel %vm840, %v3109, %v3101
        %v3120 = vsel %vm840, %v3111, %v3103
        %v3121 = vsel %vm840, %v3113, %v3105
        %v3122 = vmul.f32 %v3114, %v852
        %v3123 = vmul.f32 %v3118, %v856
        %v3124 = vmul.f32 %v3115, %v852
        %v3125 = vmul.f32 %v3119, %v856
        %v3126 = vmul.f32 %v3116, %v852
        %v3127 = vmul.f32 %v3120, %v856
        %v3128 = vmul.f32 %v3117, %v852
        %v3129 = vmul.f32 %v3121, %v856
        %3130 = vrot.lane.b32.xlu0 %v2879, 111
        %v3131 = vpop.permute.xlu0 %3130
        %3132 = vrot.lane.b32.xlu0 %v2881, 111
        %v3133 = vpop.permute.xlu0 %3132
        %3134 = vrot.lane.b32.xlu0 %v2883, 111
        %v3135 = vpop.permute.xlu0 %3134
        %3136 = vrot.lane.b32.xlu0 %v2885, 111
        %v3137 = vpop.permute.xlu0 %3136
        %3138 = vrot.lane.b32.xlu0 %v2880, 111
        %v3139 = vpop.permute.xlu0 %3138
        %3140 = vrot.lane.b32.xlu0 %v2882, 111
        %v3141 = vpop.permute.xlu0 %3140
        %3142 = vrot.lane.b32.xlu0 %v2884, 111
        %v3143 = vpop.permute.xlu0 %3142
        %3144 = vrot.lane.b32.xlu0 %v2886, 111
        %v3145 = vpop.permute.xlu0 %3144
        %v3146 = vsel %vm881, %v3131, %v3139
        %v3147 = vsel %vm881, %v3133, %v3141
        %v3148 = vsel %vm881, %v3135, %v3143
        %v3149 = vsel %vm881, %v3137, %v3145
        %v3150 = vsel %vm881, %v3139, %v3131
        %v3151 = vsel %vm881, %v3141, %v3133
        %v3152 = vsel %vm881, %v3143, %v3135
        %v3153 = vsel %vm881, %v3145, %v3137
        %v3154 = vmul.f32 %v3146, %v893
        %v3155 = vmul.f32 %v3150, %v897
        %v3156 = vmul.f32 %v3147, %v893
        %v3157 = vmul.f32 %v3151, %v897
        %v3158 = vmul.f32 %v3148, %v893
        %v3159 = vmul.f32 %v3152, %v897
        %v3160 = vmul.f32 %v3149, %v893
        %v3161 = vmul.f32 %v3153, %v897
        %v3163 = vsel %vm906, %v2897, 0
        %v3166 = vsel %vm906, %v2898, 0
        %v3169 = vsel %vm906, %v2899, 0
        %v3172 = vsel %vm906, %v2900, 0
        %3174 = vmatprep.subr.mxu0 0.0
        %3175 = vmatpush1.msra.mxu0 0.0
        %3176 = vmatprep.subr.mxu0 0.0
        %3177 = vmatpush1.msra.mxu0 0.0
        %3178 = vmatprep.subr.mxu0 0.0
        %3179 = vmatpush1.msra.mxu0 0.0
        %3180 = vmatprep.subr.mxu0 0.0
        %3181 = vmatpush1.msra.mxu0 0.0
        %3182 = vmatprep.subr.mxu0 0.0
        %3183 = vmatpush1.msra.mxu0 0.0
        %3184 = vmatprep.subr.mxu0 0.0
        %3185 = vmatpush1.msra.mxu0 0.0
        %3186 = vmatprep.subr.mxu0 0.0
        %3187 = vmatpush1.msra.mxu0 0.0
        %3188 = vmatprep.subr.mxu0 0.0
        %3189 = vmatpush1.msra.mxu0 0.0
        %3190 = vmatprep.subr.mxu0 0.0
        %3191 = vmatpush1.msra.mxu0 0.0
        %3192 = vmatprep.subr.mxu0 0.0
        %3193 = vmatpush1.msra.mxu0 0.0
        %3194 = vmatprep.subr.mxu0 0.0
        %3195 = vmatpush1.msra.mxu0 0.0
        %3196 = vmatprep.subr.mxu0 0.0
        %3197 = vmatpush1.msra.mxu0 0.0
        %3198 = vmatprep.subr.mxu0 %v2886
        %3199 = vmatpush1.msra.mxu0 %v2885
        %3200 = vmatprep.subr.mxu0 %v2884
        %3201 = vmatpush1.msra.mxu0 %v2883
        %3202 = vmatprep.subr.mxu0 %v2882
        %3203 = vmatpush1.msra.mxu0 %v2881
        %3204 = vmatprep.subr.mxu0 %v2880
        %3205 = vmatpush1.msra.mxu0 %v2879
        %3206 = vmatprep.subr.mxu0 0.0
        %3207 = vmatpush2.msra.mxu0 0.0
        %3208 = vmatprep.subr.mxu0 0.0
        %3209 = vmatpush2.msra.mxu0 0.0
        %3210 = vmatprep.subr.mxu0 0.0
        %3211 = vmatpush2.msra.mxu0 0.0
        %3212 = vmatprep.subr.mxu0 0.0
        %3213 = vmatpush2.msra.mxu0 0.0
        %3214 = vmatprep.subr.mxu0 0.0
        %3215 = vmatpush2.msra.mxu0 0.0
        %3216 = vmatprep.subr.mxu0 0.0
        %3217 = vmatpush2.msra.mxu0 0.0
        %3218 = vmatprep.subr.mxu0 0.0
        %3219 = vmatpush2.msra.mxu0 0.0
        %3220 = vmatprep.subr.mxu0 0.0
        %3221 = vmatpush2.msra.mxu0 0.0
        %3222 = vmatprep.subr.mxu0 0.0
        %3223 = vmatpush2.msra.mxu0 0.0
        %3224 = vmatprep.subr.mxu0 0.0
        %3225 = vmatpush2.msra.mxu0 0.0
        %3226 = vmatprep.subr.mxu0 0.0
        %3227 = vmatpush2.msra.mxu0 0.0
        %3228 = vmatprep.subr.mxu0 0.0
        %3229 = vmatpush2.msra.mxu0 0.0
        %3230 = vmatprep.subr.mxu0 0.0
        %3231 = vmatpush2.msra.mxu0 0.0
        %3232 = vmatprep.subr.mxu0 0.0
        %3233 = vmatpush2.msra.mxu0 0.0
        %3234 = vmatprep.subr.mxu0 0.0
        %3235 = vmatpush2.msra.mxu0 0.0
        %3236 = vmatprep.subr.mxu0 0.0
        %3237 = vmatpush2.msra.mxu0 0.0
        %3238 = vmatprep.mubr.f32.mxu0 0.0
        %3239 = vmatmul.mubr.f32.gmra.mxu0 %v3163
        %v3240 = vpop.f32.mrf.mxu0
        %v3241 = vadd.f32 0.0, %v3240
        %v3242 = vpop.f32.mrf.mxu0
        %v3243 = vadd.f32 0.0, %v3242
        %3244 = vmatprep.mubr.f32.mxu0 0.0
        %3245 = vmatmul.mubr.f32.gmra.mxu0 %v3166
        %v3246 = vpop.f32.mrf.mxu0
        %v3247 = vadd.f32 0.0, %v3246
        %v3248 = vpop.f32.mrf.mxu0
        %v3249 = vadd.f32 0.0, %v3248
        %3250 = vmatprep.mubr.f32.mxu0 0.0
        %3251 = vmatmul.mubr.f32.gmra.mxu0 %v3169
        %v3252 = vpop.f32.mrf.mxu0
        %v3253 = vadd.f32 0.0, %v3252
        %v3254 = vpop.f32.mrf.mxu0
        %v3255 = vadd.f32 0.0, %v3254
        %3256 = vmatprep.mubr.f32.mxu0 0.0
        %3257 = vmatmul.mubr.f32.gmra.mxu0 %v3172
        %v3258 = vpop.f32.mrf.mxu0
        %v3259 = vadd.f32 0.0, %v3258
        %v3260 = vpop.f32.mrf.mxu0
        %v3261 = vadd.f32 0.0, %v3260
        %3262 = vdwg.mxu0
        %3263 = vmatprep.subr.mxu0 %v3033
        %3264 = vmatpush1.msra.mxu0 %v3032
        %3265 = vmatprep.subr.mxu0 %v3031
        %3266 = vmatpush1.msra.mxu0 %v3030
        %3267 = vmatprep.subr.mxu0 %v3029
        %3268 = vmatpush1.msra.mxu0 %v3028
        %3269 = vmatprep.subr.mxu0 %v3027
        %3270 = vmatpush1.msra.mxu0 %v3026
        %3271 = vmatprep.subr.mxu0 %v3001
        %3272 = vmatpush1.msra.mxu0 %v3000
        %3273 = vmatprep.subr.mxu0 %v2999
        %3274 = vmatpush1.msra.mxu0 %v2998
        %3275 = vmatprep.subr.mxu0 %v2997
        %3276 = vmatpush1.msra.mxu0 %v2996
        %3277 = vmatprep.subr.mxu0 %v2995
        %3278 = vmatpush1.msra.mxu0 %v2994
        %3279 = vmatprep.subr.mxu0 %v2969
        %3280 = vmatpush1.msra.mxu0 %v2968
        %3281 = vmatprep.subr.mxu0 %v2967
        %3282 = vmatpush1.msra.mxu0 %v2966
        %3283 = vmatprep.subr.mxu0 %v2965
        %3284 = vmatpush1.msra.mxu0 %v2964
        %3285 = vmatprep.subr.mxu0 %v2963
        %3286 = vmatpush1.msra.mxu0 %v2962
        %3287 = vmatprep.subr.mxu0 %v2937
        %3288 = vmatpush1.msra.mxu0 %v2936
        %3289 = vmatprep.subr.mxu0 %v2935
        %3290 = vmatpush1.msra.mxu0 %v2934
        %3291 = vmatprep.subr.mxu0 %v2933
        %3292 = vmatpush1.msra.mxu0 %v2932
        %3293 = vmatprep.subr.mxu0 %v2931
        %3294 = vmatpush1.msra.mxu0 %v2930
        %3295 = vmatprep.subr.mxu0 %v3161
        %3296 = vmatpush2.msra.mxu0 %v3160
        %3297 = vmatprep.subr.mxu0 %v3159
        %3298 = vmatpush2.msra.mxu0 %v3158
        %3299 = vmatprep.subr.mxu0 %v3157
        %3300 = vmatpush2.msra.mxu0 %v3156
        %3301 = vmatprep.subr.mxu0 %v3155
        %3302 = vmatpush2.msra.mxu0 %v3154
        %3303 = vmatprep.subr.mxu0 %v3129
        %3304 = vmatpush2.msra.mxu0 %v3128
        %3305 = vmatprep.subr.mxu0 %v3127
        %3306 = vmatpush2.msra.mxu0 %v3126
        %3307 = vmatprep.subr.mxu0 %v3125
        %3308 = vmatpush2.msra.mxu0 %v3124
        %3309 = vmatprep.subr.mxu0 %v3123
        %3310 = vmatpush2.msra.mxu0 %v3122
        %3311 = vmatprep.subr.mxu0 %v3097
        %3312 = vmatpush2.msra.mxu0 %v3096
        %3313 = vmatprep.subr.mxu0 %v3095
        %3314 = vmatpush2.msra.mxu0 %v3094
        %3315 = vmatprep.subr.mxu0 %v3093
        %3316 = vmatpush2.msra.mxu0 %v3092
        %3317 = vmatprep.subr.mxu0 %v3091
        %3318 = vmatpush2.msra.mxu0 %v3090
        %3319 = vmatprep.subr.mxu0 %v3065
        %3320 = vmatpush2.msra.mxu0 %v3064
        %3321 = vmatprep.subr.mxu0 %v3063
        %3322 = vmatpush2.msra.mxu0 %v3062
        %3323 = vmatprep.subr.mxu0 %v3061
        %3324 = vmatpush2.msra.mxu0 %v3060
        %3325 = vmatprep.subr.mxu0 %v3059
        %3326 = vmatpush2.msra.mxu0 %v3058
        %3327 = vmatprep.mubr.f32.mxu0 %v2889
        %3328 = vmatmul.mubr.f32.gmra.mxu0 %v2888
        %v3329 = vpop.f32.mrf.mxu0
        %v3330 = vadd.f32 %v3241, %v3329
        %v3331 = vpop.f32.mrf.mxu0
        %v3332 = vadd.f32 %v3243, %v3331
        %3333 = vmatprep.mubr.f32.mxu0 %v2891
        %3334 = vmatmul.mubr.f32.gmra.mxu0 %v2890
        %v3335 = vpop.f32.mrf.mxu0
        %v3336 = vadd.f32 %v3247, %v3335
        %v3337 = vpop.f32.mrf.mxu0
        %v3338 = vadd.f32 %v3249, %v3337
        %3339 = vmatprep.mubr.f32.mxu0 %v2893
        %3340 = vmatmul.mubr.f32.gmra.mxu0 %v2892
        %v3341 = vpop.f32.mrf.mxu0
        %v3342 = vadd.f32 %v3253, %v3341
        %v3343 = vpop.f32.mrf.mxu0
        %v3344 = vadd.f32 %v3255, %v3343
        %3345 = vmatprep.mubr.f32.mxu0 %v2895
        %3346 = vmatmul.mubr.f32.gmra.mxu0 %v2894
        %v3347 = vpop.f32.mrf.mxu0
        %v3348 = vadd.f32 %v3259, %v3347
        %v3349 = vpop.f32.mrf.mxu0
        %v3350 = vadd.f32 %v3261, %v3349
        %3351 = vdwg.mxu0
        %3353 = vset.pattern.permute.xlu0 0
        %3354 = vperm.xlu0 %3353, %v2902
        %v3355 = vpop.permute.xlu0 %3354
        %3358 = vset.pattern.permute.xlu0 0
        %3359 = vperm.xlu0 %3358, %v2903
        %v3360 = vpop.permute.xlu0 %3359
        %3363 = vset.pattern.permute.xlu0 0
        %3364 = vperm.xlu0 %3363, %v2904
        %v3365 = vpop.permute.xlu0 %3364
        %3368 = vset.pattern.permute.xlu0 0
        %3369 = vperm.xlu0 %3368, %v2905
        %v3370 = vpop.permute.xlu0 %3369
        %v3372 = vadd.f32 %v3330, %v3355
        %v3373 = vadd.f32 %v3332, %v3355
        %v3374 = vadd.f32 %v3336, %v3360
        %v3375 = vadd.f32 %v3338, %v3360
        %v3376 = vadd.f32 %v3342, %v3365
        %v3377 = vadd.f32 %v3344, %v3365
        %v3378 = vadd.f32 %v3348, %v3370
        %v3379 = vadd.f32 %v3350, %v3370
        %v3380 = vmax.f32 %v3372, 0.0
        %v3381 = vmax.f32 %v3373, 0.0
        %v3382 = vmax.f32 %v3374, 0.0
        %v3383 = vmax.f32 %v3375, 0.0
        %v3384 = vmax.f32 %v3376, 0.0
        %v3385 = vmax.f32 %v3377, 0.0
        %v3386 = vmax.f32 %v3378, 0.0
        %v3387 = vmax.f32 %v3379, 0.0
        %s3388 = scalar_lea.vmem %s5, 128
        %v3389 = vld [vmem:[%s3388] sm:$0xff]
        %v3390 = vld [vmem:[%s3388 + $0x8] sm:$0xff]
        %v3391 = vld [vmem:[%s3388 + $0x10] sm:$0xff]
        %v3392 = vld [vmem:[%s3388 + $0x18] sm:$0xff]
        %v3393 = vld [vmem:[%s3388 + $0x20] sm:$0xff]
        %v3394 = vld [vmem:[%s3388 + $0x28] sm:$0xff]
        %v3395 = vld [vmem:[%s3388 + $0x30] sm:$0xff]
        %v3396 = vld [vmem:[%s3388 + $0x38] sm:$0xff]
        %s3397 = scalar_lea.vmem [#allocation7], 64
        %v3398 = vld [vmem:[%s3397] sm:$0xff]
        %v3399 = vld [vmem:[%s3397 + $0x8] sm:$0xff]
        %v3400 = vld [vmem:[%s3397 + $0x10] sm:$0xff]
        %v3401 = vld [vmem:[%s3397 + $0x18] sm:$0xff]
        %s3402 = scalar_lea.vmem %s7, 64
        %v3403 = vld [vmem:[%s3402] sm:$0xff]
        %v3404 = vld [vmem:[%s3402 + $0x8] sm:$0xff]
        %v3405 = vld [vmem:[%s3402 + $0x10] sm:$0xff]
        %v3406 = vld [vmem:[%s3402 + $0x18] sm:$0xff]
        %3407 = vrot.lane.b32.xlu0 %v3380, 17
        %v3408 = vpop.permute.xlu0 %3407
        %3409 = vrot.lane.b32.xlu0 %v3382, 17
        %v3410 = vpop.permute.xlu0 %3409
        %3411 = vrot.lane.b32.xlu0 %v3384, 17
        %v3412 = vpop.permute.xlu0 %3411
        %3413 = vrot.lane.b32.xlu0 %v3386, 17
        %v3414 = vpop.permute.xlu0 %3413
        %3415 = vrot.lane.b32.xlu0 %v3381, 17
        %v3416 = vpop.permute.xlu0 %3415
        %3417 = vrot.lane.b32.xlu0 %v3383, 17
        %v3418 = vpop.permute.xlu0 %3417
        %3419 = vrot.lane.b32.xlu0 %v3385, 17
        %v3420 = vpop.permute.xlu0 %3419
        %3421 = vrot.lane.b32.xlu0 %v3387, 17
        %v3422 = vpop.permute.xlu0 %3421
        %v3423 = vsel %vm594, %v3408, %v3416
        %v3424 = vsel %vm594, %v3410, %v3418
        %v3425 = vsel %vm594, %v3412, %v3420
        %v3426 = vsel %vm594, %v3414, %v3422
        %v3427 = vsel %vm594, %v3416, %v3408
        %v3428 = vsel %vm594, %v3418, %v3410
        %v3429 = vsel %vm594, %v3420, %v3412
        %v3430 = vsel %vm594, %v3422, %v3414
        %v3431 = vmul.f32 %v3427, %v606
        %v3432 = vmul.f32 %v3423, %v610
        %v3433 = vmul.f32 %v3428, %v606
        %v3434 = vmul.f32 %v3424, %v610
        %v3435 = vmul.f32 %v3429, %v606
        %v3436 = vmul.f32 %v3425, %v610
        %v3437 = vmul.f32 %v3430, %v606
        %v3438 = vmul.f32 %v3426, %v610
        %3439 = vrot.lane.b32.xlu0 %v3380, 16
        %v3440 = vpop.permute.xlu0 %3439
        %3441 = vrot.lane.b32.xlu0 %v3382, 16
        %v3442 = vpop.permute.xlu0 %3441
        %3443 = vrot.lane.b32.xlu0 %v3384, 16
        %v3444 = vpop.permute.xlu0 %3443
        %3445 = vrot.lane.b32.xlu0 %v3386, 16
        %v3446 = vpop.permute.xlu0 %3445
        %3447 = vrot.lane.b32.xlu0 %v3381, 16
        %v3448 = vpop.permute.xlu0 %3447
        %3449 = vrot.lane.b32.xlu0 %v3383, 16
        %v3450 = vpop.permute.xlu0 %3449
        %3451 = vrot.lane.b32.xlu0 %v3385, 16
        %v3452 = vpop.permute.xlu0 %3451
        %3453 = vrot.lane.b32.xlu0 %v3387, 16
        %v3454 = vpop.permute.xlu0 %3453
        %v3455 = vsel %vm635, %v3440, %v3448
        %v3456 = vsel %vm635, %v3442, %v3450
        %v3457 = vsel %vm635, %v3444, %v3452
        %v3458 = vsel %vm635, %v3446, %v3454
        %v3459 = vsel %vm635, %v3448, %v3440
        %v3460 = vsel %vm635, %v3450, %v3442
        %v3461 = vsel %vm635, %v3452, %v3444
        %v3462 = vsel %vm635, %v3454, %v3446
        %v3463 = vmul.f32 %v3459, %v647
        %v3464 = vmul.f32 %v3455, %v651
        %v3465 = vmul.f32 %v3460, %v647
        %v3466 = vmul.f32 %v3456, %v651
        %v3467 = vmul.f32 %v3461, %v647
        %v3468 = vmul.f32 %v3457, %v651
        %v3469 = vmul.f32 %v3462, %v647
        %v3470 = vmul.f32 %v3458, %v651
        %3471 = vrot.lane.b32.xlu0 %v3380, 15
        %v3472 = vpop.permute.xlu0 %3471
        %3473 = vrot.lane.b32.xlu0 %v3382, 15
        %v3474 = vpop.permute.xlu0 %3473
        %3475 = vrot.lane.b32.xlu0 %v3384, 15
        %v3476 = vpop.permute.xlu0 %3475
        %3477 = vrot.lane.b32.xlu0 %v3386, 15
        %v3478 = vpop.permute.xlu0 %3477
        %3479 = vrot.lane.b32.xlu0 %v3381, 15
        %v3480 = vpop.permute.xlu0 %3479
        %3481 = vrot.lane.b32.xlu0 %v3383, 15
        %v3482 = vpop.permute.xlu0 %3481
        %3483 = vrot.lane.b32.xlu0 %v3385, 15
        %v3484 = vpop.permute.xlu0 %3483
        %3485 = vrot.lane.b32.xlu0 %v3387, 15
        %v3486 = vpop.permute.xlu0 %3485
        %v3487 = vsel %vm676, %v3472, %v3480
        %v3488 = vsel %vm676, %v3474, %v3482
        %v3489 = vsel %vm676, %v3476, %v3484
        %v3490 = vsel %vm676, %v3478, %v3486
        %v3491 = vsel %vm676, %v3480, %v3472
        %v3492 = vsel %vm676, %v3482, %v3474
        %v3493 = vsel %vm676, %v3484, %v3476
        %v3494 = vsel %vm676, %v3486, %v3478
        %v3495 = vmul.f32 %v3491, %v688
        %v3496 = vmul.f32 %v3487, %v692
        %v3497 = vmul.f32 %v3492, %v688
        %v3498 = vmul.f32 %v3488, %v692
        %v3499 = vmul.f32 %v3493, %v688
        %v3500 = vmul.f32 %v3489, %v692
        %v3501 = vmul.f32 %v3494, %v688
        %v3502 = vmul.f32 %v3490, %v692
        %3503 = vrot.lane.b32.xlu0 %v3380, 1
        %v3504 = vpop.permute.xlu0 %3503
        %3505 = vrot.lane.b32.xlu0 %v3382, 1
        %v3506 = vpop.permute.xlu0 %3505
        %3507 = vrot.lane.b32.xlu0 %v3384, 1
        %v3508 = vpop.permute.xlu0 %3507
        %3509 = vrot.lane.b32.xlu0 %v3386, 1
        %v3510 = vpop.permute.xlu0 %3509
        %3511 = vrot.lane.b32.xlu0 %v3381, 1
        %v3512 = vpop.permute.xlu0 %3511
        %3513 = vrot.lane.b32.xlu0 %v3383, 1
        %v3514 = vpop.permute.xlu0 %3513
        %3515 = vrot.lane.b32.xlu0 %v3385, 1
        %v3516 = vpop.permute.xlu0 %3515
        %3517 = vrot.lane.b32.xlu0 %v3387, 1
        %v3518 = vpop.permute.xlu0 %3517
        %v3519 = vsel %vm717, %v3504, %v3512
        %v3520 = vsel %vm717, %v3506, %v3514
        %v3521 = vsel %vm717, %v3508, %v3516
        %v3522 = vsel %vm717, %v3510, %v3518
        %v3523 = vsel %vm717, %v3512, %v3504
        %v3524 = vsel %vm717, %v3514, %v3506
        %v3525 = vsel %vm717, %v3516, %v3508
        %v3526 = vsel %vm717, %v3518, %v3510
        %v3527 = vmul.f32 %v3523, %v729
        %v3528 = vmul.f32 %v3519, %v733
        %v3529 = vmul.f32 %v3524, %v729
        %v3530 = vmul.f32 %v3520, %v733
        %v3531 = vmul.f32 %v3525, %v729
        %v3532 = vmul.f32 %v3521, %v733
        %v3533 = vmul.f32 %v3526, %v729
        %v3534 = vmul.f32 %v3522, %v733
        %3535 = vrot.lane.b32.xlu0 %v3380, 127
        %v3536 = vpop.permute.xlu0 %3535
        %3537 = vrot.lane.b32.xlu0 %v3382, 127
        %v3538 = vpop.permute.xlu0 %3537
        %3539 = vrot.lane.b32.xlu0 %v3384, 127
        %v3540 = vpop.permute.xlu0 %3539
        %3541 = vrot.lane.b32.xlu0 %v3386, 127
        %v3542 = vpop.permute.xlu0 %3541
        %3543 = vrot.lane.b32.xlu0 %v3381, 127
        %v3544 = vpop.permute.xlu0 %3543
        %3545 = vrot.lane.b32.xlu0 %v3383, 127
        %v3546 = vpop.permute.xlu0 %3545
        %3547 = vrot.lane.b32.xlu0 %v3385, 127
        %v3548 = vpop.permute.xlu0 %3547
        %3549 = vrot.lane.b32.xlu0 %v3387, 127
        %v3550 = vpop.permute.xlu0 %3549
        %v3551 = vsel %vm758, %v3536, %v3544
        %v3552 = vsel %vm758, %v3538, %v3546
        %v3553 = vsel %vm758, %v3540, %v3548
        %v3554 = vsel %vm758, %v3542, %v3550
        %v3555 = vsel %vm758, %v3544, %v3536
        %v3556 = vsel %vm758, %v3546, %v3538
        %v3557 = vsel %vm758, %v3548, %v3540
        %v3558 = vsel %vm758, %v3550, %v3542
        %v3559 = vmul.f32 %v3551, %v770
        %v3560 = vmul.f32 %v3555, %v774
        %v3561 = vmul.f32 %v3552, %v770
        %v3562 = vmul.f32 %v3556, %v774
        %v3563 = vmul.f32 %v3553, %v770
        %v3564 = vmul.f32 %v3557, %v774
        %v3565 = vmul.f32 %v3554, %v770
        %v3566 = vmul.f32 %v3558, %v774
        %3567 = vrot.lane.b32.xlu0 %v3380, 113
        %v3568 = vpop.permute.xlu0 %3567
        %3569 = vrot.lane.b32.xlu0 %v3382, 113
        %v3570 = vpop.permute.xlu0 %3569
        %3571 = vrot.lane.b32.xlu0 %v3384, 113
        %v3572 = vpop.permute.xlu0 %3571
        %3573 = vrot.lane.b32.xlu0 %v3386, 113
        %v3574 = vpop.permute.xlu0 %3573
        %3575 = vrot.lane.b32.xlu0 %v3381, 113
        %v3576 = vpop.permute.xlu0 %3575
        %3577 = vrot.lane.b32.xlu0 %v3383, 113
        %v3578 = vpop.permute.xlu0 %3577
        %3579 = vrot.lane.b32.xlu0 %v3385, 113
        %v3580 = vpop.permute.xlu0 %3579
        %3581 = vrot.lane.b32.xlu0 %v3387, 113
        %v3582 = vpop.permute.xlu0 %3581
        %v3583 = vsel %vm799, %v3568, %v3576
        %v3584 = vsel %vm799, %v3570, %v3578
        %v3585 = vsel %vm799, %v3572, %v3580
        %v3586 = vsel %vm799, %v3574, %v3582
        %v3587 = vsel %vm799, %v3576, %v3568
        %v3588 = vsel %vm799, %v3578, %v3570
        %v3589 = vsel %vm799, %v3580, %v3572
        %v3590 = vsel %vm799, %v3582, %v3574
        %v3591 = vmul.f32 %v3583, %v811
        %v3592 = vmul.f32 %v3587, %v815
        %v3593 = vmul.f32 %v3584, %v811
        %v3594 = vmul.f32 %v3588, %v815
        %v3595 = vmul.f32 %v3585, %v811
        %v3596 = vmul.f32 %v3589, %v815
        %v3597 = vmul.f32 %v3586, %v811
        %v3598 = vmul.f32 %v3590, %v815
        %3599 = vrot.lane.b32.xlu0 %v3380, 112
        %v3600 = vpop.permute.xlu0 %3599
        %3601 = vrot.lane.b32.xlu0 %v3382, 112
        %v3602 = vpop.permute.xlu0 %3601
        %3603 = vrot.lane.b32.xlu0 %v3384, 112
        %v3604 = vpop.permute.xlu0 %3603
        %3605 = vrot.lane.b32.xlu0 %v3386, 112
        %v3606 = vpop.permute.xlu0 %3605
        %3607 = vrot.lane.b32.xlu0 %v3381, 112
        %v3608 = vpop.permute.xlu0 %3607
        %3609 = vrot.lane.b32.xlu0 %v3383, 112
        %v3610 = vpop.permute.xlu0 %3609
        %3611 = vrot.lane.b32.xlu0 %v3385, 112
        %v3612 = vpop.permute.xlu0 %3611
        %3613 = vrot.lane.b32.xlu0 %v3387, 112
        %v3614 = vpop.permute.xlu0 %3613
        %v3615 = vsel %vm840, %v3600, %v3608
        %v3616 = vsel %vm840, %v3602, %v3610
        %v3617 = vsel %vm840, %v3604, %v3612
        %v3618 = vsel %vm840, %v3606, %v3614
        %v3619 = vsel %vm840, %v3608, %v3600
        %v3620 = vsel %vm840, %v3610, %v3602
        %v3621 = vsel %vm840, %v3612, %v3604
        %v3622 = vsel %vm840, %v3614, %v3606
        %v3623 = vmul.f32 %v3615, %v852
        %v3624 = vmul.f32 %v3619, %v856
        %v3625 = vmul.f32 %v3616, %v852
        %v3626 = vmul.f32 %v3620, %v856
        %v3627 = vmul.f32 %v3617, %v852
        %v3628 = vmul.f32 %v3621, %v856
        %v3629 = vmul.f32 %v3618, %v852
        %v3630 = vmul.f32 %v3622, %v856
        %3631 = vrot.lane.b32.xlu0 %v3380, 111
        %v3632 = vpop.permute.xlu0 %3631
        %3633 = vrot.lane.b32.xlu0 %v3382, 111
        %v3634 = vpop.permute.xlu0 %3633
        %3635 = vrot.lane.b32.xlu0 %v3384, 111
        %v3636 = vpop.permute.xlu0 %3635
        %3637 = vrot.lane.b32.xlu0 %v3386, 111
        %v3638 = vpop.permute.xlu0 %3637
        %3639 = vrot.lane.b32.xlu0 %v3381, 111
        %v3640 = vpop.permute.xlu0 %3639
        %3641 = vrot.lane.b32.xlu0 %v3383, 111
        %v3642 = vpop.permute.xlu0 %3641
        %3643 = vrot.lane.b32.xlu0 %v3385, 111
        %v3644 = vpop.permute.xlu0 %3643
        %3645 = vrot.lane.b32.xlu0 %v3387, 111
        %v3646 = vpop.permute.xlu0 %3645
        %v3647 = vsel %vm881, %v3632, %v3640
        %v3648 = vsel %vm881, %v3634, %v3642
        %v3649 = vsel %vm881, %v3636, %v3644
        %v3650 = vsel %vm881, %v3638, %v3646
        %v3651 = vsel %vm881, %v3640, %v3632
        %v3652 = vsel %vm881, %v3642, %v3634
        %v3653 = vsel %vm881, %v3644, %v3636
        %v3654 = vsel %vm881, %v3646, %v3638
        %v3655 = vmul.f32 %v3647, %v893
        %v3656 = vmul.f32 %v3651, %v897
        %v3657 = vmul.f32 %v3648, %v893
        %v3658 = vmul.f32 %v3652, %v897
        %v3659 = vmul.f32 %v3649, %v893
        %v3660 = vmul.f32 %v3653, %v897
        %v3661 = vmul.f32 %v3650, %v893
        %v3662 = vmul.f32 %v3654, %v897
        %v3664 = vsel %vm906, %v3398, 0
        %v3667 = vsel %vm906, %v3399, 0
        %v3670 = vsel %vm906, %v3400, 0
        %v3673 = vsel %vm906, %v3401, 0
        %3675 = vmatprep.subr.mxu0 0.0
        %3676 = vmatpush1.msra.mxu0 0.0
        %3677 = vmatprep.subr.mxu0 0.0
        %3678 = vmatpush1.msra.mxu0 0.0
        %3679 = vmatprep.subr.mxu0 0.0
        %3680 = vmatpush1.msra.mxu0 0.0
        %3681 = vmatprep.subr.mxu0 0.0
        %3682 = vmatpush1.msra.mxu0 0.0
        %3683 = vmatprep.subr.mxu0 0.0
        %3684 = vmatpush1.msra.mxu0 0.0
        %3685 = vmatprep.subr.mxu0 0.0
        %3686 = vmatpush1.msra.mxu0 0.0
        %3687 = vmatprep.subr.mxu0 0.0
        %3688 = vmatpush1.msra.mxu0 0.0
        %3689 = vmatprep.subr.mxu0 0.0
        %3690 = vmatpush1.msra.mxu0 0.0
        %3691 = vmatprep.subr.mxu0 0.0
        %3692 = vmatpush1.msra.mxu0 0.0
        %3693 = vmatprep.subr.mxu0 0.0
        %3694 = vmatpush1.msra.mxu0 0.0
        %3695 = vmatprep.subr.mxu0 0.0
        %3696 = vmatpush1.msra.mxu0 0.0
        %3697 = vmatprep.subr.mxu0 0.0
        %3698 = vmatpush1.msra.mxu0 0.0
        %3699 = vmatprep.subr.mxu0 %v3387
        %3700 = vmatpush1.msra.mxu0 %v3386
        %3701 = vmatprep.subr.mxu0 %v3385
        %3702 = vmatpush1.msra.mxu0 %v3384
        %3703 = vmatprep.subr.mxu0 %v3383
        %3704 = vmatpush1.msra.mxu0 %v3382
        %3705 = vmatprep.subr.mxu0 %v3381
        %3706 = vmatpush1.msra.mxu0 %v3380
        %3707 = vmatprep.subr.mxu0 0.0
        %3708 = vmatpush2.msra.mxu0 0.0
        %3709 = vmatprep.subr.mxu0 0.0
        %3710 = vmatpush2.msra.mxu0 0.0
        %3711 = vmatprep.subr.mxu0 0.0
        %3712 = vmatpush2.msra.mxu0 0.0
        %3713 = vmatprep.subr.mxu0 0.0
        %3714 = vmatpush2.msra.mxu0 0.0
        %3715 = vmatprep.subr.mxu0 0.0
        %3716 = vmatpush2.msra.mxu0 0.0
        %3717 = vmatprep.subr.mxu0 0.0
        %3718 = vmatpush2.msra.mxu0 0.0
        %3719 = vmatprep.subr.mxu0 0.0
        %3720 = vmatpush2.msra.mxu0 0.0
        %3721 = vmatprep.subr.mxu0 0.0
        %3722 = vmatpush2.msra.mxu0 0.0
        %3723 = vmatprep.subr.mxu0 0.0
        %3724 = vmatpush2.msra.mxu0 0.0
        %3725 = vmatprep.subr.mxu0 0.0
        %3726 = vmatpush2.msra.mxu0 0.0
        %3727 = vmatprep.subr.mxu0 0.0
        %3728 = vmatpush2.msra.mxu0 0.0
        %3729 = vmatprep.subr.mxu0 0.0
        %3730 = vmatpush2.msra.mxu0 0.0
        %3731 = vmatprep.subr.mxu0 0.0
        %3732 = vmatpush2.msra.mxu0 0.0
        %3733 = vmatprep.subr.mxu0 0.0
        %3734 = vmatpush2.msra.mxu0 0.0
        %3735 = vmatprep.subr.mxu0 0.0
        %3736 = vmatpush2.msra.mxu0 0.0
        %3737 = vmatprep.subr.mxu0 0.0
        %3738 = vmatpush2.msra.mxu0 0.0
        %3739 = vmatprep.mubr.f32.mxu0 0.0
        %3740 = vmatmul.mubr.f32.gmra.mxu0 %v3664
        %v3741 = vpop.f32.mrf.mxu0
        %v3742 = vadd.f32 0.0, %v3741
        %v3743 = vpop.f32.mrf.mxu0
        %v3744 = vadd.f32 0.0, %v3743
        %3745 = vmatprep.mubr.f32.mxu0 0.0
        %3746 = vmatmul.mubr.f32.gmra.mxu0 %v3667
        %v3747 = vpop.f32.mrf.mxu0
        %v3748 = vadd.f32 0.0, %v3747
        %v3749 = vpop.f32.mrf.mxu0
        %v3750 = vadd.f32 0.0, %v3749
        %3751 = vmatprep.mubr.f32.mxu0 0.0
        %3752 = vmatmul.mubr.f32.gmra.mxu0 %v3670
        %v3753 = vpop.f32.mrf.mxu0
        %v3754 = vadd.f32 0.0, %v3753
        %v3755 = vpop.f32.mrf.mxu0
        %v3756 = vadd.f32 0.0, %v3755
        %3757 = vmatprep.mubr.f32.mxu0 0.0
        %3758 = vmatmul.mubr.f32.gmra.mxu0 %v3673
        %v3759 = vpop.f32.mrf.mxu0
        %v3760 = vadd.f32 0.0, %v3759
        %v3761 = vpop.f32.mrf.mxu0
        %v3762 = vadd.f32 0.0, %v3761
        %3763 = vdwg.mxu0
        %3764 = vmatprep.subr.mxu0 %v3534
        %3765 = vmatpush1.msra.mxu0 %v3533
        %3766 = vmatprep.subr.mxu0 %v3532
        %3767 = vmatpush1.msra.mxu0 %v3531
        %3768 = vmatprep.subr.mxu0 %v3530
        %3769 = vmatpush1.msra.mxu0 %v3529
        %3770 = vmatprep.subr.mxu0 %v3528
        %3771 = vmatpush1.msra.mxu0 %v3527
        %3772 = vmatprep.subr.mxu0 %v3502
        %3773 = vmatpush1.msra.mxu0 %v3501
        %3774 = vmatprep.subr.mxu0 %v3500
        %3775 = vmatpush1.msra.mxu0 %v3499
        %3776 = vmatprep.subr.mxu0 %v3498
        %3777 = vmatpush1.msra.mxu0 %v3497
        %3778 = vmatprep.subr.mxu0 %v3496
        %3779 = vmatpush1.msra.mxu0 %v3495
        %3780 = vmatprep.subr.mxu0 %v3470
        %3781 = vmatpush1.msra.mxu0 %v3469
        %3782 = vmatprep.subr.mxu0 %v3468
        %3783 = vmatpush1.msra.mxu0 %v3467
        %3784 = vmatprep.subr.mxu0 %v3466
        %3785 = vmatpush1.msra.mxu0 %v3465
        %3786 = vmatprep.subr.mxu0 %v3464
        %3787 = vmatpush1.msra.mxu0 %v3463
        %3788 = vmatprep.subr.mxu0 %v3438
        %3789 = vmatpush1.msra.mxu0 %v3437
        %3790 = vmatprep.subr.mxu0 %v3436
        %3791 = vmatpush1.msra.mxu0 %v3435
        %3792 = vmatprep.subr.mxu0 %v3434
        %3793 = vmatpush1.msra.mxu0 %v3433
        %3794 = vmatprep.subr.mxu0 %v3432
        %3795 = vmatpush1.msra.mxu0 %v3431
        %3796 = vmatprep.subr.mxu0 %v3662
        %3797 = vmatpush2.msra.mxu0 %v3661
        %3798 = vmatprep.subr.mxu0 %v3660
        %3799 = vmatpush2.msra.mxu0 %v3659
        %3800 = vmatprep.subr.mxu0 %v3658
        %3801 = vmatpush2.msra.mxu0 %v3657
        %3802 = vmatprep.subr.mxu0 %v3656
        %3803 = vmatpush2.msra.mxu0 %v3655
        %3804 = vmatprep.subr.mxu0 %v3630
        %3805 = vmatpush2.msra.mxu0 %v3629
        %3806 = vmatprep.subr.mxu0 %v3628
        %3807 = vmatpush2.msra.mxu0 %v3627
        %3808 = vmatprep.subr.mxu0 %v3626
        %3809 = vmatpush2.msra.mxu0 %v3625
        %3810 = vmatprep.subr.mxu0 %v3624
        %3811 = vmatpush2.msra.mxu0 %v3623
        %3812 = vmatprep.subr.mxu0 %v3598
        %3813 = vmatpush2.msra.mxu0 %v3597
        %3814 = vmatprep.subr.mxu0 %v3596
        %3815 = vmatpush2.msra.mxu0 %v3595
        %3816 = vmatprep.subr.mxu0 %v3594
        %3817 = vmatpush2.msra.mxu0 %v3593
        %3818 = vmatprep.subr.mxu0 %v3592
        %3819 = vmatpush2.msra.mxu0 %v3591
        %3820 = vmatprep.subr.mxu0 %v3566
        %3821 = vmatpush2.msra.mxu0 %v3565
        %3822 = vmatprep.subr.mxu0 %v3564
        %3823 = vmatpush2.msra.mxu0 %v3563
        %3824 = vmatprep.subr.mxu0 %v3562
        %3825 = vmatpush2.msra.mxu0 %v3561
        %3826 = vmatprep.subr.mxu0 %v3560
        %3827 = vmatpush2.msra.mxu0 %v3559
        %3828 = vmatprep.mubr.f32.mxu0 %v3390
        %3829 = vmatmul.mubr.f32.gmra.mxu0 %v3389
        %v3830 = vpop.f32.mrf.mxu0
        %v3831 = vadd.f32 %v3742, %v3830
        %v3832 = vpop.f32.mrf.mxu0
        %v3833 = vadd.f32 %v3744, %v3832
        %3834 = vmatprep.mubr.f32.mxu0 %v3392
        %3835 = vmatmul.mubr.f32.gmra.mxu0 %v3391
        %v3836 = vpop.f32.mrf.mxu0
        %v3837 = vadd.f32 %v3748, %v3836
        %v3838 = vpop.f32.mrf.mxu0
        %v3839 = vadd.f32 %v3750, %v3838
        %3840 = vmatprep.mubr.f32.mxu0 %v3394
        %3841 = vmatmul.mubr.f32.gmra.mxu0 %v3393
        %v3842 = vpop.f32.mrf.mxu0
        %v3843 = vadd.f32 %v3754, %v3842
        %v3844 = vpop.f32.mrf.mxu0
        %v3845 = vadd.f32 %v3756, %v3844
        %3846 = vmatprep.mubr.f32.mxu0 %v3396
        %3847 = vmatmul.mubr.f32.gmra.mxu0 %v3395
        %v3848 = vpop.f32.mrf.mxu0
        %v3849 = vadd.f32 %v3760, %v3848
        %v3850 = vpop.f32.mrf.mxu0
        %v3851 = vadd.f32 %v3762, %v3850
        %3852 = vdwg.mxu0
        %3854 = vset.pattern.permute.xlu0 0
        %3855 = vperm.xlu0 %3854, %v3403
        %v3856 = vpop.permute.xlu0 %3855
        %3859 = vset.pattern.permute.xlu0 0
        %3860 = vperm.xlu0 %3859, %v3404
        %v3861 = vpop.permute.xlu0 %3860
        %3864 = vset.pattern.permute.xlu0 0
        %3865 = vperm.xlu0 %3864, %v3405
        %v3866 = vpop.permute.xlu0 %3865
        %3869 = vset.pattern.permute.xlu0 0
        %3870 = vperm.xlu0 %3869, %v3406
        %v3871 = vpop.permute.xlu0 %3870
        %v3873 = vadd.f32 %v3831, %v3856
        %v3874 = vadd.f32 %v3833, %v3856
        %v3875 = vadd.f32 %v3837, %v3861
        %v3876 = vadd.f32 %v3839, %v3861
        %v3877 = vadd.f32 %v3843, %v3866
        %v3878 = vadd.f32 %v3845, %v3866
        %v3879 = vadd.f32 %v3849, %v3871
        %v3880 = vadd.f32 %v3851, %v3871
        %v3881 = vadd.f32 %v3873, %v3874
        %3882 = vadd.xlane.f32.xlu0 %v3881
        %v3883 = vpop.xlane.xlu0 %3882
        %v3884 = vadd.f32 %v3875, %v3876
        %3885 = vadd.xlane.f32.xlu0 %v3884
        %v3886 = vpop.xlane.xlu0 %3885
        %v3887 = vadd.f32 %v3877, %v3878
        %3888 = vadd.xlane.f32.xlu0 %v3887
        %v3889 = vpop.xlane.xlu0 %3888
        %v3890 = vadd.f32 %v3879, %v3880
        %3891 = vadd.xlane.f32.xlu0 %v3890
        %v3892 = vpop.xlane.xlu0 %3891
        %v3893 = vmul.f32 %v3883, %v1635
        %v3894 = vmul.f32 %v3886, %v1635
        %v3895 = vmul.f32 %v3889, %v1635
        %v3896 = vmul.f32 %v3892, %v1635
        %s3897 = scalar_lea.vmem %s8, 64
        %v3898 = vld [vmem:[%s3897] sm:$0xff]
        %v3899 = vld [vmem:[%s3897 + $0x8] sm:$0xff]
        %v3900 = vld [vmem:[%s3897 + $0x10] sm:$0xff]
        %v3901 = vld [vmem:[%s3897 + $0x18] sm:$0xff]
        %v3902 = vmul.f32 %v3898, %v3893
        %v3903 = vmul.f32 %v3899, %v3894
        %v3904 = vmul.f32 %v3900, %v3895
        %v3905 = vmul.f32 %v3901, %v3896
        %v3906 = vsel %vm1648, %v3902, 0.0
        %v3907 = vsel %vm1648, %v3903, 0.0
        %v3908 = vadd.f32 %v3906, %v3907
        %v3909 = vsel %vm1648, %v3904, 0.0
        %v3910 = vadd.f32 %v3908, %v3909
        %v3911 = vsel %vm1648, %v3905, 0.0
        %v3912 = vadd.f32 %v3910, %v3911
        %v3913 = vrot.slane %v3912, 4
        %v3914 = vadd.f32 %v3912, %v3913
        %v3915 = vrot.slane %v3914, 2
        %v3916 = vadd.f32 %v3914, %v3915
        %v3917 = vrot.slane %v3916, 1
        %v3918 = vadd.f32 %v3916, %v3917
        %s3919 = scalar_lea.vmem %s9, 2
        %v3920 = vld [vmem:[%s3919] sm:$0x1]
        %v3921 = vadd.f32 %v3918, %v3920
        %v3922 = vmax.f32 %v3921, 0.0
        %s3923 = scalar_lea.vmem %s10, 64
        %v3924 = vld [vmem:[%s3923] sm:$0xff]
        %v3925 = vld [vmem:[%s3923 + $0x8] sm:$0xff]
        %v3926 = vld [vmem:[%s3923 + $0x10] sm:$0xff]
        %v3927 = vld [vmem:[%s3923 + $0x18] sm:$0xff]
        %v3928 = vlaneseq
        %v3929 = vshrl.u32 %v3928, 7
        %v3930 = vsub.s32 0, %v3929
        %v3931 = vrot.slane %v3922, %v3930
        %v3932 = vmul.f32 %v3924, %v3931
        %v3933 = vmul.f32 %v3925, %v3931
        %v3934 = vmul.f32 %v3926, %v3931
        %v3935 = vmul.f32 %v3927, %v3931
        %v3936 = vsel %vm1648, %v3932, 0.0
        %3937 = vadd.xlane.f32.xlu0 %v3936
        %v3938 = vpop.xlane.xlu0 %3937
        %v3939 = vsel %vm1648, %v3933, 0.0
        %3940 = vadd.xlane.f32.xlu0 %v3939
        %v3941 = vpop.xlane.xlu0 %3940
        %v3942 = vsel %vm1648, %v3934, 0.0
        %3943 = vadd.xlane.f32.xlu0 %v3942
        %v3944 = vpop.xlane.xlu0 %3943
        %v3945 = vsel %vm1648, %v3935, 0.0
        %3946 = vadd.xlane.f32.xlu0 %v3945
        %v3947 = vpop.xlane.xlu0 %3946
        %s3948 = scalar_lea.vmem %s11, 64
        %v3949 = vld [vmem:[%s3948] sm:$0xff]
        %v3950 = vld [vmem:[%s3948 + $0x8] sm:$0xff]
        %v3951 = vld [vmem:[%s3948 + $0x10] sm:$0xff]
        %v3952 = vld [vmem:[%s3948 + $0x18] sm:$0xff]
        %v3953 = vadd.f32 %v3938, %v3949
        %v3954 = vadd.f32 %v3941, %v3950
        %v3955 = vadd.f32 %v3944, %v3951
        %v3956 = vadd.f32 %v3947, %v3952
        %v3957 = vxor.u32 %v3953, 2147483648
        %v3958 = vxor.u32 %v3954, 2147483648
        %v3959 = vxor.u32 %v3955, 2147483648
        %v3960 = vxor.u32 %v3956, 2147483648
        %v3961 = vmul.f32 %v3957, 1.442695
        %v3962 = vpow.pop %v3961
        %v3963 = vmul.f32 %v3958, 1.442695
        %v3964 = vpow.pop %v3963
        %v3965 = vmul.f32 %v3959, 1.442695
        %v3966 = vpow.pop %v3965
        %v3967 = vmul.f32 %v3960, 1.442695
        %v3968 = vpow.pop %v3967
        %v3969 = vadd.f32 %v3962, 1.0
        %v3970 = vadd.f32 %v3964, 1.0
        %v3971 = vadd.f32 %v3966, 1.0
        %v3972 = vadd.f32 %v3968, 1.0
        %v3973 = vrcp.pop %v3969
        %v3974 = vmul.f32 1.0, %v3973
        %v3975 = vrcp.pop %v3970
        %v3976 = vmul.f32 1.0, %v3975
        %v3977 = vrcp.pop %v3971
        %v3978 = vmul.f32 1.0, %v3977
        %v3979 = vrcp.pop %v3972
        %v3980 = vmul.f32 1.0, %v3979
        %3982 = vset.pattern.permute.xlu0 0
        %3983 = vperm.xlu0 %3982, %v3974
        %v3984 = vpop.permute.xlu0 %3983
        %3987 = vset.pattern.permute.xlu0 0
        %3988 = vperm.xlu0 %3987, %v3976
        %v3989 = vpop.permute.xlu0 %3988
        %3992 = vset.pattern.permute.xlu0 0
        %3993 = vperm.xlu0 %3992, %v3978
        %v3994 = vpop.permute.xlu0 %3993
        %3997 = vset.pattern.permute.xlu0 0
        %3998 = vperm.xlu0 %3997, %v3980
        %v3999 = vpop.permute.xlu0 %3998
        %v4001 = vmul.f32 %v3873, %v3984
        %v4002 = vmul.f32 %v3874, %v3984
        %v4003 = vmul.f32 %v3875, %v3989
        %v4004 = vmul.f32 %v3876, %v3989
        %v4005 = vmul.f32 %v3877, %v3994
        %v4006 = vmul.f32 %v3878, %v3994
        %v4007 = vmul.f32 %v3879, %v3999
        %v4008 = vmul.f32 %v3880, %v3999
        %v4009 = vadd.f32 %v4001, %v2879
        %v4010 = vadd.f32 %v4002, %v2880
        %v4011 = vadd.f32 %v4003, %v2881
        %v4012 = vadd.f32 %v4004, %v2882
        %v4013 = vadd.f32 %v4005, %v2883
        %v4014 = vadd.f32 %v4006, %v2884
        %v4015 = vadd.f32 %v4007, %v2885
        %v4016 = vadd.f32 %v4008, %v2886
        %s4017 = scalar_lea.vmem %s2, 192
        %v4018 = vld [vmem:[%s4017] sm:$0xff]
        %v4019 = vld [vmem:[%s4017 + $0x8] sm:$0xff]
        %v4020 = vld [vmem:[%s4017 + $0x10] sm:$0xff]
        %v4021 = vld [vmem:[%s4017 + $0x18] sm:$0xff]
        %v4022 = vld [vmem:[%s4017 + $0x20] sm:$0xff]
        %v4023 = vld [vmem:[%s4017 + $0x28] sm:$0xff]
        %v4024 = vld [vmem:[%s4017 + $0x30] sm:$0xff]
        %v4025 = vld [vmem:[%s4017 + $0x38] sm:$0xff]
        %s4026 = scalar_lea.vmem [#allocation5], 96
        %v4027 = vld [vmem:[%s4026] sm:$0xff]
        %v4028 = vld [vmem:[%s4026 + $0x8] sm:$0xff]
        %v4029 = vld [vmem:[%s4026 + $0x10] sm:$0xff]
        %v4030 = vld [vmem:[%s4026 + $0x18] sm:$0xff]
        %s4031 = scalar_lea.vmem %s4, 96
        %v4032 = vld [vmem:[%s4031] sm:$0xff]
        %v4033 = vld [vmem:[%s4031 + $0x8] sm:$0xff]
        %v4034 = vld [vmem:[%s4031 + $0x10] sm:$0xff]
        %v4035 = vld [vmem:[%s4031 + $0x18] sm:$0xff]
        %4036 = vrot.lane.b32.xlu0 %v4009, 17
        %v4037 = vpop.permute.xlu0 %4036
        %4038 = vrot.lane.b32.xlu0 %v4011, 17
        %v4039 = vpop.permute.xlu0 %4038
        %4040 = vrot.lane.b32.xlu0 %v4013, 17
        %v4041 = vpop.permute.xlu0 %4040
        %4042 = vrot.lane.b32.xlu0 %v4015, 17
        %v4043 = vpop.permute.xlu0 %4042
        %4044 = vrot.lane.b32.xlu0 %v4010, 17
        %v4045 = vpop.permute.xlu0 %4044
        %4046 = vrot.lane.b32.xlu0 %v4012, 17
        %v4047 = vpop.permute.xlu0 %4046
        %4048 = vrot.lane.b32.xlu0 %v4014, 17
        %v4049 = vpop.permute.xlu0 %4048
        %4050 = vrot.lane.b32.xlu0 %v4016, 17
        %v4051 = vpop.permute.xlu0 %4050
        %v4052 = vsel %vm594, %v4037, %v4045
        %v4053 = vsel %vm594, %v4039, %v4047
        %v4054 = vsel %vm594, %v4041, %v4049
        %v4055 = vsel %vm594, %v4043, %v4051
        %v4056 = vsel %vm594, %v4045, %v4037
        %v4057 = vsel %vm594, %v4047, %v4039
        %v4058 = vsel %vm594, %v4049, %v4041
        %v4059 = vsel %vm594, %v4051, %v4043
        %v4060 = vmul.f32 %v4056, %v606
        %v4061 = vmul.f32 %v4052, %v610
        %v4062 = vmul.f32 %v4057, %v606
        %v4063 = vmul.f32 %v4053, %v610
        %v4064 = vmul.f32 %v4058, %v606
        %v4065 = vmul.f32 %v4054, %v610
        %v4066 = vmul.f32 %v4059, %v606
        %v4067 = vmul.f32 %v4055, %v610
        %4068 = vrot.lane.b32.xlu0 %v4009, 16
        %v4069 = vpop.permute.xlu0 %4068
        %4070 = vrot.lane.b32.xlu0 %v4011, 16
        %v4071 = vpop.permute.xlu0 %4070
        %4072 = vrot.lane.b32.xlu0 %v4013, 16
        %v4073 = vpop.permute.xlu0 %4072
        %4074 = vrot.lane.b32.xlu0 %v4015, 16
        %v4075 = vpop.permute.xlu0 %4074
        %4076 = vrot.lane.b32.xlu0 %v4010, 16
        %v4077 = vpop.permute.xlu0 %4076
        %4078 = vrot.lane.b32.xlu0 %v4012, 16
        %v4079 = vpop.permute.xlu0 %4078
        %4080 = vrot.lane.b32.xlu0 %v4014, 16
        %v4081 = vpop.permute.xlu0 %4080
        %4082 = vrot.lane.b32.xlu0 %v4016, 16
        %v4083 = vpop.permute.xlu0 %4082
        %v4084 = vsel %vm635, %v4069, %v4077
        %v4085 = vsel %vm635, %v4071, %v4079
        %v4086 = vsel %vm635, %v4073, %v4081
        %v4087 = vsel %vm635, %v4075, %v4083
        %v4088 = vsel %vm635, %v4077, %v4069
        %v4089 = vsel %vm635, %v4079, %v4071
        %v4090 = vsel %vm635, %v4081, %v4073
        %v4091 = vsel %vm635, %v4083, %v4075
        %v4092 = vmul.f32 %v4088, %v647
        %v4093 = vmul.f32 %v4084, %v651
        %v4094 = vmul.f32 %v4089, %v647
        %v4095 = vmul.f32 %v4085, %v651
        %v4096 = vmul.f32 %v4090, %v647
        %v4097 = vmul.f32 %v4086, %v651
        %v4098 = vmul.f32 %v4091, %v647
        %v4099 = vmul.f32 %v4087, %v651
        %4100 = vrot.lane.b32.xlu0 %v4009, 15
        %v4101 = vpop.permute.xlu0 %4100
        %4102 = vrot.lane.b32.xlu0 %v4011, 15
        %v4103 = vpop.permute.xlu0 %4102
        %4104 = vrot.lane.b32.xlu0 %v4013, 15
        %v4105 = vpop.permute.xlu0 %4104
        %4106 = vrot.lane.b32.xlu0 %v4015, 15
        %v4107 = vpop.permute.xlu0 %4106
        %4108 = vrot.lane.b32.xlu0 %v4010, 15
        %v4109 = vpop.permute.xlu0 %4108
        %4110 = vrot.lane.b32.xlu0 %v4012, 15
        %v4111 = vpop.permute.xlu0 %4110
        %4112 = vrot.lane.b32.xlu0 %v4014, 15
        %v4113 = vpop.permute.xlu0 %4112
        %4114 = vrot.lane.b32.xlu0 %v4016, 15
        %v4115 = vpop.permute.xlu0 %4114
        %v4116 = vsel %vm676, %v4101, %v4109
        %v4117 = vsel %vm676, %v4103, %v4111
        %v4118 = vsel %vm676, %v4105, %v4113
        %v4119 = vsel %vm676, %v4107, %v4115
        %v4120 = vsel %vm676, %v4109, %v4101
        %v4121 = vsel %vm676, %v4111, %v4103
        %v4122 = vsel %vm676, %v4113, %v4105
        %v4123 = vsel %vm676, %v4115, %v4107
        %v4124 = vmul.f32 %v4120, %v688
        %v4125 = vmul.f32 %v4116, %v692
        %v4126 = vmul.f32 %v4121, %v688
        %v4127 = vmul.f32 %v4117, %v692
        %v4128 = vmul.f32 %v4122, %v688
        %v4129 = vmul.f32 %v4118, %v692
        %v4130 = vmul.f32 %v4123, %v688
        %v4131 = vmul.f32 %v4119, %v692
        %4132 = vrot.lane.b32.xlu0 %v4009, 1
        %v4133 = vpop.permute.xlu0 %4132
        %4134 = vrot.lane.b32.xlu0 %v4011, 1
        %v4135 = vpop.permute.xlu0 %4134
        %4136 = vrot.lane.b32.xlu0 %v4013, 1
        %v4137 = vpop.permute.xlu0 %4136
        %4138 = vrot.lane.b32.xlu0 %v4015, 1
        %v4139 = vpop.permute.xlu0 %4138
        %4140 = vrot.lane.b32.xlu0 %v4010, 1
        %v4141 = vpop.permute.xlu0 %4140
        %4142 = vrot.lane.b32.xlu0 %v4012, 1
        %v4143 = vpop.permute.xlu0 %4142
        %4144 = vrot.lane.b32.xlu0 %v4014, 1
        %v4145 = vpop.permute.xlu0 %4144
        %4146 = vrot.lane.b32.xlu0 %v4016, 1
        %v4147 = vpop.permute.xlu0 %4146
        %v4148 = vsel %vm717, %v4133, %v4141
        %v4149 = vsel %vm717, %v4135, %v4143
        %v4150 = vsel %vm717, %v4137, %v4145
        %v4151 = vsel %vm717, %v4139, %v4147
        %v4152 = vsel %vm717, %v4141, %v4133
        %v4153 = vsel %vm717, %v4143, %v4135
        %v4154 = vsel %vm717, %v4145, %v4137
        %v4155 = vsel %vm717, %v4147, %v4139
        %v4156 = vmul.f32 %v4152, %v729
        %v4157 = vmul.f32 %v4148, %v733
        %v4158 = vmul.f32 %v4153, %v729
        %v4159 = vmul.f32 %v4149, %v733
        %v4160 = vmul.f32 %v4154, %v729
        %v4161 = vmul.f32 %v4150, %v733
        %v4162 = vmul.f32 %v4155, %v729
        %v4163 = vmul.f32 %v4151, %v733
        %4164 = vrot.lane.b32.xlu0 %v4009, 127
        %v4165 = vpop.permute.xlu0 %4164
        %4166 = vrot.lane.b32.xlu0 %v4011, 127
        %v4167 = vpop.permute.xlu0 %4166
        %4168 = vrot.lane.b32.xlu0 %v4013, 127
        %v4169 = vpop.permute.xlu0 %4168
        %4170 = vrot.lane.b32.xlu0 %v4015, 127
        %v4171 = vpop.permute.xlu0 %4170
        %4172 = vrot.lane.b32.xlu0 %v4010, 127
        %v4173 = vpop.permute.xlu0 %4172
        %4174 = vrot.lane.b32.xlu0 %v4012, 127
        %v4175 = vpop.permute.xlu0 %4174
        %4176 = vrot.lane.b32.xlu0 %v4014, 127
        %v4177 = vpop.permute.xlu0 %4176
        %4178 = vrot.lane.b32.xlu0 %v4016, 127
        %v4179 = vpop.permute.xlu0 %4178
        %v4180 = vsel %vm758, %v4165, %v4173
        %v4181 = vsel %vm758, %v4167, %v4175
        %v4182 = vsel %vm758, %v4169, %v4177
        %v4183 = vsel %vm758, %v4171, %v4179
        %v4184 = vsel %vm758, %v4173, %v4165
        %v4185 = vsel %vm758, %v4175, %v4167
        %v4186 = vsel %vm758, %v4177, %v4169
        %v4187 = vsel %vm758, %v4179, %v4171
        %v4188 = vmul.f32 %v4180, %v770
        %v4189 = vmul.f32 %v4184, %v774
        %v4190 = vmul.f32 %v4181, %v770
        %v4191 = vmul.f32 %v4185, %v774
        %v4192 = vmul.f32 %v4182, %v770
        %v4193 = vmul.f32 %v4186, %v774
        %v4194 = vmul.f32 %v4183, %v770
        %v4195 = vmul.f32 %v4187, %v774
        %4196 = vrot.lane.b32.xlu0 %v4009, 113
        %v4197 = vpop.permute.xlu0 %4196
        %4198 = vrot.lane.b32.xlu0 %v4011, 113
        %v4199 = vpop.permute.xlu0 %4198
        %4200 = vrot.lane.b32.xlu0 %v4013, 113
        %v4201 = vpop.permute.xlu0 %4200
        %4202 = vrot.lane.b32.xlu0 %v4015, 113
        %v4203 = vpop.permute.xlu0 %4202
        %4204 = vrot.lane.b32.xlu0 %v4010, 113
        %v4205 = vpop.permute.xlu0 %4204
        %4206 = vrot.lane.b32.xlu0 %v4012, 113
        %v4207 = vpop.permute.xlu0 %4206
        %4208 = vrot.lane.b32.xlu0 %v4014, 113
        %v4209 = vpop.permute.xlu0 %4208
        %4210 = vrot.lane.b32.xlu0 %v4016, 113
        %v4211 = vpop.permute.xlu0 %4210
        %v4212 = vsel %vm799, %v4197, %v4205
        %v4213 = vsel %vm799, %v4199, %v4207
        %v4214 = vsel %vm799, %v4201, %v4209
        %v4215 = vsel %vm799, %v4203, %v4211
        %v4216 = vsel %vm799, %v4205, %v4197
        %v4217 = vsel %vm799, %v4207, %v4199
        %v4218 = vsel %vm799, %v4209, %v4201
        %v4219 = vsel %vm799, %v4211, %v4203
        %v4220 = vmul.f32 %v4212, %v811
        %v4221 = vmul.f32 %v4216, %v815
        %v4222 = vmul.f32 %v4213, %v811
        %v4223 = vmul.f32 %v4217, %v815
        %v4224 = vmul.f32 %v4214, %v811
        %v4225 = vmul.f32 %v4218, %v815
        %v4226 = vmul.f32 %v4215, %v811
        %v4227 = vmul.f32 %v4219, %v815
        %4228 = vrot.lane.b32.xlu0 %v4009, 112
        %v4229 = vpop.permute.xlu0 %4228
        %4230 = vrot.lane.b32.xlu0 %v4011, 112
        %v4231 = vpop.permute.xlu0 %4230
        %4232 = vrot.lane.b32.xlu0 %v4013, 112
        %v4233 = vpop.permute.xlu0 %4232
        %4234 = vrot.lane.b32.xlu0 %v4015, 112
        %v4235 = vpop.permute.xlu0 %4234
        %4236 = vrot.lane.b32.xlu0 %v4010, 112
        %v4237 = vpop.permute.xlu0 %4236
        %4238 = vrot.lane.b32.xlu0 %v4012, 112
        %v4239 = vpop.permute.xlu0 %4238
        %4240 = vrot.lane.b32.xlu0 %v4014, 112
        %v4241 = vpop.permute.xlu0 %4240
        %4242 = vrot.lane.b32.xlu0 %v4016, 112
        %v4243 = vpop.permute.xlu0 %4242
        %v4244 = vsel %vm840, %v4229, %v4237
        %v4245 = vsel %vm840, %v4231, %v4239
        %v4246 = vsel %vm840, %v4233, %v4241
        %v4247 = vsel %vm840, %v4235, %v4243
        %v4248 = vsel %vm840, %v4237, %v4229
        %v4249 = vsel %vm840, %v4239, %v4231
        %v4250 = vsel %vm840, %v4241, %v4233
        %v4251 = vsel %vm840, %v4243, %v4235
        %v4252 = vmul.f32 %v4244, %v852
        %v4253 = vmul.f32 %v4248, %v856
        %v4254 = vmul.f32 %v4245, %v852
        %v4255 = vmul.f32 %v4249, %v856
        %v4256 = vmul.f32 %v4246, %v852
        %v4257 = vmul.f32 %v4250, %v856
        %v4258 = vmul.f32 %v4247, %v852
        %v4259 = vmul.f32 %v4251, %v856
        %4260 = vrot.lane.b32.xlu0 %v4009, 111
        %v4261 = vpop.permute.xlu0 %4260
        %4262 = vrot.lane.b32.xlu0 %v4011, 111
        %v4263 = vpop.permute.xlu0 %4262
        %4264 = vrot.lane.b32.xlu0 %v4013, 111
        %v4265 = vpop.permute.xlu0 %4264
        %4266 = vrot.lane.b32.xlu0 %v4015, 111
        %v4267 = vpop.permute.xlu0 %4266
        %4268 = vrot.lane.b32.xlu0 %v4010, 111
        %v4269 = vpop.permute.xlu0 %4268
        %4270 = vrot.lane.b32.xlu0 %v4012, 111
        %v4271 = vpop.permute.xlu0 %4270
        %4272 = vrot.lane.b32.xlu0 %v4014, 111
        %v4273 = vpop.permute.xlu0 %4272
        %4274 = vrot.lane.b32.xlu0 %v4016, 111
        %v4275 = vpop.permute.xlu0 %4274
        %v4276 = vsel %vm881, %v4261, %v4269
        %v4277 = vsel %vm881, %v4263, %v4271
        %v4278 = vsel %vm881, %v4265, %v4273
        %v4279 = vsel %vm881, %v4267, %v4275
        %v4280 = vsel %vm881, %v4269, %v4261
        %v4281 = vsel %vm881, %v4271, %v4263
        %v4282 = vsel %vm881, %v4273, %v4265
        %v4283 = vsel %vm881, %v4275, %v4267
        %v4284 = vmul.f32 %v4276, %v893
        %v4285 = vmul.f32 %v4280, %v897
        %v4286 = vmul.f32 %v4277, %v893
        %v4287 = vmul.f32 %v4281, %v897
        %v4288 = vmul.f32 %v4278, %v893
        %v4289 = vmul.f32 %v4282, %v897
        %v4290 = vmul.f32 %v4279, %v893
        %v4291 = vmul.f32 %v4283, %v897
        %v4293 = vsel %vm906, %v4027, 0
        %v4296 = vsel %vm906, %v4028, 0
        %v4299 = vsel %vm906, %v4029, 0
        %v4302 = vsel %vm906, %v4030, 0
        %4304 = vmatprep.subr.mxu0 0.0
        %4305 = vmatpush1.msra.mxu0 0.0
        %4306 = vmatprep.subr.mxu0 0.0
        %4307 = vmatpush1.msra.mxu0 0.0
        %4308 = vmatprep.subr.mxu0 0.0
        %4309 = vmatpush1.msra.mxu0 0.0
        %4310 = vmatprep.subr.mxu0 0.0
        %4311 = vmatpush1.msra.mxu0 0.0
        %4312 = vmatprep.subr.mxu0 0.0
        %4313 = vmatpush1.msra.mxu0 0.0
        %4314 = vmatprep.subr.mxu0 0.0
        %4315 = vmatpush1.msra.mxu0 0.0
        %4316 = vmatprep.subr.mxu0 0.0
        %4317 = vmatpush1.msra.mxu0 0.0
        %4318 = vmatprep.subr.mxu0 0.0
        %4319 = vmatpush1.msra.mxu0 0.0
        %4320 = vmatprep.subr.mxu0 0.0
        %4321 = vmatpush1.msra.mxu0 0.0
        %4322 = vmatprep.subr.mxu0 0.0
        %4323 = vmatpush1.msra.mxu0 0.0
        %4324 = vmatprep.subr.mxu0 0.0
        %4325 = vmatpush1.msra.mxu0 0.0
        %4326 = vmatprep.subr.mxu0 0.0
        %4327 = vmatpush1.msra.mxu0 0.0
        %4328 = vmatprep.subr.mxu0 %v4016
        %4329 = vmatpush1.msra.mxu0 %v4015
        %4330 = vmatprep.subr.mxu0 %v4014
        %4331 = vmatpush1.msra.mxu0 %v4013
        %4332 = vmatprep.subr.mxu0 %v4012
        %4333 = vmatpush1.msra.mxu0 %v4011
        %4334 = vmatprep.subr.mxu0 %v4010
        %4335 = vmatpush1.msra.mxu0 %v4009
        %4336 = vmatprep.subr.mxu0 0.0
        %4337 = vmatpush2.msra.mxu0 0.0
        %4338 = vmatprep.subr.mxu0 0.0
        %4339 = vmatpush2.msra.mxu0 0.0
        %4340 = vmatprep.subr.mxu0 0.0
        %4341 = vmatpush2.msra.mxu0 0.0
        %4342 = vmatprep.subr.mxu0 0.0
        %4343 = vmatpush2.msra.mxu0 0.0
        %4344 = vmatprep.subr.mxu0 0.0
        %4345 = vmatpush2.msra.mxu0 0.0
        %4346 = vmatprep.subr.mxu0 0.0
        %4347 = vmatpush2.msra.mxu0 0.0
        %4348 = vmatprep.subr.mxu0 0.0
        %4349 = vmatpush2.msra.mxu0 0.0
        %4350 = vmatprep.subr.mxu0 0.0
        %4351 = vmatpush2.msra.mxu0 0.0
        %4352 = vmatprep.subr.mxu0 0.0
        %4353 = vmatpush2.msra.mxu0 0.0
        %4354 = vmatprep.subr.mxu0 0.0
        %4355 = vmatpush2.msra.mxu0 0.0
        %4356 = vmatprep.subr.mxu0 0.0
        %4357 = vmatpush2.msra.mxu0 0.0
        %4358 = vmatprep.subr.mxu0 0.0
        %4359 = vmatpush2.msra.mxu0 0.0
        %4360 = vmatprep.subr.mxu0 0.0
        %4361 = vmatpush2.msra.mxu0 0.0
        %4362 = vmatprep.subr.mxu0 0.0
        %4363 = vmatpush2.msra.mxu0 0.0
        %4364 = vmatprep.subr.mxu0 0.0
        %4365 = vmatpush2.msra.mxu0 0.0
        %4366 = vmatprep.subr.mxu0 0.0
        %4367 = vmatpush2.msra.mxu0 0.0
        %4368 = vmatprep.mubr.f32.mxu0 0.0
        %4369 = vmatmul.mubr.f32.gmra.mxu0 %v4293
        %v4370 = vpop.f32.mrf.mxu0
        %v4371 = vadd.f32 0.0, %v4370
        %v4372 = vpop.f32.mrf.mxu0
        %v4373 = vadd.f32 0.0, %v4372
        %4374 = vmatprep.mubr.f32.mxu0 0.0
        %4375 = vmatmul.mubr.f32.gmra.mxu0 %v4296
        %v4376 = vpop.f32.mrf.mxu0
        %v4377 = vadd.f32 0.0, %v4376
        %v4378 = vpop.f32.mrf.mxu0
        %v4379 = vadd.f32 0.0, %v4378
        %4380 = vmatprep.mubr.f32.mxu0 0.0
        %4381 = vmatmul.mubr.f32.gmra.mxu0 %v4299
        %v4382 = vpop.f32.mrf.mxu0
        %v4383 = vadd.f32 0.0, %v4382
        %v4384 = vpop.f32.mrf.mxu0
        %v4385 = vadd.f32 0.0, %v4384
        %4386 = vmatprep.mubr.f32.mxu0 0.0
        %4387 = vmatmul.mubr.f32.gmra.mxu0 %v4302
        %v4388 = vpop.f32.mrf.mxu0
        %v4389 = vadd.f32 0.0, %v4388
        %v4390 = vpop.f32.mrf.mxu0
        %v4391 = vadd.f32 0.0, %v4390
        %4392 = vdwg.mxu0
        %4393 = vmatprep.subr.mxu0 %v4163
        %4394 = vmatpush1.msra.mxu0 %v4162
        %4395 = vmatprep.subr.mxu0 %v4161
        %4396 = vmatpush1.msra.mxu0 %v4160
        %4397 = vmatprep.subr.mxu0 %v4159
        %4398 = vmatpush1.msra.mxu0 %v4158
        %4399 = vmatprep.subr.mxu0 %v4157
        %4400 = vmatpush1.msra.mxu0 %v4156
        %4401 = vmatprep.subr.mxu0 %v4131
        %4402 = vmatpush1.msra.mxu0 %v4130
        %4403 = vmatprep.subr.mxu0 %v4129
        %4404 = vmatpush1.msra.mxu0 %v4128
        %4405 = vmatprep.subr.mxu0 %v4127
        %4406 = vmatpush1.msra.mxu0 %v4126
        %4407 = vmatprep.subr.mxu0 %v4125
        %4408 = vmatpush1.msra.mxu0 %v4124
        %4409 = vmatprep.subr.mxu0 %v4099
        %4410 = vmatpush1.msra.mxu0 %v4098
        %4411 = vmatprep.subr.mxu0 %v4097
        %4412 = vmatpush1.msra.mxu0 %v4096
        %4413 = vmatprep.subr.mxu0 %v4095
        %4414 = vmatpush1.msra.mxu0 %v4094
        %4415 = vmatprep.subr.mxu0 %v4093
        %4416 = vmatpush1.msra.mxu0 %v4092
        %4417 = vmatprep.subr.mxu0 %v4067
        %4418 = vmatpush1.msra.mxu0 %v4066
        %4419 = vmatprep.subr.mxu0 %v4065
        %4420 = vmatpush1.msra.mxu0 %v4064
        %4421 = vmatprep.subr.mxu0 %v4063
        %4422 = vmatpush1.msra.mxu0 %v4062
        %4423 = vmatprep.subr.mxu0 %v4061
        %4424 = vmatpush1.msra.mxu0 %v4060
        %4425 = vmatprep.subr.mxu0 %v4291
        %4426 = vmatpush2.msra.mxu0 %v4290
        %4427 = vmatprep.subr.mxu0 %v4289
        %4428 = vmatpush2.msra.mxu0 %v4288
        %4429 = vmatprep.subr.mxu0 %v4287
        %4430 = vmatpush2.msra.mxu0 %v4286
        %4431 = vmatprep.subr.mxu0 %v4285
        %4432 = vmatpush2.msra.mxu0 %v4284
        %4433 = vmatprep.subr.mxu0 %v4259
        %4434 = vmatpush2.msra.mxu0 %v4258
        %4435 = vmatprep.subr.mxu0 %v4257
        %4436 = vmatpush2.msra.mxu0 %v4256
        %4437 = vmatprep.subr.mxu0 %v4255
        %4438 = vmatpush2.msra.mxu0 %v4254
        %4439 = vmatprep.subr.mxu0 %v4253
        %4440 = vmatpush2.msra.mxu0 %v4252
        %4441 = vmatprep.subr.mxu0 %v4227
        %4442 = vmatpush2.msra.mxu0 %v4226
        %4443 = vmatprep.subr.mxu0 %v4225
        %4444 = vmatpush2.msra.mxu0 %v4224
        %4445 = vmatprep.subr.mxu0 %v4223
        %4446 = vmatpush2.msra.mxu0 %v4222
        %4447 = vmatprep.subr.mxu0 %v4221
        %4448 = vmatpush2.msra.mxu0 %v4220
        %4449 = vmatprep.subr.mxu0 %v4195
        %4450 = vmatpush2.msra.mxu0 %v4194
        %4451 = vmatprep.subr.mxu0 %v4193
        %4452 = vmatpush2.msra.mxu0 %v4192
        %4453 = vmatprep.subr.mxu0 %v4191
        %4454 = vmatpush2.msra.mxu0 %v4190
        %4455 = vmatprep.subr.mxu0 %v4189
        %4456 = vmatpush2.msra.mxu0 %v4188
        %4457 = vmatprep.mubr.f32.mxu0 %v4019
        %4458 = vmatmul.mubr.f32.gmra.mxu0 %v4018
        %v4459 = vpop.f32.mrf.mxu0
        %v4460 = vadd.f32 %v4371, %v4459
        %v4461 = vpop.f32.mrf.mxu0
        %v4462 = vadd.f32 %v4373, %v4461
        %4463 = vmatprep.mubr.f32.mxu0 %v4021
        %4464 = vmatmul.mubr.f32.gmra.mxu0 %v4020
        %v4465 = vpop.f32.mrf.mxu0
        %v4466 = vadd.f32 %v4377, %v4465
        %v4467 = vpop.f32.mrf.mxu0
        %v4468 = vadd.f32 %v4379, %v4467
        %4469 = vmatprep.mubr.f32.mxu0 %v4023
        %4470 = vmatmul.mubr.f32.gmra.mxu0 %v4022
        %v4471 = vpop.f32.mrf.mxu0
        %v4472 = vadd.f32 %v4383, %v4471
        %v4473 = vpop.f32.mrf.mxu0
        %v4474 = vadd.f32 %v4385, %v4473
        %4475 = vmatprep.mubr.f32.mxu0 %v4025
        %4476 = vmatmul.mubr.f32.gmra.mxu0 %v4024
        %v4477 = vpop.f32.mrf.mxu0
        %v4478 = vadd.f32 %v4389, %v4477
        %v4479 = vpop.f32.mrf.mxu0
        %v4480 = vadd.f32 %v4391, %v4479
        %4481 = vdwg.mxu0
        %4483 = vset.pattern.permute.xlu0 0
        %4484 = vperm.xlu0 %4483, %v4032
        %v4485 = vpop.permute.xlu0 %4484
        %4488 = vset.pattern.permute.xlu0 0
        %4489 = vperm.xlu0 %4488, %v4033
        %v4490 = vpop.permute.xlu0 %4489
        %4493 = vset.pattern.permute.xlu0 0
        %4494 = vperm.xlu0 %4493, %v4034
        %v4495 = vpop.permute.xlu0 %4494
        %4498 = vset.pattern.permute.xlu0 0
        %4499 = vperm.xlu0 %4498, %v4035
        %v4500 = vpop.permute.xlu0 %4499
        %v4502 = vadd.f32 %v4460, %v4485
        %v4503 = vadd.f32 %v4462, %v4485
        %v4504 = vadd.f32 %v4466, %v4490
        %v4505 = vadd.f32 %v4468, %v4490
        %v4506 = vadd.f32 %v4472, %v4495
        %v4507 = vadd.f32 %v4474, %v4495
        %v4508 = vadd.f32 %v4478, %v4500
        %v4509 = vadd.f32 %v4480, %v4500
        %v4510 = vmax.f32 %v4502, 0.0
        %v4511 = vmax.f32 %v4503, 0.0
        %v4512 = vmax.f32 %v4504, 0.0
        %v4513 = vmax.f32 %v4505, 0.0
        %v4514 = vmax.f32 %v4506, 0.0
        %v4515 = vmax.f32 %v4507, 0.0
        %v4516 = vmax.f32 %v4508, 0.0
        %v4517 = vmax.f32 %v4509, 0.0
        %s4518 = scalar_lea.vmem %s5, 192
        %v4519 = vld [vmem:[%s4518] sm:$0xff]
        %v4520 = vld [vmem:[%s4518 + $0x8] sm:$0xff]
        %v4521 = vld [vmem:[%s4518 + $0x10] sm:$0xff]
        %v4522 = vld [vmem:[%s4518 + $0x18] sm:$0xff]
        %v4523 = vld [vmem:[%s4518 + $0x20] sm:$0xff]
        %v4524 = vld [vmem:[%s4518 + $0x28] sm:$0xff]
        %v4525 = vld [vmem:[%s4518 + $0x30] sm:$0xff]
        %v4526 = vld [vmem:[%s4518 + $0x38] sm:$0xff]
        %s4527 = scalar_lea.vmem [#allocation7], 96
        %v4528 = vld [vmem:[%s4527] sm:$0xff]
        %v4529 = vld [vmem:[%s4527 + $0x8] sm:$0xff]
        %v4530 = vld [vmem:[%s4527 + $0x10] sm:$0xff]
        %v4531 = vld [vmem:[%s4527 + $0x18] sm:$0xff]
        %s4532 = scalar_lea.vmem %s7, 96
        %v4533 = vld [vmem:[%s4532] sm:$0xff]
        %v4534 = vld [vmem:[%s4532 + $0x8] sm:$0xff]
        %v4535 = vld [vmem:[%s4532 + $0x10] sm:$0xff]
        %v4536 = vld [vmem:[%s4532 + $0x18] sm:$0xff]
        %4537 = vrot.lane.b32.xlu0 %v4510, 17
        %v4538 = vpop.permute.xlu0 %4537
        %4539 = vrot.lane.b32.xlu0 %v4512, 17
        %v4540 = vpop.permute.xlu0 %4539
        %4541 = vrot.lane.b32.xlu0 %v4514, 17
        %v4542 = vpop.permute.xlu0 %4541
        %4543 = vrot.lane.b32.xlu0 %v4516, 17
        %v4544 = vpop.permute.xlu0 %4543
        %4545 = vrot.lane.b32.xlu0 %v4511, 17
        %v4546 = vpop.permute.xlu0 %4545
        %4547 = vrot.lane.b32.xlu0 %v4513, 17
        %v4548 = vpop.permute.xlu0 %4547
        %4549 = vrot.lane.b32.xlu0 %v4515, 17
        %v4550 = vpop.permute.xlu0 %4549
        %4551 = vrot.lane.b32.xlu0 %v4517, 17
        %v4552 = vpop.permute.xlu0 %4551
        %v4553 = vsel %vm594, %v4538, %v4546
        %v4554 = vsel %vm594, %v4540, %v4548
        %v4555 = vsel %vm594, %v4542, %v4550
        %v4556 = vsel %vm594, %v4544, %v4552
        %v4557 = vsel %vm594, %v4546, %v4538
        %v4558 = vsel %vm594, %v4548, %v4540
        %v4559 = vsel %vm594, %v4550, %v4542
        %v4560 = vsel %vm594, %v4552, %v4544
        %v4561 = vmul.f32 %v4557, %v606
        %v4562 = vmul.f32 %v4553, %v610
        %v4563 = vmul.f32 %v4558, %v606
        %v4564 = vmul.f32 %v4554, %v610
        %v4565 = vmul.f32 %v4559, %v606
        %v4566 = vmul.f32 %v4555, %v610
        %v4567 = vmul.f32 %v4560, %v606
        %v4568 = vmul.f32 %v4556, %v610
        %4569 = vrot.lane.b32.xlu0 %v4510, 16
        %v4570 = vpop.permute.xlu0 %4569
        %4571 = vrot.lane.b32.xlu0 %v4512, 16
        %v4572 = vpop.permute.xlu0 %4571
        %4573 = vrot.lane.b32.xlu0 %v4514, 16
        %v4574 = vpop.permute.xlu0 %4573
        %4575 = vrot.lane.b32.xlu0 %v4516, 16
        %v4576 = vpop.permute.xlu0 %4575
        %4577 = vrot.lane.b32.xlu0 %v4511, 16
        %v4578 = vpop.permute.xlu0 %4577
        %4579 = vrot.lane.b32.xlu0 %v4513, 16
        %v4580 = vpop.permute.xlu0 %4579
        %4581 = vrot.lane.b32.xlu0 %v4515, 16
        %v4582 = vpop.permute.xlu0 %4581
        %4583 = vrot.lane.b32.xlu0 %v4517, 16
        %v4584 = vpop.permute.xlu0 %4583
        %v4585 = vsel %vm635, %v4570, %v4578
        %v4586 = vsel %vm635, %v4572, %v4580
        %v4587 = vsel %vm635, %v4574, %v4582
        %v4588 = vsel %vm635, %v4576, %v4584
        %v4589 = vsel %vm635, %v4578, %v4570
        %v4590 = vsel %vm635, %v4580, %v4572
        %v4591 = vsel %vm635, %v4582, %v4574
        %v4592 = vsel %vm635, %v4584, %v4576
        %v4593 = vmul.f32 %v4589, %v647
        %v4594 = vmul.f32 %v4585, %v651
        %v4595 = vmul.f32 %v4590, %v647
        %v4596 = vmul.f32 %v4586, %v651
        %v4597 = vmul.f32 %v4591, %v647
        %v4598 = vmul.f32 %v4587, %v651
        %v4599 = vmul.f32 %v4592, %v647
        %v4600 = vmul.f32 %v4588, %v651
        %4601 = vrot.lane.b32.xlu0 %v4510, 15
        %v4602 = vpop.permute.xlu0 %4601
        %4603 = vrot.lane.b32.xlu0 %v4512, 15
        %v4604 = vpop.permute.xlu0 %4603
        %4605 = vrot.lane.b32.xlu0 %v4514, 15
        %v4606 = vpop.permute.xlu0 %4605
        %4607 = vrot.lane.b32.xlu0 %v4516, 15
        %v4608 = vpop.permute.xlu0 %4607
        %4609 = vrot.lane.b32.xlu0 %v4511, 15
        %v4610 = vpop.permute.xlu0 %4609
        %4611 = vrot.lane.b32.xlu0 %v4513, 15
        %v4612 = vpop.permute.xlu0 %4611
        %4613 = vrot.lane.b32.xlu0 %v4515, 15
        %v4614 = vpop.permute.xlu0 %4613
        %4615 = vrot.lane.b32.xlu0 %v4517, 15
        %v4616 = vpop.permute.xlu0 %4615
        %v4617 = vsel %vm676, %v4602, %v4610
        %v4618 = vsel %vm676, %v4604, %v4612
        %v4619 = vsel %vm676, %v4606, %v4614
        %v4620 = vsel %vm676, %v4608, %v4616
        %v4621 = vsel %vm676, %v4610, %v4602
        %v4622 = vsel %vm676, %v4612, %v4604
        %v4623 = vsel %vm676, %v4614, %v4606
        %v4624 = vsel %vm676, %v4616, %v4608
        %v4625 = vmul.f32 %v4621, %v688
        %v4626 = vmul.f32 %v4617, %v692
        %v4627 = vmul.f32 %v4622, %v688
        %v4628 = vmul.f32 %v4618, %v692
        %v4629 = vmul.f32 %v4623, %v688
        %v4630 = vmul.f32 %v4619, %v692
        %v4631 = vmul.f32 %v4624, %v688
        %v4632 = vmul.f32 %v4620, %v692
        %4633 = vrot.lane.b32.xlu0 %v4510, 1
        %v4634 = vpop.permute.xlu0 %4633
        %4635 = vrot.lane.b32.xlu0 %v4512, 1
        %v4636 = vpop.permute.xlu0 %4635
        %4637 = vrot.lane.b32.xlu0 %v4514, 1
        %v4638 = vpop.permute.xlu0 %4637
        %4639 = vrot.lane.b32.xlu0 %v4516, 1
        %v4640 = vpop.permute.xlu0 %4639
        %4641 = vrot.lane.b32.xlu0 %v4511, 1
        %v4642 = vpop.permute.xlu0 %4641
        %4643 = vrot.lane.b32.xlu0 %v4513, 1
        %v4644 = vpop.permute.xlu0 %4643
        %4645 = vrot.lane.b32.xlu0 %v4515, 1
        %v4646 = vpop.permute.xlu0 %4645
        %4647 = vrot.lane.b32.xlu0 %v4517, 1
        %v4648 = vpop.permute.xlu0 %4647
        %v4649 = vsel %vm717, %v4634, %v4642
        %v4650 = vsel %vm717, %v4636, %v4644
        %v4651 = vsel %vm717, %v4638, %v4646
        %v4652 = vsel %vm717, %v4640, %v4648
        %v4653 = vsel %vm717, %v4642, %v4634
        %v4654 = vsel %vm717, %v4644, %v4636
        %v4655 = vsel %vm717, %v4646, %v4638
        %v4656 = vsel %vm717, %v4648, %v4640
        %v4657 = vmul.f32 %v4653, %v729
        %v4658 = vmul.f32 %v4649, %v733
        %v4659 = vmul.f32 %v4654, %v729
        %v4660 = vmul.f32 %v4650, %v733
        %v4661 = vmul.f32 %v4655, %v729
        %v4662 = vmul.f32 %v4651, %v733
        %v4663 = vmul.f32 %v4656, %v729
        %v4664 = vmul.f32 %v4652, %v733
        %4665 = vrot.lane.b32.xlu0 %v4510, 127
        %v4666 = vpop.permute.xlu0 %4665
        %4667 = vrot.lane.b32.xlu0 %v4512, 127
        %v4668 = vpop.permute.xlu0 %4667
        %4669 = vrot.lane.b32.xlu0 %v4514, 127
        %v4670 = vpop.permute.xlu0 %4669
        %4671 = vrot.lane.b32.xlu0 %v4516, 127
        %v4672 = vpop.permute.xlu0 %4671
        %4673 = vrot.lane.b32.xlu0 %v4511, 127
        %v4674 = vpop.permute.xlu0 %4673
        %4675 = vrot.lane.b32.xlu0 %v4513, 127
        %v4676 = vpop.permute.xlu0 %4675
        %4677 = vrot.lane.b32.xlu0 %v4515, 127
        %v4678 = vpop.permute.xlu0 %4677
        %4679 = vrot.lane.b32.xlu0 %v4517, 127
        %v4680 = vpop.permute.xlu0 %4679
        %v4681 = vsel %vm758, %v4666, %v4674
        %v4682 = vsel %vm758, %v4668, %v4676
        %v4683 = vsel %vm758, %v4670, %v4678
        %v4684 = vsel %vm758, %v4672, %v4680
        %v4685 = vsel %vm758, %v4674, %v4666
        %v4686 = vsel %vm758, %v4676, %v4668
        %v4687 = vsel %vm758, %v4678, %v4670
        %v4688 = vsel %vm758, %v4680, %v4672
        %v4689 = vmul.f32 %v4681, %v770
        %v4690 = vmul.f32 %v4685, %v774
        %v4691 = vmul.f32 %v4682, %v770
        %v4692 = vmul.f32 %v4686, %v774
        %v4693 = vmul.f32 %v4683, %v770
        %v4694 = vmul.f32 %v4687, %v774
        %v4695 = vmul.f32 %v4684, %v770
        %v4696 = vmul.f32 %v4688, %v774
        %4697 = vrot.lane.b32.xlu0 %v4510, 113
        %v4698 = vpop.permute.xlu0 %4697
        %4699 = vrot.lane.b32.xlu0 %v4512, 113
        %v4700 = vpop.permute.xlu0 %4699
        %4701 = vrot.lane.b32.xlu0 %v4514, 113
        %v4702 = vpop.permute.xlu0 %4701
        %4703 = vrot.lane.b32.xlu0 %v4516, 113
        %v4704 = vpop.permute.xlu0 %4703
        %4705 = vrot.lane.b32.xlu0 %v4511, 113
        %v4706 = vpop.permute.xlu0 %4705
        %4707 = vrot.lane.b32.xlu0 %v4513, 113
        %v4708 = vpop.permute.xlu0 %4707
        %4709 = vrot.lane.b32.xlu0 %v4515, 113
        %v4710 = vpop.permute.xlu0 %4709
        %4711 = vrot.lane.b32.xlu0 %v4517, 113
        %v4712 = vpop.permute.xlu0 %4711
        %v4713 = vsel %vm799, %v4698, %v4706
        %v4714 = vsel %vm799, %v4700, %v4708
        %v4715 = vsel %vm799, %v4702, %v4710
        %v4716 = vsel %vm799, %v4704, %v4712
        %v4717 = vsel %vm799, %v4706, %v4698
        %v4718 = vsel %vm799, %v4708, %v4700
        %v4719 = vsel %vm799, %v4710, %v4702
        %v4720 = vsel %vm799, %v4712, %v4704
        %v4721 = vmul.f32 %v4713, %v811
        %v4722 = vmul.f32 %v4717, %v815
        %v4723 = vmul.f32 %v4714, %v811
        %v4724 = vmul.f32 %v4718, %v815
        %v4725 = vmul.f32 %v4715, %v811
        %v4726 = vmul.f32 %v4719, %v815
        %v4727 = vmul.f32 %v4716, %v811
        %v4728 = vmul.f32 %v4720, %v815
        %4729 = vrot.lane.b32.xlu0 %v4510, 112
        %v4730 = vpop.permute.xlu0 %4729
        %4731 = vrot.lane.b32.xlu0 %v4512, 112
        %v4732 = vpop.permute.xlu0 %4731
        %4733 = vrot.lane.b32.xlu0 %v4514, 112
        %v4734 = vpop.permute.xlu0 %4733
        %4735 = vrot.lane.b32.xlu0 %v4516, 112
        %v4736 = vpop.permute.xlu0 %4735
        %4737 = vrot.lane.b32.xlu0 %v4511, 112
        %v4738 = vpop.permute.xlu0 %4737
        %4739 = vrot.lane.b32.xlu0 %v4513, 112
        %v4740 = vpop.permute.xlu0 %4739
        %4741 = vrot.lane.b32.xlu0 %v4515, 112
        %v4742 = vpop.permute.xlu0 %4741
        %4743 = vrot.lane.b32.xlu0 %v4517, 112
        %v4744 = vpop.permute.xlu0 %4743
        %v4745 = vsel %vm840, %v4730, %v4738
        %v4746 = vsel %vm840, %v4732, %v4740
        %v4747 = vsel %vm840, %v4734, %v4742
        %v4748 = vsel %vm840, %v4736, %v4744
        %v4749 = vsel %vm840, %v4738, %v4730
        %v4750 = vsel %vm840, %v4740, %v4732
        %v4751 = vsel %vm840, %v4742, %v4734
        %v4752 = vsel %vm840, %v4744, %v4736
        %v4753 = vmul.f32 %v4745, %v852
        %v4754 = vmul.f32 %v4749, %v856
        %v4755 = vmul.f32 %v4746, %v852
        %v4756 = vmul.f32 %v4750, %v856
        %v4757 = vmul.f32 %v4747, %v852
        %v4758 = vmul.f32 %v4751, %v856
        %v4759 = vmul.f32 %v4748, %v852
        %v4760 = vmul.f32 %v4752, %v856
        %4761 = vrot.lane.b32.xlu0 %v4510, 111
        %v4762 = vpop.permute.xlu0 %4761
        %4763 = vrot.lane.b32.xlu0 %v4512, 111
        %v4764 = vpop.permute.xlu0 %4763
        %4765 = vrot.lane.b32.xlu0 %v4514, 111
        %v4766 = vpop.permute.xlu0 %4765
        %4767 = vrot.lane.b32.xlu0 %v4516, 111
        %v4768 = vpop.permute.xlu0 %4767
        %4769 = vrot.lane.b32.xlu0 %v4511, 111
        %v4770 = vpop.permute.xlu0 %4769
        %4771 = vrot.lane.b32.xlu0 %v4513, 111
        %v4772 = vpop.permute.xlu0 %4771
        %4773 = vrot.lane.b32.xlu0 %v4515, 111
        %v4774 = vpop.permute.xlu0 %4773
        %4775 = vrot.lane.b32.xlu0 %v4517, 111
        %v4776 = vpop.permute.xlu0 %4775
        %v4777 = vsel %vm881, %v4762, %v4770
        %v4778 = vsel %vm881, %v4764, %v4772
        %v4779 = vsel %vm881, %v4766, %v4774
        %v4780 = vsel %vm881, %v4768, %v4776
        %v4781 = vsel %vm881, %v4770, %v4762
        %v4782 = vsel %vm881, %v4772, %v4764
        %v4783 = vsel %vm881, %v4774, %v4766
        %v4784 = vsel %vm881, %v4776, %v4768
        %v4785 = vmul.f32 %v4777, %v893
        %v4786 = vmul.f32 %v4781, %v897
        %v4787 = vmul.f32 %v4778, %v893
        %v4788 = vmul.f32 %v4782, %v897
        %v4789 = vmul.f32 %v4779, %v893
        %v4790 = vmul.f32 %v4783, %v897
        %v4791 = vmul.f32 %v4780, %v893
        %v4792 = vmul.f32 %v4784, %v897
        %v4794 = vsel %vm906, %v4528, 0
        %v4797 = vsel %vm906, %v4529, 0
        %v4800 = vsel %vm906, %v4530, 0
        %v4803 = vsel %vm906, %v4531, 0
        %4805 = vmatprep.subr.mxu0 0.0
        %4806 = vmatpush1.msra.mxu0 0.0
        %4807 = vmatprep.subr.mxu0 0.0
        %4808 = vmatpush1.msra.mxu0 0.0
        %4809 = vmatprep.subr.mxu0 0.0
        %4810 = vmatpush1.msra.mxu0 0.0
        %4811 = vmatprep.subr.mxu0 0.0
        %4812 = vmatpush1.msra.mxu0 0.0
        %4813 = vmatprep.subr.mxu0 0.0
        %4814 = vmatpush1.msra.mxu0 0.0
        %4815 = vmatprep.subr.mxu0 0.0
        %4816 = vmatpush1.msra.mxu0 0.0
        %4817 = vmatprep.subr.mxu0 0.0
        %4818 = vmatpush1.msra.mxu0 0.0
        %4819 = vmatprep.subr.mxu0 0.0
        %4820 = vmatpush1.msra.mxu0 0.0
        %4821 = vmatprep.subr.mxu0 0.0
        %4822 = vmatpush1.msra.mxu0 0.0
        %4823 = vmatprep.subr.mxu0 0.0
        %4824 = vmatpush1.msra.mxu0 0.0
        %4825 = vmatprep.subr.mxu0 0.0
        %4826 = vmatpush1.msra.mxu0 0.0
        %4827 = vmatprep.subr.mxu0 0.0
        %4828 = vmatpush1.msra.mxu0 0.0
        %4829 = vmatprep.subr.mxu0 %v4517
        %4830 = vmatpush1.msra.mxu0 %v4516
        %4831 = vmatprep.subr.mxu0 %v4515
        %4832 = vmatpush1.msra.mxu0 %v4514
        %4833 = vmatprep.subr.mxu0 %v4513
        %4834 = vmatpush1.msra.mxu0 %v4512
        %4835 = vmatprep.subr.mxu0 %v4511
        %4836 = vmatpush1.msra.mxu0 %v4510
        %4837 = vmatprep.subr.mxu0 0.0
        %4838 = vmatpush2.msra.mxu0 0.0
        %4839 = vmatprep.subr.mxu0 0.0
        %4840 = vmatpush2.msra.mxu0 0.0
        %4841 = vmatprep.subr.mxu0 0.0
        %4842 = vmatpush2.msra.mxu0 0.0
        %4843 = vmatprep.subr.mxu0 0.0
        %4844 = vmatpush2.msra.mxu0 0.0
        %4845 = vmatprep.subr.mxu0 0.0
        %4846 = vmatpush2.msra.mxu0 0.0
        %4847 = vmatprep.subr.mxu0 0.0
        %4848 = vmatpush2.msra.mxu0 0.0
        %4849 = vmatprep.subr.mxu0 0.0
        %4850 = vmatpush2.msra.mxu0 0.0
        %4851 = vmatprep.subr.mxu0 0.0
        %4852 = vmatpush2.msra.mxu0 0.0
        %4853 = vmatprep.subr.mxu0 0.0
        %4854 = vmatpush2.msra.mxu0 0.0
        %4855 = vmatprep.subr.mxu0 0.0
        %4856 = vmatpush2.msra.mxu0 0.0
        %4857 = vmatprep.subr.mxu0 0.0
        %4858 = vmatpush2.msra.mxu0 0.0
        %4859 = vmatprep.subr.mxu0 0.0
        %4860 = vmatpush2.msra.mxu0 0.0
        %4861 = vmatprep.subr.mxu0 0.0
        %4862 = vmatpush2.msra.mxu0 0.0
        %4863 = vmatprep.subr.mxu0 0.0
        %4864 = vmatpush2.msra.mxu0 0.0
        %4865 = vmatprep.subr.mxu0 0.0
        %4866 = vmatpush2.msra.mxu0 0.0
        %4867 = vmatprep.subr.mxu0 0.0
        %4868 = vmatpush2.msra.mxu0 0.0
        %4869 = vmatprep.mubr.f32.mxu0 0.0
        %4870 = vmatmul.mubr.f32.gmra.mxu0 %v4794
        %v4871 = vpop.f32.mrf.mxu0
        %v4872 = vadd.f32 0.0, %v4871
        %v4873 = vpop.f32.mrf.mxu0
        %v4874 = vadd.f32 0.0, %v4873
        %4875 = vmatprep.mubr.f32.mxu0 0.0
        %4876 = vmatmul.mubr.f32.gmra.mxu0 %v4797
        %v4877 = vpop.f32.mrf.mxu0
        %v4878 = vadd.f32 0.0, %v4877
        %v4879 = vpop.f32.mrf.mxu0
        %v4880 = vadd.f32 0.0, %v4879
        %4881 = vmatprep.mubr.f32.mxu0 0.0
        %4882 = vmatmul.mubr.f32.gmra.mxu0 %v4800
        %v4883 = vpop.f32.mrf.mxu0
        %v4884 = vadd.f32 0.0, %v4883
        %v4885 = vpop.f32.mrf.mxu0
        %v4886 = vadd.f32 0.0, %v4885
        %4887 = vmatprep.mubr.f32.mxu0 0.0
        %4888 = vmatmul.mubr.f32.gmra.mxu0 %v4803
        %v4889 = vpop.f32.mrf.mxu0
        %v4890 = vadd.f32 0.0, %v4889
        %v4891 = vpop.f32.mrf.mxu0
        %v4892 = vadd.f32 0.0, %v4891
        %4893 = vdwg.mxu0
        %4894 = vmatprep.subr.mxu0 %v4664
        %4895 = vmatpush1.msra.mxu0 %v4663
        %4896 = vmatprep.subr.mxu0 %v4662
        %4897 = vmatpush1.msra.mxu0 %v4661
        %4898 = vmatprep.subr.mxu0 %v4660
        %4899 = vmatpush1.msra.mxu0 %v4659
        %4900 = vmatprep.subr.mxu0 %v4658
        %4901 = vmatpush1.msra.mxu0 %v4657
        %4902 = vmatprep.subr.mxu0 %v4632
        %4903 = vmatpush1.msra.mxu0 %v4631
        %4904 = vmatprep.subr.mxu0 %v4630
        %4905 = vmatpush1.msra.mxu0 %v4629
        %4906 = vmatprep.subr.mxu0 %v4628
        %4907 = vmatpush1.msra.mxu0 %v4627
        %4908 = vmatprep.subr.mxu0 %v4626
        %4909 = vmatpush1.msra.mxu0 %v4625
        %4910 = vmatprep.subr.mxu0 %v4600
        %4911 = vmatpush1.msra.mxu0 %v4599
        %4912 = vmatprep.subr.mxu0 %v4598
        %4913 = vmatpush1.msra.mxu0 %v4597
        %4914 = vmatprep.subr.mxu0 %v4596
        %4915 = vmatpush1.msra.mxu0 %v4595
        %4916 = vmatprep.subr.mxu0 %v4594
        %4917 = vmatpush1.msra.mxu0 %v4593
        %4918 = vmatprep.subr.mxu0 %v4568
        %4919 = vmatpush1.msra.mxu0 %v4567
        %4920 = vmatprep.subr.mxu0 %v4566
        %4921 = vmatpush1.msra.mxu0 %v4565
        %4922 = vmatprep.subr.mxu0 %v4564
        %4923 = vmatpush1.msra.mxu0 %v4563
        %4924 = vmatprep.subr.mxu0 %v4562
        %4925 = vmatpush1.msra.mxu0 %v4561
        %4926 = vmatprep.subr.mxu0 %v4792
        %4927 = vmatpush2.msra.mxu0 %v4791
        %4928 = vmatprep.subr.mxu0 %v4790
        %4929 = vmatpush2.msra.mxu0 %v4789
        %4930 = vmatprep.subr.mxu0 %v4788
        %4931 = vmatpush2.msra.mxu0 %v4787
        %4932 = vmatprep.subr.mxu0 %v4786
        %4933 = vmatpush2.msra.mxu0 %v4785
        %4934 = vmatprep.subr.mxu0 %v4760
        %4935 = vmatpush2.msra.mxu0 %v4759
        %4936 = vmatprep.subr.mxu0 %v4758
        %4937 = vmatpush2.msra.mxu0 %v4757
        %4938 = vmatprep.subr.mxu0 %v4756
        %4939 = vmatpush2.msra.mxu0 %v4755
        %4940 = vmatprep.subr.mxu0 %v4754
        %4941 = vmatpush2.msra.mxu0 %v4753
        %4942 = vmatprep.subr.mxu0 %v4728
        %4943 = vmatpush2.msra.mxu0 %v4727
        %4944 = vmatprep.subr.mxu0 %v4726
        %4945 = vmatpush2.msra.mxu0 %v4725
        %4946 = vmatprep.subr.mxu0 %v4724
        %4947 = vmatpush2.msra.mxu0 %v4723
        %4948 = vmatprep.subr.mxu0 %v4722
        %4949 = vmatpush2.msra.mxu0 %v4721
        %4950 = vmatprep.subr.mxu0 %v4696
        %4951 = vmatpush2.msra.mxu0 %v4695
        %4952 = vmatprep.subr.mxu0 %v4694
        %4953 = vmatpush2.msra.mxu0 %v4693
        %4954 = vmatprep.subr.mxu0 %v4692
        %4955 = vmatpush2.msra.mxu0 %v4691
        %4956 = vmatprep.subr.mxu0 %v4690
        %4957 = vmatpush2.msra.mxu0 %v4689
        %4958 = vmatprep.mubr.f32.mxu0 %v4520
        %4959 = vmatmul.mubr.f32.gmra.mxu0 %v4519
        %v4960 = vpop.f32.mrf.mxu0
        %v4961 = vadd.f32 %v4872, %v4960
        %v4962 = vpop.f32.mrf.mxu0
        %v4963 = vadd.f32 %v4874, %v4962
        %4964 = vmatprep.mubr.f32.mxu0 %v4522
        %4965 = vmatmul.mubr.f32.gmra.mxu0 %v4521
        %v4966 = vpop.f32.mrf.mxu0
        %v4967 = vadd.f32 %v4878, %v4966
        %v4968 = vpop.f32.mrf.mxu0
        %v4969 = vadd.f32 %v4880, %v4968
        %4970 = vmatprep.mubr.f32.mxu0 %v4524
        %4971 = vmatmul.mubr.f32.gmra.mxu0 %v4523
        %v4972 = vpop.f32.mrf.mxu0
        %v4973 = vadd.f32 %v4884, %v4972
        %v4974 = vpop.f32.mrf.mxu0
        %v4975 = vadd.f32 %v4886, %v4974
        %4976 = vmatprep.mubr.f32.mxu0 %v4526
        %4977 = vmatmul.mubr.f32.gmra.mxu0 %v4525
        %v4978 = vpop.f32.mrf.mxu0
        %v4979 = vadd.f32 %v4890, %v4978
        %v4980 = vpop.f32.mrf.mxu0
        %v4981 = vadd.f32 %v4892, %v4980
        %4982 = vdwg.mxu0
        %4984 = vset.pattern.permute.xlu0 0
        %4985 = vperm.xlu0 %4984, %v4533
        %v4986 = vpop.permute.xlu0 %4985
        %4989 = vset.pattern.permute.xlu0 0
        %4990 = vperm.xlu0 %4989, %v4534
        %v4991 = vpop.permute.xlu0 %4990
        %4994 = vset.pattern.permute.xlu0 0
        %4995 = vperm.xlu0 %4994, %v4535
        %v4996 = vpop.permute.xlu0 %4995
        %4999 = vset.pattern.permute.xlu0 0
        %5000 = vperm.xlu0 %4999, %v4536
        %v5001 = vpop.permute.xlu0 %5000
        %v5003 = vadd.f32 %v4961, %v4986
        %v5004 = vadd.f32 %v4963, %v4986
        %v5005 = vadd.f32 %v4967, %v4991
        %v5006 = vadd.f32 %v4969, %v4991
        %v5007 = vadd.f32 %v4973, %v4996
        %v5008 = vadd.f32 %v4975, %v4996
        %v5009 = vadd.f32 %v4979, %v5001
        %v5010 = vadd.f32 %v4981, %v5001
        %v5011 = vadd.f32 %v5003, %v5004
        %5012 = vadd.xlane.f32.xlu0 %v5011
        %v5013 = vpop.xlane.xlu0 %5012
        %v5014 = vadd.f32 %v5005, %v5006
        %5015 = vadd.xlane.f32.xlu0 %v5014
        %v5016 = vpop.xlane.xlu0 %5015
        %v5017 = vadd.f32 %v5007, %v5008
        %5018 = vadd.xlane.f32.xlu0 %v5017
        %v5019 = vpop.xlane.xlu0 %5018
        %v5020 = vadd.f32 %v5009, %v5010
        %5021 = vadd.xlane.f32.xlu0 %v5020
        %v5022 = vpop.xlane.xlu0 %5021
        %v5023 = vmul.f32 %v5013, %v1635
        %v5024 = vmul.f32 %v5016, %v1635
        %v5025 = vmul.f32 %v5019, %v1635
        %v5026 = vmul.f32 %v5022, %v1635
        %s5027 = scalar_lea.vmem %s8, 96
        %v5028 = vld [vmem:[%s5027] sm:$0xff]
        %v5029 = vld [vmem:[%s5027 + $0x8] sm:$0xff]
        %v5030 = vld [vmem:[%s5027 + $0x10] sm:$0xff]
        %v5031 = vld [vmem:[%s5027 + $0x18] sm:$0xff]
        %v5032 = vmul.f32 %v5028, %v5023
        %v5033 = vmul.f32 %v5029, %v5024
        %v5034 = vmul.f32 %v5030, %v5025
        %v5035 = vmul.f32 %v5031, %v5026
        %v5036 = vsel %vm1648, %v5032, 0.0
        %v5037 = vsel %vm1648, %v5033, 0.0
        %v5038 = vadd.f32 %v5036, %v5037
        %v5039 = vsel %vm1648, %v5034, 0.0
        %v5040 = vadd.f32 %v5038, %v5039
        %v5041 = vsel %vm1648, %v5035, 0.0
        %v5042 = vadd.f32 %v5040, %v5041
        %v5043 = vrot.slane %v5042, 4
        %v5044 = vadd.f32 %v5042, %v5043
        %v5045 = vrot.slane %v5044, 2
        %v5046 = vadd.f32 %v5044, %v5045
        %v5047 = vrot.slane %v5046, 1
        %v5048 = vadd.f32 %v5046, %v5047
        %s5049 = scalar_lea.vmem %s9, 3
        %v5050 = vld [vmem:[%s5049] sm:$0x1]
        %v5051 = vadd.f32 %v5048, %v5050
        %v5052 = vmax.f32 %v5051, 0.0
        %s5053 = scalar_lea.vmem %s10, 96
        %v5054 = vld [vmem:[%s5053] sm:$0xff]
        %v5055 = vld [vmem:[%s5053 + $0x8] sm:$0xff]
        %v5056 = vld [vmem:[%s5053 + $0x10] sm:$0xff]
        %v5057 = vld [vmem:[%s5053 + $0x18] sm:$0xff]
        %v5058 = vlaneseq
        %v5059 = vshrl.u32 %v5058, 7
        %v5060 = vsub.s32 0, %v5059
        %v5061 = vrot.slane %v5052, %v5060
        %v5062 = vmul.f32 %v5054, %v5061
        %v5063 = vmul.f32 %v5055, %v5061
        %v5064 = vmul.f32 %v5056, %v5061
        %v5065 = vmul.f32 %v5057, %v5061
        %v5066 = vsel %vm1648, %v5062, 0.0
        %5067 = vadd.xlane.f32.xlu0 %v5066
        %v5068 = vpop.xlane.xlu0 %5067
        %v5069 = vsel %vm1648, %v5063, 0.0
        %5070 = vadd.xlane.f32.xlu0 %v5069
        %v5071 = vpop.xlane.xlu0 %5070
        %v5072 = vsel %vm1648, %v5064, 0.0
        %5073 = vadd.xlane.f32.xlu0 %v5072
        %v5074 = vpop.xlane.xlu0 %5073
        %v5075 = vsel %vm1648, %v5065, 0.0
        %5076 = vadd.xlane.f32.xlu0 %v5075
        %v5077 = vpop.xlane.xlu0 %5076
        %s5078 = scalar_lea.vmem %s11, 96
        %v5079 = vld [vmem:[%s5078] sm:$0xff]
        %v5080 = vld [vmem:[%s5078 + $0x8] sm:$0xff]
        %v5081 = vld [vmem:[%s5078 + $0x10] sm:$0xff]
        %v5082 = vld [vmem:[%s5078 + $0x18] sm:$0xff]
        %v5083 = vadd.f32 %v5068, %v5079
        %v5084 = vadd.f32 %v5071, %v5080
        %v5085 = vadd.f32 %v5074, %v5081
        %v5086 = vadd.f32 %v5077, %v5082
        %v5087 = vxor.u32 %v5083, 2147483648
        %v5088 = vxor.u32 %v5084, 2147483648
        %v5089 = vxor.u32 %v5085, 2147483648
        %v5090 = vxor.u32 %v5086, 2147483648
        %v5091 = vmul.f32 %v5087, 1.442695
        %v5092 = vpow.pop %v5091
        %v5093 = vmul.f32 %v5088, 1.442695
        %v5094 = vpow.pop %v5093
        %v5095 = vmul.f32 %v5089, 1.442695
        %v5096 = vpow.pop %v5095
        %v5097 = vmul.f32 %v5090, 1.442695
        %v5098 = vpow.pop %v5097
        %v5099 = vadd.f32 %v5092, 1.0
        %v5100 = vadd.f32 %v5094, 1.0
        %v5101 = vadd.f32 %v5096, 1.0
        %v5102 = vadd.f32 %v5098, 1.0
        %v5103 = vrcp.pop %v5099
        %v5104 = vmul.f32 1.0, %v5103
        %v5105 = vrcp.pop %v5100
        %v5106 = vmul.f32 1.0, %v5105
        %v5107 = vrcp.pop %v5101
        %v5108 = vmul.f32 1.0, %v5107
        %v5109 = vrcp.pop %v5102
        %v5110 = vmul.f32 1.0, %v5109
        %5112 = vset.pattern.permute.xlu0 0
        %5113 = vperm.xlu0 %5112, %v5104
        %v5114 = vpop.permute.xlu0 %5113
        %5117 = vset.pattern.permute.xlu0 0
        %5118 = vperm.xlu0 %5117, %v5106
        %v5119 = vpop.permute.xlu0 %5118
        %5122 = vset.pattern.permute.xlu0 0
        %5123 = vperm.xlu0 %5122, %v5108
        %v5124 = vpop.permute.xlu0 %5123
        %5127 = vset.pattern.permute.xlu0 0
        %5128 = vperm.xlu0 %5127, %v5110
        %v5129 = vpop.permute.xlu0 %5128
        %v5131 = vmul.f32 %v5003, %v5114
        %v5132 = vmul.f32 %v5004, %v5114
        %v5133 = vmul.f32 %v5005, %v5119
        %v5134 = vmul.f32 %v5006, %v5119
        %v5135 = vmul.f32 %v5007, %v5124
        %v5136 = vmul.f32 %v5008, %v5124
        %v5137 = vmul.f32 %v5009, %v5129
        %v5138 = vmul.f32 %v5010, %v5129
        %v5139 = vadd.f32 %v5131, %v4009
        %v5140 = vadd.f32 %v5132, %v4010
        %v5141 = vadd.f32 %v5133, %v4011
        %v5142 = vadd.f32 %v5134, %v4012
        %v5143 = vadd.f32 %v5135, %v4013
        %v5144 = vadd.f32 %v5136, %v4014
        %v5145 = vadd.f32 %v5137, %v4015
        %v5146 = vadd.f32 %v5138, %v4016
        %v5147 = vld [vmem:[%s12] sm:$0xff]
        %v5148 = vld [vmem:[%s12 + $0x8] sm:$0xff]
        %v5149 = vld [vmem:[%s12 + $0x10] sm:$0xff]
        %v5150 = vld [vmem:[%s12 + $0x18] sm:$0xff]
        %v5151 = vld [vmem:[%s12 + $0x20] sm:$0xff]
        %v5152 = vld [vmem:[%s12 + $0x28] sm:$0xff]
        %v5153 = vld [vmem:[%s12 + $0x30] sm:$0xff]
        %v5154 = vld [vmem:[%s12 + $0x38] sm:$0xff]
        %v5155 = vld [vmem:[#allocation8] sm:$0xff]
        %v5156 = vld [vmem:[#allocation8 + $0x8] sm:$0xff]
        %v5157 = vld [vmem:[#allocation8 + $0x10] sm:$0xff]
        %v5158 = vld [vmem:[#allocation8 + $0x18] sm:$0xff]
        %v5159 = vld [vmem:[%s14] sm:$0xff]
        %v5160 = vld [vmem:[%s14 + $0x8] sm:$0xff]
        %v5161 = vld [vmem:[%s14 + $0x10] sm:$0xff]
        %v5162 = vld [vmem:[%s14 + $0x18] sm:$0xff]
        %5163 = vrot.lane.b32.xlu0 %v5139, 17
        %v5164 = vpop.permute.xlu0 %5163
        %5165 = vrot.lane.b32.xlu0 %v5141, 17
        %v5166 = vpop.permute.xlu0 %5165
        %5167 = vrot.lane.b32.xlu0 %v5143, 17
        %v5168 = vpop.permute.xlu0 %5167
        %5169 = vrot.lane.b32.xlu0 %v5145, 17
        %v5170 = vpop.permute.xlu0 %5169
        %5171 = vrot.lane.b32.xlu0 %v5140, 17
        %v5172 = vpop.permute.xlu0 %5171
        %5173 = vrot.lane.b32.xlu0 %v5142, 17
        %v5174 = vpop.permute.xlu0 %5173
        %5175 = vrot.lane.b32.xlu0 %v5144, 17
        %v5176 = vpop.permute.xlu0 %5175
        %5177 = vrot.lane.b32.xlu0 %v5146, 17
        %v5178 = vpop.permute.xlu0 %5177
        %v5179 = vsel %vm594, %v5164, %v5172
        %v5180 = vsel %vm594, %v5166, %v5174
        %v5181 = vsel %vm594, %v5168, %v5176
        %v5182 = vsel %vm594, %v5170, %v5178
        %v5183 = vsel %vm594, %v5172, %v5164
        %v5184 = vsel %vm594, %v5174, %v5166
        %v5185 = vsel %vm594, %v5176, %v5168
        %v5186 = vsel %vm594, %v5178, %v5170
        %v5187 = vmul.f32 %v5183, %v606
        %v5188 = vmul.f32 %v5179, %v610
        %v5189 = vmul.f32 %v5184, %v606
        %v5190 = vmul.f32 %v5180, %v610
        %v5191 = vmul.f32 %v5185, %v606
        %v5192 = vmul.f32 %v5181, %v610
        %v5193 = vmul.f32 %v5186, %v606
        %v5194 = vmul.f32 %v5182, %v610
        %5195 = vrot.lane.b32.xlu0 %v5139, 16
        %v5196 = vpop.permute.xlu0 %5195
        %5197 = vrot.lane.b32.xlu0 %v5141, 16
        %v5198 = vpop.permute.xlu0 %5197
        %5199 = vrot.lane.b32.xlu0 %v5143, 16
        %v5200 = vpop.permute.xlu0 %5199
        %5201 = vrot.lane.b32.xlu0 %v5145, 16
        %v5202 = vpop.permute.xlu0 %5201
        %5203 = vrot.lane.b32.xlu0 %v5140, 16
        %v5204 = vpop.permute.xlu0 %5203
        %5205 = vrot.lane.b32.xlu0 %v5142, 16
        %v5206 = vpop.permute.xlu0 %5205
        %5207 = vrot.lane.b32.xlu0 %v5144, 16
        %v5208 = vpop.permute.xlu0 %5207
        %5209 = vrot.lane.b32.xlu0 %v5146, 16
        %v5210 = vpop.permute.xlu0 %5209
        %v5211 = vsel %vm635, %v5196, %v5204
        %v5212 = vsel %vm635, %v5198, %v5206
        %v5213 = vsel %vm635, %v5200, %v5208
        %v5214 = vsel %vm635, %v5202, %v5210
        %v5215 = vsel %vm635, %v5204, %v5196
        %v5216 = vsel %vm635, %v5206, %v5198
        %v5217 = vsel %vm635, %v5208, %v5200
        %v5218 = vsel %vm635, %v5210, %v5202
        %v5219 = vmul.f32 %v5215, %v647
        %v5220 = vmul.f32 %v5211, %v651
        %v5221 = vmul.f32 %v5216, %v647
        %v5222 = vmul.f32 %v5212, %v651
        %v5223 = vmul.f32 %v5217, %v647
        %v5224 = vmul.f32 %v5213, %v651
        %v5225 = vmul.f32 %v5218, %v647
        %v5226 = vmul.f32 %v5214, %v651
        %5227 = vrot.lane.b32.xlu0 %v5139, 15
        %v5228 = vpop.permute.xlu0 %5227
        %5229 = vrot.lane.b32.xlu0 %v5141, 15
        %v5230 = vpop.permute.xlu0 %5229
        %5231 = vrot.lane.b32.xlu0 %v5143, 15
        %v5232 = vpop.permute.xlu0 %5231
        %5233 = vrot.lane.b32.xlu0 %v5145, 15
        %v5234 = vpop.permute.xlu0 %5233
        %5235 = vrot.lane.b32.xlu0 %v5140, 15
        %v5236 = vpop.permute.xlu0 %5235
        %5237 = vrot.lane.b32.xlu0 %v5142, 15
        %v5238 = vpop.permute.xlu0 %5237
        %5239 = vrot.lane.b32.xlu0 %v5144, 15
        %v5240 = vpop.permute.xlu0 %5239
        %5241 = vrot.lane.b32.xlu0 %v5146, 15
        %v5242 = vpop.permute.xlu0 %5241
        %v5243 = vsel %vm676, %v5228, %v5236
        %v5244 = vsel %vm676, %v5230, %v5238
        %v5245 = vsel %vm676, %v5232, %v5240
        %v5246 = vsel %vm676, %v5234, %v5242
        %v5247 = vsel %vm676, %v5236, %v5228
        %v5248 = vsel %vm676, %v5238, %v5230
        %v5249 = vsel %vm676, %v5240, %v5232
        %v5250 = vsel %vm676, %v5242, %v5234
        %v5251 = vmul.f32 %v5247, %v688
        %v5252 = vmul.f32 %v5243, %v692
        %v5253 = vmul.f32 %v5248, %v688
        %v5254 = vmul.f32 %v5244, %v692
        %v5255 = vmul.f32 %v5249, %v688
        %v5256 = vmul.f32 %v5245, %v692
        %v5257 = vmul.f32 %v5250, %v688
        %v5258 = vmul.f32 %v5246, %v692
        %5259 = vrot.lane.b32.xlu0 %v5139, 1
        %v5260 = vpop.permute.xlu0 %5259
        %5261 = vrot.lane.b32.xlu0 %v5141, 1
        %v5262 = vpop.permute.xlu0 %5261
        %5263 = vrot.lane.b32.xlu0 %v5143, 1
        %v5264 = vpop.permute.xlu0 %5263
        %5265 = vrot.lane.b32.xlu0 %v5145, 1
        %v5266 = vpop.permute.xlu0 %5265
        %5267 = vrot.lane.b32.xlu0 %v5140, 1
        %v5268 = vpop.permute.xlu0 %5267
        %5269 = vrot.lane.b32.xlu0 %v5142, 1
        %v5270 = vpop.permute.xlu0 %5269
        %5271 = vrot.lane.b32.xlu0 %v5144, 1
        %v5272 = vpop.permute.xlu0 %5271
        %5273 = vrot.lane.b32.xlu0 %v5146, 1
        %v5274 = vpop.permute.xlu0 %5273
        %v5275 = vsel %vm717, %v5260, %v5268
        %v5276 = vsel %vm717, %v5262, %v5270
        %v5277 = vsel %vm717, %v5264, %v5272
        %v5278 = vsel %vm717, %v5266, %v5274
        %v5279 = vsel %vm717, %v5268, %v5260
        %v5280 = vsel %vm717, %v5270, %v5262
        %v5281 = vsel %vm717, %v5272, %v5264
        %v5282 = vsel %vm717, %v5274, %v5266
        %v5283 = vmul.f32 %v5279, %v729
        %v5284 = vmul.f32 %v5275, %v733
        %v5285 = vmul.f32 %v5280, %v729
        %v5286 = vmul.f32 %v5276, %v733
        %v5287 = vmul.f32 %v5281, %v729
        %v5288 = vmul.f32 %v5277, %v733
        %v5289 = vmul.f32 %v5282, %v729
        %v5290 = vmul.f32 %v5278, %v733
        %5291 = vrot.lane.b32.xlu0 %v5139, 127
        %v5292 = vpop.permute.xlu0 %5291
        %5293 = vrot.lane.b32.xlu0 %v5141, 127
        %v5294 = vpop.permute.xlu0 %5293
        %5295 = vrot.lane.b32.xlu0 %v5143, 127
        %v5296 = vpop.permute.xlu0 %5295
        %5297 = vrot.lane.b32.xlu0 %v5145, 127
        %v5298 = vpop.permute.xlu0 %5297
        %5299 = vrot.lane.b32.xlu0 %v5140, 127
        %v5300 = vpop.permute.xlu0 %5299
        %5301 = vrot.lane.b32.xlu0 %v5142, 127
        %v5302 = vpop.permute.xlu0 %5301
        %5303 = vrot.lane.b32.xlu0 %v5144, 127
        %v5304 = vpop.permute.xlu0 %5303
        %5305 = vrot.lane.b32.xlu0 %v5146, 127
        %v5306 = vpop.permute.xlu0 %5305
        %v5307 = vsel %vm758, %v5292, %v5300
        %v5308 = vsel %vm758, %v5294, %v5302
        %v5309 = vsel %vm758, %v5296, %v5304
        %v5310 = vsel %vm758, %v5298, %v5306
        %v5311 = vsel %vm758, %v5300, %v5292
        %v5312 = vsel %vm758, %v5302, %v5294
        %v5313 = vsel %vm758, %v5304, %v5296
        %v5314 = vsel %vm758, %v5306, %v5298
        %v5315 = vmul.f32 %v5307, %v770
        %v5316 = vmul.f32 %v5311, %v774
        %v5317 = vmul.f32 %v5308, %v770
        %v5318 = vmul.f32 %v5312, %v774
        %v5319 = vmul.f32 %v5309, %v770
        %v5320 = vmul.f32 %v5313, %v774
        %v5321 = vmul.f32 %v5310, %v770
        %v5322 = vmul.f32 %v5314, %v774
        %5323 = vrot.lane.b32.xlu0 %v5139, 113
        %v5324 = vpop.permute.xlu0 %5323
        %5325 = vrot.lane.b32.xlu0 %v5141, 113
        %v5326 = vpop.permute.xlu0 %5325
        %5327 = vrot.lane.b32.xlu0 %v5143, 113
        %v5328 = vpop.permute.xlu0 %5327
        %5329 = vrot.lane.b32.xlu0 %v5145, 113
        %v5330 = vpop.permute.xlu0 %5329
        %5331 = vrot.lane.b32.xlu0 %v5140, 113
        %v5332 = vpop.permute.xlu0 %5331
        %5333 = vrot.lane.b32.xlu0 %v5142, 113
        %v5334 = vpop.permute.xlu0 %5333
        %5335 = vrot.lane.b32.xlu0 %v5144, 113
        %v5336 = vpop.permute.xlu0 %5335
        %5337 = vrot.lane.b32.xlu0 %v5146, 113
        %v5338 = vpop.permute.xlu0 %5337
        %v5339 = vsel %vm799, %v5324, %v5332
        %v5340 = vsel %vm799, %v5326, %v5334
        %v5341 = vsel %vm799, %v5328, %v5336
        %v5342 = vsel %vm799, %v5330, %v5338
        %v5343 = vsel %vm799, %v5332, %v5324
        %v5344 = vsel %vm799, %v5334, %v5326
        %v5345 = vsel %vm799, %v5336, %v5328
        %v5346 = vsel %vm799, %v5338, %v5330
        %v5347 = vmul.f32 %v5339, %v811
        %v5348 = vmul.f32 %v5343, %v815
        %v5349 = vmul.f32 %v5340, %v811
        %v5350 = vmul.f32 %v5344, %v815
        %v5351 = vmul.f32 %v5341, %v811
        %v5352 = vmul.f32 %v5345, %v815
        %v5353 = vmul.f32 %v5342, %v811
        %v5354 = vmul.f32 %v5346, %v815
        %5355 = vrot.lane.b32.xlu0 %v5139, 112
        %v5356 = vpop.permute.xlu0 %5355
        %5357 = vrot.lane.b32.xlu0 %v5141, 112
        %v5358 = vpop.permute.xlu0 %5357
        %5359 = vrot.lane.b32.xlu0 %v5143, 112
        %v5360 = vpop.permute.xlu0 %5359
        %5361 = vrot.lane.b32.xlu0 %v5145, 112
        %v5362 = vpop.permute.xlu0 %5361
        %5363 = vrot.lane.b32.xlu0 %v5140, 112
        %v5364 = vpop.permute.xlu0 %5363
        %5365 = vrot.lane.b32.xlu0 %v5142, 112
        %v5366 = vpop.permute.xlu0 %5365
        %5367 = vrot.lane.b32.xlu0 %v5144, 112
        %v5368 = vpop.permute.xlu0 %5367
        %5369 = vrot.lane.b32.xlu0 %v5146, 112
        %v5370 = vpop.permute.xlu0 %5369
        %v5371 = vsel %vm840, %v5356, %v5364
        %v5372 = vsel %vm840, %v5358, %v5366
        %v5373 = vsel %vm840, %v5360, %v5368
        %v5374 = vsel %vm840, %v5362, %v5370
        %v5375 = vsel %vm840, %v5364, %v5356
        %v5376 = vsel %vm840, %v5366, %v5358
        %v5377 = vsel %vm840, %v5368, %v5360
        %v5378 = vsel %vm840, %v5370, %v5362
        %v5379 = vmul.f32 %v5371, %v852
        %v5380 = vmul.f32 %v5375, %v856
        %v5381 = vmul.f32 %v5372, %v852
        %v5382 = vmul.f32 %v5376, %v856
        %v5383 = vmul.f32 %v5373, %v852
        %v5384 = vmul.f32 %v5377, %v856
        %v5385 = vmul.f32 %v5374, %v852
        %v5386 = vmul.f32 %v5378, %v856
        %5387 = vrot.lane.b32.xlu0 %v5139, 111
        %v5388 = vpop.permute.xlu0 %5387
        %5389 = vrot.lane.b32.xlu0 %v5141, 111
        %v5390 = vpop.permute.xlu0 %5389
        %5391 = vrot.lane.b32.xlu0 %v5143, 111
        %v5392 = vpop.permute.xlu0 %5391
        %5393 = vrot.lane.b32.xlu0 %v5145, 111
        %v5394 = vpop.permute.xlu0 %5393
        %5395 = vrot.lane.b32.xlu0 %v5140, 111
        %v5396 = vpop.permute.xlu0 %5395
        %5397 = vrot.lane.b32.xlu0 %v5142, 111
        %v5398 = vpop.permute.xlu0 %5397
        %5399 = vrot.lane.b32.xlu0 %v5144, 111
        %v5400 = vpop.permute.xlu0 %5399
        %5401 = vrot.lane.b32.xlu0 %v5146, 111
        %v5402 = vpop.permute.xlu0 %5401
        %v5403 = vsel %vm881, %v5388, %v5396
        %v5404 = vsel %vm881, %v5390, %v5398
        %v5405 = vsel %vm881, %v5392, %v5400
        %v5406 = vsel %vm881, %v5394, %v5402
        %v5407 = vsel %vm881, %v5396, %v5388
        %v5408 = vsel %vm881, %v5398, %v5390
        %v5409 = vsel %vm881, %v5400, %v5392
        %v5410 = vsel %vm881, %v5402, %v5394
        %v5411 = vmul.f32 %v5403, %v893
        %v5412 = vmul.f32 %v5407, %v897
        %v5413 = vmul.f32 %v5404, %v893
        %v5414 = vmul.f32 %v5408, %v897
        %v5415 = vmul.f32 %v5405, %v893
        %v5416 = vmul.f32 %v5409, %v897
        %v5417 = vmul.f32 %v5406, %v893
        %v5418 = vmul.f32 %v5410, %v897
        %v5420 = vsel %vm906, %v5155, 0
        %v5423 = vsel %vm906, %v5156, 0
        %v5426 = vsel %vm906, %v5157, 0
        %v5429 = vsel %vm906, %v5158, 0
        %5431 = vmatprep.subr.mxu0 0.0
        %5432 = vmatpush1.msra.mxu0 0.0
        %5433 = vmatprep.subr.mxu0 0.0
        %5434 = vmatpush1.msra.mxu0 0.0
        %5435 = vmatprep.subr.mxu0 0.0
        %5436 = vmatpush1.msra.mxu0 0.0
        %5437 = vmatprep.subr.mxu0 0.0
        %5438 = vmatpush1.msra.mxu0 0.0
        %5439 = vmatprep.subr.mxu0 0.0
        %5440 = vmatpush1.msra.mxu0 0.0
        %5441 = vmatprep.subr.mxu0 0.0
        %5442 = vmatpush1.msra.mxu0 0.0
        %5443 = vmatprep.subr.mxu0 0.0
        %5444 = vmatpush1.msra.mxu0 0.0
        %5445 = vmatprep.subr.mxu0 0.0
        %5446 = vmatpush1.msra.mxu0 0.0
        %5447 = vmatprep.subr.mxu0 0.0
        %5448 = vmatpush1.msra.mxu0 0.0
        %5449 = vmatprep.subr.mxu0 0.0
        %5450 = vmatpush1.msra.mxu0 0.0
        %5451 = vmatprep.subr.mxu0 0.0
        %5452 = vmatpush1.msra.mxu0 0.0
        %5453 = vmatprep.subr.mxu0 0.0
        %5454 = vmatpush1.msra.mxu0 0.0
        %5455 = vmatprep.subr.mxu0 %v5146
        %5456 = vmatpush1.msra.mxu0 %v5145
        %5457 = vmatprep.subr.mxu0 %v5144
        %5458 = vmatpush1.msra.mxu0 %v5143
        %5459 = vmatprep.subr.mxu0 %v5142
        %5460 = vmatpush1.msra.mxu0 %v5141
        %5461 = vmatprep.subr.mxu0 %v5140
        %5462 = vmatpush1.msra.mxu0 %v5139
        %5463 = vmatprep.subr.mxu0 0.0
        %5464 = vmatpush2.msra.mxu0 0.0
        %5465 = vmatprep.subr.mxu0 0.0
        %5466 = vmatpush2.msra.mxu0 0.0
        %5467 = vmatprep.subr.mxu0 0.0
        %5468 = vmatpush2.msra.mxu0 0.0
        %5469 = vmatprep.subr.mxu0 0.0
        %5470 = vmatpush2.msra.mxu0 0.0
        %5471 = vmatprep.subr.mxu0 0.0
        %5472 = vmatpush2.msra.mxu0 0.0
        %5473 = vmatprep.subr.mxu0 0.0
        %5474 = vmatpush2.msra.mxu0 0.0
        %5475 = vmatprep.subr.mxu0 0.0
        %5476 = vmatpush2.msra.mxu0 0.0
        %5477 = vmatprep.subr.mxu0 0.0
        %5478 = vmatpush2.msra.mxu0 0.0
        %5479 = vmatprep.subr.mxu0 0.0
        %5480 = vmatpush2.msra.mxu0 0.0
        %5481 = vmatprep.subr.mxu0 0.0
        %5482 = vmatpush2.msra.mxu0 0.0
        %5483 = vmatprep.subr.mxu0 0.0
        %5484 = vmatpush2.msra.mxu0 0.0
        %5485 = vmatprep.subr.mxu0 0.0
        %5486 = vmatpush2.msra.mxu0 0.0
        %5487 = vmatprep.subr.mxu0 0.0
        %5488 = vmatpush2.msra.mxu0 0.0
        %5489 = vmatprep.subr.mxu0 0.0
        %5490 = vmatpush2.msra.mxu0 0.0
        %5491 = vmatprep.subr.mxu0 0.0
        %5492 = vmatpush2.msra.mxu0 0.0
        %5493 = vmatprep.subr.mxu0 0.0
        %5494 = vmatpush2.msra.mxu0 0.0
        %5495 = vmatprep.mubr.f32.mxu0 0.0
        %5496 = vmatmul.mubr.f32.gmra.mxu0 %v5420
        %v5497 = vpop.f32.mrf.mxu0
        %v5498 = vadd.f32 0.0, %v5497
        %v5499 = vpop.f32.mrf.mxu0
        %v5500 = vadd.f32 0.0, %v5499
        %5501 = vmatprep.mubr.f32.mxu0 0.0
        %5502 = vmatmul.mubr.f32.gmra.mxu0 %v5423
        %v5503 = vpop.f32.mrf.mxu0
        %v5504 = vadd.f32 0.0, %v5503
        %v5505 = vpop.f32.mrf.mxu0
        %v5506 = vadd.f32 0.0, %v5505
        %5507 = vmatprep.mubr.f32.mxu0 0.0
        %5508 = vmatmul.mubr.f32.gmra.mxu0 %v5426
        %v5509 = vpop.f32.mrf.mxu0
        %v5510 = vadd.f32 0.0, %v5509
        %v5511 = vpop.f32.mrf.mxu0
        %v5512 = vadd.f32 0.0, %v5511
        %5513 = vmatprep.mubr.f32.mxu0 0.0
        %5514 = vmatmul.mubr.f32.gmra.mxu0 %v5429
        %v5515 = vpop.f32.mrf.mxu0
        %v5516 = vadd.f32 0.0, %v5515
        %v5517 = vpop.f32.mrf.mxu0
        %v5518 = vadd.f32 0.0, %v5517
        %5519 = vdwg.mxu0
        %5520 = vmatprep.subr.mxu0 %v5290
        %5521 = vmatpush1.msra.mxu0 %v5289
        %5522 = vmatprep.subr.mxu0 %v5288
        %5523 = vmatpush1.msra.mxu0 %v5287
        %5524 = vmatprep.subr.mxu0 %v5286
        %5525 = vmatpush1.msra.mxu0 %v5285
        %5526 = vmatprep.subr.mxu0 %v5284
        %5527 = vmatpush1.msra.mxu0 %v5283
        %5528 = vmatprep.subr.mxu0 %v5258
        %5529 = vmatpush1.msra.mxu0 %v5257
        %5530 = vmatprep.subr.mxu0 %v5256
        %5531 = vmatpush1.msra.mxu0 %v5255
        %5532 = vmatprep.subr.mxu0 %v5254
        %5533 = vmatpush1.msra.mxu0 %v5253
        %5534 = vmatprep.subr.mxu0 %v5252
        %5535 = vmatpush1.msra.mxu0 %v5251
        %5536 = vmatprep.subr.mxu0 %v5226
        %5537 = vmatpush1.msra.mxu0 %v5225
        %5538 = vmatprep.subr.mxu0 %v5224
        %5539 = vmatpush1.msra.mxu0 %v5223
        %5540 = vmatprep.subr.mxu0 %v5222
        %5541 = vmatpush1.msra.mxu0 %v5221
        %5542 = vmatprep.subr.mxu0 %v5220
        %5543 = vmatpush1.msra.mxu0 %v5219
        %5544 = vmatprep.subr.mxu0 %v5194
        %5545 = vmatpush1.msra.mxu0 %v5193
        %5546 = vmatprep.subr.mxu0 %v5192
        %5547 = vmatpush1.msra.mxu0 %v5191
        %5548 = vmatprep.subr.mxu0 %v5190
        %5549 = vmatpush1.msra.mxu0 %v5189
        %5550 = vmatprep.subr.mxu0 %v5188
        %5551 = vmatpush1.msra.mxu0 %v5187
        %5552 = vmatprep.subr.mxu0 %v5418
        %5553 = vmatpush2.msra.mxu0 %v5417
        %5554 = vmatprep.subr.mxu0 %v5416
        %5555 = vmatpush2.msra.mxu0 %v5415
        %5556 = vmatprep.subr.mxu0 %v5414
        %5557 = vmatpush2.msra.mxu0 %v5413
        %5558 = vmatprep.subr.mxu0 %v5412
        %5559 = vmatpush2.msra.mxu0 %v5411
        %5560 = vmatprep.subr.mxu0 %v5386
        %5561 = vmatpush2.msra.mxu0 %v5385
        %5562 = vmatprep.subr.mxu0 %v5384
        %5563 = vmatpush2.msra.mxu0 %v5383
        %5564 = vmatprep.subr.mxu0 %v5382
        %5565 = vmatpush2.msra.mxu0 %v5381
        %5566 = vmatprep.subr.mxu0 %v5380
        %5567 = vmatpush2.msra.mxu0 %v5379
        %5568 = vmatprep.subr.mxu0 %v5354
        %5569 = vmatpush2.msra.mxu0 %v5353
        %5570 = vmatprep.subr.mxu0 %v5352
        %5571 = vmatpush2.msra.mxu0 %v5351
        %5572 = vmatprep.subr.mxu0 %v5350
        %5573 = vmatpush2.msra.mxu0 %v5349
        %5574 = vmatprep.subr.mxu0 %v5348
        %5575 = vmatpush2.msra.mxu0 %v5347
        %5576 = vmatprep.subr.mxu0 %v5322
        %5577 = vmatpush2.msra.mxu0 %v5321
        %5578 = vmatprep.subr.mxu0 %v5320
        %5579 = vmatpush2.msra.mxu0 %v5319
        %5580 = vmatprep.subr.mxu0 %v5318
        %5581 = vmatpush2.msra.mxu0 %v5317
        %5582 = vmatprep.subr.mxu0 %v5316
        %5583 = vmatpush2.msra.mxu0 %v5315
        %5584 = vmatprep.mubr.f32.mxu0 %v5148
        %5585 = vmatmul.mubr.f32.gmra.mxu0 %v5147
        %v5586 = vpop.f32.mrf.mxu0
        %v5587 = vadd.f32 %v5498, %v5586
        %v5588 = vpop.f32.mrf.mxu0
        %v5589 = vadd.f32 %v5500, %v5588
        %5590 = vmatprep.mubr.f32.mxu0 %v5150
        %5591 = vmatmul.mubr.f32.gmra.mxu0 %v5149
        %v5592 = vpop.f32.mrf.mxu0
        %v5593 = vadd.f32 %v5504, %v5592
        %v5594 = vpop.f32.mrf.mxu0
        %v5595 = vadd.f32 %v5506, %v5594
        %5596 = vmatprep.mubr.f32.mxu0 %v5152
        %5597 = vmatmul.mubr.f32.gmra.mxu0 %v5151
        %v5598 = vpop.f32.mrf.mxu0
        %v5599 = vadd.f32 %v5510, %v5598
        %v5600 = vpop.f32.mrf.mxu0
        %v5601 = vadd.f32 %v5512, %v5600
        %5602 = vmatprep.mubr.f32.mxu0 %v5154
        %5603 = vmatmul.mubr.f32.gmra.mxu0 %v5153
        %v5604 = vpop.f32.mrf.mxu0
        %v5605 = vadd.f32 %v5516, %v5604
        %v5606 = vpop.f32.mrf.mxu0
        %v5607 = vadd.f32 %v5518, %v5606
        %5608 = vdwg.mxu0
        %5610 = vset.pattern.permute.xlu0 0
        %5611 = vperm.xlu0 %5610, %v5159
        %v5612 = vpop.permute.xlu0 %5611
        %5615 = vset.pattern.permute.xlu0 0
        %5616 = vperm.xlu0 %5615, %v5160
        %v5617 = vpop.permute.xlu0 %5616
        %5620 = vset.pattern.permute.xlu0 0
        %5621 = vperm.xlu0 %5620, %v5161
        %v5622 = vpop.permute.xlu0 %5621
        %5625 = vset.pattern.permute.xlu0 0
        %5626 = vperm.xlu0 %5625, %v5162
        %v5627 = vpop.permute.xlu0 %5626
        %v5629 = vadd.f32 %v5587, %v5612
        %v5630 = vadd.f32 %v5589, %v5612
        %v5631 = vadd.f32 %v5593, %v5617
        %v5632 = vadd.f32 %v5595, %v5617
        %v5633 = vadd.f32 %v5599, %v5622
        %v5634 = vadd.f32 %v5601, %v5622
        %v5635 = vadd.f32 %v5605, %v5627
        %v5636 = vadd.f32 %v5607, %v5627
        %v5637 = vadd.f32 %v5629, %v550
        %v5638 = vadd.f32 %v5630, %v551
        %v5639 = vadd.f32 %v5631, %v552
        %v5640 = vadd.f32 %v5632, %v553
        %v5641 = vadd.f32 %v5633, %v554
        %v5642 = vadd.f32 %v5634, %v555
        %v5643 = vadd.f32 %v5635, %v556
        %v5644 = vadd.f32 %v5636, %v557
        %5645 = vst [vmem:[%s544] sm:$0xff] %v5637
        %5646 = vst [vmem:[%s544 + $0x8] sm:$0xff] %v5638
        %5647 = vst [vmem:[%s544 + $0x10] sm:$0xff] %v5639
        %5648 = vst [vmem:[%s544 + $0x18] sm:$0xff] %v5640
        %5649 = vst [vmem:[%s544 + $0x20] sm:$0xff] %v5641
        %5650 = vst [vmem:[%s544 + $0x28] sm:$0xff] %v5642
        %5651 = vst [vmem:[%s544 + $0x30] sm:$0xff] %v5643
        %5652 = vst [vmem:[%s544 + $0x38] sm:$0xff] %v5644
        %s5653 = sand.u32 %s360, 1
        %s5654 = scalar_lea.sflag [#allocation4], %s5653
        %s5655 = sand.u32 %s360, 1
        %s5656 = smul.addr %s5655, 64
        %s5657 = scalar_lea.vmem [#allocation10], %s5656
        // Predicated region
        $region97: #{tpu_custom_call.1} parent=79 // pred_check
          %p5658 = pneg %p370
        $region98: #{tpu_custom_call.1} parent=79 // pred_check_branch
          %5660 = sbr.rel (%p5658) target = $region100
        $region99: #{tpu_custom_call.1} parent=79 // pred_region
          %s5662 = ssub.s32 1024, 1024
          %5663 = vsyncadd %s5654, %s5662
          %s5664 = smul.addr %s32, 8
          %s5665 = smul.addr %s5664, 128
          %s5666 = scalar_lea.hbm %s15, %s5665
          %s5667 = sshll.u32 %s5657, 4
          %s5668 = int_to_ptr.vmem [resolvable:$true] %s5667
          %5673 = dma.vmem_to_hbm [thread:$0]  %s5668, 1024, %s5666, %s5654, 256, 256, 16
        $region100: #{tpu_custom_call.1} parent=79 // pred_fallthru
          _
      $region80: #{tpu_custom_call.1} parent=5 // pred_fallthru
        _
      %p5674 = scmp.le.s32.totalorder 2, %s27
      // Predicated region
      $region101: #{tpu_custom_call.1} parent=5 // pred_check
        %p5675 = pneg %p5674
      $region102: #{tpu_custom_call.1} parent=5 // pred_check_branch
        %5677 = sbr.rel (%p5675) target = $region104
      $region103: #{tpu_custom_call.1} parent=5 // pred_region
        %s5678 = ssub.s32 %s27, 2
        // Predicated region
        $region105: #{tpu_custom_call.1} parent=103 // pred_check
          %p5679 = pneg %p376
        $region106: #{tpu_custom_call.1} parent=103 // pred_check_branch
          %5681 = sbr.rel (%p5679) target = $region108
        $region107: #{tpu_custom_call.1} parent=103 // pred_region
          %s5682 = sand.u32 %s361, 1
          %s5683 = scalar_lea.sflag [#allocation4], %s5682
          %s5684 = sand.u32 %s361, 1
          %s5685 = smul.addr %s5684, 64
          %s5686 = scalar_lea.vmem [#allocation10], %s5685
          %5687 = dma.done %s5683, 1024
        $region108: #{tpu_custom_call.1} parent=103 // pred_fallthru
          _
      $region104: #{tpu_custom_call.1} parent=5 // pred_fallthru
        _
    $region6: #{tpu_custom_call.1} parent=1 // loop_footer
      %s31 = sadd.s32 1, %s27
    $region7: #{tpu_custom_call.1} parent=1 // loop_footer_branch
      %26 = sbr.rel target = $region3
    $region8: #{tpu_custom_call.1} parent=1 // loop_exit
      _
    %5688 = vsyncpa [#allocation3], 1
    %s5689 = scalar_lea.sflag [#allocation3], 1
    %5690 = vsyncpa %s5689, 1
    %5691 = vsyncpa [#allocation6], 1
    %5692 = vsyncpa [#allocation9], 1
    %5693 = vsyncpa [#allocation4], 1
    %s5694 = scalar_lea.sflag [#allocation4], 1
    %5695 = vsyncpa %s5694, 1

</llo_original>
